<compile_context>
chip_gen: v7x
topology: tpu7x:2x2x1
jax: 0.10.0
libtpu: 0.0.40
codegen_flags: <defaults>
</compile_context>

<pallas_src>
import jax
import jax.numpy as jnp
from jax.experimental import pallas as pl
from jax.experimental.pallas import tpu as pltpu


# ----------------------------- layout constants -----------------------------
C0, CP0 = 10, 16                # conv1 in-channels (PyTorch) / padded to 16
C1, C2 = 16, 8                  # conv1 / conv2 out-channels
HIN = 21                        # 21 -> 19 -> 17 gives Linear(2312, .)
S_IN = HIN * HIN                # 441 flattened positions per image
XPAD = 640                      # padded conv1 input width  (>= L1 + 2*21 + 2)
L1 = 512                        # conv1 output width kept on the 21-grid
L2 = 384                        # conv2 output width kept on the 21-grid
FCH = 512                       # fc1 hidden width padded 500 -> 512
K1 = 9 * CP0                    # 144 im2col rows for conv1
K2 = 9 * C1                     # 144 im2col rows for conv2
KFC = C2 * L2                   # 3072 FC1 contraction width
KTAPS = tuple((kh, kw) for kh in range(3) for kw in range(3))

# Static invariants the padded-grid trick depends on (see review concerns).
assert XPAD >= L1 + 2 * HIN + 2
assert L1 >= L2 + 2 * HIN + 2
assert L2 >= 16 * HIN + 17              # last meaningful conv2 position = 352
assert XPAD % 128 == 0 and L1 % 128 == 0 and L2 % 128 == 0 and FCH % 128 == 0


# ------------------------------ Pallas kernel --------------------------------
def simple_cnn_kernel(x_ref, w1_ref, s1_ref, t1_ref, w2_ref, s2_ref, t2_ref,
                      fc1w_ref, fc1b_ref, fc2w_ref, fc2b_ref, o_ref,
                      im1, y1, im2, y2b, y2f):
    # ---- Conv1 + BN + ReLU: im2col-by-shift, then ONE (16,144)@(144,512) ----
    for k, (kh, kw) in enumerate(KTAPS):
        s = kh * HIN + kw
        im1[k * CP0:(k + 1) * CP0, :] = x_ref[0, :, s:s + L1]          # bf16
    a1 = jnp.dot(w1_ref[...], im1[...], preferred_element_type=jnp.float32)
    y1[...] = jnp.maximum(a1 * s1_ref[...] + t1_ref[...], 0.0).astype(jnp.bfloat16)

    # ---- Conv2 + BN + ReLU: ONE (8,144)@(144,384) ----
    for k, (kh, kw) in enumerate(KTAPS):
        s = kh * HIN + kw
        im2[k * C1:(k + 1) * C1, :] = y1[:, s:s + L2]                  # bf16
    a2 = jnp.dot(w2_ref[...], im2[...], preferred_element_type=jnp.float32)
    y2b[...] = jnp.maximum(a2 * s2_ref[...] + t2_ref[...], 0.0)        # (8,384) f32

    # ---- flatten channel-major into (1, 3072) lanes (matches fc1w layout) ----
    for c in range(C2):
        y2f[:, c * L2:(c + 1) * L2] = y2b[c:c + 1, :].astype(jnp.bfloat16)

    # ---- FC1 + ReLU: ONE K=3072 MXU matmul ----
    h1 = jnp.maximum(
        jnp.dot(y2f[...], fc1w_ref[...], preferred_element_type=jnp.float32)
        + fc1b_ref[...], 0.0)                                          # (1, 512) f32

    # ---- FC2 on the VPU/XLU: elementwise mul + lane reduce ----
    res = jnp.sum(h1 * fc2w_ref[...], axis=1, keepdims=True) + fc2b_ref[...]  # (1,1)
    o_ref[...] = jnp.broadcast_to(res.reshape(1, 1, 1), (1, 8, 128))


# ------------------------------- JAX wrapper ---------------------------------
def simple_cnn_forward(x, prep):
    B = x.shape[0]
    # (B,10,21,21) -> (B,16,640): pad channels 10->16 and flattened spatial
    # 441->640 (zeros) so every 3x3 tap is a plain lane shift; cast bf16 ONCE.
    xp = jnp.pad(x.reshape(B, C0, S_IN),
                 ((0, 0), (0, CP0 - C0), (0, XPAD - S_IN))).astype(jnp.bfloat16)

    def whole(a):   # full-array VMEM block, constant across the batch grid
        return pl.BlockSpec(a.shape, lambda b: (0, 0))

    wargs = (prep["w1"], prep["s1"], prep["t1"], prep["w2"], prep["s2"],
             prep["t2"], prep["fc1w"], prep["fc1b"], prep["fc2w"], prep["fc2b"])

    out = pl.pallas_call(
        simple_cnn_kernel,
        out_shape=jax.ShapeDtypeStruct((B, 8, 128), jnp.float32),
        grid=(B,),
        in_specs=[pl.BlockSpec((1, CP0, XPAD), lambda b: (b, 0, 0))]
                 + [whole(a) for a in wargs],
        out_specs=pl.BlockSpec((1, 8, 128), lambda b: (b, 0, 0)),
        scratch_shapes=[
            pltpu.VMEM((K1, L1), jnp.bfloat16),    # conv1 im2col
            pltpu.VMEM((C1, L1), jnp.bfloat16),    # y1 on padded grid
            pltpu.VMEM((K2, L2), jnp.bfloat16),    # conv2 im2col
            pltpu.VMEM((C2, L2), jnp.float32),     # y2 on padded grid
            pltpu.VMEM((1, KFC), jnp.bfloat16),    # y2 lane-flattened
        ],
        compiler_params=pltpu.CompilerParams(
            dimension_semantics=("parallel",)),
    )(xp, *wargs)
    return out[:, 0, :1]                            # (B, 1)


def prepare_params(p, eps=1e-5):
    """One-time (outside jit) re-layout of PyTorch-style params for the kernel."""
    # Conv weights flattened for the single im2col matmul:
    #   column index = (kh*3 + kw) * Cin_padded + cin  (matches im2col row order).
    w1t = jnp.transpose(p["w1"], (0, 2, 3, 1)).reshape(C1, 9, C0)
    w1 = (jnp.zeros((C1, 9, CP0), jnp.float32).at[:, :, :C0].set(w1t)
          .reshape(C1, K1).astype(jnp.bfloat16))                        # (16, 144)
    w2 = jnp.transpose(p["w2"], (0, 2, 3, 1)).reshape(C2, K2).astype(jnp.bfloat16)

    # Fold conv bias + BatchNorm running stats into per-channel scale / shift.
    sc1 = p["g1"] * jax.lax.rsqrt(p["v1"] + eps)
    sh1 = (p["b1"] - p["m1"]) * sc1 + p["be1"]
    sc2 = p["g2"] * jax.lax.rsqrt(p["v2"] + eps)
    sh2 = (p["b2"] - p["m2"]) * sc2 + p["be2"]

    # FC1 weight onto the padded 21x21 grid (zero rows mask never-valid
    # positions), flattened channel-major to (3072, 512).  Preserves PyTorch's
    # NCHW flatten of the (8,17,17) conv2 output exactly; output 500 -> 512.
    fw1 = p["fw1"].reshape(500, C2, 17, 17).transpose(1, 2, 3, 0)       # (c,h,w,o)
    grid = jnp.zeros((C2, HIN, HIN, FCH), jnp.float32).at[:, :17, :17, :500].set(fw1)
    fc1w = grid.reshape(C2, S_IN, FCH)[:, :L2, :].reshape(KFC, FCH).astype(jnp.bfloat16)
    fc1b = jnp.zeros((1, FCH), jnp.float32).at[0, :500].set(p["fb1"])
    # FC2 kept f32 as a (1, 512) row: used on the VPU, not the MXU.
    fc2w = jnp.zeros((1, FCH), jnp.float32).at[0, :500].set(p["fw2"][0])
    fc2b = p["fb2"].reshape(1, 1).astype(jnp.float32)
    return {
        "w1": w1, "s1": sc1.reshape(C1, 1), "t1": sh1.reshape(C1, 1),
        "w2": w2, "s2": sc2.reshape(C2, 1), "t2": sh2.reshape(C2, 1),
        "fc1w": fc1w, "fc1b": fc1b, "fc2w": fc2w, "fc2b": fc2b,
    }


def init_params(key):
    ks = jax.random.split(key, 8)
    p = {}
    p["w1"] = 0.05 * jax.random.normal(ks[0], (16, 10, 3, 3), jnp.float32)
    p["b1"] = 0.01 * jax.random.normal(ks[1], (16,), jnp.float32)
    p["g1"] = jnp.ones((16,), jnp.float32)
    p["be1"] = jnp.zeros((16,), jnp.float32)
    p["m1"] = jnp.zeros((16,), jnp.float32)
    p["v1"] = jnp.ones((16,), jnp.float32)

    p["w2"] = 0.05 * jax.random.normal(ks[2], (8, 16, 3, 3), jnp.float32)
    p["b2"] = 0.01 * jax.random.normal(ks[3], (8,), jnp.float32)
    p["g2"] = jnp.ones((8,), jnp.float32)
    p["be2"] = jnp.zeros((8,), jnp.float32)
    p["m2"] = jnp.zeros((8,), jnp.float32)
    p["v2"] = jnp.ones((8,), jnp.float32)

    p["fw1"] = 0.02 * jax.random.normal(ks[4], (500, 2312), jnp.float32)  # torch (out,in)
    p["fb1"] = 0.01 * jax.random.normal(ks[5], (500,), jnp.float32)
    p["fw2"] = 0.02 * jax.random.normal(ks[6], (1, 500), jnp.float32)
    p["fb2"] = 0.01 * jax.random.normal(ks[7], (1,), jnp.float32)
    return p


if __name__ == "__main__":
    key = jax.random.PRNGKey(0)
    kx, kp = jax.random.split(key)
    # Linear(2312, 500) after two valid 3x3 convs forces 21x21 input:
    # 21 -> 19 -> 17, and 8*17*17 = 2312.
    x = jax.random.normal(kx, (2, C0, HIN, HIN), jnp.float32)
    params = init_params(kp)
    prep = prepare_params(params)          # one-time weight re-layout (outside jit)

    fwd = jax.jit(simple_cnn_forward)
    out = jax.block_until_ready(fwd(x, prep))
    assert out.shape == (2, 1), out.shape
    print("KERNEL_OK")
</pallas_src>

<mosaic_0001>
module attributes {stable_mosaic.version = 11 : i64} {
  func.func @simple_cnn_kernel(%arg0: i32, %arg1: memref<1x16x640xbf16, #tpu.memory_space<vmem>>, %arg2: memref<16x144xbf16, #tpu.memory_space<vmem>>, %arg3: memref<16x1xf32, #tpu.memory_space<vmem>>, %arg4: memref<16x1xf32, #tpu.memory_space<vmem>>, %arg5: memref<8x144xbf16, #tpu.memory_space<vmem>>, %arg6: memref<8x1xf32, #tpu.memory_space<vmem>>, %arg7: memref<8x1xf32, #tpu.memory_space<vmem>>, %arg8: memref<3072x512xbf16, #tpu.memory_space<vmem>>, %arg9: memref<1x512xf32, #tpu.memory_space<vmem>>, %arg10: memref<1x512xf32, #tpu.memory_space<vmem>>, %arg11: memref<1x1xf32, #tpu.memory_space<vmem>>, %arg12: memref<1x8x128xf32, #tpu.memory_space<vmem>>, %arg13: memref<144x512xbf16, #tpu.memory_space<vmem>>, %arg14: memref<16x512xbf16, #tpu.memory_space<vmem>>, %arg15: memref<144x384xbf16, #tpu.memory_space<vmem>>, %arg16: memref<8x384xf32, #tpu.memory_space<vmem>>, %arg17: memref<1x3072xbf16, #tpu.memory_space<vmem>>) attributes {dimension_semantics = [#tpu.dimension_semantics<parallel>], iteration_bounds = array<i64: 2>, scalar_prefetch = 0 : i64, scratch_operands = 5 : i64, tpu.core_type = #tpu.core_type<tc>, window_params = [{transform_indices = @transform_0, window_bounds = array<i64: 1, 16, 640>}, {pipeline_mode = #tpu.pipeline_mode<synchronous>, transform_indices = @transform_1, window_bounds = array<i64: 16, 144>}, {pipeline_mode = #tpu.pipeline_mode<synchronous>, transform_indices = @transform_2, window_bounds = array<i64: 16, 1>}, {pipeline_mode = #tpu.pipeline_mode<synchronous>, transform_indices = @transform_3, window_bounds = array<i64: 16, 1>}, {pipeline_mode = #tpu.pipeline_mode<synchronous>, transform_indices = @transform_4, window_bounds = array<i64: 8, 144>}, {pipeline_mode = #tpu.pipeline_mode<synchronous>, transform_indices = @transform_5, window_bounds = array<i64: 8, 1>}, {pipeline_mode = #tpu.pipeline_mode<synchronous>, transform_indices = @transform_6, window_bounds = array<i64: 8, 1>}, {pipeline_mode = #tpu.pipeline_mode<synchronous>, transform_indices = @transform_7, window_bounds = array<i64: 3072, 512>}, {pipeline_mode = #tpu.pipeline_mode<synchronous>, transform_indices = @transform_8, window_bounds = array<i64: 1, 512>}, {pipeline_mode = #tpu.pipeline_mode<synchronous>, transform_indices = @transform_9, window_bounds = array<i64: 1, 512>}, {pipeline_mode = #tpu.pipeline_mode<synchronous>, transform_indices = @transform_10, window_bounds = array<i64: 1, 1>}, {transform_indices = @transform_11, window_bounds = array<i64: 1, 8, 128>}]} {
    %c0 = arith.constant 0 : index
    %c0_0 = arith.constant 0 : index
    %c0_1 = arith.constant 0 : index
    %0 = vector.load %arg1[%c0, %c0_0, %c0_1] : memref<1x16x640xbf16, #tpu.memory_space<vmem>>, vector<1x16x512xbf16>
    %1 = vector.shape_cast %0 : vector<1x16x512xbf16> to vector<16x512xbf16>
    %c0_2 = arith.constant 0 : index
    %c0_3 = arith.constant 0 : index
    %2 = vector.load %arg13[%c0_2, %c0_3] : memref<144x512xbf16, #tpu.memory_space<vmem>>, vector<16x512xbf16>
    tpu.vector_store %arg13[%c0_2, %c0_3], %1 {strides = array<i32>} : memref<144x512xbf16, #tpu.memory_space<vmem>>, vector<16x512xbf16>,
    %c0_4 = arith.constant 0 : index
    %c0_5 = arith.constant 0 : index
    %c1 = arith.constant 1 : index
    %3 = vector.load %arg1[%c0_4, %c0_5, %c1] : memref<1x16x640xbf16, #tpu.memory_space<vmem>>, vector<1x16x512xbf16>
    %4 = vector.shape_cast %3 : vector<1x16x512xbf16> to vector<16x512xbf16>
    %c16 = arith.constant 16 : index
    %c0_6 = arith.constant 0 : index
    %5 = vector.load %arg13[%c16, %c0_6] : memref<144x512xbf16, #tpu.memory_space<vmem>>, vector<16x512xbf16>
    tpu.vector_store %arg13[%c16, %c0_6], %4 {strides = array<i32>} : memref<144x512xbf16, #tpu.memory_space<vmem>>, vector<16x512xbf16>,
    %c0_7 = arith.constant 0 : index
    %c0_8 = arith.constant 0 : index
    %c2 = arith.constant 2 : index
    %6 = vector.load %arg1[%c0_7, %c0_8, %c2] : memref<1x16x640xbf16, #tpu.memory_space<vmem>>, vector<1x16x512xbf16>
    %7 = vector.shape_cast %6 : vector<1x16x512xbf16> to vector<16x512xbf16>
    %c32 = arith.constant 32 : index
    %c0_9 = arith.constant 0 : index
    %8 = vector.load %arg13[%c32, %c0_9] : memref<144x512xbf16, #tpu.memory_space<vmem>>, vector<16x512xbf16>
    tpu.vector_store %arg13[%c32, %c0_9], %7 {strides = array<i32>} : memref<144x512xbf16, #tpu.memory_space<vmem>>, vector<16x512xbf16>,
    %c0_10 = arith.constant 0 : index
    %c0_11 = arith.constant 0 : index
    %c21 = arith.constant 21 : index
    %9 = vector.load %arg1[%c0_10, %c0_11, %c21] : memref<1x16x640xbf16, #tpu.memory_space<vmem>>, vector<1x16x512xbf16>
    %10 = vector.shape_cast %9 : vector<1x16x512xbf16> to vector<16x512xbf16>
    %c48 = arith.constant 48 : index
    %c0_12 = arith.constant 0 : index
    %11 = vector.load %arg13[%c48, %c0_12] : memref<144x512xbf16, #tpu.memory_space<vmem>>, vector<16x512xbf16>
    tpu.vector_store %arg13[%c48, %c0_12], %10 {strides = array<i32>} : memref<144x512xbf16, #tpu.memory_space<vmem>>, vector<16x512xbf16>,
    %c0_13 = arith.constant 0 : index
    %c0_14 = arith.constant 0 : index
    %c22 = arith.constant 22 : index
    %12 = vector.load %arg1[%c0_13, %c0_14, %c22] : memref<1x16x640xbf16, #tpu.memory_space<vmem>>, vector<1x16x512xbf16>
    %13 = vector.shape_cast %12 : vector<1x16x512xbf16> to vector<16x512xbf16>
    %c64 = arith.constant 64 : index
    %c0_15 = arith.constant 0 : index
    %14 = vector.load %arg13[%c64, %c0_15] : memref<144x512xbf16, #tpu.memory_space<vmem>>, vector<16x512xbf16>
    tpu.vector_store %arg13[%c64, %c0_15], %13 {strides = array<i32>} : memref<144x512xbf16, #tpu.memory_space<vmem>>, vector<16x512xbf16>,
    %c0_16 = arith.constant 0 : index
    %c0_17 = arith.constant 0 : index
    %c23 = arith.constant 23 : index
    %15 = vector.load %arg1[%c0_16, %c0_17, %c23] : memref<1x16x640xbf16, #tpu.memory_space<vmem>>, vector<1x16x512xbf16>
    %16 = vector.shape_cast %15 : vector<1x16x512xbf16> to vector<16x512xbf16>
    %c80 = arith.constant 80 : index
    %c0_18 = arith.constant 0 : index
    %17 = vector.load %arg13[%c80, %c0_18] : memref<144x512xbf16, #tpu.memory_space<vmem>>, vector<16x512xbf16>
    tpu.vector_store %arg13[%c80, %c0_18], %16 {strides = array<i32>} : memref<144x512xbf16, #tpu.memory_space<vmem>>, vector<16x512xbf16>,
    %c0_19 = arith.constant 0 : index
    %c0_20 = arith.constant 0 : index
    %c42 = arith.constant 42 : index
    %18 = vector.load %arg1[%c0_19, %c0_20, %c42] : memref<1x16x640xbf16, #tpu.memory_space<vmem>>, vector<1x16x512xbf16>
    %19 = vector.shape_cast %18 : vector<1x16x512xbf16> to vector<16x512xbf16>
    %c96 = arith.constant 96 : index
    %c0_21 = arith.constant 0 : index
    %20 = vector.load %arg13[%c96, %c0_21] : memref<144x512xbf16, #tpu.memory_space<vmem>>, vector<16x512xbf16>
    tpu.vector_store %arg13[%c96, %c0_21], %19 {strides = array<i32>} : memref<144x512xbf16, #tpu.memory_space<vmem>>, vector<16x512xbf16>,
    %c0_22 = arith.constant 0 : index
    %c0_23 = arith.constant 0 : index
    %c43 = arith.constant 43 : index
    %21 = vector.load %arg1[%c0_22, %c0_23, %c43] : memref<1x16x640xbf16, #tpu.memory_space<vmem>>, vector<1x16x512xbf16>
    %22 = vector.shape_cast %21 : vector<1x16x512xbf16> to vector<16x512xbf16>
    %c112 = arith.constant 112 : index
    %c0_24 = arith.constant 0 : index
    %23 = vector.load %arg13[%c112, %c0_24] : memref<144x512xbf16, #tpu.memory_space<vmem>>, vector<16x512xbf16>
    tpu.vector_store %arg13[%c112, %c0_24], %22 {strides = array<i32>} : memref<144x512xbf16, #tpu.memory_space<vmem>>, vector<16x512xbf16>,
    %c0_25 = arith.constant 0 : index
    %c0_26 = arith.constant 0 : index
    %c44 = arith.constant 44 : index
    %24 = vector.load %arg1[%c0_25, %c0_26, %c44] : memref<1x16x640xbf16, #tpu.memory_space<vmem>>, vector<1x16x512xbf16>
    %25 = vector.shape_cast %24 : vector<1x16x512xbf16> to vector<16x512xbf16>
    %c128 = arith.constant 128 : index
    %c0_27 = arith.constant 0 : index
    %26 = vector.load %arg13[%c128, %c0_27] : memref<144x512xbf16, #tpu.memory_space<vmem>>, vector<16x512xbf16>
    tpu.vector_store %arg13[%c128, %c0_27], %25 {strides = array<i32>} : memref<144x512xbf16, #tpu.memory_space<vmem>>, vector<16x512xbf16>,
    %c0_28 = arith.constant 0 : index
    %c0_29 = arith.constant 0 : index
    %27 = vector.load %arg2[%c0_28, %c0_29] : memref<16x144xbf16, #tpu.memory_space<vmem>>, vector<16x144xbf16>
    %c0_30 = arith.constant 0 : index
    %c0_31 = arith.constant 0 : index
    %28 = vector.load %arg13[%c0_30, %c0_31] : memref<144x512xbf16, #tpu.memory_space<vmem>>, vector<144x512xbf16>
    %cst = arith.constant dense<0.000000e+00> : vector<16x512xf32>
    %29 = tpu.matmul %27, %28, %cst {dimension_numbers = #tpu.dot_dimension_numbers<[1], [0], [0], [1], [0, 0, 1, 1], [], []>} : vector<16x144xbf16>, vector<144x512xbf16>, vector<16x512xf32> -> vector<16x512xf32>
    %c0_32 = arith.constant 0 : index
    %c0_33 = arith.constant 0 : index
    %30 = vector.load %arg3[%c0_32, %c0_33] : memref<16x1xf32, #tpu.memory_space<vmem>>, vector<16x1xf32>
    %31 = vector.broadcast %30 : vector<16x1xf32> to vector<16x512xf32>
    %32 = arith.mulf %29, %31 : vector<16x512xf32>
    %c0_34 = arith.constant 0 : index
    %c0_35 = arith.constant 0 : index
    %33 = vector.load %arg4[%c0_34, %c0_35] : memref<16x1xf32, #tpu.memory_space<vmem>>, vector<16x1xf32>
    %34 = vector.broadcast %33 : vector<16x1xf32> to vector<16x512xf32>
    %35 = arith.addf %32, %34 : vector<16x512xf32>
    %cst_36 = arith.constant 0.000000e+00 : f32
    %36 = vector.broadcast %cst_36 : f32 to vector<16x512xf32>
    %37 = arith.maximumf %35, %36 : vector<16x512xf32>
    %38 = arith.truncf %37 : vector<16x512xf32> to vector<16x512xbf16>
    %c0_37 = arith.constant 0 : index
    %c0_38 = arith.constant 0 : index
    %39 = vector.load %arg14[%c0_37, %c0_38] : memref<16x512xbf16, #tpu.memory_space<vmem>>, vector<16x512xbf16>
    tpu.vector_store %arg14[%c0_37, %c0_38], %38 {strides = array<i32>} : memref<16x512xbf16, #tpu.memory_space<vmem>>, vector<16x512xbf16>,
    %c0_39 = arith.constant 0 : index
    %c0_40 = arith.constant 0 : index
    %40 = vector.load %arg14[%c0_39, %c0_40] : memref<16x512xbf16, #tpu.memory_space<vmem>>, vector<16x384xbf16>
    %c0_41 = arith.constant 0 : index
    %c0_42 = arith.constant 0 : index
    %41 = vector.load %arg15[%c0_41, %c0_42] : memref<144x384xbf16, #tpu.memory_space<vmem>>, vector<16x384xbf16>
    tpu.vector_store %arg15[%c0_41, %c0_42], %40 {strides = array<i32>} : memref<144x384xbf16, #tpu.memory_space<vmem>>, vector<16x384xbf16>,
    %c0_43 = arith.constant 0 : index
    %c1_44 = arith.constant 1 : index
    %42 = vector.load %arg14[%c0_43, %c1_44] : memref<16x512xbf16, #tpu.memory_space<vmem>>, vector<16x384xbf16>
    %c16_45 = arith.constant 16 : index
    %c0_46 = arith.constant 0 : index
    %43 = vector.load %arg15[%c16_45, %c0_46] : memref<144x384xbf16, #tpu.memory_space<vmem>>, vector<16x384xbf16>
    tpu.vector_store %arg15[%c16_45, %c0_46], %42 {strides = array<i32>} : memref<144x384xbf16, #tpu.memory_space<vmem>>, vector<16x384xbf16>,
    %c0_47 = arith.constant 0 : index
    %c2_48 = arith.constant 2 : index
    %44 = vector.load %arg14[%c0_47, %c2_48] : memref<16x512xbf16, #tpu.memory_space<vmem>>, vector<16x384xbf16>
    %c32_49 = arith.constant 32 : index
    %c0_50 = arith.constant 0 : index
    %45 = vector.load %arg15[%c32_49, %c0_50] : memref<144x384xbf16, #tpu.memory_space<vmem>>, vector<16x384xbf16>
    tpu.vector_store %arg15[%c32_49, %c0_50], %44 {strides = array<i32>} : memref<144x384xbf16, #tpu.memory_space<vmem>>, vector<16x384xbf16>,
    %c0_51 = arith.constant 0 : index
    %c21_52 = arith.constant 21 : index
    %46 = vector.load %arg14[%c0_51, %c21_52] : memref<16x512xbf16, #tpu.memory_space<vmem>>, vector<16x384xbf16>
    %c48_53 = arith.constant 48 : index
    %c0_54 = arith.constant 0 : index
    %47 = vector.load %arg15[%c48_53, %c0_54] : memref<144x384xbf16, #tpu.memory_space<vmem>>, vector<16x384xbf16>
    tpu.vector_store %arg15[%c48_53, %c0_54], %46 {strides = array<i32>} : memref<144x384xbf16, #tpu.memory_space<vmem>>, vector<16x384xbf16>,
    %c0_55 = arith.constant 0 : index
    %c22_56 = arith.constant 22 : index
    %48 = vector.load %arg14[%c0_55, %c22_56] : memref<16x512xbf16, #tpu.memory_space<vmem>>, vector<16x384xbf16>
    %c64_57 = arith.constant 64 : index
    %c0_58 = arith.constant 0 : index
    %49 = vector.load %arg15[%c64_57, %c0_58] : memref<144x384xbf16, #tpu.memory_space<vmem>>, vector<16x384xbf16>
    tpu.vector_store %arg15[%c64_57, %c0_58], %48 {strides = array<i32>} : memref<144x384xbf16, #tpu.memory_space<vmem>>, vector<16x384xbf16>,
    %c0_59 = arith.constant 0 : index
    %c23_60 = arith.constant 23 : index
    %50 = vector.load %arg14[%c0_59, %c23_60] : memref<16x512xbf16, #tpu.memory_space<vmem>>, vector<16x384xbf16>
    %c80_61 = arith.constant 80 : index
    %c0_62 = arith.constant 0 : index
    %51 = vector.load %arg15[%c80_61, %c0_62] : memref<144x384xbf16, #tpu.memory_space<vmem>>, vector<16x384xbf16>
    tpu.vector_store %arg15[%c80_61, %c0_62], %50 {strides = array<i32>} : memref<144x384xbf16, #tpu.memory_space<vmem>>, vector<16x384xbf16>,
    %c0_63 = arith.constant 0 : index
    %c42_64 = arith.constant 42 : index
    %52 = vector.load %arg14[%c0_63, %c42_64] : memref<16x512xbf16, #tpu.memory_space<vmem>>, vector<16x384xbf16>
    %c96_65 = arith.constant 96 : index
    %c0_66 = arith.constant 0 : index
    %53 = vector.load %arg15[%c96_65, %c0_66] : memref<144x384xbf16, #tpu.memory_space<vmem>>, vector<16x384xbf16>
    tpu.vector_store %arg15[%c96_65, %c0_66], %52 {strides = array<i32>} : memref<144x384xbf16, #tpu.memory_space<vmem>>, vector<16x384xbf16>,
    %c0_67 = arith.constant 0 : index
    %c43_68 = arith.constant 43 : index
    %54 = vector.load %arg14[%c0_67, %c43_68] : memref<16x512xbf16, #tpu.memory_space<vmem>>, vector<16x384xbf16>
    %c112_69 = arith.constant 112 : index
    %c0_70 = arith.constant 0 : index
    %55 = vector.load %arg15[%c112_69, %c0_70] : memref<144x384xbf16, #tpu.memory_space<vmem>>, vector<16x384xbf16>
    tpu.vector_store %arg15[%c112_69, %c0_70], %54 {strides = array<i32>} : memref<144x384xbf16, #tpu.memory_space<vmem>>, vector<16x384xbf16>,
    %c0_71 = arith.constant 0 : index
    %c44_72 = arith.constant 44 : index
    %56 = vector.load %arg14[%c0_71, %c44_72] : memref<16x512xbf16, #tpu.memory_space<vmem>>, vector<16x384xbf16>
    %c128_73 = arith.constant 128 : index
    %c0_74 = arith.constant 0 : index
    %57 = vector.load %arg15[%c128_73, %c0_74] : memref<144x384xbf16, #tpu.memory_space<vmem>>, vector<16x384xbf16>
    tpu.vector_store %arg15[%c128_73, %c0_74], %56 {strides = array<i32>} : memref<144x384xbf16, #tpu.memory_space<vmem>>, vector<16x384xbf16>,
    %c0_75 = arith.constant 0 : index
    %c0_76 = arith.constant 0 : index
    %58 = vector.load %arg5[%c0_75, %c0_76] : memref<8x144xbf16, #tpu.memory_space<vmem>>, vector<8x144xbf16>
    %c0_77 = arith.constant 0 : index
    %c0_78 = arith.constant 0 : index
    %59 = vector.load %arg15[%c0_77, %c0_78] : memref<144x384xbf16, #tpu.memory_space<vmem>>, vector<144x384xbf16>
    %cst_79 = arith.constant dense<0.000000e+00> : vector<8x384xf32>
    %60 = tpu.matmul %58, %59, %cst_79 {dimension_numbers = #tpu.dot_dimension_numbers<[1], [0], [0], [1], [0, 0, 1, 1], [], []>} : vector<8x144xbf16>, vector<144x384xbf16>, vector<8x384xf32> -> vector<8x384xf32>
    %c0_80 = arith.constant 0 : index
    %c0_81 = arith.constant 0 : index
    %61 = vector.load %arg6[%c0_80, %c0_81] : memref<8x1xf32, #tpu.memory_space<vmem>>, vector<8x1xf32>
    %62 = vector.broadcast %61 : vector<8x1xf32> to vector<8x384xf32>
    %63 = arith.mulf %60, %62 : vector<8x384xf32>
    %c0_82 = arith.constant 0 : index
    %c0_83 = arith.constant 0 : index
    %64 = vector.load %arg7[%c0_82, %c0_83] : memref<8x1xf32, #tpu.memory_space<vmem>>, vector<8x1xf32>
    %65 = vector.broadcast %64 : vector<8x1xf32> to vector<8x384xf32>
    %66 = arith.addf %63, %65 : vector<8x384xf32>
    %cst_84 = arith.constant 0.000000e+00 : f32
    %67 = vector.broadcast %cst_84 : f32 to vector<8x384xf32>
    %68 = arith.maximumf %66, %67 : vector<8x384xf32>
    %c0_85 = arith.constant 0 : index
    %c0_86 = arith.constant 0 : index
    %69 = vector.load %arg16[%c0_85, %c0_86] : memref<8x384xf32, #tpu.memory_space<vmem>>, vector<8x384xf32>
    tpu.vector_store %arg16[%c0_85, %c0_86], %68 {strides = array<i32>} : memref<8x384xf32, #tpu.memory_space<vmem>>, vector<8x384xf32>,
    %c0_87 = arith.constant 0 : index
    %c0_88 = arith.constant 0 : index
    %70 = vector.load %arg16[%c0_87, %c0_88] : memref<8x384xf32, #tpu.memory_space<vmem>>, vector<1x384xf32>
    %71 = arith.truncf %70 : vector<1x384xf32> to vector<1x384xbf16>
    %c0_89 = arith.constant 0 : index
    %c0_90 = arith.constant 0 : index
    %72 = vector.load %arg17[%c0_89, %c0_90] : memref<1x3072xbf16, #tpu.memory_space<vmem>>, vector<1x384xbf16>
    tpu.vector_store %arg17[%c0_89, %c0_90], %71 {strides = array<i32>} : memref<1x3072xbf16, #tpu.memory_space<vmem>>, vector<1x384xbf16>,
    %c1_91 = arith.constant 1 : index
    %c0_92 = arith.constant 0 : index
    %73 = vector.load %arg16[%c1_91, %c0_92] : memref<8x384xf32, #tpu.memory_space<vmem>>, vector<1x384xf32>
    %74 = arith.truncf %73 : vector<1x384xf32> to vector<1x384xbf16>
    %c0_93 = arith.constant 0 : index
    %c384 = arith.constant 384 : index
    %75 = vector.load %arg17[%c0_93, %c384] : memref<1x3072xbf16, #tpu.memory_space<vmem>>, vector<1x384xbf16>
    tpu.vector_store %arg17[%c0_93, %c384], %74 {strides = array<i32>} : memref<1x3072xbf16, #tpu.memory_space<vmem>>, vector<1x384xbf16>,
    %c2_94 = arith.constant 2 : index
    %c0_95 = arith.constant 0 : index
    %76 = vector.load %arg16[%c2_94, %c0_95] : memref<8x384xf32, #tpu.memory_space<vmem>>, vector<1x384xf32>
    %77 = arith.truncf %76 : vector<1x384xf32> to vector<1x384xbf16>
    %c0_96 = arith.constant 0 : index
    %c768 = arith.constant 768 : index
    %78 = vector.load %arg17[%c0_96, %c768] : memref<1x3072xbf16, #tpu.memory_space<vmem>>, vector<1x384xbf16>
    tpu.vector_store %arg17[%c0_96, %c768], %77 {strides = array<i32>} : memref<1x3072xbf16, #tpu.memory_space<vmem>>, vector<1x384xbf16>,
    %c3 = arith.constant 3 : index
    %c0_97 = arith.constant 0 : index
    %79 = vector.load %arg16[%c3, %c0_97] : memref<8x384xf32, #tpu.memory_space<vmem>>, vector<1x384xf32>
    %80 = arith.truncf %79 : vector<1x384xf32> to vector<1x384xbf16>
    %c0_98 = arith.constant 0 : index
    %c1152 = arith.constant 1152 : index
    %81 = vector.load %arg17[%c0_98, %c1152] : memref<1x3072xbf16, #tpu.memory_space<vmem>>, vector<1x384xbf16>
    tpu.vector_store %arg17[%c0_98, %c1152], %80 {strides = array<i32>} : memref<1x3072xbf16, #tpu.memory_space<vmem>>, vector<1x384xbf16>,
    %c4 = arith.constant 4 : index
    %c0_99 = arith.constant 0 : index
    %82 = vector.load %arg16[%c4, %c0_99] : memref<8x384xf32, #tpu.memory_space<vmem>>, vector<1x384xf32>
    %83 = arith.truncf %82 : vector<1x384xf32> to vector<1x384xbf16>
    %c0_100 = arith.constant 0 : index
    %c1536 = arith.constant 1536 : index
    %84 = vector.load %arg17[%c0_100, %c1536] : memref<1x3072xbf16, #tpu.memory_space<vmem>>, vector<1x384xbf16>
    tpu.vector_store %arg17[%c0_100, %c1536], %83 {strides = array<i32>} : memref<1x3072xbf16, #tpu.memory_space<vmem>>, vector<1x384xbf16>,
    %c5 = arith.constant 5 : index
    %c0_101 = arith.constant 0 : index
    %85 = vector.load %arg16[%c5, %c0_101] : memref<8x384xf32, #tpu.memory_space<vmem>>, vector<1x384xf32>
    %86 = arith.truncf %85 : vector<1x384xf32> to vector<1x384xbf16>
    %c0_102 = arith.constant 0 : index
    %c1920 = arith.constant 1920 : index
    %87 = vector.load %arg17[%c0_102, %c1920] : memref<1x3072xbf16, #tpu.memory_space<vmem>>, vector<1x384xbf16>
    tpu.vector_store %arg17[%c0_102, %c1920], %86 {strides = array<i32>} : memref<1x3072xbf16, #tpu.memory_space<vmem>>, vector<1x384xbf16>,
    %c6 = arith.constant 6 : index
    %c0_103 = arith.constant 0 : index
    %88 = vector.load %arg16[%c6, %c0_103] : memref<8x384xf32, #tpu.memory_space<vmem>>, vector<1x384xf32>
    %89 = arith.truncf %88 : vector<1x384xf32> to vector<1x384xbf16>
    %c0_104 = arith.constant 0 : index
    %c2304 = arith.constant 2304 : index
    %90 = vector.load %arg17[%c0_104, %c2304] : memref<1x3072xbf16, #tpu.memory_space<vmem>>, vector<1x384xbf16>
    tpu.vector_store %arg17[%c0_104, %c2304], %89 {strides = array<i32>} : memref<1x3072xbf16, #tpu.memory_space<vmem>>, vector<1x384xbf16>,
    %c7 = arith.constant 7 : index
    %c0_105 = arith.constant 0 : index
    %91 = vector.load %arg16[%c7, %c0_105] : memref<8x384xf32, #tpu.memory_space<vmem>>, vector<1x384xf32>
    %92 = arith.truncf %91 : vector<1x384xf32> to vector<1x384xbf16>
    %c0_106 = arith.constant 0 : index
    %c2688 = arith.constant 2688 : index
    %93 = vector.load %arg17[%c0_106, %c2688] : memref<1x3072xbf16, #tpu.memory_space<vmem>>, vector<1x384xbf16>
    tpu.vector_store %arg17[%c0_106, %c2688], %92 {strides = array<i32>} : memref<1x3072xbf16, #tpu.memory_space<vmem>>, vector<1x384xbf16>,
    %c0_107 = arith.constant 0 : index
    %c0_108 = arith.constant 0 : index
    %94 = vector.load %arg17[%c0_107, %c0_108] : memref<1x3072xbf16, #tpu.memory_space<vmem>>, vector<1x3072xbf16>
    %c0_109 = arith.constant 0 : index
    %c0_110 = arith.constant 0 : index
    %95 = vector.load %arg8[%c0_109, %c0_110] : memref<3072x512xbf16, #tpu.memory_space<vmem>>, vector<3072x512xbf16>
    %cst_111 = arith.constant dense<0.000000e+00> : vector<1x512xf32>
    %96 = tpu.matmul %94, %95, %cst_111 {dimension_numbers = #tpu.dot_dimension_numbers<[1], [0], [0], [1], [0, 0, 1, 1], [], []>} : vector<1x3072xbf16>, vector<3072x512xbf16>, vector<1x512xf32> -> vector<1x512xf32>
    %c0_112 = arith.constant 0 : index
    %c0_113 = arith.constant 0 : index
    %97 = vector.load %arg9[%c0_112, %c0_113] : memref<1x512xf32, #tpu.memory_space<vmem>>, vector<1x512xf32>
    %98 = arith.addf %96, %97 : vector<1x512xf32>
    %cst_114 = arith.constant 0.000000e+00 : f32
    %99 = vector.broadcast %cst_114 : f32 to vector<1x512xf32>
    %100 = arith.maximumf %98, %99 : vector<1x512xf32>
    %c0_115 = arith.constant 0 : index
    %c0_116 = arith.constant 0 : index
    %101 = vector.load %arg10[%c0_115, %c0_116] : memref<1x512xf32, #tpu.memory_space<vmem>>, vector<1x512xf32>
    %102 = arith.mulf %100, %101 : vector<1x512xf32>
    %cst_117 = arith.constant dense<0.000000e+00> : vector<1xf32>
    %103 = vector.multi_reduction <add>, %102, %cst_117 [1] : vector<1x512xf32> to vector<1xf32>
    %104 = vector.shape_cast %103 : vector<1xf32> to vector<1x1xf32>
    %c0_118 = arith.constant 0 : index
    %c0_119 = arith.constant 0 : index
    %105 = vector.load %arg11[%c0_118, %c0_119] : memref<1x1xf32, #tpu.memory_space<vmem>>, vector<1x1xf32>
    %106 = arith.addf %104, %105 : vector<1x1xf32>
    %107 = vector.shape_cast %106 : vector<1x1xf32> to vector<1x1x1xf32>
    %108 = vector.shape_cast %107 : vector<1x1x1xf32> to vector<1x1x1xf32>
    %109 = vector.broadcast %108 : vector<1x1x1xf32> to vector<1x8x128xf32>
    %c0_120 = arith.constant 0 : index
    %c0_121 = arith.constant 0 : index
    %c0_122 = arith.constant 0 : index
    %110 = vector.load %arg12[%c0_120, %c0_121, %c0_122] : memref<1x8x128xf32, #tpu.memory_space<vmem>>, vector<1x8x128xf32>
    tpu.vector_store %arg12[%c0_120, %c0_121, %c0_122], %109 {strides = array<i32>} : memref<1x8x128xf32, #tpu.memory_space<vmem>>, vector<1x8x128xf32>,
    return
  }
  func.func @transform_0(%arg0: i32) -> (i32, i32, i32) {
    %c0_i32 = arith.constant 0 : i32
    %c0_i32_0 = arith.constant 0 : i32
    %c0_i32_1 = arith.constant 0 : i32
    return %arg0, %c0_i32, %c0_i32_0 : i32, i32, i32
  }
  func.func @transform_1(%arg0: i32) -> (i32, i32) {
    %c0_i32 = arith.constant 0 : i32
    %c0_i32_0 = arith.constant 0 : i32
    %c0_i32_1 = arith.constant 0 : i32
    return %c0_i32, %c0_i32_0 : i32, i32
  }
  func.func @transform_2(%arg0: i32) -> (i32, i32) {
    %c0_i32 = arith.constant 0 : i32
    %c0_i32_0 = arith.constant 0 : i32
    %c0_i32_1 = arith.constant 0 : i32
    return %c0_i32, %c0_i32_0 : i32, i32
  }
  func.func @transform_3(%arg0: i32) -> (i32, i32) {
    %c0_i32 = arith.constant 0 : i32
    %c0_i32_0 = arith.constant 0 : i32
    %c0_i32_1 = arith.constant 0 : i32
    return %c0_i32, %c0_i32_0 : i32, i32
  }
  func.func @transform_4(%arg0: i32) -> (i32, i32) {
    %c0_i32 = arith.constant 0 : i32
    %c0_i32_0 = arith.constant 0 : i32
    %c0_i32_1 = arith.constant 0 : i32
    return %c0_i32, %c0_i32_0 : i32, i32
  }
  func.func @transform_5(%arg0: i32) -> (i32, i32) {
    %c0_i32 = arith.constant 0 : i32
    %c0_i32_0 = arith.constant 0 : i32
    %c0_i32_1 = arith.constant 0 : i32
    return %c0_i32, %c0_i32_0 : i32, i32
  }
  func.func @transform_6(%arg0: i32) -> (i32, i32) {
    %c0_i32 = arith.constant 0 : i32
    %c0_i32_0 = arith.constant 0 : i32
    %c0_i32_1 = arith.constant 0 : i32
    return %c0_i32, %c0_i32_0 : i32, i32
  }
  func.func @transform_7(%arg0: i32) -> (i32, i32) {
    %c0_i32 = arith.constant 0 : i32
    %c0_i32_0 = arith.constant 0 : i32
    %c0_i32_1 = arith.constant 0 : i32
    return %c0_i32, %c0_i32_0 : i32, i32
  }
  func.func @transform_8(%arg0: i32) -> (i32, i32) {
    %c0_i32 = arith.constant 0 : i32
    %c0_i32_0 = arith.constant 0 : i32
    %c0_i32_1 = arith.constant 0 : i32
    return %c0_i32, %c0_i32_0 : i32, i32
  }
  func.func @transform_9(%arg0: i32) -> (i32, i32) {
    %c0_i32 = arith.constant 0 : i32
    %c0_i32_0 = arith.constant 0 : i32
    %c0_i32_1 = arith.constant 0 : i32
    return %c0_i32, %c0_i32_0 : i32, i32
  }
  func.func @transform_10(%arg0: i32) -> (i32, i32) {
    %c0_i32 = arith.constant 0 : i32
    %c0_i32_0 = arith.constant 0 : i32
    %c0_i32_1 = arith.constant 0 : i32
    return %c0_i32, %c0_i32_0 : i32, i32
  }
  func.func @transform_11(%arg0: i32) -> (i32, i32, i32) {
    %c0_i32 = arith.constant 0 : i32
    %c0_i32_0 = arith.constant 0 : i32
    %c0_i32_1 = arith.constant 0 : i32
    return %arg0, %c0_i32, %c0_i32_0 : i32, i32, i32
  }
}

</mosaic_0001>

<llo_original>
// kernel: simple_cnn_forward.1
$region0: #{simple_cnn_forward.1}
  #allocation0 [shape = 'u32[]', space=smem, size = 0x4, offset = 0x4, fixed_abs, tag = 'smem constant byte address 0x4 - core index']
  #allocation1 [shape = 'u32[144,128]{1,0:T(1,128)}', space=vmem, size = 0x12000, scoped, tag = 'internal scratch']
  #allocation2 [shape = 'bf16[144,512]{1,0:T(16,128)(2,1)}', space=vmem, size = 0x24000, scoped, tag = 'scratch operand']
  #allocation3 [shape = 'bf16[16,512]{1,0:T(16,128)(2,1)}', space=vmem, size = 0x4000, scoped, tag = 'scratch operand']
  #allocation4 [shape = 'bf16[144,384]{1,0:T(16,128)(2,1)}', space=vmem, size = 0x1b000, scoped, tag = 'scratch operand']
  #allocation5 [shape = 'f32[8,384]{1,0:T(8,128)}', space=vmem, size = 0x3000, scoped, tag = 'scratch operand']
  #allocation6 [shape = 'bf16[1,3072]{1,0:T(2,128)(2,1)}', space=vmem, size = 0x3000, scoped, tag = 'scratch operand']
  #allocation7 [shape = 'f32[1,1]{1,0:T(1,128)S(1)}', space=vmem, size = 0x200, scoped, tag = 'scoped memory for simple_cnn_forward.1']
  %s0 = inlined_call_operand.vmem [shape: bf16[2,16,640], index: 0, kind: input, shape index: {}]
  %s1 = inlined_call_operand.hbm [shape: bf16[16,144], index: 1, kind: input, shape index: {}]
  %s2 = inlined_call_operand.vmem [shape: f32[16,1], index: 2, kind: input, shape index: {}]
  %s3 = inlined_call_operand.vmem [shape: f32[16,1], index: 3, kind: input, shape index: {}]
  %s4 = inlined_call_operand.hbm [shape: bf16[8,144], index: 4, kind: input, shape index: {}]
  %s5 = inlined_call_operand.vmem [shape: f32[8,1], index: 5, kind: input, shape index: {}]
  %s6 = inlined_call_operand.vmem [shape: f32[8,1], index: 6, kind: input, shape index: {}]
  %s7 = inlined_call_operand.hbm [shape: bf16[3072,512], index: 7, kind: input, shape index: {}]
  %s8 = inlined_call_operand.hbm [shape: f32[1,512], index: 8, kind: input, shape index: {}]
  %s9 = inlined_call_operand.hbm [shape: f32[1,512], index: 9, kind: input, shape index: {}]
  %s10 = inlined_call_operand.<no memory space> [shape: f32[1,1], index: 10, kind: input, shape index: {}]
  %s11 = inlined_call_operand.vmem [shape: f32[2,8,128], index: 11, kind: output, shape index: {}]
  %s12 = sld [smem:[#allocation0]]
  $region97: #{simple_cnn_forward.1} parent=0
    _
  %s14 = ssub.s32 1, %s12
  %s15 = scalar_select 0, %s14, %s12
  %v16 = vstv %s10
  %17 = vst [vmem:[#allocation7] sm:$0x1] %v16
  $region1: #{simple_cnn_forward.1} parent=0
    #allocation8 [shape = 'u8[8192]{0}', space=vmem, size = 0x2000, scoped, tag = 'input window, operand 1, single buffered']
    #allocation9 [shape = 's32[2]{0}', space=sflag, size = 0x8, scoped, tag = 'scoped memory for simple_cnn_forward.1']
    #allocation10 [shape = 'u8[4096]{0}', space=vmem, size = 0x1000, scoped, tag = 'input window, operand 4, single buffered']
    #allocation11 [shape = 's32[1]{0}', space=sflag, size = 0x4, scoped, tag = 'scoped memory for simple_cnn_forward.1']
    #allocation12 [shape = 'u8[3145728]{0}', space=vmem, size = 0x300000, scoped, tag = 'input window, operand 7, single buffered']
    #allocation13 [shape = 'u8[2048]{0}', space=vmem, size = 0x800, scoped, tag = 'input window, operand 8, single buffered']
    #allocation14 [shape = 's32[1]{0}', space=sflag, size = 0x4, scoped, tag = 'scoped memory for simple_cnn_forward.1']
    #allocation15 [shape = 'u8[2048]{0}', space=vmem, size = 0x800, scoped, tag = 'input window, operand 9, single buffered']
    %18 = vsyncpa [#allocation9], 0
    %19 = vsyncpa [#allocation11], 0
    %20 = vsyncpa [#allocation14], 0
    loop: start=0, step=1, limit=4
    $region2: #{simple_cnn_forward.1} parent=1 // loop_pre_header
      _
    $region3: #{simple_cnn_forward.1} parent=1 // loop_header
      %s22 = sphi 0, %s26
      %p23 = scmp.ge.s32.totalorder %s22, 4
      %s32 = sphi 0, %s34
      %s35 = sphi 0, %s32
      %s36 = sphi 0, %s35
      %s52 = sphi 0, %s36
      %s56 = sphi 0, %s56
      %s58 = sphi 0, %s56
      %s59 = sphi 0, %s58
      %s73 = sphi 0, %s59
      %s77 = sphi 0, %s77
      %s79 = sphi 0, %s77
      %s80 = sphi 0, %s79
      %s94 = sphi 0, %s80
      %s98 = sphi 0, %s98
      %s100 = sphi 0, %s98
      %s101 = sphi 0, %s100
      %s115 = sphi 0, %s101
      %s119 = sphi 0, %s119
      %s121 = sphi 0, %s119
      %s122 = sphi 0, %s121
      %s136 = sphi 0, %s122
      %s140 = sphi 0, %s140
      %s142 = sphi 0, %s140
      %s143 = sphi 0, %s142
      %s157 = sphi 0, %s143
      %s161 = sphi 0, %s161
      %s163 = sphi 0, %s161
      %s164 = sphi 0, %s163
      %s178 = sphi 0, %s164
      %s182 = sphi 0, %s182
      %s184 = sphi 0, %s182
      %s185 = sphi 0, %s184
      %s199 = sphi 0, %s185
      %s203 = sphi 0, %s203
      %s205 = sphi 0, %s203
      %s206 = sphi 0, %s205
      %s220 = sphi 0, %s206
      %s224 = sphi 0, %s224
      %s226 = sphi 0, %s224
      %s227 = sphi 0, %s226
      %s241 = sphi 0, %s227
      %s245 = sphi 0, %s245
      %s247 = sphi 0, %s245
      %s248 = sphi 0, %s247
      %s262 = sphi 0, %s248
      %s268 = sphi 0, %s270
      %s271 = sphi 0, %s268
      %s272 = sphi 0, %s271
      %s288 = sphi 0, %s272
    $region4: #{simple_cnn_forward.1} parent=1 // loop_header_branch
      %25 = sbr.rel (%p23) target = $region8
    $region5: #{simple_cnn_forward.1} parent=1 // loop_body
      %s27 = ssub.s32 %s22, 1
      %s28 = ssub.s32 %s22, 2
      %s29 = sadd.s32 %s22, 1
      %s30 = ssub.s32 %s22, %s29
      %p31 = scmp.eq.s32.totalorder %s30, 0
      %s33 = sadd.s32 %s32, 1
      %s34 = scalar_select %p31, %s32, %s33
      %p37 = pneg %p31
      %p38 = scmp.eq.s32.totalorder %s22, 1
      %p39 = por %p37, %p38
      %p40 = scmp.ne.s32.totalorder %s32, %s35
      %p41 = scmp.eq.s32.totalorder %s22, 0
      %p42 = por %p40, %p41
      %p43 = scmp.ne.s32.totalorder %s32, %s35
      %p44 = scmp.eq.s32.totalorder %s27, 1
      %p45 = por %p43, %p44
      %p46 = scmp.ne.s32.totalorder %s35, %s36
      %p47 = scmp.eq.s32.totalorder %s27, 0
      %p48 = por %p46, %p47
      %p49 = scmp.ne.s32.totalorder %s35, %s36
      %p50 = scmp.eq.s32.totalorder %s28, 1
      %p51 = por %p49, %p50
      %p53 = scmp.ne.s32.totalorder %s36, %s52
      %p54 = scmp.eq.s32.totalorder %s28, 0
      %p55 = por %p53, %p54
      %s57 = sadd.s32 %s56, 1
      %p60 = scmp.eq.s32.totalorder %s22, 1
      %p61 = scmp.ne.s32.totalorder %s56, %s58
      %p62 = scmp.eq.s32.totalorder %s22, 0
      %p63 = por %p61, %p62
      %p64 = scmp.ne.s32.totalorder %s56, %s58
      %p65 = scmp.eq.s32.totalorder %s27, 1
      %p66 = por %p64, %p65
      %p67 = scmp.ne.s32.totalorder %s58, %s59
      %p68 = scmp.eq.s32.totalorder %s27, 0
      %p69 = por %p67, %p68
      %p70 = scmp.ne.s32.totalorder %s58, %s59
      %p71 = scmp.eq.s32.totalorder %s28, 1
      %p72 = por %p70, %p71
      %p74 = scmp.ne.s32.totalorder %s59, %s73
      %p75 = scmp.eq.s32.totalorder %s28, 0
      %p76 = por %p74, %p75
      %s78 = sadd.s32 %s77, 1
      %p81 = scmp.eq.s32.totalorder %s22, 1
      %p82 = scmp.ne.s32.totalorder %s77, %s79
      %p83 = scmp.eq.s32.totalorder %s22, 0
      %p84 = por %p82, %p83
      %p85 = scmp.ne.s32.totalorder %s77, %s79
      %p86 = scmp.eq.s32.totalorder %s27, 1
      %p87 = por %p85, %p86
      %p88 = scmp.ne.s32.totalorder %s79, %s80
      %p89 = scmp.eq.s32.totalorder %s27, 0
      %p90 = por %p88, %p89
      %p91 = scmp.ne.s32.totalorder %s79, %s80
      %p92 = scmp.eq.s32.totalorder %s28, 1
      %p93 = por %p91, %p92
      %p95 = scmp.ne.s32.totalorder %s80, %s94
      %p96 = scmp.eq.s32.totalorder %s28, 0
      %p97 = por %p95, %p96
      %s99 = sadd.s32 %s98, 1
      %p102 = scmp.eq.s32.totalorder %s22, 1
      %p103 = scmp.ne.s32.totalorder %s98, %s100
      %p104 = scmp.eq.s32.totalorder %s22, 0
      %p105 = por %p103, %p104
      %p106 = scmp.ne.s32.totalorder %s98, %s100
      %p107 = scmp.eq.s32.totalorder %s27, 1
      %p108 = por %p106, %p107
      %p109 = scmp.ne.s32.totalorder %s100, %s101
      %p110 = scmp.eq.s32.totalorder %s27, 0
      %p111 = por %p109, %p110
      %p112 = scmp.ne.s32.totalorder %s100, %s101
      %p113 = scmp.eq.s32.totalorder %s28, 1
      %p114 = por %p112, %p113
      %p116 = scmp.ne.s32.totalorder %s101, %s115
      %p117 = scmp.eq.s32.totalorder %s28, 0
      %p118 = por %p116, %p117
      %s120 = sadd.s32 %s119, 1
      %p123 = scmp.eq.s32.totalorder %s22, 1
      %p124 = scmp.ne.s32.totalorder %s119, %s121
      %p125 = scmp.eq.s32.totalorder %s22, 0
      %p126 = por %p124, %p125
      %p127 = scmp.ne.s32.totalorder %s119, %s121
      %p128 = scmp.eq.s32.totalorder %s27, 1
      %p129 = por %p127, %p128
      %p130 = scmp.ne.s32.totalorder %s121, %s122
      %p131 = scmp.eq.s32.totalorder %s27, 0
      %p132 = por %p130, %p131
      %p133 = scmp.ne.s32.totalorder %s121, %s122
      %p134 = scmp.eq.s32.totalorder %s28, 1
      %p135 = por %p133, %p134
      %p137 = scmp.ne.s32.totalorder %s122, %s136
      %p138 = scmp.eq.s32.totalorder %s28, 0
      %p139 = por %p137, %p138
      %s141 = sadd.s32 %s140, 1
      %p144 = scmp.eq.s32.totalorder %s22, 1
      %p145 = scmp.ne.s32.totalorder %s140, %s142
      %p146 = scmp.eq.s32.totalorder %s22, 0
      %p147 = por %p145, %p146
      %p148 = scmp.ne.s32.totalorder %s140, %s142
      %p149 = scmp.eq.s32.totalorder %s27, 1
      %p150 = por %p148, %p149
      %p151 = scmp.ne.s32.totalorder %s142, %s143
      %p152 = scmp.eq.s32.totalorder %s27, 0
      %p153 = por %p151, %p152
      %p154 = scmp.ne.s32.totalorder %s142, %s143
      %p155 = scmp.eq.s32.totalorder %s28, 1
      %p156 = por %p154, %p155
      %p158 = scmp.ne.s32.totalorder %s143, %s157
      %p159 = scmp.eq.s32.totalorder %s28, 0
      %p160 = por %p158, %p159
      %s162 = sadd.s32 %s161, 1
      %p165 = scmp.eq.s32.totalorder %s22, 1
      %p166 = scmp.ne.s32.totalorder %s161, %s163
      %p167 = scmp.eq.s32.totalorder %s22, 0
      %p168 = por %p166, %p167
      %p169 = scmp.ne.s32.totalorder %s161, %s163
      %p170 = scmp.eq.s32.totalorder %s27, 1
      %p171 = por %p169, %p170
      %p172 = scmp.ne.s32.totalorder %s163, %s164
      %p173 = scmp.eq.s32.totalorder %s27, 0
      %p174 = por %p172, %p173
      %p175 = scmp.ne.s32.totalorder %s163, %s164
      %p176 = scmp.eq.s32.totalorder %s28, 1
      %p177 = por %p175, %p176
      %p179 = scmp.ne.s32.totalorder %s164, %s178
      %p180 = scmp.eq.s32.totalorder %s28, 0
      %p181 = por %p179, %p180
      %s183 = sadd.s32 %s182, 1
      %p186 = scmp.eq.s32.totalorder %s22, 1
      %p187 = scmp.ne.s32.totalorder %s182, %s184
      %p188 = scmp.eq.s32.totalorder %s22, 0
      %p189 = por %p187, %p188
      %p190 = scmp.ne.s32.totalorder %s182, %s184
      %p191 = scmp.eq.s32.totalorder %s27, 1
      %p192 = por %p190, %p191
      %p193 = scmp.ne.s32.totalorder %s184, %s185
      %p194 = scmp.eq.s32.totalorder %s27, 0
      %p195 = por %p193, %p194
      %p196 = scmp.ne.s32.totalorder %s184, %s185
      %p197 = scmp.eq.s32.totalorder %s28, 1
      %p198 = por %p196, %p197
      %p200 = scmp.ne.s32.totalorder %s185, %s199
      %p201 = scmp.eq.s32.totalorder %s28, 0
      %p202 = por %p200, %p201
      %s204 = sadd.s32 %s203, 1
      %p207 = scmp.eq.s32.totalorder %s22, 1
      %p208 = scmp.ne.s32.totalorder %s203, %s205
      %p209 = scmp.eq.s32.totalorder %s22, 0
      %p210 = por %p208, %p209
      %p211 = scmp.ne.s32.totalorder %s203, %s205
      %p212 = scmp.eq.s32.totalorder %s27, 1
      %p213 = por %p211, %p212
      %p214 = scmp.ne.s32.totalorder %s205, %s206
      %p215 = scmp.eq.s32.totalorder %s27, 0
      %p216 = por %p214, %p215
      %p217 = scmp.ne.s32.totalorder %s205, %s206
      %p218 = scmp.eq.s32.totalorder %s28, 1
      %p219 = por %p217, %p218
      %p221 = scmp.ne.s32.totalorder %s206, %s220
      %p222 = scmp.eq.s32.totalorder %s28, 0
      %p223 = por %p221, %p222
      %s225 = sadd.s32 %s224, 1
      %p228 = scmp.eq.s32.totalorder %s22, 1
      %p229 = scmp.ne.s32.totalorder %s224, %s226
      %p230 = scmp.eq.s32.totalorder %s22, 0
      %p231 = por %p229, %p230
      %p232 = scmp.ne.s32.totalorder %s224, %s226
      %p233 = scmp.eq.s32.totalorder %s27, 1
      %p234 = por %p232, %p233
      %p235 = scmp.ne.s32.totalorder %s226, %s227
      %p236 = scmp.eq.s32.totalorder %s27, 0
      %p237 = por %p235, %p236
      %p238 = scmp.ne.s32.totalorder %s226, %s227
      %p239 = scmp.eq.s32.totalorder %s28, 1
      %p240 = por %p238, %p239
      %p242 = scmp.ne.s32.totalorder %s227, %s241
      %p243 = scmp.eq.s32.totalorder %s28, 0
      %p244 = por %p242, %p243
      %s246 = sadd.s32 %s245, 1
      %p249 = scmp.eq.s32.totalorder %s22, 1
      %p250 = scmp.ne.s32.totalorder %s245, %s247
      %p251 = scmp.eq.s32.totalorder %s22, 0
      %p252 = por %p250, %p251
      %p253 = scmp.ne.s32.totalorder %s245, %s247
      %p254 = scmp.eq.s32.totalorder %s27, 1
      %p255 = por %p253, %p254
      %p256 = scmp.ne.s32.totalorder %s247, %s248
      %p257 = scmp.eq.s32.totalorder %s27, 0
      %p258 = por %p256, %p257
      %p259 = scmp.ne.s32.totalorder %s247, %s248
      %p260 = scmp.eq.s32.totalorder %s28, 1
      %p261 = por %p259, %p260
      %p263 = scmp.ne.s32.totalorder %s248, %s262
      %p264 = scmp.eq.s32.totalorder %s28, 0
      %p265 = por %p263, %p264
      %s266 = ssub.s32 %s22, %s29
      %p267 = scmp.eq.s32.totalorder %s266, 0
      %s269 = sadd.s32 %s268, 1
      %s270 = scalar_select %p267, %s268, %s269
      %p273 = pneg %p267
      %p274 = scmp.eq.s32.totalorder %s22, 1
      %p275 = por %p273, %p274
      %p276 = scmp.ne.s32.totalorder %s268, %s271
      %p277 = scmp.eq.s32.totalorder %s22, 0
      %p278 = por %p276, %p277
      %p279 = scmp.ne.s32.totalorder %s268, %s271
      %p280 = scmp.eq.s32.totalorder %s27, 1
      %p281 = por %p279, %p280
      %p282 = scmp.ne.s32.totalorder %s271, %s272
      %p283 = scmp.eq.s32.totalorder %s27, 0
      %p284 = por %p282, %p283
      %p285 = scmp.ne.s32.totalorder %s271, %s272
      %p286 = scmp.eq.s32.totalorder %s28, 1
      %p287 = por %p285, %p286
      %p289 = scmp.ne.s32.totalorder %s272, %s288
      %p290 = scmp.eq.s32.totalorder %s28, 0
      %p291 = por %p289, %p290
      %p292 = scmp.le.s32.totalorder 1, %s22
      %p293 = scmp.lt.s32.totalorder %s22, 3
      %p294 = pnand %p292, %p293
      %p295 = pneg %p294
      // Predicated region
      $region9: #{simple_cnn_forward.1} parent=5 // pred_check
        _
      $region10: #{simple_cnn_forward.1} parent=5 // pred_check_branch
        %297 = sbr.rel (%p294) target = $region12
      $region11: #{simple_cnn_forward.1} parent=5 // pred_region
        %s298 = ssub.s32 %s22, 1
        // Predicated region
        $region13: #{simple_cnn_forward.1} parent=11 // pred_check
          %p299 = pneg %p69
        $region14: #{simple_cnn_forward.1} parent=11 // pred_check_branch
          %301 = sbr.rel (%p299) target = $region16
        $region15: #{simple_cnn_forward.1} parent=11 // pred_region
          %s303 = ssub.s32 256, 256
          %304 = vsyncadd [#allocation9], %s303
          %s305 = sshll.u32 [#allocation8], 4
          %s306 = int_to_ptr.vmem [resolvable:$true] %s305
          %311 = dma.hbm_to_vmem [thread:$0]  %s1, 256, %s306, [#allocation9], 128, 128, 8
        $region16: #{simple_cnn_forward.1} parent=11 // pred_fallthru
          _
        // Predicated region
        $region17: #{simple_cnn_forward.1} parent=11 // pred_check
          %p312 = pneg %p90
        $region18: #{simple_cnn_forward.1} parent=11 // pred_check_branch
          %314 = sbr.rel (%p312) target = $region20
        $region19: #{simple_cnn_forward.1} parent=11 // pred_region
          _
        $region20: #{simple_cnn_forward.1} parent=11 // pred_fallthru
          _
        // Predicated region
        $region21: #{simple_cnn_forward.1} parent=11 // pred_check
          %p315 = pneg %p111
        $region22: #{simple_cnn_forward.1} parent=11 // pred_check_branch
          %317 = sbr.rel (%p315) target = $region24
        $region23: #{simple_cnn_forward.1} parent=11 // pred_region
          _
        $region24: #{simple_cnn_forward.1} parent=11 // pred_fallthru
          _
        // Predicated region
        $region25: #{simple_cnn_forward.1} parent=11 // pred_check
          %p318 = pneg %p132
        $region26: #{simple_cnn_forward.1} parent=11 // pred_check_branch
          %320 = sbr.rel (%p318) target = $region28
        $region27: #{simple_cnn_forward.1} parent=11 // pred_region
          %s322 = ssub.s32 128, 128
          %323 = vsyncadd [#allocation11], %s322
          %s325 = sshll.u32 [#allocation10], 4
          %s326 = int_to_ptr.vmem [resolvable:$true] %s325
          %328 = dma.hbm_to_vmem [thread:$0]  %s4, 128, %s326, [#allocation11]
        $region28: #{simple_cnn_forward.1} parent=11 // pred_fallthru
          _
        // Predicated region
        $region29: #{simple_cnn_forward.1} parent=11 // pred_check
          %p329 = pneg %p153
        $region30: #{simple_cnn_forward.1} parent=11 // pred_check_branch
          %331 = sbr.rel (%p329) target = $region32
        $region31: #{simple_cnn_forward.1} parent=11 // pred_region
          _
        $region32: #{simple_cnn_forward.1} parent=11 // pred_fallthru
          _
        // Predicated region
        $region33: #{simple_cnn_forward.1} parent=11 // pred_check
          %p332 = pneg %p174
        $region34: #{simple_cnn_forward.1} parent=11 // pred_check_branch
          %334 = sbr.rel (%p332) target = $region36
        $region35: #{simple_cnn_forward.1} parent=11 // pred_region
          _
        $region36: #{simple_cnn_forward.1} parent=11 // pred_fallthru
          _
        // Predicated region
        $region37: #{simple_cnn_forward.1} parent=11 // pred_check
          %p335 = pneg %p195
        $region38: #{simple_cnn_forward.1} parent=11 // pred_check_branch
          %337 = sbr.rel (%p335) target = $region40
        $region39: #{simple_cnn_forward.1} parent=11 // pred_region
          %s339 = ssub.s32 98304, 98304
          %340 = vsyncadd [#allocation11], %s339
          %s341 = sshll.u32 [#allocation12], 4
          %s342 = int_to_ptr.vmem [resolvable:$true] %s341
          %347 = dma.hbm_to_vmem [thread:$0]  %s7, 98304, %s342, [#allocation11], 256, 256, 16
        $region40: #{simple_cnn_forward.1} parent=11 // pred_fallthru
          _
        // Predicated region
        $region41: #{simple_cnn_forward.1} parent=11 // pred_check
          %p348 = pneg %p216
        $region42: #{simple_cnn_forward.1} parent=11 // pred_check_branch
          %350 = sbr.rel (%p348) target = $region44
        $region43: #{simple_cnn_forward.1} parent=11 // pred_region
          %s352 = ssub.s32 64, 64
          %353 = vsyncadd [#allocation14], %s352
          %s355 = sshll.u32 [#allocation13], 4
          %s356 = int_to_ptr.vmem [resolvable:$true] %s355
          %358 = dma.hbm_to_vmem [thread:$0]  %s8, 64, %s356, [#allocation14]
        $region44: #{simple_cnn_forward.1} parent=11 // pred_fallthru
          _
        // Predicated region
        $region45: #{simple_cnn_forward.1} parent=11 // pred_check
          %p359 = pneg %p237
        $region46: #{simple_cnn_forward.1} parent=11 // pred_check_branch
          %361 = sbr.rel (%p359) target = $region48
        $region47: #{simple_cnn_forward.1} parent=11 // pred_region
          %s363 = ssub.s32 64, 64
          %364 = vsyncadd [#allocation14], %s363
          %s366 = sshll.u32 [#allocation15], 4
          %s367 = int_to_ptr.vmem [resolvable:$true] %s366
          %369 = dma.hbm_to_vmem [thread:$0]  %s9, 64, %s367, [#allocation14]
        $region48: #{simple_cnn_forward.1} parent=11 // pred_fallthru
          _
        // Predicated region
        $region49: #{simple_cnn_forward.1} parent=11 // pred_check
          %p370 = pneg %p258
        $region50: #{simple_cnn_forward.1} parent=11 // pred_check_branch
          %372 = sbr.rel (%p370) target = $region52
        $region51: #{simple_cnn_forward.1} parent=11 // pred_region
          _
        $region52: #{simple_cnn_forward.1} parent=11 // pred_fallthru
          _
      $region12: #{simple_cnn_forward.1} parent=5 // pred_fallthru
        _
      %p373 = scmp.lt.s32.totalorder %s22, 2
      // Predicated region
      $region53: #{simple_cnn_forward.1} parent=5 // pred_check
        %p374 = pneg %p373
      $region54: #{simple_cnn_forward.1} parent=5 // pred_check_branch
        %376 = sbr.rel (%p374) target = $region56
      $region55: #{simple_cnn_forward.1} parent=5 // pred_region
        // Predicated region
        $region57: #{simple_cnn_forward.1} parent=55 // pred_check
          %p377 = pneg %p42
        $region58: #{simple_cnn_forward.1} parent=55 // pred_check_branch
          %379 = sbr.rel (%p377) target = $region60
        $region59: #{simple_cnn_forward.1} parent=55 // pred_region
          %p380 = scmp.lt.s32.totalorder %s22, 1
          %s381 = scalar_select %p380, %s22, 1
          %s382 = smul.addr %s381, 10
          %s383 = smul.addr %s382, 4
          %s384 = scalar_lea.vmem %s0, %s383
        $region60: #{simple_cnn_forward.1} parent=55 // pred_fallthru
          _
      $region56: #{simple_cnn_forward.1} parent=5 // pred_fallthru
        _
      %p385 = scmp.le.s32.totalorder 1, %s22
      %p386 = scmp.lt.s32.totalorder %s22, 3
      %p387 = pnand %p385, %p386
      %p388 = pneg %p387
      // Predicated region
      $region61: #{simple_cnn_forward.1} parent=5 // pred_check
        _
      $region62: #{simple_cnn_forward.1} parent=5 // pred_check_branch
        %390 = sbr.rel (%p387) target = $region64
      $region63: #{simple_cnn_forward.1} parent=5 // pred_region
        %s391 = ssub.s32 %s22, 1
        // Predicated region
        $region65: #{simple_cnn_forward.1} parent=63 // pred_check
          %p392 = pneg %p69
        $region66: #{simple_cnn_forward.1} parent=63 // pred_check_branch
          %394 = sbr.rel (%p392) target = $region68
        $region67: #{simple_cnn_forward.1} parent=63 // pred_region
          %395 = dma.done [#allocation9], 256
        $region68: #{simple_cnn_forward.1} parent=63 // pred_fallthru
          _
        // Predicated region
        $region69: #{simple_cnn_forward.1} parent=63 // pred_check
          %p396 = pneg %p132
        $region70: #{simple_cnn_forward.1} parent=63 // pred_check_branch
          %398 = sbr.rel (%p396) target = $region72
        $region71: #{simple_cnn_forward.1} parent=63 // pred_region
          %399 = dma.done [#allocation11], 128
        $region72: #{simple_cnn_forward.1} parent=63 // pred_fallthru
          _
        // Predicated region
        $region73: #{simple_cnn_forward.1} parent=63 // pred_check
          %p400 = pneg %p195
        $region74: #{simple_cnn_forward.1} parent=63 // pred_check_branch
          %402 = sbr.rel (%p400) target = $region76
        $region75: #{simple_cnn_forward.1} parent=63 // pred_region
          %403 = dma.done [#allocation11], 98304
        $region76: #{simple_cnn_forward.1} parent=63 // pred_fallthru
          _
        // Predicated region
        $region77: #{simple_cnn_forward.1} parent=63 // pred_check
          %p404 = pneg %p216
        $region78: #{simple_cnn_forward.1} parent=63 // pred_check_branch
          %406 = sbr.rel (%p404) target = $region80
        $region79: #{simple_cnn_forward.1} parent=63 // pred_region
          %407 = dma.done [#allocation14], 64
        $region80: #{simple_cnn_forward.1} parent=63 // pred_fallthru
          _
        // Predicated region
        $region81: #{simple_cnn_forward.1} parent=63 // pred_check
          %p408 = pneg %p237
        $region82: #{simple_cnn_forward.1} parent=63 // pred_check_branch
          %410 = sbr.rel (%p408) target = $region84
        $region83: #{simple_cnn_forward.1} parent=63 // pred_region
          %411 = dma.done [#allocation14], 64
        $region84: #{simple_cnn_forward.1} parent=63 // pred_fallthru
          _
        %p412 = scmp.lt.s32.totalorder %s27, 1
        %s413 = scalar_select %p412, %s27, 1
        %s414 = smul.addr %s413, 10
        %s415 = smul.addr %s414, 4
        %s416 = scalar_lea.vmem %s0, %s415
        %p417 = pneg %p48
        %p418 = pneg %p45
        %p419 = pneg %p69
        %p420 = pneg %p66
        %p421 = pneg %p90
        %p422 = pneg %p87
        %p423 = pneg %p111
        %p424 = pneg %p108
        %p425 = pneg %p132
        %p426 = pneg %p129
        %p427 = pneg %p153
        %p428 = pneg %p150
        %p429 = pneg %p174
        %p430 = pneg %p171
        %p431 = pneg %p195
        %p432 = pneg %p192
        %p433 = pneg %p216
        %p434 = pneg %p213
        %p435 = pneg %p237
        %p436 = pneg %p234
        %p437 = pneg %p258
        %p438 = pneg %p255
        %p439 = pneg %p284
        %p440 = pneg %p281
        %p441 = scmp.lt.s32.totalorder %s27, 1
        %s442 = scalar_select %p441, %s27, 1
        %s443 = smul.addr %s442, 8
        %s444 = scalar_lea.vmem %s11, %s443
        %p445 = scmp.lt.s32.totalorder %s27, 1
        %s446 = scalar_select %p445, %s27, 1
        %s447 = smul.addr %s446, 10
        %s448 = smul.addr %s447, 4
        %s449 = scalar_lea.vmem %s0, %s448
        %p450 = scmp.lt.s32.totalorder %s27, 1
        %s451 = scalar_select %p450, %s27, 1
        %s452 = smul.addr %s451, 8
        %s453 = scalar_lea.vmem %s11, %s452
        %v455 = vld [vmem:[%s449] sm:$0xff]
        %v456 = vld [vmem:[%s449 + $0x8] sm:$0xff]
        %v457 = vld [vmem:[%s449 + $0x14] sm:$0xff]
        %v458 = vld [vmem:[%s449 + $0x1c] sm:$0xff]
        %v463 = vunpack.c.l.b16 %v455
        %v464 = vunpack.c.h.b16 %v455
        %v465 = vunpack.c.l.b16 %v456
        %v466 = vunpack.c.h.b16 %v456
        %v467 = vunpack.c.l.b16 %v457
        %v468 = vunpack.c.h.b16 %v457
        %v469 = vunpack.c.l.b16 %v458
        %v470 = vunpack.c.h.b16 %v458
        %v471 = vpack.c.b16 %v467, %v463
        %v472 = vpack.c.b16 %v468, %v464
        %v473 = vpack.c.b16 %v469, %v465
        %v474 = vpack.c.b16 %v470, %v466
        %479 = vst [vmem:[#allocation2] sm:$0xff] %v471
        %480 = vst [vmem:[#allocation2 + $0x8] sm:$0xff] %v472
        %481 = vst [vmem:[#allocation2 + $0x10] sm:$0xff] %v473
        %482 = vst [vmem:[#allocation2 + $0x18] sm:$0xff] %v474
        %v483 = vld [vmem:[%s449] sm:$0xff]
        %v484 = vld [vmem:[%s449 + $0x8] sm:$0xff]
        %v485 = vld [vmem:[%s449 + $0x10] sm:$0xf]
        %v486 = vld [vmem:[%s449 + $0x14] sm:$0xff]
        %v487 = vld [vmem:[%s449 + $0x1c] sm:$0xff]
        %v488 = vld [vmem:[%s449 + $0x24] sm:$0xf]
        %v495 = vunpack.c.l.b16 %v483
        %v496 = vunpack.c.h.b16 %v483
        %v497 = vunpack.c.l.b16 %v484
        %v498 = vunpack.c.h.b16 %v484
        %v499 = vunpack.c.l.b16 %v485
        %v500 = vunpack.c.l.b16 %v486
        %v501 = vunpack.c.h.b16 %v486
        %v502 = vunpack.c.l.b16 %v487
        %v503 = vunpack.c.h.b16 %v487
        %v504 = vunpack.c.l.b16 %v488
        %v505 = vpack.c.b16 %v500, %v495
        %v506 = vpack.c.b16 %v501, %v496
        %v507 = vpack.c.b16 %v502, %v497
        %v508 = vpack.c.b16 %v503, %v498
        %v509 = vpack.c.b16 %v504, %v499
        %510 = vrot.lane.b32.xlu0 %v505, 127
        %v511 = vpop.permute.xlu0 %510
        %512 = vrot.lane.b32.xlu0 %v506, 127
        %v513 = vpop.permute.xlu0 %512
        %514 = vrot.lane.b32.xlu0 %v507, 127
        %v515 = vpop.permute.xlu0 %514
        %516 = vrot.lane.b32.xlu0 %v508, 127
        %v517 = vpop.permute.xlu0 %516
        %518 = vrot.lane.b32.xlu0 %v509, 127
        %v519 = vpop.permute.xlu0 %518
        %vm520 = vcmask 1039360
        %v521 = vsel %vm520, %v511, %v513
        %v522 = vsel %vm520, %v513, %v515
        %v523 = vsel %vm520, %v515, %v517
        %v524 = vsel %vm520, %v517, %v519
        %529 = vst [vmem:[#allocation2 + $0x20] sm:$0xff] %v521
        %530 = vst [vmem:[#allocation2 + $0x28] sm:$0xff] %v522
        %531 = vst [vmem:[#allocation2 + $0x30] sm:$0xff] %v523
        %532 = vst [vmem:[#allocation2 + $0x38] sm:$0xff] %v524
        %v533 = vld [vmem:[%s449] sm:$0xff]
        %v534 = vld [vmem:[%s449 + $0x8] sm:$0xff]
        %v535 = vld [vmem:[%s449 + $0x10] sm:$0xf]
        %v536 = vld [vmem:[%s449 + $0x14] sm:$0xff]
        %v537 = vld [vmem:[%s449 + $0x1c] sm:$0xff]
        %v538 = vld [vmem:[%s449 + $0x24] sm:$0xf]
        %v545 = vunpack.c.l.b16 %v533
        %v546 = vunpack.c.h.b16 %v533
        %v547 = vunpack.c.l.b16 %v534
        %v548 = vunpack.c.h.b16 %v534
        %v549 = vunpack.c.l.b16 %v535
        %v550 = vunpack.c.l.b16 %v536
        %v551 = vunpack.c.h.b16 %v536
        %v552 = vunpack.c.l.b16 %v537
        %v553 = vunpack.c.h.b16 %v537
        %v554 = vunpack.c.l.b16 %v538
        %v555 = vpack.c.b16 %v550, %v545
        %v556 = vpack.c.b16 %v551, %v546
        %v557 = vpack.c.b16 %v552, %v547
        %v558 = vpack.c.b16 %v553, %v548
        %v559 = vpack.c.b16 %v554, %v549
        %560 = vrot.lane.b32.xlu0 %v555, 126
        %v561 = vpop.permute.xlu0 %560
        %562 = vrot.lane.b32.xlu0 %v556, 126
        %v563 = vpop.permute.xlu0 %562
        %564 = vrot.lane.b32.xlu0 %v557, 126
        %v565 = vpop.permute.xlu0 %564
        %566 = vrot.lane.b32.xlu0 %v558, 126
        %v567 = vpop.permute.xlu0 %566
        %568 = vrot.lane.b32.xlu0 %v559, 126
        %v569 = vpop.permute.xlu0 %568
        %vm570 = vcmask 1031168
        %v571 = vsel %vm570, %v561, %v563
        %v572 = vsel %vm570, %v563, %v565
        %v573 = vsel %vm570, %v565, %v567
        %v574 = vsel %vm570, %v567, %v569
        %579 = vst [vmem:[#allocation2 + $0x40] sm:$0xff] %v571
        %580 = vst [vmem:[#allocation2 + $0x48] sm:$0xff] %v572
        %581 = vst [vmem:[#allocation2 + $0x50] sm:$0xff] %v573
        %582 = vst [vmem:[#allocation2 + $0x58] sm:$0xff] %v574
        %v583 = vld [vmem:[%s449] sm:$0xff]
        %v584 = vld [vmem:[%s449 + $0x8] sm:$0xff]
        %v585 = vld [vmem:[%s449 + $0x10] sm:$0xf]
        %v586 = vld [vmem:[%s449 + $0x14] sm:$0xff]
        %v587 = vld [vmem:[%s449 + $0x1c] sm:$0xff]
        %v588 = vld [vmem:[%s449 + $0x24] sm:$0xf]
        %v595 = vunpack.c.l.b16 %v583
        %v596 = vunpack.c.h.b16 %v583
        %v597 = vunpack.c.l.b16 %v584
        %v598 = vunpack.c.h.b16 %v584
        %v599 = vunpack.c.l.b16 %v585
        %v600 = vunpack.c.l.b16 %v586
        %v601 = vunpack.c.h.b16 %v586
        %v602 = vunpack.c.l.b16 %v587
        %v603 = vunpack.c.h.b16 %v587
        %v604 = vunpack.c.l.b16 %v588
        %v605 = vpack.c.b16 %v600, %v595
        %v606 = vpack.c.b16 %v601, %v596
        %v607 = vpack.c.b16 %v602, %v597
        %v608 = vpack.c.b16 %v603, %v598
        %v609 = vpack.c.b16 %v604, %v599
        %610 = vrot.lane.b32.xlu0 %v605, 107
        %v611 = vpop.permute.xlu0 %610
        %612 = vrot.lane.b32.xlu0 %v606, 107
        %v613 = vpop.permute.xlu0 %612
        %614 = vrot.lane.b32.xlu0 %v607, 107
        %v615 = vpop.permute.xlu0 %614
        %616 = vrot.lane.b32.xlu0 %v608, 107
        %v617 = vpop.permute.xlu0 %616
        %618 = vrot.lane.b32.xlu0 %v609, 107
        %v619 = vpop.permute.xlu0 %618
        %vm620 = vcmask 875520
        %v621 = vsel %vm620, %v611, %v613
        %v622 = vsel %vm620, %v613, %v615
        %v623 = vsel %vm620, %v615, %v617
        %v624 = vsel %vm620, %v617, %v619
        %629 = vst [vmem:[#allocation2 + $0x60] sm:$0xff] %v621
        %630 = vst [vmem:[#allocation2 + $0x68] sm:$0xff] %v622
        %631 = vst [vmem:[#allocation2 + $0x70] sm:$0xff] %v623
        %632 = vst [vmem:[#allocation2 + $0x78] sm:$0xff] %v624
        %v633 = vld [vmem:[%s449] sm:$0xff]
        %v634 = vld [vmem:[%s449 + $0x8] sm:$0xff]
        %v635 = vld [vmem:[%s449 + $0x10] sm:$0xf]
        %v636 = vld [vmem:[%s449 + $0x14] sm:$0xff]
        %v637 = vld [vmem:[%s449 + $0x1c] sm:$0xff]
        %v638 = vld [vmem:[%s449 + $0x24] sm:$0xf]
        %v645 = vunpack.c.l.b16 %v633
        %v646 = vunpack.c.h.b16 %v633
        %v647 = vunpack.c.l.b16 %v634
        %v648 = vunpack.c.h.b16 %v634
        %v649 = vunpack.c.l.b16 %v635
        %v650 = vunpack.c.l.b16 %v636
        %v651 = vunpack.c.h.b16 %v636
        %v652 = vunpack.c.l.b16 %v637
        %v653 = vunpack.c.h.b16 %v637
        %v654 = vunpack.c.l.b16 %v638
        %v655 = vpack.c.b16 %v650, %v645
        %v656 = vpack.c.b16 %v651, %v646
        %v657 = vpack.c.b16 %v652, %v647
        %v658 = vpack.c.b16 %v653, %v648
        %v659 = vpack.c.b16 %v654, %v649
        %660 = vrot.lane.b32.xlu0 %v655, 106
        %v661 = vpop.permute.xlu0 %660
        %662 = vrot.lane.b32.xlu0 %v656, 106
        %v663 = vpop.permute.xlu0 %662
        %664 = vrot.lane.b32.xlu0 %v657, 106
        %v665 = vpop.permute.xlu0 %664
        %666 = vrot.lane.b32.xlu0 %v658, 106
        %v667 = vpop.permute.xlu0 %666
        %668 = vrot.lane.b32.xlu0 %v659, 106
        %v669 = vpop.permute.xlu0 %668
        %vm670 = vcmask 867328
        %v671 = vsel %vm670, %v661, %v663
        %v672 = vsel %vm670, %v663, %v665
        %v673 = vsel %vm670, %v665, %v667
        %v674 = vsel %vm670, %v667, %v669
        %679 = vst [vmem:[#allocation2 + $0x80] sm:$0xff] %v671
        %680 = vst [vmem:[#allocation2 + $0x88] sm:$0xff] %v672
        %681 = vst [vmem:[#allocation2 + $0x90] sm:$0xff] %v673
        %682 = vst [vmem:[#allocation2 + $0x98] sm:$0xff] %v674
        %v683 = vld [vmem:[%s449] sm:$0xff]
        %v684 = vld [vmem:[%s449 + $0x8] sm:$0xff]
        %v685 = vld [vmem:[%s449 + $0x10] sm:$0xf]
        %v686 = vld [vmem:[%s449 + $0x14] sm:$0xff]
        %v687 = vld [vmem:[%s449 + $0x1c] sm:$0xff]
        %v688 = vld [vmem:[%s449 + $0x24] sm:$0xf]
        %v695 = vunpack.c.l.b16 %v683
        %v696 = vunpack.c.h.b16 %v683
        %v697 = vunpack.c.l.b16 %v684
        %v698 = vunpack.c.h.b16 %v684
        %v699 = vunpack.c.l.b16 %v685
        %v700 = vunpack.c.l.b16 %v686
        %v701 = vunpack.c.h.b16 %v686
        %v702 = vunpack.c.l.b16 %v687
        %v703 = vunpack.c.h.b16 %v687
        %v704 = vunpack.c.l.b16 %v688
        %v705 = vpack.c.b16 %v700, %v695
        %v706 = vpack.c.b16 %v701, %v696
        %v707 = vpack.c.b16 %v702, %v697
        %v708 = vpack.c.b16 %v703, %v698
        %v709 = vpack.c.b16 %v704, %v699
        %710 = vrot.lane.b32.xlu0 %v705, 105
        %v711 = vpop.permute.xlu0 %710
        %712 = vrot.lane.b32.xlu0 %v706, 105
        %v713 = vpop.permute.xlu0 %712
        %714 = vrot.lane.b32.xlu0 %v707, 105
        %v715 = vpop.permute.xlu0 %714
        %716 = vrot.lane.b32.xlu0 %v708, 105
        %v717 = vpop.permute.xlu0 %716
        %718 = vrot.lane.b32.xlu0 %v709, 105
        %v719 = vpop.permute.xlu0 %718
        %vm720 = vcmask 859136
        %v721 = vsel %vm720, %v711, %v713
        %v722 = vsel %vm720, %v713, %v715
        %v723 = vsel %vm720, %v715, %v717
        %v724 = vsel %vm720, %v717, %v719
        %729 = vst [vmem:[#allocation2 + $0xa0] sm:$0xff] %v721
        %730 = vst [vmem:[#allocation2 + $0xa8] sm:$0xff] %v722
        %731 = vst [vmem:[#allocation2 + $0xb0] sm:$0xff] %v723
        %732 = vst [vmem:[#allocation2 + $0xb8] sm:$0xff] %v724
        %v733 = vld [vmem:[%s449] sm:$0xff]
        %v734 = vld [vmem:[%s449 + $0x8] sm:$0xff]
        %v735 = vld [vmem:[%s449 + $0x10] sm:$0xf]
        %v736 = vld [vmem:[%s449 + $0x14] sm:$0xff]
        %v737 = vld [vmem:[%s449 + $0x1c] sm:$0xff]
        %v738 = vld [vmem:[%s449 + $0x24] sm:$0xf]
        %v745 = vunpack.c.l.b16 %v733
        %v746 = vunpack.c.h.b16 %v733
        %v747 = vunpack.c.l.b16 %v734
        %v748 = vunpack.c.h.b16 %v734
        %v749 = vunpack.c.l.b16 %v735
        %v750 = vunpack.c.l.b16 %v736
        %v751 = vunpack.c.h.b16 %v736
        %v752 = vunpack.c.l.b16 %v737
        %v753 = vunpack.c.h.b16 %v737
        %v754 = vunpack.c.l.b16 %v738
        %v755 = vpack.c.b16 %v750, %v745
        %v756 = vpack.c.b16 %v751, %v746
        %v757 = vpack.c.b16 %v752, %v747
        %v758 = vpack.c.b16 %v753, %v748
        %v759 = vpack.c.b16 %v754, %v749
        %760 = vrot.lane.b32.xlu0 %v755, 86
        %v761 = vpop.permute.xlu0 %760
        %762 = vrot.lane.b32.xlu0 %v756, 86
        %v763 = vpop.permute.xlu0 %762
        %764 = vrot.lane.b32.xlu0 %v757, 86
        %v765 = vpop.permute.xlu0 %764
        %766 = vrot.lane.b32.xlu0 %v758, 86
        %v767 = vpop.permute.xlu0 %766
        %768 = vrot.lane.b32.xlu0 %v759, 86
        %v769 = vpop.permute.xlu0 %768
        %vm770 = vcmask 703488
        %v771 = vsel %vm770, %v761, %v763
        %v772 = vsel %vm770, %v763, %v765
        %v773 = vsel %vm770, %v765, %v767
        %v774 = vsel %vm770, %v767, %v769
        %779 = vst [vmem:[#allocation2 + $0xc0] sm:$0xff] %v771
        %780 = vst [vmem:[#allocation2 + $0xc8] sm:$0xff] %v772
        %781 = vst [vmem:[#allocation2 + $0xd0] sm:$0xff] %v773
        %782 = vst [vmem:[#allocation2 + $0xd8] sm:$0xff] %v774
        %v783 = vld [vmem:[%s449] sm:$0xff]
        %v784 = vld [vmem:[%s449 + $0x8] sm:$0xff]
        %v785 = vld [vmem:[%s449 + $0x10] sm:$0xf]
        %v786 = vld [vmem:[%s449 + $0x14] sm:$0xff]
        %v787 = vld [vmem:[%s449 + $0x1c] sm:$0xff]
        %v788 = vld [vmem:[%s449 + $0x24] sm:$0xf]
        %v795 = vunpack.c.l.b16 %v783
        %v796 = vunpack.c.h.b16 %v783
        %v797 = vunpack.c.l.b16 %v784
        %v798 = vunpack.c.h.b16 %v784
        %v799 = vunpack.c.l.b16 %v785
        %v800 = vunpack.c.l.b16 %v786
        %v801 = vunpack.c.h.b16 %v786
        %v802 = vunpack.c.l.b16 %v787
        %v803 = vunpack.c.h.b16 %v787
        %v804 = vunpack.c.l.b16 %v788
        %v805 = vpack.c.b16 %v800, %v795
        %v806 = vpack.c.b16 %v801, %v796
        %v807 = vpack.c.b16 %v802, %v797
        %v808 = vpack.c.b16 %v803, %v798
        %v809 = vpack.c.b16 %v804, %v799
        %810 = vrot.lane.b32.xlu0 %v805, 85
        %v811 = vpop.permute.xlu0 %810
        %812 = vrot.lane.b32.xlu0 %v806, 85
        %v813 = vpop.permute.xlu0 %812
        %814 = vrot.lane.b32.xlu0 %v807, 85
        %v815 = vpop.permute.xlu0 %814
        %816 = vrot.lane.b32.xlu0 %v808, 85
        %v817 = vpop.permute.xlu0 %816
        %818 = vrot.lane.b32.xlu0 %v809, 85
        %v819 = vpop.permute.xlu0 %818
        %vm820 = vcmask 695296
        %v821 = vsel %vm820, %v811, %v813
        %v822 = vsel %vm820, %v813, %v815
        %v823 = vsel %vm820, %v815, %v817
        %v824 = vsel %vm820, %v817, %v819
        %829 = vst [vmem:[#allocation2 + $0xe0] sm:$0xff] %v821
        %830 = vst [vmem:[#allocation2 + $0xe8] sm:$0xff] %v822
        %831 = vst [vmem:[#allocation2 + $0xf0] sm:$0xff] %v823
        %832 = vst [vmem:[#allocation2 + $0xf8] sm:$0xff] %v824
        %v833 = vld [vmem:[%s449] sm:$0xff]
        %v834 = vld [vmem:[%s449 + $0x8] sm:$0xff]
        %v835 = vld [vmem:[%s449 + $0x10] sm:$0xf]
        %v836 = vld [vmem:[%s449 + $0x14] sm:$0xff]
        %v837 = vld [vmem:[%s449 + $0x1c] sm:$0xff]
        %v838 = vld [vmem:[%s449 + $0x24] sm:$0xf]
        %v845 = vunpack.c.l.b16 %v833
        %v846 = vunpack.c.h.b16 %v833
        %v847 = vunpack.c.l.b16 %v834
        %v848 = vunpack.c.h.b16 %v834
        %v849 = vunpack.c.l.b16 %v835
        %v850 = vunpack.c.l.b16 %v836
        %v851 = vunpack.c.h.b16 %v836
        %v852 = vunpack.c.l.b16 %v837
        %v853 = vunpack.c.h.b16 %v837
        %v854 = vunpack.c.l.b16 %v838
        %v855 = vpack.c.b16 %v850, %v845
        %v856 = vpack.c.b16 %v851, %v846
        %v857 = vpack.c.b16 %v852, %v847
        %v858 = vpack.c.b16 %v853, %v848
        %v859 = vpack.c.b16 %v854, %v849
        %860 = vrot.lane.b32.xlu0 %v855, 84
        %v861 = vpop.permute.xlu0 %860
        %862 = vrot.lane.b32.xlu0 %v856, 84
        %v863 = vpop.permute.xlu0 %862
        %864 = vrot.lane.b32.xlu0 %v857, 84
        %v865 = vpop.permute.xlu0 %864
        %866 = vrot.lane.b32.xlu0 %v858, 84
        %v867 = vpop.permute.xlu0 %866
        %868 = vrot.lane.b32.xlu0 %v859, 84
        %v869 = vpop.permute.xlu0 %868
        %vm870 = vcmask 687104
        %v871 = vsel %vm870, %v861, %v863
        %v872 = vsel %vm870, %v863, %v865
        %v873 = vsel %vm870, %v865, %v867
        %v874 = vsel %vm870, %v867, %v869
        %879 = vst [vmem:[#allocation2 + $0x100] sm:$0xff] %v871
        %880 = vst [vmem:[#allocation2 + $0x108] sm:$0xff] %v872
        %881 = vst [vmem:[#allocation2 + $0x110] sm:$0xff] %v873
        %882 = vst [vmem:[#allocation2 + $0x118] sm:$0xff] %v874
        %v883 = vld [vmem:[#allocation8] sm:$0xff]
        %v884 = vld [vmem:[#allocation8 + $0x8] sm:$0xff]
        %v885 = vld [vmem:[#allocation2] sm:$0xff]
        %v886 = vld [vmem:[#allocation2 + $0x8] sm:$0xff]
        %v887 = vld [vmem:[#allocation2 + $0x10] sm:$0xff]
        %v888 = vld [vmem:[#allocation2 + $0x18] sm:$0xff]
        %v889 = vld [vmem:[#allocation2 + $0x20] sm:$0xff]
        %v890 = vld [vmem:[#allocation2 + $0x28] sm:$0xff]
        %v891 = vld [vmem:[#allocation2 + $0x30] sm:$0xff]
        %v892 = vld [vmem:[#allocation2 + $0x38] sm:$0xff]
        %v893 = vld [vmem:[#allocation2 + $0x40] sm:$0xff]
        %v894 = vld [vmem:[#allocation2 + $0x48] sm:$0xff]
        %v895 = vld [vmem:[#allocation2 + $0x50] sm:$0xff]
        %v896 = vld [vmem:[#allocation2 + $0x58] sm:$0xff]
        %v897 = vld [vmem:[#allocation2 + $0x60] sm:$0xff]
        %v898 = vld [vmem:[#allocation2 + $0x68] sm:$0xff]
        %v899 = vld [vmem:[#allocation2 + $0x70] sm:$0xff]
        %v900 = vld [vmem:[#allocation2 + $0x78] sm:$0xff]
        %v901 = vld [vmem:[#allocation2 + $0x80] sm:$0xff]
        %v902 = vld [vmem:[#allocation2 + $0x88] sm:$0xff]
        %v903 = vld [vmem:[#allocation2 + $0x90] sm:$0xff]
        %v904 = vld [vmem:[#allocation2 + $0x98] sm:$0xff]
        %v905 = vld [vmem:[#allocation2 + $0xa0] sm:$0xff]
        %v906 = vld [vmem:[#allocation2 + $0xa8] sm:$0xff]
        %v907 = vld [vmem:[#allocation2 + $0xb0] sm:$0xff]
        %v908 = vld [vmem:[#allocation2 + $0xb8] sm:$0xff]
        %v909 = vld [vmem:[#allocation2 + $0xc0] sm:$0xff]
        %v910 = vld [vmem:[#allocation2 + $0xc8] sm:$0xff]
        %v911 = vld [vmem:[#allocation2 + $0xd0] sm:$0xff]
        %v912 = vld [vmem:[#allocation2 + $0xd8] sm:$0xff]
        %v913 = vld [vmem:[#allocation2 + $0xe0] sm:$0xff]
        %v914 = vld [vmem:[#allocation2 + $0xe8] sm:$0xff]
        %v915 = vld [vmem:[#allocation2 + $0xf0] sm:$0xff]
        %v916 = vld [vmem:[#allocation2 + $0xf8] sm:$0xff]
        %v917 = vld [vmem:[#allocation2 + $0x100] sm:$0xff]
        %v918 = vld [vmem:[#allocation2 + $0x108] sm:$0xff]
        %v919 = vld [vmem:[#allocation2 + $0x110] sm:$0xff]
        %v920 = vld [vmem:[#allocation2 + $0x118] sm:$0xff]
        %v923 = vunpack.c.l.b16 %v883
        %v924 = vunpack.c.h.b16 %v883
        %v925 = vunpack.c.l.b16 %v884
        %v926 = vunpack.c.h.b16 %v884
        %v927 = vpack.c.b16 %v925, %v923
        %v928 = vpack.c.b16 %v926, %v924
        %vm930 = vcmask 130048
        %v932 = vsel %vm930, %v928, 0
        %934 = vmatprep.subr.bf16.mxu0 %v886
        %935 = vmatpush1.bf16.msra.mxu0 %v885
        %936 = vmatprep.subr.bf16.mxu0 %v890
        %937 = vmatpush1.bf16.msra.mxu0 %v889
        %938 = vmatprep.subr.bf16.mxu0 %v894
        %939 = vmatpush1.bf16.msra.mxu0 %v893
        %940 = vmatprep.subr.bf16.mxu0 %v898
        %941 = vmatpush1.bf16.msra.mxu0 %v897
        %942 = vmatprep.subr.bf16.mxu0 %v902
        %943 = vmatpush1.bf16.msra.mxu0 %v901
        %944 = vmatprep.subr.bf16.mxu0 %v906
        %945 = vmatpush1.bf16.msra.mxu0 %v905
        %946 = vmatprep.subr.bf16.mxu0 %v910
        %947 = vmatpush1.bf16.msra.mxu0 %v909
        %948 = vmatprep.subr.bf16.mxu0 %v914
        %949 = vmatpush1.bf16.msra.mxu0 %v913
        %950 = vmatprep.subr.bf16.mxu0 %v918
        %951 = vmatpush1.bf16.msra.mxu0 %v917
        %952 = vmatprep.subr.bf16.mxu0 0
        %953 = vmatpush1.bf16.msra.mxu0 0
        %954 = vmatprep.subr.bf16.mxu0 0
        %955 = vmatpush1.bf16.msra.mxu0 0
        %956 = vmatprep.subr.bf16.mxu0 0
        %957 = vmatpush1.bf16.msra.mxu0 0
        %958 = vmatprep.subr.bf16.mxu0 0
        %959 = vmatpush1.bf16.msra.mxu0 0
        %960 = vmatprep.subr.bf16.mxu0 0
        %961 = vmatpush1.bf16.msra.mxu0 0
        %962 = vmatprep.subr.bf16.mxu0 0
        %963 = vmatpush1.bf16.msra.mxu0 0
        %964 = vmatprep.subr.bf16.mxu0 0
        %965 = vmatpush1.bf16.msra.mxu0 0
        %966 = vmatprep.mubr.bf16.mxu0 %v932
        %967 = vmatmul.mubr.bf16.gmra.mrb[0].mxu0 %v927
        %v968 = vpop.f32.mrb[0].mxu0
        %v969 = vadd.f32 0.0, %v968
        %v970 = vpop.f32.mrb[0].mxu0
        %v971 = vadd.f32 0.0, %v970
        %v972 = vpop.f32.mrb[0].mxu0
        %v973 = vadd.f32 0.0, %v972
        %v974 = vpop.f32.mrb[0].mxu0
        %v975 = vadd.f32 0.0, %v974
        %976 = vdwg.mxu0
        %977 = vmatprep.subr.bf16.mxu0 %v888
        %978 = vmatpush1.bf16.msra.mxu0 %v887
        %979 = vmatprep.subr.bf16.mxu0 %v892
        %980 = vmatpush1.bf16.msra.mxu0 %v891
        %981 = vmatprep.subr.bf16.mxu0 %v896
        %982 = vmatpush1.bf16.msra.mxu0 %v895
        %983 = vmatprep.subr.bf16.mxu0 %v900
        %984 = vmatpush1.bf16.msra.mxu0 %v899
        %985 = vmatprep.subr.bf16.mxu0 %v904
        %986 = vmatpush1.bf16.msra.mxu0 %v903
        %987 = vmatprep.subr.bf16.mxu0 %v908
        %988 = vmatpush1.bf16.msra.mxu0 %v907
        %989 = vmatprep.subr.bf16.mxu0 %v912
        %990 = vmatpush1.bf16.msra.mxu0 %v911
        %991 = vmatprep.subr.bf16.mxu0 %v916
        %992 = vmatpush1.bf16.msra.mxu0 %v915
        %993 = vmatprep.subr.bf16.mxu0 %v920
        %994 = vmatpush1.bf16.msra.mxu0 %v919
        %995 = vmatprep.subr.bf16.mxu0 0
        %996 = vmatpush1.bf16.msra.mxu0 0
        %997 = vmatprep.subr.bf16.mxu0 0
        %998 = vmatpush1.bf16.msra.mxu0 0
        %999 = vmatprep.subr.bf16.mxu0 0
        %1000 = vmatpush1.bf16.msra.mxu0 0
        %1001 = vmatprep.subr.bf16.mxu0 0
        %1002 = vmatpush1.bf16.msra.mxu0 0
        %1003 = vmatprep.subr.bf16.mxu0 0
        %1004 = vmatpush1.bf16.msra.mxu0 0
        %1005 = vmatprep.subr.bf16.mxu0 0
        %1006 = vmatpush1.bf16.msra.mxu0 0
        %1007 = vmatprep.subr.bf16.mxu0 0
        %1008 = vmatpush1.bf16.msra.mxu0 0
        %1009 = vmatprep.mubr.bf16.mxu0 %v932
        %1010 = vmatmul.mubr.bf16.gmra.mrb[0].mxu0 %v927
        %v1011 = vpop.f32.mrb[0].mxu0
        %v1012 = vadd.f32 0.0, %v1011
        %v1013 = vpop.f32.mrb[0].mxu0
        %v1014 = vadd.f32 0.0, %v1013
        %v1015 = vpop.f32.mrb[0].mxu0
        %v1016 = vadd.f32 0.0, %v1015
        %v1017 = vpop.f32.mrb[0].mxu0
        %v1018 = vadd.f32 0.0, %v1017
        %1019 = vdwg.mxu0
        %v1020 = vld [vmem:[%s2] sm:$0xff]
        %v1021 = vld [vmem:[%s2 + $0x8] sm:$0xff]
        %1023 = vset.pattern.permute.xlu0 0
        %1024 = vperm.xlu0 %1023, %v1020
        %v1025 = vpop.permute.xlu0 %1024
        %1028 = vset.pattern.permute.xlu0 0
        %1029 = vperm.xlu0 %1028, %v1021
        %v1030 = vpop.permute.xlu0 %1029
        %v1032 = vmul.f32 %v969, %v1025
        %v1033 = vmul.f32 %v971, %v1025
        %v1034 = vmul.f32 %v1012, %v1025
        %v1035 = vmul.f32 %v1014, %v1025
        %v1036 = vmul.f32 %v973, %v1030
        %v1037 = vmul.f32 %v975, %v1030
        %v1038 = vmul.f32 %v1016, %v1030
        %v1039 = vmul.f32 %v1018, %v1030
        %v1040 = vld [vmem:[%s3] sm:$0xff]
        %v1041 = vld [vmem:[%s3 + $0x8] sm:$0xff]
        %1043 = vset.pattern.permute.xlu0 0
        %1044 = vperm.xlu0 %1043, %v1040
        %v1045 = vpop.permute.xlu0 %1044
        %1048 = vset.pattern.permute.xlu0 0
        %1049 = vperm.xlu0 %1048, %v1041
        %v1050 = vpop.permute.xlu0 %1049
        %v1052 = vadd.f32 %v1032, %v1045
        %v1053 = vadd.f32 %v1033, %v1045
        %v1054 = vadd.f32 %v1034, %v1045
        %v1055 = vadd.f32 %v1035, %v1045
        %v1056 = vadd.f32 %v1036, %v1050
        %v1057 = vadd.f32 %v1037, %v1050
        %v1058 = vadd.f32 %v1038, %v1050
        %v1059 = vadd.f32 %v1039, %v1050
        %v1060 = vmax.f32 %v1052, 0.0
        %v1061 = vmax.f32 %v1053, 0.0
        %v1062 = vmax.f32 %v1054, 0.0
        %v1063 = vmax.f32 %v1055, 0.0
        %v1064 = vmax.f32 %v1056, 0.0
        %v1065 = vmax.f32 %v1057, 0.0
        %v1066 = vmax.f32 %v1058, 0.0
        %v1067 = vmax.f32 %v1059, 0.0
        %v1068 = vpack.c.bf16 %v1064, %v1060
        %v1069 = vpack.c.bf16 %v1065, %v1061
        %v1070 = vpack.c.bf16 %v1066, %v1062
        %v1071 = vpack.c.bf16 %v1067, %v1063
        %1072 = vst [vmem:[#allocation3] sm:$0xff] %v1068
        %1073 = vst [vmem:[#allocation3 + $0x8] sm:$0xff] %v1069
        %1074 = vst [vmem:[#allocation3 + $0x10] sm:$0xff] %v1070
        %1075 = vst [vmem:[#allocation3 + $0x18] sm:$0xff] %v1071
        %v1076 = vld [vmem:[#allocation3] sm:$0xff]
        %v1077 = vld [vmem:[#allocation3 + $0x8] sm:$0xff]
        %v1078 = vld [vmem:[#allocation3 + $0x10] sm:$0xff]
        %1079 = vst [vmem:[#allocation4] sm:$0xff] %v1076
        %1080 = vst [vmem:[#allocation4 + $0x8] sm:$0xff] %v1077
        %1081 = vst [vmem:[#allocation4 + $0x10] sm:$0xff] %v1078
        %v1082 = vld [vmem:[#allocation3] sm:$0xff]
        %v1083 = vld [vmem:[#allocation3 + $0x8] sm:$0xff]
        %v1084 = vld [vmem:[#allocation3 + $0x10] sm:$0xff]
        %v1085 = vld [vmem:[#allocation3 + $0x18] sm:$0xff]
        %1090 = vrot.lane.b32.xlu0 %v1082, 127
        %v1091 = vpop.permute.xlu0 %1090
        %1092 = vrot.lane.b32.xlu0 %v1083, 127
        %v1093 = vpop.permute.xlu0 %1092
        %1094 = vrot.lane.b32.xlu0 %v1084, 127
        %v1095 = vpop.permute.xlu0 %1094
        %1096 = vrot.lane.b32.xlu0 %v1085, 127
        %v1097 = vpop.permute.xlu0 %1096
        %v1098 = vsel %vm520, %v1091, %v1093
        %v1099 = vsel %vm520, %v1093, %v1095
        %v1100 = vsel %vm520, %v1095, %v1097
        %1104 = vst [vmem:[#allocation4 + $0x18] sm:$0xff] %v1098
        %1105 = vst [vmem:[#allocation4 + $0x20] sm:$0xff] %v1099
        %1106 = vst [vmem:[#allocation4 + $0x28] sm:$0xff] %v1100
        %v1107 = vld [vmem:[#allocation3] sm:$0xff]
        %v1108 = vld [vmem:[#allocation3 + $0x8] sm:$0xff]
        %v1109 = vld [vmem:[#allocation3 + $0x10] sm:$0xff]
        %v1110 = vld [vmem:[#allocation3 + $0x18] sm:$0xff]
        %1115 = vrot.lane.b32.xlu0 %v1107, 126
        %v1116 = vpop.permute.xlu0 %1115
        %1117 = vrot.lane.b32.xlu0 %v1108, 126
        %v1118 = vpop.permute.xlu0 %1117
        %1119 = vrot.lane.b32.xlu0 %v1109, 126
        %v1120 = vpop.permute.xlu0 %1119
        %1121 = vrot.lane.b32.xlu0 %v1110, 126
        %v1122 = vpop.permute.xlu0 %1121
        %v1123 = vsel %vm570, %v1116, %v1118
        %v1124 = vsel %vm570, %v1118, %v1120
        %v1125 = vsel %vm570, %v1120, %v1122
        %1129 = vst [vmem:[#allocation4 + $0x30] sm:$0xff] %v1123
        %1130 = vst [vmem:[#allocation4 + $0x38] sm:$0xff] %v1124
        %1131 = vst [vmem:[#allocation4 + $0x40] sm:$0xff] %v1125
        %v1132 = vld [vmem:[#allocation3] sm:$0xff]
        %v1133 = vld [vmem:[#allocation3 + $0x8] sm:$0xff]
        %v1134 = vld [vmem:[#allocation3 + $0x10] sm:$0xff]
        %v1135 = vld [vmem:[#allocation3 + $0x18] sm:$0xff]
        %1140 = vrot.lane.b32.xlu0 %v1132, 107
        %v1141 = vpop.permute.xlu0 %1140
        %1142 = vrot.lane.b32.xlu0 %v1133, 107
        %v1143 = vpop.permute.xlu0 %1142
        %1144 = vrot.lane.b32.xlu0 %v1134, 107
        %v1145 = vpop.permute.xlu0 %1144
        %1146 = vrot.lane.b32.xlu0 %v1135, 107
        %v1147 = vpop.permute.xlu0 %1146
        %v1148 = vsel %vm620, %v1141, %v1143
        %v1149 = vsel %vm620, %v1143, %v1145
        %v1150 = vsel %vm620, %v1145, %v1147
        %1154 = vst [vmem:[#allocation4 + $0x48] sm:$0xff] %v1148
        %1155 = vst [vmem:[#allocation4 + $0x50] sm:$0xff] %v1149
        %1156 = vst [vmem:[#allocation4 + $0x58] sm:$0xff] %v1150
        %v1157 = vld [vmem:[#allocation3] sm:$0xff]
        %v1158 = vld [vmem:[#allocation3 + $0x8] sm:$0xff]
        %v1159 = vld [vmem:[#allocation3 + $0x10] sm:$0xff]
        %v1160 = vld [vmem:[#allocation3 + $0x18] sm:$0xff]
        %1165 = vrot.lane.b32.xlu0 %v1157, 106
        %v1166 = vpop.permute.xlu0 %1165
        %1167 = vrot.lane.b32.xlu0 %v1158, 106
        %v1168 = vpop.permute.xlu0 %1167
        %1169 = vrot.lane.b32.xlu0 %v1159, 106
        %v1170 = vpop.permute.xlu0 %1169
        %1171 = vrot.lane.b32.xlu0 %v1160, 106
        %v1172 = vpop.permute.xlu0 %1171
        %v1173 = vsel %vm670, %v1166, %v1168
        %v1174 = vsel %vm670, %v1168, %v1170
        %v1175 = vsel %vm670, %v1170, %v1172
        %1179 = vst [vmem:[#allocation4 + $0x60] sm:$0xff] %v1173
        %1180 = vst [vmem:[#allocation4 + $0x68] sm:$0xff] %v1174
        %1181 = vst [vmem:[#allocation4 + $0x70] sm:$0xff] %v1175
        %v1182 = vld [vmem:[#allocation3] sm:$0xff]
        %v1183 = vld [vmem:[#allocation3 + $0x8] sm:$0xff]
        %v1184 = vld [vmem:[#allocation3 + $0x10] sm:$0xff]
        %v1185 = vld [vmem:[#allocation3 + $0x18] sm:$0xff]
        %1190 = vrot.lane.b32.xlu0 %v1182, 105
        %v1191 = vpop.permute.xlu0 %1190
        %1192 = vrot.lane.b32.xlu0 %v1183, 105
        %v1193 = vpop.permute.xlu0 %1192
        %1194 = vrot.lane.b32.xlu0 %v1184, 105
        %v1195 = vpop.permute.xlu0 %1194
        %1196 = vrot.lane.b32.xlu0 %v1185, 105
        %v1197 = vpop.permute.xlu0 %1196
        %v1198 = vsel %vm720, %v1191, %v1193
        %v1199 = vsel %vm720, %v1193, %v1195
        %v1200 = vsel %vm720, %v1195, %v1197
        %1204 = vst [vmem:[#allocation4 + $0x78] sm:$0xff] %v1198
        %1205 = vst [vmem:[#allocation4 + $0x80] sm:$0xff] %v1199
        %1206 = vst [vmem:[#allocation4 + $0x88] sm:$0xff] %v1200
        %v1207 = vld [vmem:[#allocation3] sm:$0xff]
        %v1208 = vld [vmem:[#allocation3 + $0x8] sm:$0xff]
        %v1209 = vld [vmem:[#allocation3 + $0x10] sm:$0xff]
        %v1210 = vld [vmem:[#allocation3 + $0x18] sm:$0xff]
        %1215 = vrot.lane.b32.xlu0 %v1207, 86
        %v1216 = vpop.permute.xlu0 %1215
        %1217 = vrot.lane.b32.xlu0 %v1208, 86
        %v1218 = vpop.permute.xlu0 %1217
        %1219 = vrot.lane.b32.xlu0 %v1209, 86
        %v1220 = vpop.permute.xlu0 %1219
        %1221 = vrot.lane.b32.xlu0 %v1210, 86
        %v1222 = vpop.permute.xlu0 %1221
        %v1223 = vsel %vm770, %v1216, %v1218
        %v1224 = vsel %vm770, %v1218, %v1220
        %v1225 = vsel %vm770, %v1220, %v1222
        %1229 = vst [vmem:[#allocation4 + $0x90] sm:$0xff] %v1223
        %1230 = vst [vmem:[#allocation4 + $0x98] sm:$0xff] %v1224
        %1231 = vst [vmem:[#allocation4 + $0xa0] sm:$0xff] %v1225
        %v1232 = vld [vmem:[#allocation3] sm:$0xff]
        %v1233 = vld [vmem:[#allocation3 + $0x8] sm:$0xff]
        %v1234 = vld [vmem:[#allocation3 + $0x10] sm:$0xff]
        %v1235 = vld [vmem:[#allocation3 + $0x18] sm:$0xff]
        %1240 = vrot.lane.b32.xlu0 %v1232, 85
        %v1241 = vpop.permute.xlu0 %1240
        %1242 = vrot.lane.b32.xlu0 %v1233, 85
        %v1243 = vpop.permute.xlu0 %1242
        %1244 = vrot.lane.b32.xlu0 %v1234, 85
        %v1245 = vpop.permute.xlu0 %1244
        %1246 = vrot.lane.b32.xlu0 %v1235, 85
        %v1247 = vpop.permute.xlu0 %1246
        %v1248 = vsel %vm820, %v1241, %v1243
        %v1249 = vsel %vm820, %v1243, %v1245
        %v1250 = vsel %vm820, %v1245, %v1247
        %1254 = vst [vmem:[#allocation4 + $0xa8] sm:$0xff] %v1248
        %1255 = vst [vmem:[#allocation4 + $0xb0] sm:$0xff] %v1249
        %1256 = vst [vmem:[#allocation4 + $0xb8] sm:$0xff] %v1250
        %v1257 = vld [vmem:[#allocation3] sm:$0xff]
        %v1258 = vld [vmem:[#allocation3 + $0x8] sm:$0xff]
        %v1259 = vld [vmem:[#allocation3 + $0x10] sm:$0xff]
        %v1260 = vld [vmem:[#allocation3 + $0x18] sm:$0xff]
        %1265 = vrot.lane.b32.xlu0 %v1257, 84
        %v1266 = vpop.permute.xlu0 %1265
        %1267 = vrot.lane.b32.xlu0 %v1258, 84
        %v1268 = vpop.permute.xlu0 %1267
        %1269 = vrot.lane.b32.xlu0 %v1259, 84
        %v1270 = vpop.permute.xlu0 %1269
        %1271 = vrot.lane.b32.xlu0 %v1260, 84
        %v1272 = vpop.permute.xlu0 %1271
        %v1273 = vsel %vm870, %v1266, %v1268
        %v1274 = vsel %vm870, %v1268, %v1270
        %v1275 = vsel %vm870, %v1270, %v1272
        %1279 = vst [vmem:[#allocation4 + $0xc0] sm:$0xff] %v1273
        %1280 = vst [vmem:[#allocation4 + $0xc8] sm:$0xff] %v1274
        %1281 = vst [vmem:[#allocation4 + $0xd0] sm:$0xff] %v1275
        %v1282 = vld [vmem:[#allocation10] sm:$0xff]
        %v1283 = vld [vmem:[#allocation4] sm:$0xff]
        %v1284 = vld [vmem:[#allocation4 + $0x8] sm:$0xff]
        %v1285 = vld [vmem:[#allocation4 + $0x10] sm:$0xff]
        %v1286 = vld [vmem:[#allocation4 + $0x18] sm:$0xff]
        %v1287 = vld [vmem:[#allocation4 + $0x20] sm:$0xff]
        %v1288 = vld [vmem:[#allocation4 + $0x28] sm:$0xff]
        %v1289 = vld [vmem:[#allocation4 + $0x30] sm:$0xff]
        %v1290 = vld [vmem:[#allocation4 + $0x38] sm:$0xff]
        %v1291 = vld [vmem:[#allocation4 + $0x40] sm:$0xff]
        %v1292 = vld [vmem:[#allocation4 + $0x48] sm:$0xff]
        %v1293 = vld [vmem:[#allocation4 + $0x50] sm:$0xff]
        %v1294 = vld [vmem:[#allocation4 + $0x58] sm:$0xff]
        %v1295 = vld [vmem:[#allocation4 + $0x60] sm:$0xff]
        %v1296 = vld [vmem:[#allocation4 + $0x68] sm:$0xff]
        %v1297 = vld [vmem:[#allocation4 + $0x70] sm:$0xff]
        %v1298 = vld [vmem:[#allocation4 + $0x78] sm:$0xff]
        %v1299 = vld [vmem:[#allocation4 + $0x80] sm:$0xff]
        %v1300 = vld [vmem:[#allocation4 + $0x88] sm:$0xff]
        %v1301 = vld [vmem:[#allocation4 + $0x90] sm:$0xff]
        %v1302 = vld [vmem:[#allocation4 + $0x98] sm:$0xff]
        %v1303 = vld [vmem:[#allocation4 + $0xa0] sm:$0xff]
        %v1304 = vld [vmem:[#allocation4 + $0xa8] sm:$0xff]
        %v1305 = vld [vmem:[#allocation4 + $0xb0] sm:$0xff]
        %v1306 = vld [vmem:[#allocation4 + $0xb8] sm:$0xff]
        %v1307 = vld [vmem:[#allocation4 + $0xc0] sm:$0xff]
        %v1308 = vld [vmem:[#allocation4 + $0xc8] sm:$0xff]
        %v1309 = vld [vmem:[#allocation4 + $0xd0] sm:$0xff]
        %v1311 = vunpack.c.l.b16 %v1282
        %v1312 = vunpack.c.h.b16 %v1282
        %v1313 = vpack.c.b16 %v1311, %v1311
        %v1314 = vpack.c.b16 %v1312, %v1312
        %v1317 = vsel %vm930, %v1314, 0
        %1319 = vmatprep.subr.bf16.mxu0 %v1284
        %1320 = vmatpush1.bf16.msra.mxu0 %v1283
        %1321 = vmatprep.subr.bf16.mxu0 %v1287
        %1322 = vmatpush1.bf16.msra.mxu0 %v1286
        %1323 = vmatprep.subr.bf16.mxu0 %v1290
        %1324 = vmatpush1.bf16.msra.mxu0 %v1289
        %1325 = vmatprep.subr.bf16.mxu0 %v1293
        %1326 = vmatpush1.bf16.msra.mxu0 %v1292
        %1327 = vmatprep.subr.bf16.mxu0 %v1296
        %1328 = vmatpush1.bf16.msra.mxu0 %v1295
        %1329 = vmatprep.subr.bf16.mxu0 %v1299
        %1330 = vmatpush1.bf16.msra.mxu0 %v1298
        %1331 = vmatprep.subr.bf16.mxu0 %v1302
        %1332 = vmatpush1.bf16.msra.mxu0 %v1301
        %1333 = vmatprep.subr.bf16.mxu0 %v1305
        %1334 = vmatpush1.bf16.msra.mxu0 %v1304
        %1335 = vmatprep.subr.bf16.mxu0 %v1308
        %1336 = vmatpush1.bf16.msra.mxu0 %v1307
        %1337 = vmatprep.subr.bf16.mxu0 0
        %1338 = vmatpush1.bf16.msra.mxu0 0
        %1339 = vmatprep.subr.bf16.mxu0 0
        %1340 = vmatpush1.bf16.msra.mxu0 0
        %1341 = vmatprep.subr.bf16.mxu0 0
        %1342 = vmatpush1.bf16.msra.mxu0 0
        %1343 = vmatprep.subr.bf16.mxu0 0
        %1344 = vmatpush1.bf16.msra.mxu0 0
        %1345 = vmatprep.subr.bf16.mxu0 0
        %1346 = vmatpush1.bf16.msra.mxu0 0
        %1347 = vmatprep.subr.bf16.mxu0 0
        %1348 = vmatpush1.bf16.msra.mxu0 0
        %1349 = vmatprep.subr.bf16.mxu0 0
        %1350 = vmatpush1.bf16.msra.mxu0 0
        %1351 = vmatprep.mubr.bf16.mxu0 %v1317
        %1352 = vmatmul.mubr.bf16.gmra.mrb[0].mxu0 %v1313
        %v1353 = vpop.f32.mrb[0].mxu0
        %v1354 = vadd.f32 0.0, %v1353
        %v1355 = vpop.f32.mrb[0].mxu0
        %v1356 = vadd.f32 0.0, %v1355
        %v1357 = vpop.f32.mrb[0].mxu0
        %v1358 = vpop.f32.mrb[0].mxu0
        %1359 = vdwg.mxu0
        %1360 = vmatprep.subr.bf16.mxu0 0
        %1361 = vmatpush1.bf16.msra.mxu0 %v1285
        %1362 = vmatprep.subr.bf16.mxu0 0
        %1363 = vmatpush1.bf16.msra.mxu0 %v1288
        %1364 = vmatprep.subr.bf16.mxu0 0
        %1365 = vmatpush1.bf16.msra.mxu0 %v1291
        %1366 = vmatprep.subr.bf16.mxu0 0
        %1367 = vmatpush1.bf16.msra.mxu0 %v1294
        %1368 = vmatprep.subr.bf16.mxu0 0
        %1369 = vmatpush1.bf16.msra.mxu0 %v1297
        %1370 = vmatprep.subr.bf16.mxu0 0
        %1371 = vmatpush1.bf16.msra.mxu0 %v1300
        %1372 = vmatprep.subr.bf16.mxu0 0
        %1373 = vmatpush1.bf16.msra.mxu0 %v1303
        %1374 = vmatprep.subr.bf16.mxu0 0
        %1375 = vmatpush1.bf16.msra.mxu0 %v1306
        %1376 = vmatprep.subr.bf16.mxu0 0
        %1377 = vmatpush1.bf16.msra.mxu0 %v1309
        %1378 = vmatprep.subr.bf16.mxu0 0
        %1379 = vmatpush1.bf16.msra.mxu0 0
        %1380 = vmatprep.subr.bf16.mxu0 0
        %1381 = vmatpush1.bf16.msra.mxu0 0
        %1382 = vmatprep.subr.bf16.mxu0 0
        %1383 = vmatpush1.bf16.msra.mxu0 0
        %1384 = vmatprep.subr.bf16.mxu0 0
        %1385 = vmatpush1.bf16.msra.mxu0 0
        %1386 = vmatprep.subr.bf16.mxu0 0
        %1387 = vmatpush1.bf16.msra.mxu0 0
        %1388 = vmatprep.subr.bf16.mxu0 0
        %1389 = vmatpush1.bf16.msra.mxu0 0
        %1390 = vmatprep.subr.bf16.mxu0 0
        %1391 = vmatpush1.bf16.msra.mxu0 0
        %1392 = vmatprep.mubr.bf16.mxu0 %v1317
        %1393 = vmatmul.mubr.bf16.gmra.mrb[0].mxu0 %v1313
        %v1394 = vpop.f32.mrb[0].mxu0
        %v1395 = vadd.f32 0.0, %v1394
        %v1396 = vpop.f32.mrb[0].mxu0
        %v1397 = vpop.f32.mrb[0].mxu0
        %v1398 = vpop.f32.mrb[0].mxu0
        %1399 = vdwg.mxu0
        %v1400 = vld [vmem:[%s5] sm:$0xff]
        %1402 = vset.pattern.permute.xlu0 0
        %1403 = vperm.xlu0 %1402, %v1400
        %v1404 = vpop.permute.xlu0 %1403
        %v1406 = vmul.f32 %v1354, %v1404
        %v1407 = vmul.f32 %v1356, %v1404
        %v1408 = vmul.f32 %v1395, %v1404
        %v1409 = vld [vmem:[%s6] sm:$0xff]
        %1411 = vset.pattern.permute.xlu0 0
        %1412 = vperm.xlu0 %1411, %v1409
        %v1413 = vpop.permute.xlu0 %1412
        %v1415 = vadd.f32 %v1406, %v1413
        %v1416 = vadd.f32 %v1407, %v1413
        %v1417 = vadd.f32 %v1408, %v1413
        %v1418 = vmax.f32 %v1415, 0.0
        %v1419 = vmax.f32 %v1416, 0.0
        %v1420 = vmax.f32 %v1417, 0.0
        %1421 = vst [vmem:[#allocation5] sm:$0xff] %v1418
        %1422 = vst [vmem:[#allocation5 + $0x8] sm:$0xff] %v1419
        %1423 = vst [vmem:[#allocation5 + $0x10] sm:$0xff] %v1420
        %v1424 = vld [vmem:[#allocation5] ss:$8 sm:$0x7]
        %v1426 = vlaneseq
        %v1427 = vshrl.u32 %v1426, 7
        %v1428 = vsub.s32 0, %v1427
        %v1429 = vrot.slane %v1424, %v1428
        %v1430 = vlaneseq
        %v1431 = vshrl.u32 %v1430, 7
        %v1432 = vsub.s32 1, %v1431
        %v1433 = vrot.slane %v1424, %v1432
        %v1434 = vlaneseq
        %v1435 = vshrl.u32 %v1434, 7
        %v1436 = vsub.s32 2, %v1435
        %v1437 = vrot.slane %v1424, %v1436
        %v1441 = vpack.c.bf16 %v1429, %v1429
        %v1442 = vpack.c.bf16 %v1433, %v1433
        %v1443 = vpack.c.bf16 %v1437, %v1437
        %v1447 = vcombine.low %v1441, %v1442
        %v1449 = vunpack.c.l.s4 1966171168
        %v1450 = vunpack.c.0.s8 %v1449
        %v1451 = vlaneseq
        %v1452 = vshrl.u32 %v1451, 7
        %v1453 = vsub.s32 %v1450, %v1452
        %v1454 = vrot.slane %v1447, %v1453
        %v1456 = vunpack.c.l.s4 1966171168
        %v1457 = vunpack.c.0.s8 %v1456
        %v1458 = vlaneseq
        %v1459 = vshrl.u32 %v1458, 7
        %v1460 = vsub.s32 %v1457, %v1459
        %v1461 = vrot.slane %v1443, %v1460
        %v1462 = vcombine.low %v1454, %v1461
        %v1464 = vunpack.c.l.s4 1966171168
        %v1465 = vunpack.c.0.s8 %v1464
        %v1466 = vlaneseq
        %v1467 = vshrl.u32 %v1466, 7
        %v1468 = vsub.s32 %v1465, %v1467
        %v1469 = vrot.slane %v1462, %v1468
        %vm1471 = vcmask 1040384
        %vm1472 = vsmask.f32 256
        %vm1473 = vmand %vm1471, %vm1472
        %vm1474 = vcmask 1041409
        %vm1475 = vsmask.f32 1280
        %vm1476 = vmand %vm1474, %vm1475
        %vm1477 = vmor %vm1476, %vm1473
        %vm1478 = vcmask 1042434
        %vm1479 = vsmask.f32 2304
        %vm1480 = vmand %vm1478, %vm1479
        %vm1481 = vmor %vm1480, %vm1477
        %v1482 = vld [vmem:[#allocation6] sm:$0x7]
        %v1483 = vsel %vm1481, %v1469, %v1482
        %1484 = vst [vmem:[#allocation6] sm:$0x7] %v1483
        %s1485 = scalar_lea.vmem [#allocation5], 1
        %v1486 = vld [vmem:[%s1485] ss:$8 sm:$0x7]
        %v1488 = vlaneseq
        %v1489 = vshrl.u32 %v1488, 7
        %v1490 = vsub.s32 0, %v1489
        %v1491 = vrot.slane %v1486, %v1490
        %v1492 = vlaneseq
        %v1493 = vshrl.u32 %v1492, 7
        %v1494 = vsub.s32 1, %v1493
        %v1495 = vrot.slane %v1486, %v1494
        %v1496 = vlaneseq
        %v1497 = vshrl.u32 %v1496, 7
        %v1498 = vsub.s32 2, %v1497
        %v1499 = vrot.slane %v1486, %v1498
        %v1503 = vpack.c.bf16 %v1491, %v1491
        %v1504 = vpack.c.bf16 %v1495, %v1495
        %v1505 = vpack.c.bf16 %v1499, %v1499
        %v1509 = vcombine.low %v1503, %v1504
        %v1511 = vunpack.c.l.s4 1966171168
        %v1512 = vunpack.c.0.s8 %v1511
        %v1513 = vlaneseq
        %v1514 = vshrl.u32 %v1513, 7
        %v1515 = vsub.s32 %v1512, %v1514
        %v1516 = vrot.slane %v1509, %v1515
        %v1518 = vunpack.c.l.s4 1966171168
        %v1519 = vunpack.c.0.s8 %v1518
        %v1520 = vlaneseq
        %v1521 = vshrl.u32 %v1520, 7
        %v1522 = vsub.s32 %v1519, %v1521
        %v1523 = vrot.slane %v1505, %v1522
        %v1524 = vcombine.low %v1516, %v1523
        %v1526 = vunpack.c.l.s4 1966171168
        %v1527 = vunpack.c.0.s8 %v1526
        %v1528 = vlaneseq
        %v1529 = vshrl.u32 %v1528, 7
        %v1530 = vsub.s32 %v1527, %v1529
        %v1531 = vrot.slane %v1524, %v1530
        %v1533 = vld [vmem:[#allocation6 + $0x3] sm:$0x7]
        %v1534 = vsel %vm1481, %v1531, %v1533
        %1535 = vst [vmem:[#allocation6 + $0x3] sm:$0x7] %v1534
        %s1536 = scalar_lea.vmem [#allocation5], 2
        %v1537 = vld [vmem:[%s1536] ss:$8 sm:$0x7]
        %v1539 = vlaneseq
        %v1540 = vshrl.u32 %v1539, 7
        %v1541 = vsub.s32 0, %v1540
        %v1542 = vrot.slane %v1537, %v1541
        %v1543 = vlaneseq
        %v1544 = vshrl.u32 %v1543, 7
        %v1545 = vsub.s32 1, %v1544
        %v1546 = vrot.slane %v1537, %v1545
        %v1547 = vlaneseq
        %v1548 = vshrl.u32 %v1547, 7
        %v1549 = vsub.s32 2, %v1548
        %v1550 = vrot.slane %v1537, %v1549
        %v1554 = vpack.c.bf16 %v1542, %v1542
        %v1555 = vpack.c.bf16 %v1546, %v1546
        %v1556 = vpack.c.bf16 %v1550, %v1550
        %v1560 = vcombine.low %v1554, %v1555
        %v1562 = vunpack.c.l.s4 1966171168
        %v1563 = vunpack.c.0.s8 %v1562
        %v1564 = vlaneseq
        %v1565 = vshrl.u32 %v1564, 7
        %v1566 = vsub.s32 %v1563, %v1565
        %v1567 = vrot.slane %v1560, %v1566
        %v1569 = vunpack.c.l.s4 1966171168
        %v1570 = vunpack.c.0.s8 %v1569
        %v1571 = vlaneseq
        %v1572 = vshrl.u32 %v1571, 7
        %v1573 = vsub.s32 %v1570, %v1572
        %v1574 = vrot.slane %v1556, %v1573
        %v1575 = vcombine.low %v1567, %v1574
        %v1577 = vunpack.c.l.s4 1966171168
        %v1578 = vunpack.c.0.s8 %v1577
        %v1579 = vlaneseq
        %v1580 = vshrl.u32 %v1579, 7
        %v1581 = vsub.s32 %v1578, %v1580
        %v1582 = vrot.slane %v1575, %v1581
        %v1584 = vld [vmem:[#allocation6 + $0x6] sm:$0x7]
        %v1585 = vsel %vm1481, %v1582, %v1584
        %1586 = vst [vmem:[#allocation6 + $0x6] sm:$0x7] %v1585
        %s1587 = scalar_lea.vmem [#allocation5], 3
        %v1588 = vld [vmem:[%s1587] ss:$8 sm:$0x7]
        %v1590 = vlaneseq
        %v1591 = vshrl.u32 %v1590, 7
        %v1592 = vsub.s32 0, %v1591
        %v1593 = vrot.slane %v1588, %v1592
        %v1594 = vlaneseq
        %v1595 = vshrl.u32 %v1594, 7
        %v1596 = vsub.s32 1, %v1595
        %v1597 = vrot.slane %v1588, %v1596
        %v1598 = vlaneseq
        %v1599 = vshrl.u32 %v1598, 7
        %v1600 = vsub.s32 2, %v1599
        %v1601 = vrot.slane %v1588, %v1600
        %v1605 = vpack.c.bf16 %v1593, %v1593
        %v1606 = vpack.c.bf16 %v1597, %v1597
        %v1607 = vpack.c.bf16 %v1601, %v1601
        %v1611 = vcombine.low %v1605, %v1606
        %v1613 = vunpack.c.l.s4 1966171168
        %v1614 = vunpack.c.0.s8 %v1613
        %v1615 = vlaneseq
        %v1616 = vshrl.u32 %v1615, 7
        %v1617 = vsub.s32 %v1614, %v1616
        %v1618 = vrot.slane %v1611, %v1617
        %v1620 = vunpack.c.l.s4 1966171168
        %v1621 = vunpack.c.0.s8 %v1620
        %v1622 = vlaneseq
        %v1623 = vshrl.u32 %v1622, 7
        %v1624 = vsub.s32 %v1621, %v1623
        %v1625 = vrot.slane %v1607, %v1624
        %v1626 = vcombine.low %v1618, %v1625
        %v1628 = vunpack.c.l.s4 1966171168
        %v1629 = vunpack.c.0.s8 %v1628
        %v1630 = vlaneseq
        %v1631 = vshrl.u32 %v1630, 7
        %v1632 = vsub.s32 %v1629, %v1631
        %v1633 = vrot.slane %v1626, %v1632
        %v1635 = vld [vmem:[#allocation6 + $0x9] sm:$0x7]
        %v1636 = vsel %vm1481, %v1633, %v1635
        %1637 = vst [vmem:[#allocation6 + $0x9] sm:$0x7] %v1636
        %s1638 = scalar_lea.vmem [#allocation5], 4
        %v1639 = vld [vmem:[%s1638] ss:$8 sm:$0x7]
        %v1641 = vlaneseq
        %v1642 = vshrl.u32 %v1641, 7
        %v1643 = vsub.s32 0, %v1642
        %v1644 = vrot.slane %v1639, %v1643
        %v1645 = vlaneseq
        %v1646 = vshrl.u32 %v1645, 7
        %v1647 = vsub.s32 1, %v1646
        %v1648 = vrot.slane %v1639, %v1647
        %v1649 = vlaneseq
        %v1650 = vshrl.u32 %v1649, 7
        %v1651 = vsub.s32 2, %v1650
        %v1652 = vrot.slane %v1639, %v1651
        %v1656 = vpack.c.bf16 %v1644, %v1644
        %v1657 = vpack.c.bf16 %v1648, %v1648
        %v1658 = vpack.c.bf16 %v1652, %v1652
        %v1662 = vcombine.low %v1656, %v1657
        %v1664 = vunpack.c.l.s4 1966171168
        %v1665 = vunpack.c.0.s8 %v1664
        %v1666 = vlaneseq
        %v1667 = vshrl.u32 %v1666, 7
        %v1668 = vsub.s32 %v1665, %v1667
        %v1669 = vrot.slane %v1662, %v1668
        %v1671 = vunpack.c.l.s4 1966171168
        %v1672 = vunpack.c.0.s8 %v1671
        %v1673 = vlaneseq
        %v1674 = vshrl.u32 %v1673, 7
        %v1675 = vsub.s32 %v1672, %v1674
        %v1676 = vrot.slane %v1658, %v1675
        %v1677 = vcombine.low %v1669, %v1676
        %v1679 = vunpack.c.l.s4 1966171168
        %v1680 = vunpack.c.0.s8 %v1679
        %v1681 = vlaneseq
        %v1682 = vshrl.u32 %v1681, 7
        %v1683 = vsub.s32 %v1680, %v1682
        %v1684 = vrot.slane %v1677, %v1683
        %v1686 = vld [vmem:[#allocation6 + $0xc] sm:$0x7]
        %v1687 = vsel %vm1481, %v1684, %v1686
        %1688 = vst [vmem:[#allocation6 + $0xc] sm:$0x7] %v1687
        %s1689 = scalar_lea.vmem [#allocation5], 5
        %v1690 = vld [vmem:[%s1689] ss:$8 sm:$0x7]
        %v1692 = vlaneseq
        %v1693 = vshrl.u32 %v1692, 7
        %v1694 = vsub.s32 0, %v1693
        %v1695 = vrot.slane %v1690, %v1694
        %v1696 = vlaneseq
        %v1697 = vshrl.u32 %v1696, 7
        %v1698 = vsub.s32 1, %v1697
        %v1699 = vrot.slane %v1690, %v1698
        %v1700 = vlaneseq
        %v1701 = vshrl.u32 %v1700, 7
        %v1702 = vsub.s32 2, %v1701
        %v1703 = vrot.slane %v1690, %v1702
        %v1707 = vpack.c.bf16 %v1695, %v1695
        %v1708 = vpack.c.bf16 %v1699, %v1699
        %v1709 = vpack.c.bf16 %v1703, %v1703
        %v1713 = vcombine.low %v1707, %v1708
        %v1715 = vunpack.c.l.s4 1966171168
        %v1716 = vunpack.c.0.s8 %v1715
        %v1717 = vlaneseq
        %v1718 = vshrl.u32 %v1717, 7
        %v1719 = vsub.s32 %v1716, %v1718
        %v1720 = vrot.slane %v1713, %v1719
        %v1722 = vunpack.c.l.s4 1966171168
        %v1723 = vunpack.c.0.s8 %v1722
        %v1724 = vlaneseq
        %v1725 = vshrl.u32 %v1724, 7
        %v1726 = vsub.s32 %v1723, %v1725
        %v1727 = vrot.slane %v1709, %v1726
        %v1728 = vcombine.low %v1720, %v1727
        %v1730 = vunpack.c.l.s4 1966171168
        %v1731 = vunpack.c.0.s8 %v1730
        %v1732 = vlaneseq
        %v1733 = vshrl.u32 %v1732, 7
        %v1734 = vsub.s32 %v1731, %v1733
        %v1735 = vrot.slane %v1728, %v1734
        %v1737 = vld [vmem:[#allocation6 + $0xf] sm:$0x7]
        %v1738 = vsel %vm1481, %v1735, %v1737
        %1739 = vst [vmem:[#allocation6 + $0xf] sm:$0x7] %v1738
        %s1740 = scalar_lea.vmem [#allocation5], 6
        %v1741 = vld [vmem:[%s1740] ss:$8 sm:$0x7]
        %v1743 = vlaneseq
        %v1744 = vshrl.u32 %v1743, 7
        %v1745 = vsub.s32 0, %v1744
        %v1746 = vrot.slane %v1741, %v1745
        %v1747 = vlaneseq
        %v1748 = vshrl.u32 %v1747, 7
        %v1749 = vsub.s32 1, %v1748
        %v1750 = vrot.slane %v1741, %v1749
        %v1751 = vlaneseq
        %v1752 = vshrl.u32 %v1751, 7
        %v1753 = vsub.s32 2, %v1752
        %v1754 = vrot.slane %v1741, %v1753
        %v1758 = vpack.c.bf16 %v1746, %v1746
        %v1759 = vpack.c.bf16 %v1750, %v1750
        %v1760 = vpack.c.bf16 %v1754, %v1754
        %v1764 = vcombine.low %v1758, %v1759
        %v1766 = vunpack.c.l.s4 1966171168
        %v1767 = vunpack.c.0.s8 %v1766
        %v1768 = vlaneseq
        %v1769 = vshrl.u32 %v1768, 7
        %v1770 = vsub.s32 %v1767, %v1769
        %v1771 = vrot.slane %v1764, %v1770
        %v1773 = vunpack.c.l.s4 1966171168
        %v1774 = vunpack.c.0.s8 %v1773
        %v1775 = vlaneseq
        %v1776 = vshrl.u32 %v1775, 7
        %v1777 = vsub.s32 %v1774, %v1776
        %v1778 = vrot.slane %v1760, %v1777
        %v1779 = vcombine.low %v1771, %v1778
        %v1781 = vunpack.c.l.s4 1966171168
        %v1782 = vunpack.c.0.s8 %v1781
        %v1783 = vlaneseq
        %v1784 = vshrl.u32 %v1783, 7
        %v1785 = vsub.s32 %v1782, %v1784
        %v1786 = vrot.slane %v1779, %v1785
        %v1788 = vld [vmem:[#allocation6 + $0x12] sm:$0x7]
        %v1789 = vsel %vm1481, %v1786, %v1788
        %1790 = vst [vmem:[#allocation6 + $0x12] sm:$0x7] %v1789
        %s1791 = scalar_lea.vmem [#allocation5], 7
        %v1792 = vld [vmem:[%s1791] ss:$8 sm:$0x7]
        %v1794 = vlaneseq
        %v1795 = vshrl.u32 %v1794, 7
        %v1796 = vsub.s32 0, %v1795
        %v1797 = vrot.slane %v1792, %v1796
        %v1798 = vlaneseq
        %v1799 = vshrl.u32 %v1798, 7
        %v1800 = vsub.s32 1, %v1799
        %v1801 = vrot.slane %v1792, %v1800
        %v1802 = vlaneseq
        %v1803 = vshrl.u32 %v1802, 7
        %v1804 = vsub.s32 2, %v1803
        %v1805 = vrot.slane %v1792, %v1804
        %v1809 = vpack.c.bf16 %v1797, %v1797
        %v1810 = vpack.c.bf16 %v1801, %v1801
        %v1811 = vpack.c.bf16 %v1805, %v1805
        %v1815 = vcombine.low %v1809, %v1810
        %v1817 = vunpack.c.l.s4 1966171168
        %v1818 = vunpack.c.0.s8 %v1817
        %v1819 = vlaneseq
        %v1820 = vshrl.u32 %v1819, 7
        %v1821 = vsub.s32 %v1818, %v1820
        %v1822 = vrot.slane %v1815, %v1821
        %v1824 = vunpack.c.l.s4 1966171168
        %v1825 = vunpack.c.0.s8 %v1824
        %v1826 = vlaneseq
        %v1827 = vshrl.u32 %v1826, 7
        %v1828 = vsub.s32 %v1825, %v1827
        %v1829 = vrot.slane %v1811, %v1828
        %v1830 = vcombine.low %v1822, %v1829
        %v1832 = vunpack.c.l.s4 1966171168
        %v1833 = vunpack.c.0.s8 %v1832
        %v1834 = vlaneseq
        %v1835 = vshrl.u32 %v1834, 7
        %v1836 = vsub.s32 %v1833, %v1835
        %v1837 = vrot.slane %v1830, %v1836
        %v1839 = vld [vmem:[#allocation6 + $0x15] sm:$0x7]
        %v1840 = vsel %vm1481, %v1837, %v1839
        %1841 = vst [vmem:[#allocation6 + $0x15] sm:$0x7] %v1840
        %v1842 = vld [vmem:[#allocation6] sm:$0xff]
        %v1843 = vld [vmem:[#allocation6 + $0x8] sm:$0xff]
        %v1844 = vld [vmem:[#allocation6 + $0x10] sm:$0xff]
        %v1845 = vld [vmem:[#allocation12] sm:$0xff]
        %v1846 = vld [vmem:[#allocation12 + $0x8] sm:$0xff]
        %v1847 = vld [vmem:[#allocation12 + $0x10] sm:$0xff]
        %v1848 = vld [vmem:[#allocation12 + $0x18] sm:$0xff]
        %v1849 = vld [vmem:[#allocation12 + $0x20] sm:$0xff]
        %v1850 = vld [vmem:[#allocation12 + $0x28] sm:$0xff]
        %v1851 = vld [vmem:[#allocation12 + $0x30] sm:$0xff]
        %v1852 = vld [vmem:[#allocation12 + $0x38] sm:$0xff]
        %v1853 = vld [vmem:[#allocation12 + $0x40] sm:$0xff]
        %v1854 = vld [vmem:[#allocation12 + $0x48] sm:$0xff]
        %v1855 = vld [vmem:[#allocation12 + $0x50] sm:$0xff]
        %v1856 = vld [vmem:[#allocation12 + $0x58] sm:$0xff]
        %v1857 = vld [vmem:[#allocation12 + $0x60] sm:$0xff]
        %v1858 = vld [vmem:[#allocation12 + $0x68] sm:$0xff]
        %v1859 = vld [vmem:[#allocation12 + $0x70] sm:$0xff]
        %v1860 = vld [vmem:[#allocation12 + $0x78] sm:$0xff]
        %v1861 = vld [vmem:[#allocation12 + $0x80] sm:$0xff]
        %v1862 = vld [vmem:[#allocation12 + $0x88] sm:$0xff]
        %v1863 = vld [vmem:[#allocation12 + $0x90] sm:$0xff]
        %v1864 = vld [vmem:[#allocation12 + $0x98] sm:$0xff]
        %v1865 = vld [vmem:[#allocation12 + $0xa0] sm:$0xff]
        %v1866 = vld [vmem:[#allocation12 + $0xa8] sm:$0xff]
        %v1867 = vld [vmem:[#allocation12 + $0xb0] sm:$0xff]
        %v1868 = vld [vmem:[#allocation12 + $0xb8] sm:$0xff]
        %v1869 = vld [vmem:[#allocation12 + $0xc0] sm:$0xff]
        %v1870 = vld [vmem:[#allocation12 + $0xc8] sm:$0xff]
        %v1871 = vld [vmem:[#allocation12 + $0xd0] sm:$0xff]
        %v1872 = vld [vmem:[#allocation12 + $0xd8] sm:$0xff]
        %v1873 = vld [vmem:[#allocation12 + $0xe0] sm:$0xff]
        %v1874 = vld [vmem:[#allocation12 + $0xe8] sm:$0xff]
        %v1875 = vld [vmem:[#allocation12 + $0xf0] sm:$0xff]
        %v1876 = vld [vmem:[#allocation12 + $0xf8] sm:$0xff]
        %v1877 = vld [vmem:[#allocation12 + $0x100] sm:$0xff]
        %v1878 = vld [vmem:[#allocation12 + $0x108] sm:$0xff]
        %v1879 = vld [vmem:[#allocation12 + $0x110] sm:$0xff]
        %v1880 = vld [vmem:[#allocation12 + $0x118] sm:$0xff]
        %v1881 = vld [vmem:[#allocation12 + $0x120] sm:$0xff]
        %v1882 = vld [vmem:[#allocation12 + $0x128] sm:$0xff]
        %v1883 = vld [vmem:[#allocation12 + $0x130] sm:$0xff]
        %v1884 = vld [vmem:[#allocation12 + $0x138] sm:$0xff]
        %v1885 = vld [vmem:[#allocation12 + $0x140] sm:$0xff]
        %v1886 = vld [vmem:[#allocation12 + $0x148] sm:$0xff]
        %v1887 = vld [vmem:[#allocation12 + $0x150] sm:$0xff]
        %v1888 = vld [vmem:[#allocation12 + $0x158] sm:$0xff]
        %v1889 = vld [vmem:[#allocation12 + $0x160] sm:$0xff]
        %v1890 = vld [vmem:[#allocation12 + $0x168] sm:$0xff]
        %v1891 = vld [vmem:[#allocation12 + $0x170] sm:$0xff]
        %v1892 = vld [vmem:[#allocation12 + $0x178] sm:$0xff]
        %v1893 = vld [vmem:[#allocation12 + $0x180] sm:$0xff]
        %v1894 = vld [vmem:[#allocation12 + $0x188] sm:$0xff]
        %v1895 = vld [vmem:[#allocation12 + $0x190] sm:$0xff]
        %v1896 = vld [vmem:[#allocation12 + $0x198] sm:$0xff]
        %v1897 = vld [vmem:[#allocation12 + $0x1a0] sm:$0xff]
        %v1898 = vld [vmem:[#allocation12 + $0x1a8] sm:$0xff]
        %v1899 = vld [vmem:[#allocation12 + $0x1b0] sm:$0xff]
        %v1900 = vld [vmem:[#allocation12 + $0x1b8] sm:$0xff]
        %v1901 = vld [vmem:[#allocation12 + $0x1c0] sm:$0xff]
        %v1902 = vld [vmem:[#allocation12 + $0x1c8] sm:$0xff]
        %v1903 = vld [vmem:[#allocation12 + $0x1d0] sm:$0xff]
        %v1904 = vld [vmem:[#allocation12 + $0x1d8] sm:$0xff]
        %v1905 = vld [vmem:[#allocation12 + $0x1e0] sm:$0xff]
        %v1906 = vld [vmem:[#allocation12 + $0x1e8] sm:$0xff]
        %v1907 = vld [vmem:[#allocation12 + $0x1f0] sm:$0xff]
        %v1908 = vld [vmem:[#allocation12 + $0x1f8] sm:$0xff]
        %v1909 = vld [vmem:[#allocation12 + $0x200] sm:$0xff]
        %v1910 = vld [vmem:[#allocation12 + $0x208] sm:$0xff]
        %v1911 = vld [vmem:[#allocation12 + $0x210] sm:$0xff]
        %v1912 = vld [vmem:[#allocation12 + $0x218] sm:$0xff]
        %v1913 = vld [vmem:[#allocation12 + $0x220] sm:$0xff]
        %v1914 = vld [vmem:[#allocation12 + $0x228] sm:$0xff]
        %v1915 = vld [vmem:[#allocation12 + $0x230] sm:$0xff]
        %v1916 = vld [vmem:[#allocation12 + $0x238] sm:$0xff]
        %v1917 = vld [vmem:[#allocation12 + $0x240] sm:$0xff]
        %v1918 = vld [vmem:[#allocation12 + $0x248] sm:$0xff]
        %v1919 = vld [vmem:[#allocation12 + $0x250] sm:$0xff]
        %v1920 = vld [vmem:[#allocation12 + $0x258] sm:$0xff]
        %v1921 = vld [vmem:[#allocation12 + $0x260] sm:$0xff]
        %v1922 = vld [vmem:[#allocation12 + $0x268] sm:$0xff]
        %v1923 = vld [vmem:[#allocation12 + $0x270] sm:$0xff]
        %v1924 = vld [vmem:[#allocation12 + $0x278] sm:$0xff]
        %v1925 = vld [vmem:[#allocation12 + $0x280] sm:$0xff]
        %v1926 = vld [vmem:[#allocation12 + $0x288] sm:$0xff]
        %v1927 = vld [vmem:[#allocation12 + $0x290] sm:$0xff]
        %v1928 = vld [vmem:[#allocation12 + $0x298] sm:$0xff]
        %v1929 = vld [vmem:[#allocation12 + $0x2a0] sm:$0xff]
        %v1930 = vld [vmem:[#allocation12 + $0x2a8] sm:$0xff]
        %v1931 = vld [vmem:[#allocation12 + $0x2b0] sm:$0xff]
        %v1932 = vld [vmem:[#allocation12 + $0x2b8] sm:$0xff]
        %v1933 = vld [vmem:[#allocation12 + $0x2c0] sm:$0xff]
        %v1934 = vld [vmem:[#allocation12 + $0x2c8] sm:$0xff]
        %v1935 = vld [vmem:[#allocation12 + $0x2d0] sm:$0xff]
        %v1936 = vld [vmem:[#allocation12 + $0x2d8] sm:$0xff]
        %v1937 = vld [vmem:[#allocation12 + $0x2e0] sm:$0xff]
        %v1938 = vld [vmem:[#allocation12 + $0x2e8] sm:$0xff]
        %v1939 = vld [vmem:[#allocation12 + $0x2f0] sm:$0xff]
        %v1940 = vld [vmem:[#allocation12 + $0x2f8] sm:$0xff]
        %v1941 = vld [vmem:[#allocation12 + $0x300] sm:$0xff]
        %v1942 = vld [vmem:[#allocation12 + $0x308] sm:$0xff]
        %v1943 = vld [vmem:[#allocation12 + $0x310] sm:$0xff]
        %v1944 = vld [vmem:[#allocation12 + $0x318] sm:$0xff]
        %v1945 = vld [vmem:[#allocation12 + $0x320] sm:$0xff]
        %v1946 = vld [vmem:[#allocation12 + $0x328] sm:$0xff]
        %v1947 = vld [vmem:[#allocation12 + $0x330] sm:$0xff]
        %v1948 = vld [vmem:[#allocation12 + $0x338] sm:$0xff]
        %v1949 = vld [vmem:[#allocation12 + $0x340] sm:$0xff]
        %v1950 = vld [vmem:[#allocation12 + $0x348] sm:$0xff]
        %v1951 = vld [vmem:[#allocation12 + $0x350] sm:$0xff]
        %v1952 = vld [vmem:[#allocation12 + $0x358] sm:$0xff]
        %v1953 = vld [vmem:[#allocation12 + $0x360] sm:$0xff]
        %v1954 = vld [vmem:[#allocation12 + $0x368] sm:$0xff]
        %v1955 = vld [vmem:[#allocation12 + $0x370] sm:$0xff]
        %v1956 = vld [vmem:[#allocation12 + $0x378] sm:$0xff]
        %v1957 = vld [vmem:[#allocation12 + $0x380] sm:$0xff]
        %v1958 = vld [vmem:[#allocation12 + $0x388] sm:$0xff]
        %v1959 = vld [vmem:[#allocation12 + $0x390] sm:$0xff]
        %v1960 = vld [vmem:[#allocation12 + $0x398] sm:$0xff]
        %v1961 = vld [vmem:[#allocation12 + $0x3a0] sm:$0xff]
        %v1962 = vld [vmem:[#allocation12 + $0x3a8] sm:$0xff]
        %v1963 = vld [vmem:[#allocation12 + $0x3b0] sm:$0xff]
        %v1964 = vld [vmem:[#allocation12 + $0x3b8] sm:$0xff]
        %v1965 = vld [vmem:[#allocation12 + $0x3c0] sm:$0xff]
        %v1966 = vld [vmem:[#allocation12 + $0x3c8] sm:$0xff]
        %v1967 = vld [vmem:[#allocation12 + $0x3d0] sm:$0xff]
        %v1968 = vld [vmem:[#allocation12 + $0x3d8] sm:$0xff]
        %v1969 = vld [vmem:[#allocation12 + $0x3e0] sm:$0xff]
        %v1970 = vld [vmem:[#allocation12 + $0x3e8] sm:$0xff]
        %v1971 = vld [vmem:[#allocation12 + $0x3f0] sm:$0xff]
        %v1972 = vld [vmem:[#allocation12 + $0x3f8] sm:$0xff]
        %v1973 = vld [vmem:[#allocation12 + $0x400] sm:$0xff]
        %v1974 = vld [vmem:[#allocation12 + $0x408] sm:$0xff]
        %v1975 = vld [vmem:[#allocation12 + $0x410] sm:$0xff]
        %v1976 = vld [vmem:[#allocation12 + $0x418] sm:$0xff]
        %v1977 = vld [vmem:[#allocation12 + $0x420] sm:$0xff]
        %v1978 = vld [vmem:[#allocation12 + $0x428] sm:$0xff]
        %v1979 = vld [vmem:[#allocation12 + $0x430] sm:$0xff]
        %v1980 = vld [vmem:[#allocation12 + $0x438] sm:$0xff]
        %v1981 = vld [vmem:[#allocation12 + $0x440] sm:$0xff]
        %v1982 = vld [vmem:[#allocation12 + $0x448] sm:$0xff]
        %v1983 = vld [vmem:[#allocation12 + $0x450] sm:$0xff]
        %v1984 = vld [vmem:[#allocation12 + $0x458] sm:$0xff]
        %v1985 = vld [vmem:[#allocation12 + $0x460] sm:$0xff]
        %v1986 = vld [vmem:[#allocation12 + $0x468] sm:$0xff]
        %v1987 = vld [vmem:[#allocation12 + $0x470] sm:$0xff]
        %v1988 = vld [vmem:[#allocation12 + $0x478] sm:$0xff]
        %v1989 = vld [vmem:[#allocation12 + $0x480] sm:$0xff]
        %v1990 = vld [vmem:[#allocation12 + $0x488] sm:$0xff]
        %v1991 = vld [vmem:[#allocation12 + $0x490] sm:$0xff]
        %v1992 = vld [vmem:[#allocation12 + $0x498] sm:$0xff]
        %v1993 = vld [vmem:[#allocation12 + $0x4a0] sm:$0xff]
        %v1994 = vld [vmem:[#allocation12 + $0x4a8] sm:$0xff]
        %v1995 = vld [vmem:[#allocation12 + $0x4b0] sm:$0xff]
        %v1996 = vld [vmem:[#allocation12 + $0x4b8] sm:$0xff]
        %v1997 = vld [vmem:[#allocation12 + $0x4c0] sm:$0xff]
        %v1998 = vld [vmem:[#allocation12 + $0x4c8] sm:$0xff]
        %v1999 = vld [vmem:[#allocation12 + $0x4d0] sm:$0xff]
        %v2000 = vld [vmem:[#allocation12 + $0x4d8] sm:$0xff]
        %v2001 = vld [vmem:[#allocation12 + $0x4e0] sm:$0xff]
        %v2002 = vld [vmem:[#allocation12 + $0x4e8] sm:$0xff]
        %v2003 = vld [vmem:[#allocation12 + $0x4f0] sm:$0xff]
        %v2004 = vld [vmem:[#allocation12 + $0x4f8] sm:$0xff]
        %v2005 = vld [vmem:[#allocation12 + $0x500] sm:$0xff]
        %v2006 = vld [vmem:[#allocation12 + $0x508] sm:$0xff]
        %v2007 = vld [vmem:[#allocation12 + $0x510] sm:$0xff]
        %v2008 = vld [vmem:[#allocation12 + $0x518] sm:$0xff]
        %v2009 = vld [vmem:[#allocation12 + $0x520] sm:$0xff]
        %v2010 = vld [vmem:[#allocation12 + $0x528] sm:$0xff]
        %v2011 = vld [vmem:[#allocation12 + $0x530] sm:$0xff]
        %v2012 = vld [vmem:[#allocation12 + $0x538] sm:$0xff]
        %v2013 = vld [vmem:[#allocation12 + $0x540] sm:$0xff]
        %v2014 = vld [vmem:[#allocation12 + $0x548] sm:$0xff]
        %v2015 = vld [vmem:[#allocation12 + $0x550] sm:$0xff]
        %v2016 = vld [vmem:[#allocation12 + $0x558] sm:$0xff]
        %v2017 = vld [vmem:[#allocation12 + $0x560] sm:$0xff]
        %v2018 = vld [vmem:[#allocation12 + $0x568] sm:$0xff]
        %v2019 = vld [vmem:[#allocation12 + $0x570] sm:$0xff]
        %v2020 = vld [vmem:[#allocation12 + $0x578] sm:$0xff]
        %v2021 = vld [vmem:[#allocation12 + $0x580] sm:$0xff]
        %v2022 = vld [vmem:[#allocation12 + $0x588] sm:$0xff]
        %v2023 = vld [vmem:[#allocation12 + $0x590] sm:$0xff]
        %v2024 = vld [vmem:[#allocation12 + $0x598] sm:$0xff]
        %v2025 = vld [vmem:[#allocation12 + $0x5a0] sm:$0xff]
        %v2026 = vld [vmem:[#allocation12 + $0x5a8] sm:$0xff]
        %v2027 = vld [vmem:[#allocation12 + $0x5b0] sm:$0xff]
        %v2028 = vld [vmem:[#allocation12 + $0x5b8] sm:$0xff]
        %v2029 = vld [vmem:[#allocation12 + $0x5c0] sm:$0xff]
        %v2030 = vld [vmem:[#allocation12 + $0x5c8] sm:$0xff]
        %v2031 = vld [vmem:[#allocation12 + $0x5d0] sm:$0xff]
        %v2032 = vld [vmem:[#allocation12 + $0x5d8] sm:$0xff]
        %v2033 = vld [vmem:[#allocation12 + $0x5e0] sm:$0xff]
        %v2034 = vld [vmem:[#allocation12 + $0x5e8] sm:$0xff]
        %v2035 = vld [vmem:[#allocation12 + $0x5f0] sm:$0xff]
        %v2036 = vld [vmem:[#allocation12 + $0x5f8] sm:$0xff]
        %v2037 = vld [vmem:[#allocation12 + $0x600] sm:$0xff]
        %v2038 = vld [vmem:[#allocation12 + $0x608] sm:$0xff]
        %v2039 = vld [vmem:[#allocation12 + $0x610] sm:$0xff]
        %v2040 = vld [vmem:[#allocation12 + $0x618] sm:$0xff]
        %v2041 = vld [vmem:[#allocation12 + $0x620] sm:$0xff]
        %v2042 = vld [vmem:[#allocation12 + $0x628] sm:$0xff]
        %v2043 = vld [vmem:[#allocation12 + $0x630] sm:$0xff]
        %v2044 = vld [vmem:[#allocation12 + $0x638] sm:$0xff]
        %v2045 = vld [vmem:[#allocation12 + $0x640] sm:$0xff]
        %v2046 = vld [vmem:[#allocation12 + $0x648] sm:$0xff]
        %v2047 = vld [vmem:[#allocation12 + $0x650] sm:$0xff]
        %v2048 = vld [vmem:[#allocation12 + $0x658] sm:$0xff]
        %v2049 = vld [vmem:[#allocation12 + $0x660] sm:$0xff]
        %v2050 = vld [vmem:[#allocation12 + $0x668] sm:$0xff]
        %v2051 = vld [vmem:[#allocation12 + $0x670] sm:$0xff]
        %v2052 = vld [vmem:[#allocation12 + $0x678] sm:$0xff]
        %v2053 = vld [vmem:[#allocation12 + $0x680] sm:$0xff]
        %v2054 = vld [vmem:[#allocation12 + $0x688] sm:$0xff]
        %v2055 = vld [vmem:[#allocation12 + $0x690] sm:$0xff]
        %v2056 = vld [vmem:[#allocation12 + $0x698] sm:$0xff]
        %v2057 = vld [vmem:[#allocation12 + $0x6a0] sm:$0xff]
        %v2058 = vld [vmem:[#allocation12 + $0x6a8] sm:$0xff]
        %v2059 = vld [vmem:[#allocation12 + $0x6b0] sm:$0xff]
        %v2060 = vld [vmem:[#allocation12 + $0x6b8] sm:$0xff]
        %v2061 = vld [vmem:[#allocation12 + $0x6c0] sm:$0xff]
        %v2062 = vld [vmem:[#allocation12 + $0x6c8] sm:$0xff]
        %v2063 = vld [vmem:[#allocation12 + $0x6d0] sm:$0xff]
        %v2064 = vld [vmem:[#allocation12 + $0x6d8] sm:$0xff]
        %v2065 = vld [vmem:[#allocation12 + $0x6e0] sm:$0xff]
        %v2066 = vld [vmem:[#allocation12 + $0x6e8] sm:$0xff]
        %v2067 = vld [vmem:[#allocation12 + $0x6f0] sm:$0xff]
        %v2068 = vld [vmem:[#allocation12 + $0x6f8] sm:$0xff]
        %v2069 = vld [vmem:[#allocation12 + $0x700] sm:$0xff]
        %v2070 = vld [vmem:[#allocation12 + $0x708] sm:$0xff]
        %v2071 = vld [vmem:[#allocation12 + $0x710] sm:$0xff]
        %v2072 = vld [vmem:[#allocation12 + $0x718] sm:$0xff]
        %v2073 = vld [vmem:[#allocation12 + $0x720] sm:$0xff]
        %v2074 = vld [vmem:[#allocation12 + $0x728] sm:$0xff]
        %v2075 = vld [vmem:[#allocation12 + $0x730] sm:$0xff]
        %v2076 = vld [vmem:[#allocation12 + $0x738] sm:$0xff]
        %v2077 = vld [vmem:[#allocation12 + $0x740] sm:$0xff]
        %v2078 = vld [vmem:[#allocation12 + $0x748] sm:$0xff]
        %v2079 = vld [vmem:[#allocation12 + $0x750] sm:$0xff]
        %v2080 = vld [vmem:[#allocation12 + $0x758] sm:$0xff]
        %v2081 = vld [vmem:[#allocation12 + $0x760] sm:$0xff]
        %v2082 = vld [vmem:[#allocation12 + $0x768] sm:$0xff]
        %v2083 = vld [vmem:[#allocation12 + $0x770] sm:$0xff]
        %v2084 = vld [vmem:[#allocation12 + $0x778] sm:$0xff]
        %v2085 = vld [vmem:[#allocation12 + $0x780] sm:$0xff]
        %v2086 = vld [vmem:[#allocation12 + $0x788] sm:$0xff]
        %v2087 = vld [vmem:[#allocation12 + $0x790] sm:$0xff]
        %v2088 = vld [vmem:[#allocation12 + $0x798] sm:$0xff]
        %v2089 = vld [vmem:[#allocation12 + $0x7a0] sm:$0xff]
        %v2090 = vld [vmem:[#allocation12 + $0x7a8] sm:$0xff]
        %v2091 = vld [vmem:[#allocation12 + $0x7b0] sm:$0xff]
        %v2092 = vld [vmem:[#allocation12 + $0x7b8] sm:$0xff]
        %v2093 = vld [vmem:[#allocation12 + $0x7c0] sm:$0xff]
        %v2094 = vld [vmem:[#allocation12 + $0x7c8] sm:$0xff]
        %v2095 = vld [vmem:[#allocation12 + $0x7d0] sm:$0xff]
        %v2096 = vld [vmem:[#allocation12 + $0x7d8] sm:$0xff]
        %v2097 = vld [vmem:[#allocation12 + $0x7e0] sm:$0xff]
        %v2098 = vld [vmem:[#allocation12 + $0x7e8] sm:$0xff]
        %v2099 = vld [vmem:[#allocation12 + $0x7f0] sm:$0xff]
        %v2100 = vld [vmem:[#allocation12 + $0x7f8] sm:$0xff]
        %v2101 = vld [vmem:[#allocation12 + $0x800] sm:$0xff]
        %v2102 = vld [vmem:[#allocation12 + $0x808] sm:$0xff]
        %v2103 = vld [vmem:[#allocation12 + $0x810] sm:$0xff]
        %v2104 = vld [vmem:[#allocation12 + $0x818] sm:$0xff]
        %v2105 = vld [vmem:[#allocation12 + $0x820] sm:$0xff]
        %v2106 = vld [vmem:[#allocation12 + $0x828] sm:$0xff]
        %v2107 = vld [vmem:[#allocation12 + $0x830] sm:$0xff]
        %v2108 = vld [vmem:[#allocation12 + $0x838] sm:$0xff]
        %v2109 = vld [vmem:[#allocation12 + $0x840] sm:$0xff]
        %v2110 = vld [vmem:[#allocation12 + $0x848] sm:$0xff]
        %v2111 = vld [vmem:[#allocation12 + $0x850] sm:$0xff]
        %v2112 = vld [vmem:[#allocation12 + $0x858] sm:$0xff]
        %v2113 = vld [vmem:[#allocation12 + $0x860] sm:$0xff]
        %v2114 = vld [vmem:[#allocation12 + $0x868] sm:$0xff]
        %v2115 = vld [vmem:[#allocation12 + $0x870] sm:$0xff]
        %v2116 = vld [vmem:[#allocation12 + $0x878] sm:$0xff]
        %v2117 = vld [vmem:[#allocation12 + $0x880] sm:$0xff]
        %v2118 = vld [vmem:[#allocation12 + $0x888] sm:$0xff]
        %v2119 = vld [vmem:[#allocation12 + $0x890] sm:$0xff]
        %v2120 = vld [vmem:[#allocation12 + $0x898] sm:$0xff]
        %v2121 = vld [vmem:[#allocation12 + $0x8a0] sm:$0xff]
        %v2122 = vld [vmem:[#allocation12 + $0x8a8] sm:$0xff]
        %v2123 = vld [vmem:[#allocation12 + $0x8b0] sm:$0xff]
        %v2124 = vld [vmem:[#allocation12 + $0x8b8] sm:$0xff]
        %v2125 = vld [vmem:[#allocation12 + $0x8c0] sm:$0xff]
        %v2126 = vld [vmem:[#allocation12 + $0x8c8] sm:$0xff]
        %v2127 = vld [vmem:[#allocation12 + $0x8d0] sm:$0xff]
        %v2128 = vld [vmem:[#allocation12 + $0x8d8] sm:$0xff]
        %v2129 = vld [vmem:[#allocation12 + $0x8e0] sm:$0xff]
        %v2130 = vld [vmem:[#allocation12 + $0x8e8] sm:$0xff]
        %v2131 = vld [vmem:[#allocation12 + $0x8f0] sm:$0xff]
        %v2132 = vld [vmem:[#allocation12 + $0x8f8] sm:$0xff]
        %v2133 = vld [vmem:[#allocation12 + $0x900] sm:$0xff]
        %v2134 = vld [vmem:[#allocation12 + $0x908] sm:$0xff]
        %v2135 = vld [vmem:[#allocation12 + $0x910] sm:$0xff]
        %v2136 = vld [vmem:[#allocation12 + $0x918] sm:$0xff]
        %v2137 = vld [vmem:[#allocation12 + $0x920] sm:$0xff]
        %v2138 = vld [vmem:[#allocation12 + $0x928] sm:$0xff]
        %v2139 = vld [vmem:[#allocation12 + $0x930] sm:$0xff]
        %v2140 = vld [vmem:[#allocation12 + $0x938] sm:$0xff]
        %v2141 = vld [vmem:[#allocation12 + $0x940] sm:$0xff]
        %v2142 = vld [vmem:[#allocation12 + $0x948] sm:$0xff]
        %v2143 = vld [vmem:[#allocation12 + $0x950] sm:$0xff]
        %v2144 = vld [vmem:[#allocation12 + $0x958] sm:$0xff]
        %v2145 = vld [vmem:[#allocation12 + $0x960] sm:$0xff]
        %v2146 = vld [vmem:[#allocation12 + $0x968] sm:$0xff]
        %v2147 = vld [vmem:[#allocation12 + $0x970] sm:$0xff]
        %v2148 = vld [vmem:[#allocation12 + $0x978] sm:$0xff]
        %v2149 = vld [vmem:[#allocation12 + $0x980] sm:$0xff]
        %v2150 = vld [vmem:[#allocation12 + $0x988] sm:$0xff]
        %v2151 = vld [vmem:[#allocation12 + $0x990] sm:$0xff]
        %v2152 = vld [vmem:[#allocation12 + $0x998] sm:$0xff]
        %v2153 = vld [vmem:[#allocation12 + $0x9a0] sm:$0xff]
        %v2154 = vld [vmem:[#allocation12 + $0x9a8] sm:$0xff]
        %v2155 = vld [vmem:[#allocation12 + $0x9b0] sm:$0xff]
        %v2156 = vld [vmem:[#allocation12 + $0x9b8] sm:$0xff]
        %v2157 = vld [vmem:[#allocation12 + $0x9c0] sm:$0xff]
        %v2158 = vld [vmem:[#allocation12 + $0x9c8] sm:$0xff]
        %v2159 = vld [vmem:[#allocation12 + $0x9d0] sm:$0xff]
        %v2160 = vld [vmem:[#allocation12 + $0x9d8] sm:$0xff]
        %v2161 = vld [vmem:[#allocation12 + $0x9e0] sm:$0xff]
        %v2162 = vld [vmem:[#allocation12 + $0x9e8] sm:$0xff]
        %v2163 = vld [vmem:[#allocation12 + $0x9f0] sm:$0xff]
        %v2164 = vld [vmem:[#allocation12 + $0x9f8] sm:$0xff]
        %v2165 = vld [vmem:[#allocation12 + $0xa00] sm:$0xff]
        %v2166 = vld [vmem:[#allocation12 + $0xa08] sm:$0xff]
        %v2167 = vld [vmem:[#allocation12 + $0xa10] sm:$0xff]
        %v2168 = vld [vmem:[#allocation12 + $0xa18] sm:$0xff]
        %v2169 = vld [vmem:[#allocation12 + $0xa20] sm:$0xff]
        %v2170 = vld [vmem:[#allocation12 + $0xa28] sm:$0xff]
        %v2171 = vld [vmem:[#allocation12 + $0xa30] sm:$0xff]
        %v2172 = vld [vmem:[#allocation12 + $0xa38] sm:$0xff]
        %v2173 = vld [vmem:[#allocation12 + $0xa40] sm:$0xff]
        %v2174 = vld [vmem:[#allocation12 + $0xa48] sm:$0xff]
        %v2175 = vld [vmem:[#allocation12 + $0xa50] sm:$0xff]
        %v2176 = vld [vmem:[#allocation12 + $0xa58] sm:$0xff]
        %v2177 = vld [vmem:[#allocation12 + $0xa60] sm:$0xff]
        %v2178 = vld [vmem:[#allocation12 + $0xa68] sm:$0xff]
        %v2179 = vld [vmem:[#allocation12 + $0xa70] sm:$0xff]
        %v2180 = vld [vmem:[#allocation12 + $0xa78] sm:$0xff]
        %v2181 = vld [vmem:[#allocation12 + $0xa80] sm:$0xff]
        %v2182 = vld [vmem:[#allocation12 + $0xa88] sm:$0xff]
        %v2183 = vld [vmem:[#allocation12 + $0xa90] sm:$0xff]
        %v2184 = vld [vmem:[#allocation12 + $0xa98] sm:$0xff]
        %v2185 = vld [vmem:[#allocation12 + $0xaa0] sm:$0xff]
        %v2186 = vld [vmem:[#allocation12 + $0xaa8] sm:$0xff]
        %v2187 = vld [vmem:[#allocation12 + $0xab0] sm:$0xff]
        %v2188 = vld [vmem:[#allocation12 + $0xab8] sm:$0xff]
        %v2189 = vld [vmem:[#allocation12 + $0xac0] sm:$0xff]
        %v2190 = vld [vmem:[#allocation12 + $0xac8] sm:$0xff]
        %v2191 = vld [vmem:[#allocation12 + $0xad0] sm:$0xff]
        %v2192 = vld [vmem:[#allocation12 + $0xad8] sm:$0xff]
        %v2193 = vld [vmem:[#allocation12 + $0xae0] sm:$0xff]
        %v2194 = vld [vmem:[#allocation12 + $0xae8] sm:$0xff]
        %v2195 = vld [vmem:[#allocation12 + $0xaf0] sm:$0xff]
        %v2196 = vld [vmem:[#allocation12 + $0xaf8] sm:$0xff]
        %v2197 = vld [vmem:[#allocation12 + $0xb00] sm:$0xff]
        %v2198 = vld [vmem:[#allocation12 + $0xb08] sm:$0xff]
        %v2199 = vld [vmem:[#allocation12 + $0xb10] sm:$0xff]
        %v2200 = vld [vmem:[#allocation12 + $0xb18] sm:$0xff]
        %v2201 = vld [vmem:[#allocation12 + $0xb20] sm:$0xff]
        %v2202 = vld [vmem:[#allocation12 + $0xb28] sm:$0xff]
        %v2203 = vld [vmem:[#allocation12 + $0xb30] sm:$0xff]
        %v2204 = vld [vmem:[#allocation12 + $0xb38] sm:$0xff]
        %v2205 = vld [vmem:[#allocation12 + $0xb40] sm:$0xff]
        %v2206 = vld [vmem:[#allocation12 + $0xb48] sm:$0xff]
        %v2207 = vld [vmem:[#allocation12 + $0xb50] sm:$0xff]
        %v2208 = vld [vmem:[#allocation12 + $0xb58] sm:$0xff]
        %v2209 = vld [vmem:[#allocation12 + $0xb60] sm:$0xff]
        %v2210 = vld [vmem:[#allocation12 + $0xb68] sm:$0xff]
        %v2211 = vld [vmem:[#allocation12 + $0xb70] sm:$0xff]
        %v2212 = vld [vmem:[#allocation12 + $0xb78] sm:$0xff]
        %v2213 = vld [vmem:[#allocation12 + $0xb80] sm:$0xff]
        %v2214 = vld [vmem:[#allocation12 + $0xb88] sm:$0xff]
        %v2215 = vld [vmem:[#allocation12 + $0xb90] sm:$0xff]
        %v2216 = vld [vmem:[#allocation12 + $0xb98] sm:$0xff]
        %v2217 = vld [vmem:[#allocation12 + $0xba0] sm:$0xff]
        %v2218 = vld [vmem:[#allocation12 + $0xba8] sm:$0xff]
        %v2219 = vld [vmem:[#allocation12 + $0xbb0] sm:$0xff]
        %v2220 = vld [vmem:[#allocation12 + $0xbb8] sm:$0xff]
        %v2221 = vld [vmem:[#allocation12 + $0xbc0] sm:$0xff]
        %v2222 = vld [vmem:[#allocation12 + $0xbc8] sm:$0xff]
        %v2223 = vld [vmem:[#allocation12 + $0xbd0] sm:$0xff]
        %v2224 = vld [vmem:[#allocation12 + $0xbd8] sm:$0xff]
        %v2225 = vld [vmem:[#allocation12 + $0xbe0] sm:$0xff]
        %v2226 = vld [vmem:[#allocation12 + $0xbe8] sm:$0xff]
        %v2227 = vld [vmem:[#allocation12 + $0xbf0] sm:$0xff]
        %v2228 = vld [vmem:[#allocation12 + $0xbf8] sm:$0xff]
        %v2229 = vld [vmem:[#allocation12 + $0xc00] sm:$0xff]
        %v2230 = vld [vmem:[#allocation12 + $0xc08] sm:$0xff]
        %v2231 = vld [vmem:[#allocation12 + $0xc10] sm:$0xff]
        %v2232 = vld [vmem:[#allocation12 + $0xc18] sm:$0xff]
        %v2233 = vld [vmem:[#allocation12 + $0xc20] sm:$0xff]
        %v2234 = vld [vmem:[#allocation12 + $0xc28] sm:$0xff]
        %v2235 = vld [vmem:[#allocation12 + $0xc30] sm:$0xff]
        %v2236 = vld [vmem:[#allocation12 + $0xc38] sm:$0xff]
        %v2237 = vld [vmem:[#allocation12 + $0xc40] sm:$0xff]
        %v2238 = vld [vmem:[#allocation12 + $0xc48] sm:$0xff]
        %v2239 = vld [vmem:[#allocation12 + $0xc50] sm:$0xff]
        %v2240 = vld [vmem:[#allocation12 + $0xc58] sm:$0xff]
        %v2241 = vld [vmem:[#allocation12 + $0xc60] sm:$0xff]
        %v2242 = vld [vmem:[#allocation12 + $0xc68] sm:$0xff]
        %v2243 = vld [vmem:[#allocation12 + $0xc70] sm:$0xff]
        %v2244 = vld [vmem:[#allocation12 + $0xc78] sm:$0xff]
        %v2245 = vld [vmem:[#allocation12 + $0xc80] sm:$0xff]
        %v2246 = vld [vmem:[#allocation12 + $0xc88] sm:$0xff]
        %v2247 = vld [vmem:[#allocation12 + $0xc90] sm:$0xff]
        %v2248 = vld [vmem:[#allocation12 + $0xc98] sm:$0xff]
        %v2249 = vld [vmem:[#allocation12 + $0xca0] sm:$0xff]
        %v2250 = vld [vmem:[#allocation12 + $0xca8] sm:$0xff]
        %v2251 = vld [vmem:[#allocation12 + $0xcb0] sm:$0xff]
        %v2252 = vld [vmem:[#allocation12 + $0xcb8] sm:$0xff]
        %v2253 = vld [vmem:[#allocation12 + $0xcc0] sm:$0xff]
        %v2254 = vld [vmem:[#allocation12 + $0xcc8] sm:$0xff]
        %v2255 = vld [vmem:[#allocation12 + $0xcd0] sm:$0xff]
        %v2256 = vld [vmem:[#allocation12 + $0xcd8] sm:$0xff]
        %v2257 = vld [vmem:[#allocation12 + $0xce0] sm:$0xff]
        %v2258 = vld [vmem:[#allocation12 + $0xce8] sm:$0xff]
        %v2259 = vld [vmem:[#allocation12 + $0xcf0] sm:$0xff]
        %v2260 = vld [vmem:[#allocation12 + $0xcf8] sm:$0xff]
        %v2261 = vld [vmem:[#allocation12 + $0xd00] sm:$0xff]
        %v2262 = vld [vmem:[#allocation12 + $0xd08] sm:$0xff]
        %v2263 = vld [vmem:[#allocation12 + $0xd10] sm:$0xff]
        %v2264 = vld [vmem:[#allocation12 + $0xd18] sm:$0xff]
        %v2265 = vld [vmem:[#allocation12 + $0xd20] sm:$0xff]
        %v2266 = vld [vmem:[#allocation12 + $0xd28] sm:$0xff]
        %v2267 = vld [vmem:[#allocation12 + $0xd30] sm:$0xff]
        %v2268 = vld [vmem:[#allocation12 + $0xd38] sm:$0xff]
        %v2269 = vld [vmem:[#allocation12 + $0xd40] sm:$0xff]
        %v2270 = vld [vmem:[#allocation12 + $0xd48] sm:$0xff]
        %v2271 = vld [vmem:[#allocation12 + $0xd50] sm:$0xff]
        %v2272 = vld [vmem:[#allocation12 + $0xd58] sm:$0xff]
        %v2273 = vld [vmem:[#allocation12 + $0xd60] sm:$0xff]
        %v2274 = vld [vmem:[#allocation12 + $0xd68] sm:$0xff]
        %v2275 = vld [vmem:[#allocation12 + $0xd70] sm:$0xff]
        %v2276 = vld [vmem:[#allocation12 + $0xd78] sm:$0xff]
        %v2277 = vld [vmem:[#allocation12 + $0xd80] sm:$0xff]
        %v2278 = vld [vmem:[#allocation12 + $0xd88] sm:$0xff]
        %v2279 = vld [vmem:[#allocation12 + $0xd90] sm:$0xff]
        %v2280 = vld [vmem:[#allocation12 + $0xd98] sm:$0xff]
        %v2281 = vld [vmem:[#allocation12 + $0xda0] sm:$0xff]
        %v2282 = vld [vmem:[#allocation12 + $0xda8] sm:$0xff]
        %v2283 = vld [vmem:[#allocation12 + $0xdb0] sm:$0xff]
        %v2284 = vld [vmem:[#allocation12 + $0xdb8] sm:$0xff]
        %v2285 = vld [vmem:[#allocation12 + $0xdc0] sm:$0xff]
        %v2286 = vld [vmem:[#allocation12 + $0xdc8] sm:$0xff]
        %v2287 = vld [vmem:[#allocation12 + $0xdd0] sm:$0xff]
        %v2288 = vld [vmem:[#allocation12 + $0xdd8] sm:$0xff]
        %v2289 = vld [vmem:[#allocation12 + $0xde0] sm:$0xff]
        %v2290 = vld [vmem:[#allocation12 + $0xde8] sm:$0xff]
        %v2291 = vld [vmem:[#allocation12 + $0xdf0] sm:$0xff]
        %v2292 = vld [vmem:[#allocation12 + $0xdf8] sm:$0xff]
        %v2293 = vld [vmem:[#allocation12 + $0xe00] sm:$0xff]
        %v2294 = vld [vmem:[#allocation12 + $0xe08] sm:$0xff]
        %v2295 = vld [vmem:[#allocation12 + $0xe10] sm:$0xff]
        %v2296 = vld [vmem:[#allocation12 + $0xe18] sm:$0xff]
        %v2297 = vld [vmem:[#allocation12 + $0xe20] sm:$0xff]
        %v2298 = vld [vmem:[#allocation12 + $0xe28] sm:$0xff]
        %v2299 = vld [vmem:[#allocation12 + $0xe30] sm:$0xff]
        %v2300 = vld [vmem:[#allocation12 + $0xe38] sm:$0xff]
        %v2301 = vld [vmem:[#allocation12 + $0xe40] sm:$0xff]
        %v2302 = vld [vmem:[#allocation12 + $0xe48] sm:$0xff]
        %v2303 = vld [vmem:[#allocation12 + $0xe50] sm:$0xff]
        %v2304 = vld [vmem:[#allocation12 + $0xe58] sm:$0xff]
        %v2305 = vld [vmem:[#allocation12 + $0xe60] sm:$0xff]
        %v2306 = vld [vmem:[#allocation12 + $0xe68] sm:$0xff]
        %v2307 = vld [vmem:[#allocation12 + $0xe70] sm:$0xff]
        %v2308 = vld [vmem:[#allocation12 + $0xe78] sm:$0xff]
        %v2309 = vld [vmem:[#allocation12 + $0xe80] sm:$0xff]
        %v2310 = vld [vmem:[#allocation12 + $0xe88] sm:$0xff]
        %v2311 = vld [vmem:[#allocation12 + $0xe90] sm:$0xff]
        %v2312 = vld [vmem:[#allocation12 + $0xe98] sm:$0xff]
        %v2313 = vld [vmem:[#allocation12 + $0xea0] sm:$0xff]
        %v2314 = vld [vmem:[#allocation12 + $0xea8] sm:$0xff]
        %v2315 = vld [vmem:[#allocation12 + $0xeb0] sm:$0xff]
        %v2316 = vld [vmem:[#allocation12 + $0xeb8] sm:$0xff]
        %v2317 = vld [vmem:[#allocation12 + $0xec0] sm:$0xff]
        %v2318 = vld [vmem:[#allocation12 + $0xec8] sm:$0xff]
        %v2319 = vld [vmem:[#allocation12 + $0xed0] sm:$0xff]
        %v2320 = vld [vmem:[#allocation12 + $0xed8] sm:$0xff]
        %v2321 = vld [vmem:[#allocation12 + $0xee0] sm:$0xff]
        %v2322 = vld [vmem:[#allocation12 + $0xee8] sm:$0xff]
        %v2323 = vld [vmem:[#allocation12 + $0xef0] sm:$0xff]
        %v2324 = vld [vmem:[#allocation12 + $0xef8] sm:$0xff]
        %v2325 = vld [vmem:[#allocation12 + $0xf00] sm:$0xff]
        %v2326 = vld [vmem:[#allocation12 + $0xf08] sm:$0xff]
        %v2327 = vld [vmem:[#allocation12 + $0xf10] sm:$0xff]
        %v2328 = vld [vmem:[#allocation12 + $0xf18] sm:$0xff]
        %v2329 = vld [vmem:[#allocation12 + $0xf20] sm:$0xff]
        %v2330 = vld [vmem:[#allocation12 + $0xf28] sm:$0xff]
        %v2331 = vld [vmem:[#allocation12 + $0xf30] sm:$0xff]
        %v2332 = vld [vmem:[#allocation12 + $0xf38] sm:$0xff]
        %v2333 = vld [vmem:[#allocation12 + $0xf40] sm:$0xff]
        %v2334 = vld [vmem:[#allocation12 + $0xf48] sm:$0xff]
        %v2335 = vld [vmem:[#allocation12 + $0xf50] sm:$0xff]
        %v2336 = vld [vmem:[#allocation12 + $0xf58] sm:$0xff]
        %v2337 = vld [vmem:[#allocation12 + $0xf60] sm:$0xff]
        %v2338 = vld [vmem:[#allocation12 + $0xf68] sm:$0xff]
        %v2339 = vld [vmem:[#allocation12 + $0xf70] sm:$0xff]
        %v2340 = vld [vmem:[#allocation12 + $0xf78] sm:$0xff]
        %v2341 = vld [vmem:[#allocation12 + $0xf80] sm:$0xff]
        %v2342 = vld [vmem:[#allocation12 + $0xf88] sm:$0xff]
        %v2343 = vld [vmem:[#allocation12 + $0xf90] sm:$0xff]
        %v2344 = vld [vmem:[#allocation12 + $0xf98] sm:$0xff]
        %v2345 = vld [vmem:[#allocation12 + $0xfa0] sm:$0xff]
        %v2346 = vld [vmem:[#allocation12 + $0xfa8] sm:$0xff]
        %v2347 = vld [vmem:[#allocation12 + $0xfb0] sm:$0xff]
        %v2348 = vld [vmem:[#allocation12 + $0xfb8] sm:$0xff]
        %v2349 = vld [vmem:[#allocation12 + $0xfc0] sm:$0xff]
        %v2350 = vld [vmem:[#allocation12 + $0xfc8] sm:$0xff]
        %v2351 = vld [vmem:[#allocation12 + $0xfd0] sm:$0xff]
        %v2352 = vld [vmem:[#allocation12 + $0xfd8] sm:$0xff]
        %v2353 = vld [vmem:[#allocation12 + $0xfe0] sm:$0xff]
        %v2354 = vld [vmem:[#allocation12 + $0xfe8] sm:$0xff]
        %v2355 = vld [vmem:[#allocation12 + $0xff0] sm:$0xff]
        %v2356 = vld [vmem:[#allocation12 + $0xff8] sm:$0xff]
        %v2357 = vld [vmem:[#allocation12 + $0x1000] sm:$0xff]
        %v2358 = vld [vmem:[#allocation12 + $0x1008] sm:$0xff]
        %v2359 = vld [vmem:[#allocation12 + $0x1010] sm:$0xff]
        %v2360 = vld [vmem:[#allocation12 + $0x1018] sm:$0xff]
        %v2361 = vld [vmem:[#allocation12 + $0x1020] sm:$0xff]
        %v2362 = vld [vmem:[#allocation12 + $0x1028] sm:$0xff]
        %v2363 = vld [vmem:[#allocation12 + $0x1030] sm:$0xff]
        %v2364 = vld [vmem:[#allocation12 + $0x1038] sm:$0xff]
        %v2365 = vld [vmem:[#allocation12 + $0x1040] sm:$0xff]
        %v2366 = vld [vmem:[#allocation12 + $0x1048] sm:$0xff]
        %v2367 = vld [vmem:[#allocation12 + $0x1050] sm:$0xff]
        %v2368 = vld [vmem:[#allocation12 + $0x1058] sm:$0xff]
        %v2369 = vld [vmem:[#allocation12 + $0x1060] sm:$0xff]
        %v2370 = vld [vmem:[#allocation12 + $0x1068] sm:$0xff]
        %v2371 = vld [vmem:[#allocation12 + $0x1070] sm:$0xff]
        %v2372 = vld [vmem:[#allocation12 + $0x1078] sm:$0xff]
        %v2373 = vld [vmem:[#allocation12 + $0x1080] sm:$0xff]
        %v2374 = vld [vmem:[#allocation12 + $0x1088] sm:$0xff]
        %v2375 = vld [vmem:[#allocation12 + $0x1090] sm:$0xff]
        %v2376 = vld [vmem:[#allocation12 + $0x1098] sm:$0xff]
        %v2377 = vld [vmem:[#allocation12 + $0x10a0] sm:$0xff]
        %v2378 = vld [vmem:[#allocation12 + $0x10a8] sm:$0xff]
        %v2379 = vld [vmem:[#allocation12 + $0x10b0] sm:$0xff]
        %v2380 = vld [vmem:[#allocation12 + $0x10b8] sm:$0xff]
        %v2381 = vld [vmem:[#allocation12 + $0x10c0] sm:$0xff]
        %v2382 = vld [vmem:[#allocation12 + $0x10c8] sm:$0xff]
        %v2383 = vld [vmem:[#allocation12 + $0x10d0] sm:$0xff]
        %v2384 = vld [vmem:[#allocation12 + $0x10d8] sm:$0xff]
        %v2385 = vld [vmem:[#allocation12 + $0x10e0] sm:$0xff]
        %v2386 = vld [vmem:[#allocation12 + $0x10e8] sm:$0xff]
        %v2387 = vld [vmem:[#allocation12 + $0x10f0] sm:$0xff]
        %v2388 = vld [vmem:[#allocation12 + $0x10f8] sm:$0xff]
        %v2389 = vld [vmem:[#allocation12 + $0x1100] sm:$0xff]
        %v2390 = vld [vmem:[#allocation12 + $0x1108] sm:$0xff]
        %v2391 = vld [vmem:[#allocation12 + $0x1110] sm:$0xff]
        %v2392 = vld [vmem:[#allocation12 + $0x1118] sm:$0xff]
        %v2393 = vld [vmem:[#allocation12 + $0x1120] sm:$0xff]
        %v2394 = vld [vmem:[#allocation12 + $0x1128] sm:$0xff]
        %v2395 = vld [vmem:[#allocation12 + $0x1130] sm:$0xff]
        %v2396 = vld [vmem:[#allocation12 + $0x1138] sm:$0xff]
        %v2397 = vld [vmem:[#allocation12 + $0x1140] sm:$0xff]
        %v2398 = vld [vmem:[#allocation12 + $0x1148] sm:$0xff]
        %v2399 = vld [vmem:[#allocation12 + $0x1150] sm:$0xff]
        %v2400 = vld [vmem:[#allocation12 + $0x1158] sm:$0xff]
        %v2401 = vld [vmem:[#allocation12 + $0x1160] sm:$0xff]
        %v2402 = vld [vmem:[#allocation12 + $0x1168] sm:$0xff]
        %v2403 = vld [vmem:[#allocation12 + $0x1170] sm:$0xff]
        %v2404 = vld [vmem:[#allocation12 + $0x1178] sm:$0xff]
        %v2405 = vld [vmem:[#allocation12 + $0x1180] sm:$0xff]
        %v2406 = vld [vmem:[#allocation12 + $0x1188] sm:$0xff]
        %v2407 = vld [vmem:[#allocation12 + $0x1190] sm:$0xff]
        %v2408 = vld [vmem:[#allocation12 + $0x1198] sm:$0xff]
        %v2409 = vld [vmem:[#allocation12 + $0x11a0] sm:$0xff]
        %v2410 = vld [vmem:[#allocation12 + $0x11a8] sm:$0xff]
        %v2411 = vld [vmem:[#allocation12 + $0x11b0] sm:$0xff]
        %v2412 = vld [vmem:[#allocation12 + $0x11b8] sm:$0xff]
        %v2413 = vld [vmem:[#allocation12 + $0x11c0] sm:$0xff]
        %v2414 = vld [vmem:[#allocation12 + $0x11c8] sm:$0xff]
        %v2415 = vld [vmem:[#allocation12 + $0x11d0] sm:$0xff]
        %v2416 = vld [vmem:[#allocation12 + $0x11d8] sm:$0xff]
        %v2417 = vld [vmem:[#allocation12 + $0x11e0] sm:$0xff]
        %v2418 = vld [vmem:[#allocation12 + $0x11e8] sm:$0xff]
        %v2419 = vld [vmem:[#allocation12 + $0x11f0] sm:$0xff]
        %v2420 = vld [vmem:[#allocation12 + $0x11f8] sm:$0xff]
        %v2421 = vld [vmem:[#allocation12 + $0x1200] sm:$0xff]
        %v2422 = vld [vmem:[#allocation12 + $0x1208] sm:$0xff]
        %v2423 = vld [vmem:[#allocation12 + $0x1210] sm:$0xff]
        %v2424 = vld [vmem:[#allocation12 + $0x1218] sm:$0xff]
        %v2425 = vld [vmem:[#allocation12 + $0x1220] sm:$0xff]
        %v2426 = vld [vmem:[#allocation12 + $0x1228] sm:$0xff]
        %v2427 = vld [vmem:[#allocation12 + $0x1230] sm:$0xff]
        %v2428 = vld [vmem:[#allocation12 + $0x1238] sm:$0xff]
        %v2429 = vld [vmem:[#allocation12 + $0x1240] sm:$0xff]
        %v2430 = vld [vmem:[#allocation12 + $0x1248] sm:$0xff]
        %v2431 = vld [vmem:[#allocation12 + $0x1250] sm:$0xff]
        %v2432 = vld [vmem:[#allocation12 + $0x1258] sm:$0xff]
        %v2433 = vld [vmem:[#allocation12 + $0x1260] sm:$0xff]
        %v2434 = vld [vmem:[#allocation12 + $0x1268] sm:$0xff]
        %v2435 = vld [vmem:[#allocation12 + $0x1270] sm:$0xff]
        %v2436 = vld [vmem:[#allocation12 + $0x1278] sm:$0xff]
        %v2437 = vld [vmem:[#allocation12 + $0x1280] sm:$0xff]
        %v2438 = vld [vmem:[#allocation12 + $0x1288] sm:$0xff]
        %v2439 = vld [vmem:[#allocation12 + $0x1290] sm:$0xff]
        %v2440 = vld [vmem:[#allocation12 + $0x1298] sm:$0xff]
        %v2441 = vld [vmem:[#allocation12 + $0x12a0] sm:$0xff]
        %v2442 = vld [vmem:[#allocation12 + $0x12a8] sm:$0xff]
        %v2443 = vld [vmem:[#allocation12 + $0x12b0] sm:$0xff]
        %v2444 = vld [vmem:[#allocation12 + $0x12b8] sm:$0xff]
        %v2445 = vld [vmem:[#allocation12 + $0x12c0] sm:$0xff]
        %v2446 = vld [vmem:[#allocation12 + $0x12c8] sm:$0xff]
        %v2447 = vld [vmem:[#allocation12 + $0x12d0] sm:$0xff]
        %v2448 = vld [vmem:[#allocation12 + $0x12d8] sm:$0xff]
        %v2449 = vld [vmem:[#allocation12 + $0x12e0] sm:$0xff]
        %v2450 = vld [vmem:[#allocation12 + $0x12e8] sm:$0xff]
        %v2451 = vld [vmem:[#allocation12 + $0x12f0] sm:$0xff]
        %v2452 = vld [vmem:[#allocation12 + $0x12f8] sm:$0xff]
        %v2453 = vld [vmem:[#allocation12 + $0x1300] sm:$0xff]
        %v2454 = vld [vmem:[#allocation12 + $0x1308] sm:$0xff]
        %v2455 = vld [vmem:[#allocation12 + $0x1310] sm:$0xff]
        %v2456 = vld [vmem:[#allocation12 + $0x1318] sm:$0xff]
        %v2457 = vld [vmem:[#allocation12 + $0x1320] sm:$0xff]
        %v2458 = vld [vmem:[#allocation12 + $0x1328] sm:$0xff]
        %v2459 = vld [vmem:[#allocation12 + $0x1330] sm:$0xff]
        %v2460 = vld [vmem:[#allocation12 + $0x1338] sm:$0xff]
        %v2461 = vld [vmem:[#allocation12 + $0x1340] sm:$0xff]
        %v2462 = vld [vmem:[#allocation12 + $0x1348] sm:$0xff]
        %v2463 = vld [vmem:[#allocation12 + $0x1350] sm:$0xff]
        %v2464 = vld [vmem:[#allocation12 + $0x1358] sm:$0xff]
        %v2465 = vld [vmem:[#allocation12 + $0x1360] sm:$0xff]
        %v2466 = vld [vmem:[#allocation12 + $0x1368] sm:$0xff]
        %v2467 = vld [vmem:[#allocation12 + $0x1370] sm:$0xff]
        %v2468 = vld [vmem:[#allocation12 + $0x1378] sm:$0xff]
        %v2469 = vld [vmem:[#allocation12 + $0x1380] sm:$0xff]
        %v2470 = vld [vmem:[#allocation12 + $0x1388] sm:$0xff]
        %v2471 = vld [vmem:[#allocation12 + $0x1390] sm:$0xff]
        %v2472 = vld [vmem:[#allocation12 + $0x1398] sm:$0xff]
        %v2473 = vld [vmem:[#allocation12 + $0x13a0] sm:$0xff]
        %v2474 = vld [vmem:[#allocation12 + $0x13a8] sm:$0xff]
        %v2475 = vld [vmem:[#allocation12 + $0x13b0] sm:$0xff]
        %v2476 = vld [vmem:[#allocation12 + $0x13b8] sm:$0xff]
        %v2477 = vld [vmem:[#allocation12 + $0x13c0] sm:$0xff]
        %v2478 = vld [vmem:[#allocation12 + $0x13c8] sm:$0xff]
        %v2479 = vld [vmem:[#allocation12 + $0x13d0] sm:$0xff]
        %v2480 = vld [vmem:[#allocation12 + $0x13d8] sm:$0xff]
        %v2481 = vld [vmem:[#allocation12 + $0x13e0] sm:$0xff]
        %v2482 = vld [vmem:[#allocation12 + $0x13e8] sm:$0xff]
        %v2483 = vld [vmem:[#allocation12 + $0x13f0] sm:$0xff]
        %v2484 = vld [vmem:[#allocation12 + $0x13f8] sm:$0xff]
        %v2485 = vld [vmem:[#allocation12 + $0x1400] sm:$0xff]
        %v2486 = vld [vmem:[#allocation12 + $0x1408] sm:$0xff]
        %v2487 = vld [vmem:[#allocation12 + $0x1410] sm:$0xff]
        %v2488 = vld [vmem:[#allocation12 + $0x1418] sm:$0xff]
        %v2489 = vld [vmem:[#allocation12 + $0x1420] sm:$0xff]
        %v2490 = vld [vmem:[#allocation12 + $0x1428] sm:$0xff]
        %v2491 = vld [vmem:[#allocation12 + $0x1430] sm:$0xff]
        %v2492 = vld [vmem:[#allocation12 + $0x1438] sm:$0xff]
        %v2493 = vld [vmem:[#allocation12 + $0x1440] sm:$0xff]
        %v2494 = vld [vmem:[#allocation12 + $0x1448] sm:$0xff]
        %v2495 = vld [vmem:[#allocation12 + $0x1450] sm:$0xff]
        %v2496 = vld [vmem:[#allocation12 + $0x1458] sm:$0xff]
        %v2497 = vld [vmem:[#allocation12 + $0x1460] sm:$0xff]
        %v2498 = vld [vmem:[#allocation12 + $0x1468] sm:$0xff]
        %v2499 = vld [vmem:[#allocation12 + $0x1470] sm:$0xff]
        %v2500 = vld [vmem:[#allocation12 + $0x1478] sm:$0xff]
        %v2501 = vld [vmem:[#allocation12 + $0x1480] sm:$0xff]
        %v2502 = vld [vmem:[#allocation12 + $0x1488] sm:$0xff]
        %v2503 = vld [vmem:[#allocation12 + $0x1490] sm:$0xff]
        %v2504 = vld [vmem:[#allocation12 + $0x1498] sm:$0xff]
        %v2505 = vld [vmem:[#allocation12 + $0x14a0] sm:$0xff]
        %v2506 = vld [vmem:[#allocation12 + $0x14a8] sm:$0xff]
        %v2507 = vld [vmem:[#allocation12 + $0x14b0] sm:$0xff]
        %v2508 = vld [vmem:[#allocation12 + $0x14b8] sm:$0xff]
        %v2509 = vld [vmem:[#allocation12 + $0x14c0] sm:$0xff]
        %v2510 = vld [vmem:[#allocation12 + $0x14c8] sm:$0xff]
        %v2511 = vld [vmem:[#allocation12 + $0x14d0] sm:$0xff]
        %v2512 = vld [vmem:[#allocation12 + $0x14d8] sm:$0xff]
        %v2513 = vld [vmem:[#allocation12 + $0x14e0] sm:$0xff]
        %v2514 = vld [vmem:[#allocation12 + $0x14e8] sm:$0xff]
        %v2515 = vld [vmem:[#allocation12 + $0x14f0] sm:$0xff]
        %v2516 = vld [vmem:[#allocation12 + $0x14f8] sm:$0xff]
        %v2517 = vld [vmem:[#allocation12 + $0x1500] sm:$0xff]
        %v2518 = vld [vmem:[#allocation12 + $0x1508] sm:$0xff]
        %v2519 = vld [vmem:[#allocation12 + $0x1510] sm:$0xff]
        %v2520 = vld [vmem:[#allocation12 + $0x1518] sm:$0xff]
        %v2521 = vld [vmem:[#allocation12 + $0x1520] sm:$0xff]
        %v2522 = vld [vmem:[#allocation12 + $0x1528] sm:$0xff]
        %v2523 = vld [vmem:[#allocation12 + $0x1530] sm:$0xff]
        %v2524 = vld [vmem:[#allocation12 + $0x1538] sm:$0xff]
        %v2525 = vld [vmem:[#allocation12 + $0x1540] sm:$0xff]
        %v2526 = vld [vmem:[#allocation12 + $0x1548] sm:$0xff]
        %v2527 = vld [vmem:[#allocation12 + $0x1550] sm:$0xff]
        %v2528 = vld [vmem:[#allocation12 + $0x1558] sm:$0xff]
        %v2529 = vld [vmem:[#allocation12 + $0x1560] sm:$0xff]
        %v2530 = vld [vmem:[#allocation12 + $0x1568] sm:$0xff]
        %v2531 = vld [vmem:[#allocation12 + $0x1570] sm:$0xff]
        %v2532 = vld [vmem:[#allocation12 + $0x1578] sm:$0xff]
        %v2533 = vld [vmem:[#allocation12 + $0x1580] sm:$0xff]
        %v2534 = vld [vmem:[#allocation12 + $0x1588] sm:$0xff]
        %v2535 = vld [vmem:[#allocation12 + $0x1590] sm:$0xff]
        %v2536 = vld [vmem:[#allocation12 + $0x1598] sm:$0xff]
        %v2537 = vld [vmem:[#allocation12 + $0x15a0] sm:$0xff]
        %v2538 = vld [vmem:[#allocation12 + $0x15a8] sm:$0xff]
        %v2539 = vld [vmem:[#allocation12 + $0x15b0] sm:$0xff]
        %v2540 = vld [vmem:[#allocation12 + $0x15b8] sm:$0xff]
        %v2541 = vld [vmem:[#allocation12 + $0x15c0] sm:$0xff]
        %v2542 = vld [vmem:[#allocation12 + $0x15c8] sm:$0xff]
        %v2543 = vld [vmem:[#allocation12 + $0x15d0] sm:$0xff]
        %v2544 = vld [vmem:[#allocation12 + $0x15d8] sm:$0xff]
        %v2545 = vld [vmem:[#allocation12 + $0x15e0] sm:$0xff]
        %v2546 = vld [vmem:[#allocation12 + $0x15e8] sm:$0xff]
        %v2547 = vld [vmem:[#allocation12 + $0x15f0] sm:$0xff]
        %v2548 = vld [vmem:[#allocation12 + $0x15f8] sm:$0xff]
        %v2549 = vld [vmem:[#allocation12 + $0x1600] sm:$0xff]
        %v2550 = vld [vmem:[#allocation12 + $0x1608] sm:$0xff]
        %v2551 = vld [vmem:[#allocation12 + $0x1610] sm:$0xff]
        %v2552 = vld [vmem:[#allocation12 + $0x1618] sm:$0xff]
        %v2553 = vld [vmem:[#allocation12 + $0x1620] sm:$0xff]
        %v2554 = vld [vmem:[#allocation12 + $0x1628] sm:$0xff]
        %v2555 = vld [vmem:[#allocation12 + $0x1630] sm:$0xff]
        %v2556 = vld [vmem:[#allocation12 + $0x1638] sm:$0xff]
        %v2557 = vld [vmem:[#allocation12 + $0x1640] sm:$0xff]
        %v2558 = vld [vmem:[#allocation12 + $0x1648] sm:$0xff]
        %v2559 = vld [vmem:[#allocation12 + $0x1650] sm:$0xff]
        %v2560 = vld [vmem:[#allocation12 + $0x1658] sm:$0xff]
        %v2561 = vld [vmem:[#allocation12 + $0x1660] sm:$0xff]
        %v2562 = vld [vmem:[#allocation12 + $0x1668] sm:$0xff]
        %v2563 = vld [vmem:[#allocation12 + $0x1670] sm:$0xff]
        %v2564 = vld [vmem:[#allocation12 + $0x1678] sm:$0xff]
        %v2565 = vld [vmem:[#allocation12 + $0x1680] sm:$0xff]
        %v2566 = vld [vmem:[#allocation12 + $0x1688] sm:$0xff]
        %v2567 = vld [vmem:[#allocation12 + $0x1690] sm:$0xff]
        %v2568 = vld [vmem:[#allocation12 + $0x1698] sm:$0xff]
        %v2569 = vld [vmem:[#allocation12 + $0x16a0] sm:$0xff]
        %v2570 = vld [vmem:[#allocation12 + $0x16a8] sm:$0xff]
        %v2571 = vld [vmem:[#allocation12 + $0x16b0] sm:$0xff]
        %v2572 = vld [vmem:[#allocation12 + $0x16b8] sm:$0xff]
        %v2573 = vld [vmem:[#allocation12 + $0x16c0] sm:$0xff]
        %v2574 = vld [vmem:[#allocation12 + $0x16c8] sm:$0xff]
        %v2575 = vld [vmem:[#allocation12 + $0x16d0] sm:$0xff]
        %v2576 = vld [vmem:[#allocation12 + $0x16d8] sm:$0xff]
        %v2577 = vld [vmem:[#allocation12 + $0x16e0] sm:$0xff]
        %v2578 = vld [vmem:[#allocation12 + $0x16e8] sm:$0xff]
        %v2579 = vld [vmem:[#allocation12 + $0x16f0] sm:$0xff]
        %v2580 = vld [vmem:[#allocation12 + $0x16f8] sm:$0xff]
        %v2581 = vld [vmem:[#allocation12 + $0x1700] sm:$0xff]
        %v2582 = vld [vmem:[#allocation12 + $0x1708] sm:$0xff]
        %v2583 = vld [vmem:[#allocation12 + $0x1710] sm:$0xff]
        %v2584 = vld [vmem:[#allocation12 + $0x1718] sm:$0xff]
        %v2585 = vld [vmem:[#allocation12 + $0x1720] sm:$0xff]
        %v2586 = vld [vmem:[#allocation12 + $0x1728] sm:$0xff]
        %v2587 = vld [vmem:[#allocation12 + $0x1730] sm:$0xff]
        %v2588 = vld [vmem:[#allocation12 + $0x1738] sm:$0xff]
        %v2589 = vld [vmem:[#allocation12 + $0x1740] sm:$0xff]
        %v2590 = vld [vmem:[#allocation12 + $0x1748] sm:$0xff]
        %v2591 = vld [vmem:[#allocation12 + $0x1750] sm:$0xff]
        %v2592 = vld [vmem:[#allocation12 + $0x1758] sm:$0xff]
        %v2593 = vld [vmem:[#allocation12 + $0x1760] sm:$0xff]
        %v2594 = vld [vmem:[#allocation12 + $0x1768] sm:$0xff]
        %v2595 = vld [vmem:[#allocation12 + $0x1770] sm:$0xff]
        %v2596 = vld [vmem:[#allocation12 + $0x1778] sm:$0xff]
        %v2597 = vld [vmem:[#allocation12 + $0x1780] sm:$0xff]
        %v2598 = vld [vmem:[#allocation12 + $0x1788] sm:$0xff]
        %v2599 = vld [vmem:[#allocation12 + $0x1790] sm:$0xff]
        %v2600 = vld [vmem:[#allocation12 + $0x1798] sm:$0xff]
        %v2601 = vld [vmem:[#allocation12 + $0x17a0] sm:$0xff]
        %v2602 = vld [vmem:[#allocation12 + $0x17a8] sm:$0xff]
        %v2603 = vld [vmem:[#allocation12 + $0x17b0] sm:$0xff]
        %v2604 = vld [vmem:[#allocation12 + $0x17b8] sm:$0xff]
        %v2605 = vld [vmem:[#allocation12 + $0x17c0] sm:$0xff]
        %v2606 = vld [vmem:[#allocation12 + $0x17c8] sm:$0xff]
        %v2607 = vld [vmem:[#allocation12 + $0x17d0] sm:$0xff]
        %v2608 = vld [vmem:[#allocation12 + $0x17d8] sm:$0xff]
        %v2609 = vld [vmem:[#allocation12 + $0x17e0] sm:$0xff]
        %v2610 = vld [vmem:[#allocation12 + $0x17e8] sm:$0xff]
        %v2611 = vld [vmem:[#allocation12 + $0x17f0] sm:$0xff]
        %v2612 = vld [vmem:[#allocation12 + $0x17f8] sm:$0xff]
        %v2613 = vld [vmem:[#allocation13] sm:$0xf]
        %v2617 = vcombine.high %v1842, %v1842
        %v2619 = vunpack.c.l.s4 1966171168
        %v2620 = vunpack.c.0.s8 %v2619
        %v2621 = vlaneseq
        %v2622 = vshrl.u32 %v2621, 7
        %v2623 = vsub.s32 %v2620, %v2622
        %v2624 = vrot.slane %v1842, %v2623
        %v2626 = vunpack.c.l.s4 1966171168
        %v2627 = vunpack.c.0.s8 %v2626
        %v2628 = vlaneseq
        %v2629 = vshrl.u32 %v2628, 7
        %v2630 = vsub.s32 %v2627, %v2629
        %v2631 = vrot.slane %v2617, %v2630
        %v2632 = vcombine.high %v2624, %v2624
        %v2633 = vcombine.high %v2631, %v2631
        %v2635 = vunpack.c.l.s4 1966171168
        %v2636 = vunpack.c.0.s8 %v2635
        %v2637 = vlaneseq
        %v2638 = vshrl.u32 %v2637, 7
        %v2639 = vsub.s32 %v2636, %v2638
        %v2640 = vrot.slane %v2624, %v2639
        %v2642 = vunpack.c.l.s4 1966171168
        %v2643 = vunpack.c.0.s8 %v2642
        %v2644 = vlaneseq
        %v2645 = vshrl.u32 %v2644, 7
        %v2646 = vsub.s32 %v2643, %v2645
        %v2647 = vrot.slane %v2631, %v2646
        %v2649 = vunpack.c.l.s4 1966171168
        %v2650 = vunpack.c.0.s8 %v2649
        %v2651 = vlaneseq
        %v2652 = vshrl.u32 %v2651, 7
        %v2653 = vsub.s32 %v2650, %v2652
        %v2654 = vrot.slane %v2632, %v2653
        %v2656 = vunpack.c.l.s4 1966171168
        %v2657 = vunpack.c.0.s8 %v2656
        %v2658 = vlaneseq
        %v2659 = vshrl.u32 %v2658, 7
        %v2660 = vsub.s32 %v2657, %v2659
        %v2661 = vrot.slane %v2633, %v2660
        %v2662 = vcombine.high %v2640, %v2640
        %v2663 = vcombine.high %v2647, %v2647
        %v2664 = vcombine.high %v2654, %v2654
        %v2665 = vcombine.high %v2661, %v2661
        %v2666 = vcombine.high %v1843, %v1843
        %v2668 = vunpack.c.l.s4 1966171168
        %v2669 = vunpack.c.0.s8 %v2668
        %v2670 = vlaneseq
        %v2671 = vshrl.u32 %v2670, 7
        %v2672 = vsub.s32 %v2669, %v2671
        %v2673 = vrot.slane %v1843, %v2672
        %v2675 = vunpack.c.l.s4 1966171168
        %v2676 = vunpack.c.0.s8 %v2675
        %v2677 = vlaneseq
        %v2678 = vshrl.u32 %v2677, 7
        %v2679 = vsub.s32 %v2676, %v2678
        %v2680 = vrot.slane %v2666, %v2679
        %v2681 = vcombine.high %v2673, %v2673
        %v2682 = vcombine.high %v2680, %v2680
        %v2684 = vunpack.c.l.s4 1966171168
        %v2685 = vunpack.c.0.s8 %v2684
        %v2686 = vlaneseq
        %v2687 = vshrl.u32 %v2686, 7
        %v2688 = vsub.s32 %v2685, %v2687
        %v2689 = vrot.slane %v2673, %v2688
        %v2691 = vunpack.c.l.s4 1966171168
        %v2692 = vunpack.c.0.s8 %v2691
        %v2693 = vlaneseq
        %v2694 = vshrl.u32 %v2693, 7
        %v2695 = vsub.s32 %v2692, %v2694
        %v2696 = vrot.slane %v2680, %v2695
        %v2698 = vunpack.c.l.s4 1966171168
        %v2699 = vunpack.c.0.s8 %v2698
        %v2700 = vlaneseq
        %v2701 = vshrl.u32 %v2700, 7
        %v2702 = vsub.s32 %v2699, %v2701
        %v2703 = vrot.slane %v2681, %v2702
        %v2705 = vunpack.c.l.s4 1966171168
        %v2706 = vunpack.c.0.s8 %v2705
        %v2707 = vlaneseq
        %v2708 = vshrl.u32 %v2707, 7
        %v2709 = vsub.s32 %v2706, %v2708
        %v2710 = vrot.slane %v2682, %v2709
        %v2711 = vcombine.high %v2689, %v2689
        %v2712 = vcombine.high %v2696, %v2696
        %v2713 = vcombine.high %v2703, %v2703
        %v2714 = vcombine.high %v2710, %v2710
        %v2715 = vcombine.high %v1844, %v1844
        %v2717 = vunpack.c.l.s4 1966171168
        %v2718 = vunpack.c.0.s8 %v2717
        %v2719 = vlaneseq
        %v2720 = vshrl.u32 %v2719, 7
        %v2721 = vsub.s32 %v2718, %v2720
        %v2722 = vrot.slane %v1844, %v2721
        %v2724 = vunpack.c.l.s4 1966171168
        %v2725 = vunpack.c.0.s8 %v2724
        %v2726 = vlaneseq
        %v2727 = vshrl.u32 %v2726, 7
        %v2728 = vsub.s32 %v2725, %v2727
        %v2729 = vrot.slane %v2715, %v2728
        %v2730 = vcombine.high %v2722, %v2722
        %v2731 = vcombine.high %v2729, %v2729
        %v2733 = vunpack.c.l.s4 1966171168
        %v2734 = vunpack.c.0.s8 %v2733
        %v2735 = vlaneseq
        %v2736 = vshrl.u32 %v2735, 7
        %v2737 = vsub.s32 %v2734, %v2736
        %v2738 = vrot.slane %v2722, %v2737
        %v2740 = vunpack.c.l.s4 1966171168
        %v2741 = vunpack.c.0.s8 %v2740
        %v2742 = vlaneseq
        %v2743 = vshrl.u32 %v2742, 7
        %v2744 = vsub.s32 %v2741, %v2743
        %v2745 = vrot.slane %v2729, %v2744
        %v2747 = vunpack.c.l.s4 1966171168
        %v2748 = vunpack.c.0.s8 %v2747
        %v2749 = vlaneseq
        %v2750 = vshrl.u32 %v2749, 7
        %v2751 = vsub.s32 %v2748, %v2750
        %v2752 = vrot.slane %v2730, %v2751
        %v2754 = vunpack.c.l.s4 1966171168
        %v2755 = vunpack.c.0.s8 %v2754
        %v2756 = vlaneseq
        %v2757 = vshrl.u32 %v2756, 7
        %v2758 = vsub.s32 %v2755, %v2757
        %v2759 = vrot.slane %v2731, %v2758
        %v2760 = vcombine.high %v2738, %v2738
        %v2761 = vcombine.high %v2745, %v2745
        %v2762 = vcombine.high %v2752, %v2752
        %v2763 = vcombine.high %v2759, %v2759
        %v3556 = vunpack.c.l.b16 %v1845
        %v3557 = vunpack.c.h.b16 %v1845
        %v3558 = vunpack.c.l.b16 %v1846
        %v3559 = vunpack.c.h.b16 %v1846
        %v3560 = vunpack.c.l.b16 %v1847
        %v3561 = vunpack.c.h.b16 %v1847
        %v3562 = vunpack.c.l.b16 %v1848
        %v3563 = vunpack.c.h.b16 %v1848
        %v3564 = vunpack.c.l.b16 %v1849
        %v3565 = vunpack.c.h.b16 %v1849
        %v3566 = vunpack.c.l.b16 %v1850
        %v3567 = vunpack.c.h.b16 %v1850
        %v3568 = vunpack.c.l.b16 %v1851
        %v3569 = vunpack.c.h.b16 %v1851
        %v3570 = vunpack.c.l.b16 %v1852
        %v3571 = vunpack.c.h.b16 %v1852
        %v3572 = vunpack.c.l.b16 %v1853
        %v3573 = vunpack.c.h.b16 %v1853
        %v3574 = vunpack.c.l.b16 %v1854
        %v3575 = vunpack.c.h.b16 %v1854
        %v3576 = vunpack.c.l.b16 %v1855
        %v3577 = vunpack.c.h.b16 %v1855
        %v3578 = vunpack.c.l.b16 %v1856
        %v3579 = vunpack.c.h.b16 %v1856
        %v3580 = vunpack.c.l.b16 %v1857
        %v3581 = vunpack.c.h.b16 %v1857
        %v3582 = vunpack.c.l.b16 %v1858
        %v3583 = vunpack.c.h.b16 %v1858
        %v3584 = vunpack.c.l.b16 %v1859
        %v3585 = vunpack.c.h.b16 %v1859
        %v3586 = vunpack.c.l.b16 %v1860
        %v3587 = vunpack.c.h.b16 %v1860
        %v3588 = vunpack.c.l.b16 %v1861
        %v3589 = vunpack.c.h.b16 %v1861
        %v3590 = vunpack.c.l.b16 %v1862
        %v3591 = vunpack.c.h.b16 %v1862
        %v3592 = vunpack.c.l.b16 %v1863
        %v3593 = vunpack.c.h.b16 %v1863
        %v3594 = vunpack.c.l.b16 %v1864
        %v3595 = vunpack.c.h.b16 %v1864
        %v3596 = vunpack.c.l.b16 %v1865
        %v3597 = vunpack.c.h.b16 %v1865
        %v3598 = vunpack.c.l.b16 %v1866
        %v3599 = vunpack.c.h.b16 %v1866
        %v3600 = vunpack.c.l.b16 %v1867
        %v3601 = vunpack.c.h.b16 %v1867
        %v3602 = vunpack.c.l.b16 %v1868
        %v3603 = vunpack.c.h.b16 %v1868
        %v3604 = vunpack.c.l.b16 %v1869
        %v3605 = vunpack.c.h.b16 %v1869
        %v3606 = vunpack.c.l.b16 %v1870
        %v3607 = vunpack.c.h.b16 %v1870
        %v3608 = vunpack.c.l.b16 %v1871
        %v3609 = vunpack.c.h.b16 %v1871
        %v3610 = vunpack.c.l.b16 %v1872
        %v3611 = vunpack.c.h.b16 %v1872
        %v3612 = vunpack.c.l.b16 %v1873
        %v3613 = vunpack.c.h.b16 %v1873
        %v3614 = vunpack.c.l.b16 %v1874
        %v3615 = vunpack.c.h.b16 %v1874
        %v3616 = vunpack.c.l.b16 %v1875
        %v3617 = vunpack.c.h.b16 %v1875
        %v3618 = vunpack.c.l.b16 %v1876
        %v3619 = vunpack.c.h.b16 %v1876
        %v3620 = vunpack.c.l.b16 %v1877
        %v3621 = vunpack.c.h.b16 %v1877
        %v3622 = vunpack.c.l.b16 %v1878
        %v3623 = vunpack.c.h.b16 %v1878
        %v3624 = vunpack.c.l.b16 %v1879
        %v3625 = vunpack.c.h.b16 %v1879
        %v3626 = vunpack.c.l.b16 %v1880
        %v3627 = vunpack.c.h.b16 %v1880
        %v3628 = vunpack.c.l.b16 %v1881
        %v3629 = vunpack.c.h.b16 %v1881
        %v3630 = vunpack.c.l.b16 %v1882
        %v3631 = vunpack.c.h.b16 %v1882
        %v3632 = vunpack.c.l.b16 %v1883
        %v3633 = vunpack.c.h.b16 %v1883
        %v3634 = vunpack.c.l.b16 %v1884
        %v3635 = vunpack.c.h.b16 %v1884
        %v3636 = vunpack.c.l.b16 %v1885
        %v3637 = vunpack.c.h.b16 %v1885
        %v3638 = vunpack.c.l.b16 %v1886
        %v3639 = vunpack.c.h.b16 %v1886
        %v3640 = vunpack.c.l.b16 %v1887
        %v3641 = vunpack.c.h.b16 %v1887
        %v3642 = vunpack.c.l.b16 %v1888
        %v3643 = vunpack.c.h.b16 %v1888
        %v3644 = vunpack.c.l.b16 %v1889
        %v3645 = vunpack.c.h.b16 %v1889
        %v3646 = vunpack.c.l.b16 %v1890
        %v3647 = vunpack.c.h.b16 %v1890
        %v3648 = vunpack.c.l.b16 %v1891
        %v3649 = vunpack.c.h.b16 %v1891
        %v3650 = vunpack.c.l.b16 %v1892
        %v3651 = vunpack.c.h.b16 %v1892
        %v3652 = vunpack.c.l.b16 %v1893
        %v3653 = vunpack.c.h.b16 %v1893
        %v3654 = vunpack.c.l.b16 %v1894
        %v3655 = vunpack.c.h.b16 %v1894
        %v3656 = vunpack.c.l.b16 %v1895
        %v3657 = vunpack.c.h.b16 %v1895
        %v3658 = vunpack.c.l.b16 %v1896
        %v3659 = vunpack.c.h.b16 %v1896
        %v3660 = vunpack.c.l.b16 %v1897
        %v3661 = vunpack.c.h.b16 %v1897
        %v3662 = vunpack.c.l.b16 %v1898
        %v3663 = vunpack.c.h.b16 %v1898
        %v3664 = vunpack.c.l.b16 %v1899
        %v3665 = vunpack.c.h.b16 %v1899
        %v3666 = vunpack.c.l.b16 %v1900
        %v3667 = vunpack.c.h.b16 %v1900
        %v3668 = vunpack.c.l.b16 %v1901
        %v3669 = vunpack.c.h.b16 %v1901
        %v3670 = vunpack.c.l.b16 %v1902
        %v3671 = vunpack.c.h.b16 %v1902
        %v3672 = vunpack.c.l.b16 %v1903
        %v3673 = vunpack.c.h.b16 %v1903
        %v3674 = vunpack.c.l.b16 %v1904
        %v3675 = vunpack.c.h.b16 %v1904
        %v3676 = vunpack.c.l.b16 %v1905
        %v3677 = vunpack.c.h.b16 %v1905
        %v3678 = vunpack.c.l.b16 %v1906
        %v3679 = vunpack.c.h.b16 %v1906
        %v3680 = vunpack.c.l.b16 %v1907
        %v3681 = vunpack.c.h.b16 %v1907
        %v3682 = vunpack.c.l.b16 %v1908
        %v3683 = vunpack.c.h.b16 %v1908
        %v3684 = vunpack.c.l.b16 %v1909
        %v3685 = vunpack.c.h.b16 %v1909
        %v3686 = vunpack.c.l.b16 %v1910
        %v3687 = vunpack.c.h.b16 %v1910
        %v3688 = vunpack.c.l.b16 %v1911
        %v3689 = vunpack.c.h.b16 %v1911
        %v3690 = vunpack.c.l.b16 %v1912
        %v3691 = vunpack.c.h.b16 %v1912
        %v3692 = vunpack.c.l.b16 %v1913
        %v3693 = vunpack.c.h.b16 %v1913
        %v3694 = vunpack.c.l.b16 %v1914
        %v3695 = vunpack.c.h.b16 %v1914
        %v3696 = vunpack.c.l.b16 %v1915
        %v3697 = vunpack.c.h.b16 %v1915
        %v3698 = vunpack.c.l.b16 %v1916
        %v3699 = vunpack.c.h.b16 %v1916
        %v3700 = vunpack.c.l.b16 %v1917
        %v3701 = vunpack.c.h.b16 %v1917
        %v3702 = vunpack.c.l.b16 %v1918
        %v3703 = vunpack.c.h.b16 %v1918
        %v3704 = vunpack.c.l.b16 %v1919
        %v3705 = vunpack.c.h.b16 %v1919
        %v3706 = vunpack.c.l.b16 %v1920
        %v3707 = vunpack.c.h.b16 %v1920
        %v3708 = vunpack.c.l.b16 %v1921
        %v3709 = vunpack.c.h.b16 %v1921
        %v3710 = vunpack.c.l.b16 %v1922
        %v3711 = vunpack.c.h.b16 %v1922
        %v3712 = vunpack.c.l.b16 %v1923
        %v3713 = vunpack.c.h.b16 %v1923
        %v3714 = vunpack.c.l.b16 %v1924
        %v3715 = vunpack.c.h.b16 %v1924
        %v3716 = vunpack.c.l.b16 %v1925
        %v3717 = vunpack.c.h.b16 %v1925
        %v3718 = vunpack.c.l.b16 %v1926
        %v3719 = vunpack.c.h.b16 %v1926
        %v3720 = vunpack.c.l.b16 %v1927
        %v3721 = vunpack.c.h.b16 %v1927
        %v3722 = vunpack.c.l.b16 %v1928
        %v3723 = vunpack.c.h.b16 %v1928
        %v3724 = vunpack.c.l.b16 %v1929
        %v3725 = vunpack.c.h.b16 %v1929
        %v3726 = vunpack.c.l.b16 %v1930
        %v3727 = vunpack.c.h.b16 %v1930
        %v3728 = vunpack.c.l.b16 %v1931
        %v3729 = vunpack.c.h.b16 %v1931
        %v3730 = vunpack.c.l.b16 %v1932
        %v3731 = vunpack.c.h.b16 %v1932
        %v3732 = vunpack.c.l.b16 %v1933
        %v3733 = vunpack.c.h.b16 %v1933
        %v3734 = vunpack.c.l.b16 %v1934
        %v3735 = vunpack.c.h.b16 %v1934
        %v3736 = vunpack.c.l.b16 %v1935
        %v3737 = vunpack.c.h.b16 %v1935
        %v3738 = vunpack.c.l.b16 %v1936
        %v3739 = vunpack.c.h.b16 %v1936
        %v3740 = vunpack.c.l.b16 %v1937
        %v3741 = vunpack.c.h.b16 %v1937
        %v3742 = vunpack.c.l.b16 %v1938
        %v3743 = vunpack.c.h.b16 %v1938
        %v3744 = vunpack.c.l.b16 %v1939
        %v3745 = vunpack.c.h.b16 %v1939
        %v3746 = vunpack.c.l.b16 %v1940
        %v3747 = vunpack.c.h.b16 %v1940
        %v3748 = vunpack.c.l.b16 %v1941
        %v3749 = vunpack.c.h.b16 %v1941
        %v3750 = vunpack.c.l.b16 %v1942
        %v3751 = vunpack.c.h.b16 %v1942
        %v3752 = vunpack.c.l.b16 %v1943
        %v3753 = vunpack.c.h.b16 %v1943
        %v3754 = vunpack.c.l.b16 %v1944
        %v3755 = vunpack.c.h.b16 %v1944
        %v3756 = vunpack.c.l.b16 %v1945
        %v3757 = vunpack.c.h.b16 %v1945
        %v3758 = vunpack.c.l.b16 %v1946
        %v3759 = vunpack.c.h.b16 %v1946
        %v3760 = vunpack.c.l.b16 %v1947
        %v3761 = vunpack.c.h.b16 %v1947
        %v3762 = vunpack.c.l.b16 %v1948
        %v3763 = vunpack.c.h.b16 %v1948
        %v3764 = vunpack.c.l.b16 %v1949
        %v3765 = vunpack.c.h.b16 %v1949
        %v3766 = vunpack.c.l.b16 %v1950
        %v3767 = vunpack.c.h.b16 %v1950
        %v3768 = vunpack.c.l.b16 %v1951
        %v3769 = vunpack.c.h.b16 %v1951
        %v3770 = vunpack.c.l.b16 %v1952
        %v3771 = vunpack.c.h.b16 %v1952
        %v3772 = vunpack.c.l.b16 %v1953
        %v3773 = vunpack.c.h.b16 %v1953
        %v3774 = vunpack.c.l.b16 %v1954
        %v3775 = vunpack.c.h.b16 %v1954
        %v3776 = vunpack.c.l.b16 %v1955
        %v3777 = vunpack.c.h.b16 %v1955
        %v3778 = vunpack.c.l.b16 %v1956
        %v3779 = vunpack.c.h.b16 %v1956
        %v3780 = vunpack.c.l.b16 %v1957
        %v3781 = vunpack.c.h.b16 %v1957
        %v3782 = vunpack.c.l.b16 %v1958
        %v3783 = vunpack.c.h.b16 %v1958
        %v3784 = vunpack.c.l.b16 %v1959
        %v3785 = vunpack.c.h.b16 %v1959
        %v3786 = vunpack.c.l.b16 %v1960
        %v3787 = vunpack.c.h.b16 %v1960
        %v3788 = vunpack.c.l.b16 %v1961
        %v3789 = vunpack.c.h.b16 %v1961
        %v3790 = vunpack.c.l.b16 %v1962
        %v3791 = vunpack.c.h.b16 %v1962
        %v3792 = vunpack.c.l.b16 %v1963
        %v3793 = vunpack.c.h.b16 %v1963
        %v3794 = vunpack.c.l.b16 %v1964
        %v3795 = vunpack.c.h.b16 %v1964
        %v3796 = vunpack.c.l.b16 %v1965
        %v3797 = vunpack.c.h.b16 %v1965
        %v3798 = vunpack.c.l.b16 %v1966
        %v3799 = vunpack.c.h.b16 %v1966
        %v3800 = vunpack.c.l.b16 %v1967
        %v3801 = vunpack.c.h.b16 %v1967
        %v3802 = vunpack.c.l.b16 %v1968
        %v3803 = vunpack.c.h.b16 %v1968
        %v3804 = vunpack.c.l.b16 %v1969
        %v3805 = vunpack.c.h.b16 %v1969
        %v3806 = vunpack.c.l.b16 %v1970
        %v3807 = vunpack.c.h.b16 %v1970
        %v3808 = vunpack.c.l.b16 %v1971
        %v3809 = vunpack.c.h.b16 %v1971
        %v3810 = vunpack.c.l.b16 %v1972
        %v3811 = vunpack.c.h.b16 %v1972
        %v3812 = vunpack.c.l.b16 %v1973
        %v3813 = vunpack.c.h.b16 %v1973
        %v3814 = vunpack.c.l.b16 %v1974
        %v3815 = vunpack.c.h.b16 %v1974
        %v3816 = vunpack.c.l.b16 %v1975
        %v3817 = vunpack.c.h.b16 %v1975
        %v3818 = vunpack.c.l.b16 %v1976
        %v3819 = vunpack.c.h.b16 %v1976
        %v3820 = vunpack.c.l.b16 %v1977
        %v3821 = vunpack.c.h.b16 %v1977
        %v3822 = vunpack.c.l.b16 %v1978
        %v3823 = vunpack.c.h.b16 %v1978
        %v3824 = vunpack.c.l.b16 %v1979
        %v3825 = vunpack.c.h.b16 %v1979
        %v3826 = vunpack.c.l.b16 %v1980
        %v3827 = vunpack.c.h.b16 %v1980
        %v3828 = vunpack.c.l.b16 %v1981
        %v3829 = vunpack.c.h.b16 %v1981
        %v3830 = vunpack.c.l.b16 %v1982
        %v3831 = vunpack.c.h.b16 %v1982
        %v3832 = vunpack.c.l.b16 %v1983
        %v3833 = vunpack.c.h.b16 %v1983
        %v3834 = vunpack.c.l.b16 %v1984
        %v3835 = vunpack.c.h.b16 %v1984
        %v3836 = vunpack.c.l.b16 %v1985
        %v3837 = vunpack.c.h.b16 %v1985
        %v3838 = vunpack.c.l.b16 %v1986
        %v3839 = vunpack.c.h.b16 %v1986
        %v3840 = vunpack.c.l.b16 %v1987
        %v3841 = vunpack.c.h.b16 %v1987
        %v3842 = vunpack.c.l.b16 %v1988
        %v3843 = vunpack.c.h.b16 %v1988
        %v3844 = vunpack.c.l.b16 %v1989
        %v3845 = vunpack.c.h.b16 %v1989
        %v3846 = vunpack.c.l.b16 %v1990
        %v3847 = vunpack.c.h.b16 %v1990
        %v3848 = vunpack.c.l.b16 %v1991
        %v3849 = vunpack.c.h.b16 %v1991
        %v3850 = vunpack.c.l.b16 %v1992
        %v3851 = vunpack.c.h.b16 %v1992
        %v3852 = vunpack.c.l.b16 %v1993
        %v3853 = vunpack.c.h.b16 %v1993
        %v3854 = vunpack.c.l.b16 %v1994
        %v3855 = vunpack.c.h.b16 %v1994
        %v3856 = vunpack.c.l.b16 %v1995
        %v3857 = vunpack.c.h.b16 %v1995
        %v3858 = vunpack.c.l.b16 %v1996
        %v3859 = vunpack.c.h.b16 %v1996
        %v3860 = vunpack.c.l.b16 %v1997
        %v3861 = vunpack.c.h.b16 %v1997
        %v3862 = vunpack.c.l.b16 %v1998
        %v3863 = vunpack.c.h.b16 %v1998
        %v3864 = vunpack.c.l.b16 %v1999
        %v3865 = vunpack.c.h.b16 %v1999
        %v3866 = vunpack.c.l.b16 %v2000
        %v3867 = vunpack.c.h.b16 %v2000
        %v3868 = vunpack.c.l.b16 %v2001
        %v3869 = vunpack.c.h.b16 %v2001
        %v3870 = vunpack.c.l.b16 %v2002
        %v3871 = vunpack.c.h.b16 %v2002
        %v3872 = vunpack.c.l.b16 %v2003
        %v3873 = vunpack.c.h.b16 %v2003
        %v3874 = vunpack.c.l.b16 %v2004
        %v3875 = vunpack.c.h.b16 %v2004
        %v3876 = vunpack.c.l.b16 %v2005
        %v3877 = vunpack.c.h.b16 %v2005
        %v3878 = vunpack.c.l.b16 %v2006
        %v3879 = vunpack.c.h.b16 %v2006
        %v3880 = vunpack.c.l.b16 %v2007
        %v3881 = vunpack.c.h.b16 %v2007
        %v3882 = vunpack.c.l.b16 %v2008
        %v3883 = vunpack.c.h.b16 %v2008
        %v3884 = vunpack.c.l.b16 %v2009
        %v3885 = vunpack.c.h.b16 %v2009
        %v3886 = vunpack.c.l.b16 %v2010
        %v3887 = vunpack.c.h.b16 %v2010
        %v3888 = vunpack.c.l.b16 %v2011
        %v3889 = vunpack.c.h.b16 %v2011
        %v3890 = vunpack.c.l.b16 %v2012
        %v3891 = vunpack.c.h.b16 %v2012
        %v3892 = vunpack.c.l.b16 %v2013
        %v3893 = vunpack.c.h.b16 %v2013
        %v3894 = vunpack.c.l.b16 %v2014
        %v3895 = vunpack.c.h.b16 %v2014
        %v3896 = vunpack.c.l.b16 %v2015
        %v3897 = vunpack.c.h.b16 %v2015
        %v3898 = vunpack.c.l.b16 %v2016
        %v3899 = vunpack.c.h.b16 %v2016
        %v3900 = vunpack.c.l.b16 %v2017
        %v3901 = vunpack.c.h.b16 %v2017
        %v3902 = vunpack.c.l.b16 %v2018
        %v3903 = vunpack.c.h.b16 %v2018
        %v3904 = vunpack.c.l.b16 %v2019
        %v3905 = vunpack.c.h.b16 %v2019
        %v3906 = vunpack.c.l.b16 %v2020
        %v3907 = vunpack.c.h.b16 %v2020
        %v3908 = vunpack.c.l.b16 %v2021
        %v3909 = vunpack.c.h.b16 %v2021
        %v3910 = vunpack.c.l.b16 %v2022
        %v3911 = vunpack.c.h.b16 %v2022
        %v3912 = vunpack.c.l.b16 %v2023
        %v3913 = vunpack.c.h.b16 %v2023
        %v3914 = vunpack.c.l.b16 %v2024
        %v3915 = vunpack.c.h.b16 %v2024
        %v3916 = vunpack.c.l.b16 %v2025
        %v3917 = vunpack.c.h.b16 %v2025
        %v3918 = vunpack.c.l.b16 %v2026
        %v3919 = vunpack.c.h.b16 %v2026
        %v3920 = vunpack.c.l.b16 %v2027
        %v3921 = vunpack.c.h.b16 %v2027
        %v3922 = vunpack.c.l.b16 %v2028
        %v3923 = vunpack.c.h.b16 %v2028
        %v3924 = vunpack.c.l.b16 %v2029
        %v3925 = vunpack.c.h.b16 %v2029
        %v3926 = vunpack.c.l.b16 %v2030
        %v3927 = vunpack.c.h.b16 %v2030
        %v3928 = vunpack.c.l.b16 %v2031
        %v3929 = vunpack.c.h.b16 %v2031
        %v3930 = vunpack.c.l.b16 %v2032
        %v3931 = vunpack.c.h.b16 %v2032
        %v3932 = vunpack.c.l.b16 %v2033
        %v3933 = vunpack.c.h.b16 %v2033
        %v3934 = vunpack.c.l.b16 %v2034
        %v3935 = vunpack.c.h.b16 %v2034
        %v3936 = vunpack.c.l.b16 %v2035
        %v3937 = vunpack.c.h.b16 %v2035
        %v3938 = vunpack.c.l.b16 %v2036
        %v3939 = vunpack.c.h.b16 %v2036
        %v3940 = vunpack.c.l.b16 %v2037
        %v3941 = vunpack.c.h.b16 %v2037
        %v3942 = vunpack.c.l.b16 %v2038
        %v3943 = vunpack.c.h.b16 %v2038
        %v3944 = vunpack.c.l.b16 %v2039
        %v3945 = vunpack.c.h.b16 %v2039
        %v3946 = vunpack.c.l.b16 %v2040
        %v3947 = vunpack.c.h.b16 %v2040
        %v3948 = vunpack.c.l.b16 %v2041
        %v3949 = vunpack.c.h.b16 %v2041
        %v3950 = vunpack.c.l.b16 %v2042
        %v3951 = vunpack.c.h.b16 %v2042
        %v3952 = vunpack.c.l.b16 %v2043
        %v3953 = vunpack.c.h.b16 %v2043
        %v3954 = vunpack.c.l.b16 %v2044
        %v3955 = vunpack.c.h.b16 %v2044
        %v3956 = vunpack.c.l.b16 %v2045
        %v3957 = vunpack.c.h.b16 %v2045
        %v3958 = vunpack.c.l.b16 %v2046
        %v3959 = vunpack.c.h.b16 %v2046
        %v3960 = vunpack.c.l.b16 %v2047
        %v3961 = vunpack.c.h.b16 %v2047
        %v3962 = vunpack.c.l.b16 %v2048
        %v3963 = vunpack.c.h.b16 %v2048
        %v3964 = vunpack.c.l.b16 %v2049
        %v3965 = vunpack.c.h.b16 %v2049
        %v3966 = vunpack.c.l.b16 %v2050
        %v3967 = vunpack.c.h.b16 %v2050
        %v3968 = vunpack.c.l.b16 %v2051
        %v3969 = vunpack.c.h.b16 %v2051
        %v3970 = vunpack.c.l.b16 %v2052
        %v3971 = vunpack.c.h.b16 %v2052
        %v3972 = vunpack.c.l.b16 %v2053
        %v3973 = vunpack.c.h.b16 %v2053
        %v3974 = vunpack.c.l.b16 %v2054
        %v3975 = vunpack.c.h.b16 %v2054
        %v3976 = vunpack.c.l.b16 %v2055
        %v3977 = vunpack.c.h.b16 %v2055
        %v3978 = vunpack.c.l.b16 %v2056
        %v3979 = vunpack.c.h.b16 %v2056
        %v3980 = vunpack.c.l.b16 %v2057
        %v3981 = vunpack.c.h.b16 %v2057
        %v3982 = vunpack.c.l.b16 %v2058
        %v3983 = vunpack.c.h.b16 %v2058
        %v3984 = vunpack.c.l.b16 %v2059
        %v3985 = vunpack.c.h.b16 %v2059
        %v3986 = vunpack.c.l.b16 %v2060
        %v3987 = vunpack.c.h.b16 %v2060
        %v3988 = vunpack.c.l.b16 %v2061
        %v3989 = vunpack.c.h.b16 %v2061
        %v3990 = vunpack.c.l.b16 %v2062
        %v3991 = vunpack.c.h.b16 %v2062
        %v3992 = vunpack.c.l.b16 %v2063
        %v3993 = vunpack.c.h.b16 %v2063
        %v3994 = vunpack.c.l.b16 %v2064
        %v3995 = vunpack.c.h.b16 %v2064
        %v3996 = vunpack.c.l.b16 %v2065
        %v3997 = vunpack.c.h.b16 %v2065
        %v3998 = vunpack.c.l.b16 %v2066
        %v3999 = vunpack.c.h.b16 %v2066
        %v4000 = vunpack.c.l.b16 %v2067
        %v4001 = vunpack.c.h.b16 %v2067
        %v4002 = vunpack.c.l.b16 %v2068
        %v4003 = vunpack.c.h.b16 %v2068
        %v4004 = vunpack.c.l.b16 %v2069
        %v4005 = vunpack.c.h.b16 %v2069
        %v4006 = vunpack.c.l.b16 %v2070
        %v4007 = vunpack.c.h.b16 %v2070
        %v4008 = vunpack.c.l.b16 %v2071
        %v4009 = vunpack.c.h.b16 %v2071
        %v4010 = vunpack.c.l.b16 %v2072
        %v4011 = vunpack.c.h.b16 %v2072
        %v4012 = vunpack.c.l.b16 %v2073
        %v4013 = vunpack.c.h.b16 %v2073
        %v4014 = vunpack.c.l.b16 %v2074
        %v4015 = vunpack.c.h.b16 %v2074
        %v4016 = vunpack.c.l.b16 %v2075
        %v4017 = vunpack.c.h.b16 %v2075
        %v4018 = vunpack.c.l.b16 %v2076
        %v4019 = vunpack.c.h.b16 %v2076
        %v4020 = vunpack.c.l.b16 %v2077
        %v4021 = vunpack.c.h.b16 %v2077
        %v4022 = vunpack.c.l.b16 %v2078
        %v4023 = vunpack.c.h.b16 %v2078
        %v4024 = vunpack.c.l.b16 %v2079
        %v4025 = vunpack.c.h.b16 %v2079
        %v4026 = vunpack.c.l.b16 %v2080
        %v4027 = vunpack.c.h.b16 %v2080
        %v4028 = vunpack.c.l.b16 %v2081
        %v4029 = vunpack.c.h.b16 %v2081
        %v4030 = vunpack.c.l.b16 %v2082
        %v4031 = vunpack.c.h.b16 %v2082
        %v4032 = vunpack.c.l.b16 %v2083
        %v4033 = vunpack.c.h.b16 %v2083
        %v4034 = vunpack.c.l.b16 %v2084
        %v4035 = vunpack.c.h.b16 %v2084
        %v4036 = vunpack.c.l.b16 %v2085
        %v4037 = vunpack.c.h.b16 %v2085
        %v4038 = vunpack.c.l.b16 %v2086
        %v4039 = vunpack.c.h.b16 %v2086
        %v4040 = vunpack.c.l.b16 %v2087
        %v4041 = vunpack.c.h.b16 %v2087
        %v4042 = vunpack.c.l.b16 %v2088
        %v4043 = vunpack.c.h.b16 %v2088
        %v4044 = vunpack.c.l.b16 %v2089
        %v4045 = vunpack.c.h.b16 %v2089
        %v4046 = vunpack.c.l.b16 %v2090
        %v4047 = vunpack.c.h.b16 %v2090
        %v4048 = vunpack.c.l.b16 %v2091
        %v4049 = vunpack.c.h.b16 %v2091
        %v4050 = vunpack.c.l.b16 %v2092
        %v4051 = vunpack.c.h.b16 %v2092
        %v4052 = vunpack.c.l.b16 %v2093
        %v4053 = vunpack.c.h.b16 %v2093
        %v4054 = vunpack.c.l.b16 %v2094
        %v4055 = vunpack.c.h.b16 %v2094
        %v4056 = vunpack.c.l.b16 %v2095
        %v4057 = vunpack.c.h.b16 %v2095
        %v4058 = vunpack.c.l.b16 %v2096
        %v4059 = vunpack.c.h.b16 %v2096
        %v4060 = vunpack.c.l.b16 %v2097
        %v4061 = vunpack.c.h.b16 %v2097
        %v4062 = vunpack.c.l.b16 %v2098
        %v4063 = vunpack.c.h.b16 %v2098
        %v4064 = vunpack.c.l.b16 %v2099
        %v4065 = vunpack.c.h.b16 %v2099
        %v4066 = vunpack.c.l.b16 %v2100
        %v4067 = vunpack.c.h.b16 %v2100
        %v4068 = vunpack.c.l.b16 %v2101
        %v4069 = vunpack.c.h.b16 %v2101
        %v4070 = vunpack.c.l.b16 %v2102
        %v4071 = vunpack.c.h.b16 %v2102
        %v4072 = vunpack.c.l.b16 %v2103
        %v4073 = vunpack.c.h.b16 %v2103
        %v4074 = vunpack.c.l.b16 %v2104
        %v4075 = vunpack.c.h.b16 %v2104
        %v4076 = vunpack.c.l.b16 %v2105
        %v4077 = vunpack.c.h.b16 %v2105
        %v4078 = vunpack.c.l.b16 %v2106
        %v4079 = vunpack.c.h.b16 %v2106
        %v4080 = vunpack.c.l.b16 %v2107
        %v4081 = vunpack.c.h.b16 %v2107
        %v4082 = vunpack.c.l.b16 %v2108
        %v4083 = vunpack.c.h.b16 %v2108
        %v4084 = vunpack.c.l.b16 %v2109
        %v4085 = vunpack.c.h.b16 %v2109
        %v4086 = vunpack.c.l.b16 %v2110
        %v4087 = vunpack.c.h.b16 %v2110
        %v4088 = vunpack.c.l.b16 %v2111
        %v4089 = vunpack.c.h.b16 %v2111
        %v4090 = vunpack.c.l.b16 %v2112
        %v4091 = vunpack.c.h.b16 %v2112
        %v4092 = vunpack.c.l.b16 %v2113
        %v4093 = vunpack.c.h.b16 %v2113
        %v4094 = vunpack.c.l.b16 %v2114
        %v4095 = vunpack.c.h.b16 %v2114
        %v4096 = vunpack.c.l.b16 %v2115
        %v4097 = vunpack.c.h.b16 %v2115
        %v4098 = vunpack.c.l.b16 %v2116
        %v4099 = vunpack.c.h.b16 %v2116
        %v4100 = vunpack.c.l.b16 %v2117
        %v4101 = vunpack.c.h.b16 %v2117
        %v4102 = vunpack.c.l.b16 %v2118
        %v4103 = vunpack.c.h.b16 %v2118
        %v4104 = vunpack.c.l.b16 %v2119
        %v4105 = vunpack.c.h.b16 %v2119
        %v4106 = vunpack.c.l.b16 %v2120
        %v4107 = vunpack.c.h.b16 %v2120
        %v4108 = vunpack.c.l.b16 %v2121
        %v4109 = vunpack.c.h.b16 %v2121
        %v4110 = vunpack.c.l.b16 %v2122
        %v4111 = vunpack.c.h.b16 %v2122
        %v4112 = vunpack.c.l.b16 %v2123
        %v4113 = vunpack.c.h.b16 %v2123
        %v4114 = vunpack.c.l.b16 %v2124
        %v4115 = vunpack.c.h.b16 %v2124
        %v4116 = vunpack.c.l.b16 %v2125
        %v4117 = vunpack.c.h.b16 %v2125
        %v4118 = vunpack.c.l.b16 %v2126
        %v4119 = vunpack.c.h.b16 %v2126
        %v4120 = vunpack.c.l.b16 %v2127
        %v4121 = vunpack.c.h.b16 %v2127
        %v4122 = vunpack.c.l.b16 %v2128
        %v4123 = vunpack.c.h.b16 %v2128
        %v4124 = vunpack.c.l.b16 %v2129
        %v4125 = vunpack.c.h.b16 %v2129
        %v4126 = vunpack.c.l.b16 %v2130
        %v4127 = vunpack.c.h.b16 %v2130
        %v4128 = vunpack.c.l.b16 %v2131
        %v4129 = vunpack.c.h.b16 %v2131
        %v4130 = vunpack.c.l.b16 %v2132
        %v4131 = vunpack.c.h.b16 %v2132
        %v4132 = vunpack.c.l.b16 %v2133
        %v4133 = vunpack.c.h.b16 %v2133
        %v4134 = vunpack.c.l.b16 %v2134
        %v4135 = vunpack.c.h.b16 %v2134
        %v4136 = vunpack.c.l.b16 %v2135
        %v4137 = vunpack.c.h.b16 %v2135
        %v4138 = vunpack.c.l.b16 %v2136
        %v4139 = vunpack.c.h.b16 %v2136
        %v4140 = vunpack.c.l.b16 %v2137
        %v4141 = vunpack.c.h.b16 %v2137
        %v4142 = vunpack.c.l.b16 %v2138
        %v4143 = vunpack.c.h.b16 %v2138
        %v4144 = vunpack.c.l.b16 %v2139
        %v4145 = vunpack.c.h.b16 %v2139
        %v4146 = vunpack.c.l.b16 %v2140
        %v4147 = vunpack.c.h.b16 %v2140
        %v4148 = vunpack.c.l.b16 %v2141
        %v4149 = vunpack.c.h.b16 %v2141
        %v4150 = vunpack.c.l.b16 %v2142
        %v4151 = vunpack.c.h.b16 %v2142
        %v4152 = vunpack.c.l.b16 %v2143
        %v4153 = vunpack.c.h.b16 %v2143
        %v4154 = vunpack.c.l.b16 %v2144
        %v4155 = vunpack.c.h.b16 %v2144
        %v4156 = vunpack.c.l.b16 %v2145
        %v4157 = vunpack.c.h.b16 %v2145
        %v4158 = vunpack.c.l.b16 %v2146
        %v4159 = vunpack.c.h.b16 %v2146
        %v4160 = vunpack.c.l.b16 %v2147
        %v4161 = vunpack.c.h.b16 %v2147
        %v4162 = vunpack.c.l.b16 %v2148
        %v4163 = vunpack.c.h.b16 %v2148
        %v4164 = vunpack.c.l.b16 %v2149
        %v4165 = vunpack.c.h.b16 %v2149
        %v4166 = vunpack.c.l.b16 %v2150
        %v4167 = vunpack.c.h.b16 %v2150
        %v4168 = vunpack.c.l.b16 %v2151
        %v4169 = vunpack.c.h.b16 %v2151
        %v4170 = vunpack.c.l.b16 %v2152
        %v4171 = vunpack.c.h.b16 %v2152
        %v4172 = vunpack.c.l.b16 %v2153
        %v4173 = vunpack.c.h.b16 %v2153
        %v4174 = vunpack.c.l.b16 %v2154
        %v4175 = vunpack.c.h.b16 %v2154
        %v4176 = vunpack.c.l.b16 %v2155
        %v4177 = vunpack.c.h.b16 %v2155
        %v4178 = vunpack.c.l.b16 %v2156
        %v4179 = vunpack.c.h.b16 %v2156
        %v4180 = vunpack.c.l.b16 %v2157
        %v4181 = vunpack.c.h.b16 %v2157
        %v4182 = vunpack.c.l.b16 %v2158
        %v4183 = vunpack.c.h.b16 %v2158
        %v4184 = vunpack.c.l.b16 %v2159
        %v4185 = vunpack.c.h.b16 %v2159
        %v4186 = vunpack.c.l.b16 %v2160
        %v4187 = vunpack.c.h.b16 %v2160
        %v4188 = vunpack.c.l.b16 %v2161
        %v4189 = vunpack.c.h.b16 %v2161
        %v4190 = vunpack.c.l.b16 %v2162
        %v4191 = vunpack.c.h.b16 %v2162
        %v4192 = vunpack.c.l.b16 %v2163
        %v4193 = vunpack.c.h.b16 %v2163
        %v4194 = vunpack.c.l.b16 %v2164
        %v4195 = vunpack.c.h.b16 %v2164
        %v4196 = vunpack.c.l.b16 %v2165
        %v4197 = vunpack.c.h.b16 %v2165
        %v4198 = vunpack.c.l.b16 %v2166
        %v4199 = vunpack.c.h.b16 %v2166
        %v4200 = vunpack.c.l.b16 %v2167
        %v4201 = vunpack.c.h.b16 %v2167
        %v4202 = vunpack.c.l.b16 %v2168
        %v4203 = vunpack.c.h.b16 %v2168
        %v4204 = vunpack.c.l.b16 %v2169
        %v4205 = vunpack.c.h.b16 %v2169
        %v4206 = vunpack.c.l.b16 %v2170
        %v4207 = vunpack.c.h.b16 %v2170
        %v4208 = vunpack.c.l.b16 %v2171
        %v4209 = vunpack.c.h.b16 %v2171
        %v4210 = vunpack.c.l.b16 %v2172
        %v4211 = vunpack.c.h.b16 %v2172
        %v4212 = vunpack.c.l.b16 %v2173
        %v4213 = vunpack.c.h.b16 %v2173
        %v4214 = vunpack.c.l.b16 %v2174
        %v4215 = vunpack.c.h.b16 %v2174
        %v4216 = vunpack.c.l.b16 %v2175
        %v4217 = vunpack.c.h.b16 %v2175
        %v4218 = vunpack.c.l.b16 %v2176
        %v4219 = vunpack.c.h.b16 %v2176
        %v4220 = vunpack.c.l.b16 %v2177
        %v4221 = vunpack.c.h.b16 %v2177
        %v4222 = vunpack.c.l.b16 %v2178
        %v4223 = vunpack.c.h.b16 %v2178
        %v4224 = vunpack.c.l.b16 %v2179
        %v4225 = vunpack.c.h.b16 %v2179
        %v4226 = vunpack.c.l.b16 %v2180
        %v4227 = vunpack.c.h.b16 %v2180
        %v4228 = vunpack.c.l.b16 %v2181
        %v4229 = vunpack.c.h.b16 %v2181
        %v4230 = vunpack.c.l.b16 %v2182
        %v4231 = vunpack.c.h.b16 %v2182
        %v4232 = vunpack.c.l.b16 %v2183
        %v4233 = vunpack.c.h.b16 %v2183
        %v4234 = vunpack.c.l.b16 %v2184
        %v4235 = vunpack.c.h.b16 %v2184
        %v4236 = vunpack.c.l.b16 %v2185
        %v4237 = vunpack.c.h.b16 %v2185
        %v4238 = vunpack.c.l.b16 %v2186
        %v4239 = vunpack.c.h.b16 %v2186
        %v4240 = vunpack.c.l.b16 %v2187
        %v4241 = vunpack.c.h.b16 %v2187
        %v4242 = vunpack.c.l.b16 %v2188
        %v4243 = vunpack.c.h.b16 %v2188
        %v4244 = vunpack.c.l.b16 %v2189
        %v4245 = vunpack.c.h.b16 %v2189
        %v4246 = vunpack.c.l.b16 %v2190
        %v4247 = vunpack.c.h.b16 %v2190
        %v4248 = vunpack.c.l.b16 %v2191
        %v4249 = vunpack.c.h.b16 %v2191
        %v4250 = vunpack.c.l.b16 %v2192
        %v4251 = vunpack.c.h.b16 %v2192
        %v4252 = vunpack.c.l.b16 %v2193
        %v4253 = vunpack.c.h.b16 %v2193
        %v4254 = vunpack.c.l.b16 %v2194
        %v4255 = vunpack.c.h.b16 %v2194
        %v4256 = vunpack.c.l.b16 %v2195
        %v4257 = vunpack.c.h.b16 %v2195
        %v4258 = vunpack.c.l.b16 %v2196
        %v4259 = vunpack.c.h.b16 %v2196
        %v4260 = vunpack.c.l.b16 %v2197
        %v4261 = vunpack.c.h.b16 %v2197
        %v4262 = vunpack.c.l.b16 %v2198
        %v4263 = vunpack.c.h.b16 %v2198
        %v4264 = vunpack.c.l.b16 %v2199
        %v4265 = vunpack.c.h.b16 %v2199
        %v4266 = vunpack.c.l.b16 %v2200
        %v4267 = vunpack.c.h.b16 %v2200
        %v4268 = vunpack.c.l.b16 %v2201
        %v4269 = vunpack.c.h.b16 %v2201
        %v4270 = vunpack.c.l.b16 %v2202
        %v4271 = vunpack.c.h.b16 %v2202
        %v4272 = vunpack.c.l.b16 %v2203
        %v4273 = vunpack.c.h.b16 %v2203
        %v4274 = vunpack.c.l.b16 %v2204
        %v4275 = vunpack.c.h.b16 %v2204
        %v4276 = vunpack.c.l.b16 %v2205
        %v4277 = vunpack.c.h.b16 %v2205
        %v4278 = vunpack.c.l.b16 %v2206
        %v4279 = vunpack.c.h.b16 %v2206
        %v4280 = vunpack.c.l.b16 %v2207
        %v4281 = vunpack.c.h.b16 %v2207
        %v4282 = vunpack.c.l.b16 %v2208
        %v4283 = vunpack.c.h.b16 %v2208
        %v4284 = vunpack.c.l.b16 %v2209
        %v4285 = vunpack.c.h.b16 %v2209
        %v4286 = vunpack.c.l.b16 %v2210
        %v4287 = vunpack.c.h.b16 %v2210
        %v4288 = vunpack.c.l.b16 %v2211
        %v4289 = vunpack.c.h.b16 %v2211
        %v4290 = vunpack.c.l.b16 %v2212
        %v4291 = vunpack.c.h.b16 %v2212
        %v4292 = vunpack.c.l.b16 %v2213
        %v4293 = vunpack.c.h.b16 %v2213
        %v4294 = vunpack.c.l.b16 %v2214
        %v4295 = vunpack.c.h.b16 %v2214
        %v4296 = vunpack.c.l.b16 %v2215
        %v4297 = vunpack.c.h.b16 %v2215
        %v4298 = vunpack.c.l.b16 %v2216
        %v4299 = vunpack.c.h.b16 %v2216
        %v4300 = vunpack.c.l.b16 %v2217
        %v4301 = vunpack.c.h.b16 %v2217
        %v4302 = vunpack.c.l.b16 %v2218
        %v4303 = vunpack.c.h.b16 %v2218
        %v4304 = vunpack.c.l.b16 %v2219
        %v4305 = vunpack.c.h.b16 %v2219
        %v4306 = vunpack.c.l.b16 %v2220
        %v4307 = vunpack.c.h.b16 %v2220
        %v4308 = vunpack.c.l.b16 %v2221
        %v4309 = vunpack.c.h.b16 %v2221
        %v4310 = vunpack.c.l.b16 %v2222
        %v4311 = vunpack.c.h.b16 %v2222
        %v4312 = vunpack.c.l.b16 %v2223
        %v4313 = vunpack.c.h.b16 %v2223
        %v4314 = vunpack.c.l.b16 %v2224
        %v4315 = vunpack.c.h.b16 %v2224
        %v4316 = vunpack.c.l.b16 %v2225
        %v4317 = vunpack.c.h.b16 %v2225
        %v4318 = vunpack.c.l.b16 %v2226
        %v4319 = vunpack.c.h.b16 %v2226
        %v4320 = vunpack.c.l.b16 %v2227
        %v4321 = vunpack.c.h.b16 %v2227
        %v4322 = vunpack.c.l.b16 %v2228
        %v4323 = vunpack.c.h.b16 %v2228
        %v4324 = vunpack.c.l.b16 %v2229
        %v4325 = vunpack.c.h.b16 %v2229
        %v4326 = vunpack.c.l.b16 %v2230
        %v4327 = vunpack.c.h.b16 %v2230
        %v4328 = vunpack.c.l.b16 %v2231
        %v4329 = vunpack.c.h.b16 %v2231
        %v4330 = vunpack.c.l.b16 %v2232
        %v4331 = vunpack.c.h.b16 %v2232
        %v4332 = vunpack.c.l.b16 %v2233
        %v4333 = vunpack.c.h.b16 %v2233
        %v4334 = vunpack.c.l.b16 %v2234
        %v4335 = vunpack.c.h.b16 %v2234
        %v4336 = vunpack.c.l.b16 %v2235
        %v4337 = vunpack.c.h.b16 %v2235
        %v4338 = vunpack.c.l.b16 %v2236
        %v4339 = vunpack.c.h.b16 %v2236
        %v4340 = vunpack.c.l.b16 %v2237
        %v4341 = vunpack.c.h.b16 %v2237
        %v4342 = vunpack.c.l.b16 %v2238
        %v4343 = vunpack.c.h.b16 %v2238
        %v4344 = vunpack.c.l.b16 %v2239
        %v4345 = vunpack.c.h.b16 %v2239
        %v4346 = vunpack.c.l.b16 %v2240
        %v4347 = vunpack.c.h.b16 %v2240
        %v4348 = vunpack.c.l.b16 %v2241
        %v4349 = vunpack.c.h.b16 %v2241
        %v4350 = vunpack.c.l.b16 %v2242
        %v4351 = vunpack.c.h.b16 %v2242
        %v4352 = vunpack.c.l.b16 %v2243
        %v4353 = vunpack.c.h.b16 %v2243
        %v4354 = vunpack.c.l.b16 %v2244
        %v4355 = vunpack.c.h.b16 %v2244
        %v4356 = vunpack.c.l.b16 %v2245
        %v4357 = vunpack.c.h.b16 %v2245
        %v4358 = vunpack.c.l.b16 %v2246
        %v4359 = vunpack.c.h.b16 %v2246
        %v4360 = vunpack.c.l.b16 %v2247
        %v4361 = vunpack.c.h.b16 %v2247
        %v4362 = vunpack.c.l.b16 %v2248
        %v4363 = vunpack.c.h.b16 %v2248
        %v4364 = vunpack.c.l.b16 %v2249
        %v4365 = vunpack.c.h.b16 %v2249
        %v4366 = vunpack.c.l.b16 %v2250
        %v4367 = vunpack.c.h.b16 %v2250
        %v4368 = vunpack.c.l.b16 %v2251
        %v4369 = vunpack.c.h.b16 %v2251
        %v4370 = vunpack.c.l.b16 %v2252
        %v4371 = vunpack.c.h.b16 %v2252
        %v4372 = vunpack.c.l.b16 %v2253
        %v4373 = vunpack.c.h.b16 %v2253
        %v4374 = vunpack.c.l.b16 %v2254
        %v4375 = vunpack.c.h.b16 %v2254
        %v4376 = vunpack.c.l.b16 %v2255
        %v4377 = vunpack.c.h.b16 %v2255
        %v4378 = vunpack.c.l.b16 %v2256
        %v4379 = vunpack.c.h.b16 %v2256
        %v4380 = vunpack.c.l.b16 %v2257
        %v4381 = vunpack.c.h.b16 %v2257
        %v4382 = vunpack.c.l.b16 %v2258
        %v4383 = vunpack.c.h.b16 %v2258
        %v4384 = vunpack.c.l.b16 %v2259
        %v4385 = vunpack.c.h.b16 %v2259
        %v4386 = vunpack.c.l.b16 %v2260
        %v4387 = vunpack.c.h.b16 %v2260
        %v4388 = vunpack.c.l.b16 %v2261
        %v4389 = vunpack.c.h.b16 %v2261
        %v4390 = vunpack.c.l.b16 %v2262
        %v4391 = vunpack.c.h.b16 %v2262
        %v4392 = vunpack.c.l.b16 %v2263
        %v4393 = vunpack.c.h.b16 %v2263
        %v4394 = vunpack.c.l.b16 %v2264
        %v4395 = vunpack.c.h.b16 %v2264
        %v4396 = vunpack.c.l.b16 %v2265
        %v4397 = vunpack.c.h.b16 %v2265
        %v4398 = vunpack.c.l.b16 %v2266
        %v4399 = vunpack.c.h.b16 %v2266
        %v4400 = vunpack.c.l.b16 %v2267
        %v4401 = vunpack.c.h.b16 %v2267
        %v4402 = vunpack.c.l.b16 %v2268
        %v4403 = vunpack.c.h.b16 %v2268
        %v4404 = vunpack.c.l.b16 %v2269
        %v4405 = vunpack.c.h.b16 %v2269
        %v4406 = vunpack.c.l.b16 %v2270
        %v4407 = vunpack.c.h.b16 %v2270
        %v4408 = vunpack.c.l.b16 %v2271
        %v4409 = vunpack.c.h.b16 %v2271
        %v4410 = vunpack.c.l.b16 %v2272
        %v4411 = vunpack.c.h.b16 %v2272
        %v4412 = vunpack.c.l.b16 %v2273
        %v4413 = vunpack.c.h.b16 %v2273
        %v4414 = vunpack.c.l.b16 %v2274
        %v4415 = vunpack.c.h.b16 %v2274
        %v4416 = vunpack.c.l.b16 %v2275
        %v4417 = vunpack.c.h.b16 %v2275
        %v4418 = vunpack.c.l.b16 %v2276
        %v4419 = vunpack.c.h.b16 %v2276
        %v4420 = vunpack.c.l.b16 %v2277
        %v4421 = vunpack.c.h.b16 %v2277
        %v4422 = vunpack.c.l.b16 %v2278
        %v4423 = vunpack.c.h.b16 %v2278
        %v4424 = vunpack.c.l.b16 %v2279
        %v4425 = vunpack.c.h.b16 %v2279
        %v4426 = vunpack.c.l.b16 %v2280
        %v4427 = vunpack.c.h.b16 %v2280
        %v4428 = vunpack.c.l.b16 %v2281
        %v4429 = vunpack.c.h.b16 %v2281
        %v4430 = vunpack.c.l.b16 %v2282
        %v4431 = vunpack.c.h.b16 %v2282
        %v4432 = vunpack.c.l.b16 %v2283
        %v4433 = vunpack.c.h.b16 %v2283
        %v4434 = vunpack.c.l.b16 %v2284
        %v4435 = vunpack.c.h.b16 %v2284
        %v4436 = vunpack.c.l.b16 %v2285
        %v4437 = vunpack.c.h.b16 %v2285
        %v4438 = vunpack.c.l.b16 %v2286
        %v4439 = vunpack.c.h.b16 %v2286
        %v4440 = vunpack.c.l.b16 %v2287
        %v4441 = vunpack.c.h.b16 %v2287
        %v4442 = vunpack.c.l.b16 %v2288
        %v4443 = vunpack.c.h.b16 %v2288
        %v4444 = vunpack.c.l.b16 %v2289
        %v4445 = vunpack.c.h.b16 %v2289
        %v4446 = vunpack.c.l.b16 %v2290
        %v4447 = vunpack.c.h.b16 %v2290
        %v4448 = vunpack.c.l.b16 %v2291
        %v4449 = vunpack.c.h.b16 %v2291
        %v4450 = vunpack.c.l.b16 %v2292
        %v4451 = vunpack.c.h.b16 %v2292
        %v4452 = vunpack.c.l.b16 %v2293
        %v4453 = vunpack.c.h.b16 %v2293
        %v4454 = vunpack.c.l.b16 %v2294
        %v4455 = vunpack.c.h.b16 %v2294
        %v4456 = vunpack.c.l.b16 %v2295
        %v4457 = vunpack.c.h.b16 %v2295
        %v4458 = vunpack.c.l.b16 %v2296
        %v4459 = vunpack.c.h.b16 %v2296
        %v4460 = vunpack.c.l.b16 %v2297
        %v4461 = vunpack.c.h.b16 %v2297
        %v4462 = vunpack.c.l.b16 %v2298
        %v4463 = vunpack.c.h.b16 %v2298
        %v4464 = vunpack.c.l.b16 %v2299
        %v4465 = vunpack.c.h.b16 %v2299
        %v4466 = vunpack.c.l.b16 %v2300
        %v4467 = vunpack.c.h.b16 %v2300
        %v4468 = vunpack.c.l.b16 %v2301
        %v4469 = vunpack.c.h.b16 %v2301
        %v4470 = vunpack.c.l.b16 %v2302
        %v4471 = vunpack.c.h.b16 %v2302
        %v4472 = vunpack.c.l.b16 %v2303
        %v4473 = vunpack.c.h.b16 %v2303
        %v4474 = vunpack.c.l.b16 %v2304
        %v4475 = vunpack.c.h.b16 %v2304
        %v4476 = vunpack.c.l.b16 %v2305
        %v4477 = vunpack.c.h.b16 %v2305
        %v4478 = vunpack.c.l.b16 %v2306
        %v4479 = vunpack.c.h.b16 %v2306
        %v4480 = vunpack.c.l.b16 %v2307
        %v4481 = vunpack.c.h.b16 %v2307
        %v4482 = vunpack.c.l.b16 %v2308
        %v4483 = vunpack.c.h.b16 %v2308
        %v4484 = vunpack.c.l.b16 %v2309
        %v4485 = vunpack.c.h.b16 %v2309
        %v4486 = vunpack.c.l.b16 %v2310
        %v4487 = vunpack.c.h.b16 %v2310
        %v4488 = vunpack.c.l.b16 %v2311
        %v4489 = vunpack.c.h.b16 %v2311
        %v4490 = vunpack.c.l.b16 %v2312
        %v4491 = vunpack.c.h.b16 %v2312
        %v4492 = vunpack.c.l.b16 %v2313
        %v4493 = vunpack.c.h.b16 %v2313
        %v4494 = vunpack.c.l.b16 %v2314
        %v4495 = vunpack.c.h.b16 %v2314
        %v4496 = vunpack.c.l.b16 %v2315
        %v4497 = vunpack.c.h.b16 %v2315
        %v4498 = vunpack.c.l.b16 %v2316
        %v4499 = vunpack.c.h.b16 %v2316
        %v4500 = vunpack.c.l.b16 %v2317
        %v4501 = vunpack.c.h.b16 %v2317
        %v4502 = vunpack.c.l.b16 %v2318
        %v4503 = vunpack.c.h.b16 %v2318
        %v4504 = vunpack.c.l.b16 %v2319
        %v4505 = vunpack.c.h.b16 %v2319
        %v4506 = vunpack.c.l.b16 %v2320
        %v4507 = vunpack.c.h.b16 %v2320
        %v4508 = vunpack.c.l.b16 %v2321
        %v4509 = vunpack.c.h.b16 %v2321
        %v4510 = vunpack.c.l.b16 %v2322
        %v4511 = vunpack.c.h.b16 %v2322
        %v4512 = vunpack.c.l.b16 %v2323
        %v4513 = vunpack.c.h.b16 %v2323
        %v4514 = vunpack.c.l.b16 %v2324
        %v4515 = vunpack.c.h.b16 %v2324
        %v4516 = vunpack.c.l.b16 %v2325
        %v4517 = vunpack.c.h.b16 %v2325
        %v4518 = vunpack.c.l.b16 %v2326
        %v4519 = vunpack.c.h.b16 %v2326
        %v4520 = vunpack.c.l.b16 %v2327
        %v4521 = vunpack.c.h.b16 %v2327
        %v4522 = vunpack.c.l.b16 %v2328
        %v4523 = vunpack.c.h.b16 %v2328
        %v4524 = vunpack.c.l.b16 %v2329
        %v4525 = vunpack.c.h.b16 %v2329
        %v4526 = vunpack.c.l.b16 %v2330
        %v4527 = vunpack.c.h.b16 %v2330
        %v4528 = vunpack.c.l.b16 %v2331
        %v4529 = vunpack.c.h.b16 %v2331
        %v4530 = vunpack.c.l.b16 %v2332
        %v4531 = vunpack.c.h.b16 %v2332
        %v4532 = vunpack.c.l.b16 %v2333
        %v4533 = vunpack.c.h.b16 %v2333
        %v4534 = vunpack.c.l.b16 %v2334
        %v4535 = vunpack.c.h.b16 %v2334
        %v4536 = vunpack.c.l.b16 %v2335
        %v4537 = vunpack.c.h.b16 %v2335
        %v4538 = vunpack.c.l.b16 %v2336
        %v4539 = vunpack.c.h.b16 %v2336
        %v4540 = vunpack.c.l.b16 %v2337
        %v4541 = vunpack.c.h.b16 %v2337
        %v4542 = vunpack.c.l.b16 %v2338
        %v4543 = vunpack.c.h.b16 %v2338
        %v4544 = vunpack.c.l.b16 %v2339
        %v4545 = vunpack.c.h.b16 %v2339
        %v4546 = vunpack.c.l.b16 %v2340
        %v4547 = vunpack.c.h.b16 %v2340
        %v4548 = vunpack.c.l.b16 %v2341
        %v4549 = vunpack.c.h.b16 %v2341
        %v4550 = vunpack.c.l.b16 %v2342
        %v4551 = vunpack.c.h.b16 %v2342
        %v4552 = vunpack.c.l.b16 %v2343
        %v4553 = vunpack.c.h.b16 %v2343
        %v4554 = vunpack.c.l.b16 %v2344
        %v4555 = vunpack.c.h.b16 %v2344
        %v4556 = vunpack.c.l.b16 %v2345
        %v4557 = vunpack.c.h.b16 %v2345
        %v4558 = vunpack.c.l.b16 %v2346
        %v4559 = vunpack.c.h.b16 %v2346
        %v4560 = vunpack.c.l.b16 %v2347
        %v4561 = vunpack.c.h.b16 %v2347
        %v4562 = vunpack.c.l.b16 %v2348
        %v4563 = vunpack.c.h.b16 %v2348
        %v4564 = vunpack.c.l.b16 %v2349
        %v4565 = vunpack.c.h.b16 %v2349
        %v4566 = vunpack.c.l.b16 %v2350
        %v4567 = vunpack.c.h.b16 %v2350
        %v4568 = vunpack.c.l.b16 %v2351
        %v4569 = vunpack.c.h.b16 %v2351
        %v4570 = vunpack.c.l.b16 %v2352
        %v4571 = vunpack.c.h.b16 %v2352
        %v4572 = vunpack.c.l.b16 %v2353
        %v4573 = vunpack.c.h.b16 %v2353
        %v4574 = vunpack.c.l.b16 %v2354
        %v4575 = vunpack.c.h.b16 %v2354
        %v4576 = vunpack.c.l.b16 %v2355
        %v4577 = vunpack.c.h.b16 %v2355
        %v4578 = vunpack.c.l.b16 %v2356
        %v4579 = vunpack.c.h.b16 %v2356
        %v4580 = vunpack.c.l.b16 %v2357
        %v4581 = vunpack.c.h.b16 %v2357
        %v4582 = vunpack.c.l.b16 %v2358
        %v4583 = vunpack.c.h.b16 %v2358
        %v4584 = vunpack.c.l.b16 %v2359
        %v4585 = vunpack.c.h.b16 %v2359
        %v4586 = vunpack.c.l.b16 %v2360
        %v4587 = vunpack.c.h.b16 %v2360
        %v4588 = vunpack.c.l.b16 %v2361
        %v4589 = vunpack.c.h.b16 %v2361
        %v4590 = vunpack.c.l.b16 %v2362
        %v4591 = vunpack.c.h.b16 %v2362
        %v4592 = vunpack.c.l.b16 %v2363
        %v4593 = vunpack.c.h.b16 %v2363
        %v4594 = vunpack.c.l.b16 %v2364
        %v4595 = vunpack.c.h.b16 %v2364
        %v4596 = vunpack.c.l.b16 %v2365
        %v4597 = vunpack.c.h.b16 %v2365
        %v4598 = vunpack.c.l.b16 %v2366
        %v4599 = vunpack.c.h.b16 %v2366
        %v4600 = vunpack.c.l.b16 %v2367
        %v4601 = vunpack.c.h.b16 %v2367
        %v4602 = vunpack.c.l.b16 %v2368
        %v4603 = vunpack.c.h.b16 %v2368
        %v4604 = vunpack.c.l.b16 %v2369
        %v4605 = vunpack.c.h.b16 %v2369
        %v4606 = vunpack.c.l.b16 %v2370
        %v4607 = vunpack.c.h.b16 %v2370
        %v4608 = vunpack.c.l.b16 %v2371
        %v4609 = vunpack.c.h.b16 %v2371
        %v4610 = vunpack.c.l.b16 %v2372
        %v4611 = vunpack.c.h.b16 %v2372
        %v4612 = vunpack.c.l.b16 %v2373
        %v4613 = vunpack.c.h.b16 %v2373
        %v4614 = vunpack.c.l.b16 %v2374
        %v4615 = vunpack.c.h.b16 %v2374
        %v4616 = vunpack.c.l.b16 %v2375
        %v4617 = vunpack.c.h.b16 %v2375
        %v4618 = vunpack.c.l.b16 %v2376
        %v4619 = vunpack.c.h.b16 %v2376
        %v4620 = vunpack.c.l.b16 %v2377
        %v4621 = vunpack.c.h.b16 %v2377
        %v4622 = vunpack.c.l.b16 %v2378
        %v4623 = vunpack.c.h.b16 %v2378
        %v4624 = vunpack.c.l.b16 %v2379
        %v4625 = vunpack.c.h.b16 %v2379
        %v4626 = vunpack.c.l.b16 %v2380
        %v4627 = vunpack.c.h.b16 %v2380
        %v4628 = vunpack.c.l.b16 %v2381
        %v4629 = vunpack.c.h.b16 %v2381
        %v4630 = vunpack.c.l.b16 %v2382
        %v4631 = vunpack.c.h.b16 %v2382
        %v4632 = vunpack.c.l.b16 %v2383
        %v4633 = vunpack.c.h.b16 %v2383
        %v4634 = vunpack.c.l.b16 %v2384
        %v4635 = vunpack.c.h.b16 %v2384
        %v4636 = vunpack.c.l.b16 %v2385
        %v4637 = vunpack.c.h.b16 %v2385
        %v4638 = vunpack.c.l.b16 %v2386
        %v4639 = vunpack.c.h.b16 %v2386
        %v4640 = vunpack.c.l.b16 %v2387
        %v4641 = vunpack.c.h.b16 %v2387
        %v4642 = vunpack.c.l.b16 %v2388
        %v4643 = vunpack.c.h.b16 %v2388
        %v4644 = vunpack.c.l.b16 %v2389
        %v4645 = vunpack.c.h.b16 %v2389
        %v4646 = vunpack.c.l.b16 %v2390
        %v4647 = vunpack.c.h.b16 %v2390
        %v4648 = vunpack.c.l.b16 %v2391
        %v4649 = vunpack.c.h.b16 %v2391
        %v4650 = vunpack.c.l.b16 %v2392
        %v4651 = vunpack.c.h.b16 %v2392
        %v4652 = vunpack.c.l.b16 %v2393
        %v4653 = vunpack.c.h.b16 %v2393
        %v4654 = vunpack.c.l.b16 %v2394
        %v4655 = vunpack.c.h.b16 %v2394
        %v4656 = vunpack.c.l.b16 %v2395
        %v4657 = vunpack.c.h.b16 %v2395
        %v4658 = vunpack.c.l.b16 %v2396
        %v4659 = vunpack.c.h.b16 %v2396
        %v4660 = vunpack.c.l.b16 %v2397
        %v4661 = vunpack.c.h.b16 %v2397
        %v4662 = vunpack.c.l.b16 %v2398
        %v4663 = vunpack.c.h.b16 %v2398
        %v4664 = vunpack.c.l.b16 %v2399
        %v4665 = vunpack.c.h.b16 %v2399
        %v4666 = vunpack.c.l.b16 %v2400
        %v4667 = vunpack.c.h.b16 %v2400
        %v4668 = vunpack.c.l.b16 %v2401
        %v4669 = vunpack.c.h.b16 %v2401
        %v4670 = vunpack.c.l.b16 %v2402
        %v4671 = vunpack.c.h.b16 %v2402
        %v4672 = vunpack.c.l.b16 %v2403
        %v4673 = vunpack.c.h.b16 %v2403
        %v4674 = vunpack.c.l.b16 %v2404
        %v4675 = vunpack.c.h.b16 %v2404
        %v4676 = vunpack.c.l.b16 %v2405
        %v4677 = vunpack.c.h.b16 %v2405
        %v4678 = vunpack.c.l.b16 %v2406
        %v4679 = vunpack.c.h.b16 %v2406
        %v4680 = vunpack.c.l.b16 %v2407
        %v4681 = vunpack.c.h.b16 %v2407
        %v4682 = vunpack.c.l.b16 %v2408
        %v4683 = vunpack.c.h.b16 %v2408
        %v4684 = vunpack.c.l.b16 %v2409
        %v4685 = vunpack.c.h.b16 %v2409
        %v4686 = vunpack.c.l.b16 %v2410
        %v4687 = vunpack.c.h.b16 %v2410
        %v4688 = vunpack.c.l.b16 %v2411
        %v4689 = vunpack.c.h.b16 %v2411
        %v4690 = vunpack.c.l.b16 %v2412
        %v4691 = vunpack.c.h.b16 %v2412
        %v4692 = vunpack.c.l.b16 %v2413
        %v4693 = vunpack.c.h.b16 %v2413
        %v4694 = vunpack.c.l.b16 %v2414
        %v4695 = vunpack.c.h.b16 %v2414
        %v4696 = vunpack.c.l.b16 %v2415
        %v4697 = vunpack.c.h.b16 %v2415
        %v4698 = vunpack.c.l.b16 %v2416
        %v4699 = vunpack.c.h.b16 %v2416
        %v4700 = vunpack.c.l.b16 %v2417
        %v4701 = vunpack.c.h.b16 %v2417
        %v4702 = vunpack.c.l.b16 %v2418
        %v4703 = vunpack.c.h.b16 %v2418
        %v4704 = vunpack.c.l.b16 %v2419
        %v4705 = vunpack.c.h.b16 %v2419
        %v4706 = vunpack.c.l.b16 %v2420
        %v4707 = vunpack.c.h.b16 %v2420
        %v4708 = vunpack.c.l.b16 %v2421
        %v4709 = vunpack.c.h.b16 %v2421
        %v4710 = vunpack.c.l.b16 %v2422
        %v4711 = vunpack.c.h.b16 %v2422
        %v4712 = vunpack.c.l.b16 %v2423
        %v4713 = vunpack.c.h.b16 %v2423
        %v4714 = vunpack.c.l.b16 %v2424
        %v4715 = vunpack.c.h.b16 %v2424
        %v4716 = vunpack.c.l.b16 %v2425
        %v4717 = vunpack.c.h.b16 %v2425
        %v4718 = vunpack.c.l.b16 %v2426
        %v4719 = vunpack.c.h.b16 %v2426
        %v4720 = vunpack.c.l.b16 %v2427
        %v4721 = vunpack.c.h.b16 %v2427
        %v4722 = vunpack.c.l.b16 %v2428
        %v4723 = vunpack.c.h.b16 %v2428
        %v4724 = vunpack.c.l.b16 %v2429
        %v4725 = vunpack.c.h.b16 %v2429
        %v4726 = vunpack.c.l.b16 %v2430
        %v4727 = vunpack.c.h.b16 %v2430
        %v4728 = vunpack.c.l.b16 %v2431
        %v4729 = vunpack.c.h.b16 %v2431
        %v4730 = vunpack.c.l.b16 %v2432
        %v4731 = vunpack.c.h.b16 %v2432
        %v4732 = vunpack.c.l.b16 %v2433
        %v4733 = vunpack.c.h.b16 %v2433
        %v4734 = vunpack.c.l.b16 %v2434
        %v4735 = vunpack.c.h.b16 %v2434
        %v4736 = vunpack.c.l.b16 %v2435
        %v4737 = vunpack.c.h.b16 %v2435
        %v4738 = vunpack.c.l.b16 %v2436
        %v4739 = vunpack.c.h.b16 %v2436
        %v4740 = vunpack.c.l.b16 %v2437
        %v4741 = vunpack.c.h.b16 %v2437
        %v4742 = vunpack.c.l.b16 %v2438
        %v4743 = vunpack.c.h.b16 %v2438
        %v4744 = vunpack.c.l.b16 %v2439
        %v4745 = vunpack.c.h.b16 %v2439
        %v4746 = vunpack.c.l.b16 %v2440
        %v4747 = vunpack.c.h.b16 %v2440
        %v4748 = vunpack.c.l.b16 %v2441
        %v4749 = vunpack.c.h.b16 %v2441
        %v4750 = vunpack.c.l.b16 %v2442
        %v4751 = vunpack.c.h.b16 %v2442
        %v4752 = vunpack.c.l.b16 %v2443
        %v4753 = vunpack.c.h.b16 %v2443
        %v4754 = vunpack.c.l.b16 %v2444
        %v4755 = vunpack.c.h.b16 %v2444
        %v4756 = vunpack.c.l.b16 %v2445
        %v4757 = vunpack.c.h.b16 %v2445
        %v4758 = vunpack.c.l.b16 %v2446
        %v4759 = vunpack.c.h.b16 %v2446
        %v4760 = vunpack.c.l.b16 %v2447
        %v4761 = vunpack.c.h.b16 %v2447
        %v4762 = vunpack.c.l.b16 %v2448
        %v4763 = vunpack.c.h.b16 %v2448
        %v4764 = vunpack.c.l.b16 %v2449
        %v4765 = vunpack.c.h.b16 %v2449
        %v4766 = vunpack.c.l.b16 %v2450
        %v4767 = vunpack.c.h.b16 %v2450
        %v4768 = vunpack.c.l.b16 %v2451
        %v4769 = vunpack.c.h.b16 %v2451
        %v4770 = vunpack.c.l.b16 %v2452
        %v4771 = vunpack.c.h.b16 %v2452
        %v4772 = vunpack.c.l.b16 %v2453
        %v4773 = vunpack.c.h.b16 %v2453
        %v4774 = vunpack.c.l.b16 %v2454
        %v4775 = vunpack.c.h.b16 %v2454
        %v4776 = vunpack.c.l.b16 %v2455
        %v4777 = vunpack.c.h.b16 %v2455
        %v4778 = vunpack.c.l.b16 %v2456
        %v4779 = vunpack.c.h.b16 %v2456
        %v4780 = vunpack.c.l.b16 %v2457
        %v4781 = vunpack.c.h.b16 %v2457
        %v4782 = vunpack.c.l.b16 %v2458
        %v4783 = vunpack.c.h.b16 %v2458
        %v4784 = vunpack.c.l.b16 %v2459
        %v4785 = vunpack.c.h.b16 %v2459
        %v4786 = vunpack.c.l.b16 %v2460
        %v4787 = vunpack.c.h.b16 %v2460
        %v4788 = vunpack.c.l.b16 %v2461
        %v4789 = vunpack.c.h.b16 %v2461
        %v4790 = vunpack.c.l.b16 %v2462
        %v4791 = vunpack.c.h.b16 %v2462
        %v4792 = vunpack.c.l.b16 %v2463
        %v4793 = vunpack.c.h.b16 %v2463
        %v4794 = vunpack.c.l.b16 %v2464
        %v4795 = vunpack.c.h.b16 %v2464
        %v4796 = vunpack.c.l.b16 %v2465
        %v4797 = vunpack.c.h.b16 %v2465
        %v4798 = vunpack.c.l.b16 %v2466
        %v4799 = vunpack.c.h.b16 %v2466
        %v4800 = vunpack.c.l.b16 %v2467
        %v4801 = vunpack.c.h.b16 %v2467
        %v4802 = vunpack.c.l.b16 %v2468
        %v4803 = vunpack.c.h.b16 %v2468
        %v4804 = vunpack.c.l.b16 %v2469
        %v4805 = vunpack.c.h.b16 %v2469
        %v4806 = vunpack.c.l.b16 %v2470
        %v4807 = vunpack.c.h.b16 %v2470
        %v4808 = vunpack.c.l.b16 %v2471
        %v4809 = vunpack.c.h.b16 %v2471
        %v4810 = vunpack.c.l.b16 %v2472
        %v4811 = vunpack.c.h.b16 %v2472
        %v4812 = vunpack.c.l.b16 %v2473
        %v4813 = vunpack.c.h.b16 %v2473
        %v4814 = vunpack.c.l.b16 %v2474
        %v4815 = vunpack.c.h.b16 %v2474
        %v4816 = vunpack.c.l.b16 %v2475
        %v4817 = vunpack.c.h.b16 %v2475
        %v4818 = vunpack.c.l.b16 %v2476
        %v4819 = vunpack.c.h.b16 %v2476
        %v4820 = vunpack.c.l.b16 %v2477
        %v4821 = vunpack.c.h.b16 %v2477
        %v4822 = vunpack.c.l.b16 %v2478
        %v4823 = vunpack.c.h.b16 %v2478
        %v4824 = vunpack.c.l.b16 %v2479
        %v4825 = vunpack.c.h.b16 %v2479
        %v4826 = vunpack.c.l.b16 %v2480
        %v4827 = vunpack.c.h.b16 %v2480
        %v4828 = vunpack.c.l.b16 %v2481
        %v4829 = vunpack.c.h.b16 %v2481
        %v4830 = vunpack.c.l.b16 %v2482
        %v4831 = vunpack.c.h.b16 %v2482
        %v4832 = vunpack.c.l.b16 %v2483
        %v4833 = vunpack.c.h.b16 %v2483
        %v4834 = vunpack.c.l.b16 %v2484
        %v4835 = vunpack.c.h.b16 %v2484
        %v4836 = vunpack.c.l.b16 %v2485
        %v4837 = vunpack.c.h.b16 %v2485
        %v4838 = vunpack.c.l.b16 %v2486
        %v4839 = vunpack.c.h.b16 %v2486
        %v4840 = vunpack.c.l.b16 %v2487
        %v4841 = vunpack.c.h.b16 %v2487
        %v4842 = vunpack.c.l.b16 %v2488
        %v4843 = vunpack.c.h.b16 %v2488
        %v4844 = vunpack.c.l.b16 %v2489
        %v4845 = vunpack.c.h.b16 %v2489
        %v4846 = vunpack.c.l.b16 %v2490
        %v4847 = vunpack.c.h.b16 %v2490
        %v4848 = vunpack.c.l.b16 %v2491
        %v4849 = vunpack.c.h.b16 %v2491
        %v4850 = vunpack.c.l.b16 %v2492
        %v4851 = vunpack.c.h.b16 %v2492
        %v4852 = vunpack.c.l.b16 %v2493
        %v4853 = vunpack.c.h.b16 %v2493
        %v4854 = vunpack.c.l.b16 %v2494
        %v4855 = vunpack.c.h.b16 %v2494
        %v4856 = vunpack.c.l.b16 %v2495
        %v4857 = vunpack.c.h.b16 %v2495
        %v4858 = vunpack.c.l.b16 %v2496
        %v4859 = vunpack.c.h.b16 %v2496
        %v4860 = vunpack.c.l.b16 %v2497
        %v4861 = vunpack.c.h.b16 %v2497
        %v4862 = vunpack.c.l.b16 %v2498
        %v4863 = vunpack.c.h.b16 %v2498
        %v4864 = vunpack.c.l.b16 %v2499
        %v4865 = vunpack.c.h.b16 %v2499
        %v4866 = vunpack.c.l.b16 %v2500
        %v4867 = vunpack.c.h.b16 %v2500
        %v4868 = vunpack.c.l.b16 %v2501
        %v4869 = vunpack.c.h.b16 %v2501
        %v4870 = vunpack.c.l.b16 %v2502
        %v4871 = vunpack.c.h.b16 %v2502
        %v4872 = vunpack.c.l.b16 %v2503
        %v4873 = vunpack.c.h.b16 %v2503
        %v4874 = vunpack.c.l.b16 %v2504
        %v4875 = vunpack.c.h.b16 %v2504
        %v4876 = vunpack.c.l.b16 %v2505
        %v4877 = vunpack.c.h.b16 %v2505
        %v4878 = vunpack.c.l.b16 %v2506
        %v4879 = vunpack.c.h.b16 %v2506
        %v4880 = vunpack.c.l.b16 %v2507
        %v4881 = vunpack.c.h.b16 %v2507
        %v4882 = vunpack.c.l.b16 %v2508
        %v4883 = vunpack.c.h.b16 %v2508
        %v4884 = vunpack.c.l.b16 %v2509
        %v4885 = vunpack.c.h.b16 %v2509
        %v4886 = vunpack.c.l.b16 %v2510
        %v4887 = vunpack.c.h.b16 %v2510
        %v4888 = vunpack.c.l.b16 %v2511
        %v4889 = vunpack.c.h.b16 %v2511
        %v4890 = vunpack.c.l.b16 %v2512
        %v4891 = vunpack.c.h.b16 %v2512
        %v4892 = vunpack.c.l.b16 %v2513
        %v4893 = vunpack.c.h.b16 %v2513
        %v4894 = vunpack.c.l.b16 %v2514
        %v4895 = vunpack.c.h.b16 %v2514
        %v4896 = vunpack.c.l.b16 %v2515
        %v4897 = vunpack.c.h.b16 %v2515
        %v4898 = vunpack.c.l.b16 %v2516
        %v4899 = vunpack.c.h.b16 %v2516
        %v4900 = vunpack.c.l.b16 %v2517
        %v4901 = vunpack.c.h.b16 %v2517
        %v4902 = vunpack.c.l.b16 %v2518
        %v4903 = vunpack.c.h.b16 %v2518
        %v4904 = vunpack.c.l.b16 %v2519
        %v4905 = vunpack.c.h.b16 %v2519
        %v4906 = vunpack.c.l.b16 %v2520
        %v4907 = vunpack.c.h.b16 %v2520
        %v4908 = vunpack.c.l.b16 %v2521
        %v4909 = vunpack.c.h.b16 %v2521
        %v4910 = vunpack.c.l.b16 %v2522
        %v4911 = vunpack.c.h.b16 %v2522
        %v4912 = vunpack.c.l.b16 %v2523
        %v4913 = vunpack.c.h.b16 %v2523
        %v4914 = vunpack.c.l.b16 %v2524
        %v4915 = vunpack.c.h.b16 %v2524
        %v4916 = vunpack.c.l.b16 %v2525
        %v4917 = vunpack.c.h.b16 %v2525
        %v4918 = vunpack.c.l.b16 %v2526
        %v4919 = vunpack.c.h.b16 %v2526
        %v4920 = vunpack.c.l.b16 %v2527
        %v4921 = vunpack.c.h.b16 %v2527
        %v4922 = vunpack.c.l.b16 %v2528
        %v4923 = vunpack.c.h.b16 %v2528
        %v4924 = vunpack.c.l.b16 %v2529
        %v4925 = vunpack.c.h.b16 %v2529
        %v4926 = vunpack.c.l.b16 %v2530
        %v4927 = vunpack.c.h.b16 %v2530
        %v4928 = vunpack.c.l.b16 %v2531
        %v4929 = vunpack.c.h.b16 %v2531
        %v4930 = vunpack.c.l.b16 %v2532
        %v4931 = vunpack.c.h.b16 %v2532
        %v4932 = vunpack.c.l.b16 %v2533
        %v4933 = vunpack.c.h.b16 %v2533
        %v4934 = vunpack.c.l.b16 %v2534
        %v4935 = vunpack.c.h.b16 %v2534
        %v4936 = vunpack.c.l.b16 %v2535
        %v4937 = vunpack.c.h.b16 %v2535
        %v4938 = vunpack.c.l.b16 %v2536
        %v4939 = vunpack.c.h.b16 %v2536
        %v4940 = vunpack.c.l.b16 %v2537
        %v4941 = vunpack.c.h.b16 %v2537
        %v4942 = vunpack.c.l.b16 %v2538
        %v4943 = vunpack.c.h.b16 %v2538
        %v4944 = vunpack.c.l.b16 %v2539
        %v4945 = vunpack.c.h.b16 %v2539
        %v4946 = vunpack.c.l.b16 %v2540
        %v4947 = vunpack.c.h.b16 %v2540
        %v4948 = vunpack.c.l.b16 %v2541
        %v4949 = vunpack.c.h.b16 %v2541
        %v4950 = vunpack.c.l.b16 %v2542
        %v4951 = vunpack.c.h.b16 %v2542
        %v4952 = vunpack.c.l.b16 %v2543
        %v4953 = vunpack.c.h.b16 %v2543
        %v4954 = vunpack.c.l.b16 %v2544
        %v4955 = vunpack.c.h.b16 %v2544
        %v4956 = vunpack.c.l.b16 %v2545
        %v4957 = vunpack.c.h.b16 %v2545
        %v4958 = vunpack.c.l.b16 %v2546
        %v4959 = vunpack.c.h.b16 %v2546
        %v4960 = vunpack.c.l.b16 %v2547
        %v4961 = vunpack.c.h.b16 %v2547
        %v4962 = vunpack.c.l.b16 %v2548
        %v4963 = vunpack.c.h.b16 %v2548
        %v4964 = vunpack.c.l.b16 %v2549
        %v4965 = vunpack.c.h.b16 %v2549
        %v4966 = vunpack.c.l.b16 %v2550
        %v4967 = vunpack.c.h.b16 %v2550
        %v4968 = vunpack.c.l.b16 %v2551
        %v4969 = vunpack.c.h.b16 %v2551
        %v4970 = vunpack.c.l.b16 %v2552
        %v4971 = vunpack.c.h.b16 %v2552
        %v4972 = vunpack.c.l.b16 %v2553
        %v4973 = vunpack.c.h.b16 %v2553
        %v4974 = vunpack.c.l.b16 %v2554
        %v4975 = vunpack.c.h.b16 %v2554
        %v4976 = vunpack.c.l.b16 %v2555
        %v4977 = vunpack.c.h.b16 %v2555
        %v4978 = vunpack.c.l.b16 %v2556
        %v4979 = vunpack.c.h.b16 %v2556
        %v4980 = vunpack.c.l.b16 %v2557
        %v4981 = vunpack.c.h.b16 %v2557
        %v4982 = vunpack.c.l.b16 %v2558
        %v4983 = vunpack.c.h.b16 %v2558
        %v4984 = vunpack.c.l.b16 %v2559
        %v4985 = vunpack.c.h.b16 %v2559
        %v4986 = vunpack.c.l.b16 %v2560
        %v4987 = vunpack.c.h.b16 %v2560
        %v4988 = vunpack.c.l.b16 %v2561
        %v4989 = vunpack.c.h.b16 %v2561
        %v4990 = vunpack.c.l.b16 %v2562
        %v4991 = vunpack.c.h.b16 %v2562
        %v4992 = vunpack.c.l.b16 %v2563
        %v4993 = vunpack.c.h.b16 %v2563
        %v4994 = vunpack.c.l.b16 %v2564
        %v4995 = vunpack.c.h.b16 %v2564
        %v4996 = vunpack.c.l.b16 %v2565
        %v4997 = vunpack.c.h.b16 %v2565
        %v4998 = vunpack.c.l.b16 %v2566
        %v4999 = vunpack.c.h.b16 %v2566
        %v5000 = vunpack.c.l.b16 %v2567
        %v5001 = vunpack.c.h.b16 %v2567
        %v5002 = vunpack.c.l.b16 %v2568
        %v5003 = vunpack.c.h.b16 %v2568
        %v5004 = vunpack.c.l.b16 %v2569
        %v5005 = vunpack.c.h.b16 %v2569
        %v5006 = vunpack.c.l.b16 %v2570
        %v5007 = vunpack.c.h.b16 %v2570
        %v5008 = vunpack.c.l.b16 %v2571
        %v5009 = vunpack.c.h.b16 %v2571
        %v5010 = vunpack.c.l.b16 %v2572
        %v5011 = vunpack.c.h.b16 %v2572
        %v5012 = vunpack.c.l.b16 %v2573
        %v5013 = vunpack.c.h.b16 %v2573
        %v5014 = vunpack.c.l.b16 %v2574
        %v5015 = vunpack.c.h.b16 %v2574
        %v5016 = vunpack.c.l.b16 %v2575
        %v5017 = vunpack.c.h.b16 %v2575
        %v5018 = vunpack.c.l.b16 %v2576
        %v5019 = vunpack.c.h.b16 %v2576
        %v5020 = vunpack.c.l.b16 %v2577
        %v5021 = vunpack.c.h.b16 %v2577
        %v5022 = vunpack.c.l.b16 %v2578
        %v5023 = vunpack.c.h.b16 %v2578
        %v5024 = vunpack.c.l.b16 %v2579
        %v5025 = vunpack.c.h.b16 %v2579
        %v5026 = vunpack.c.l.b16 %v2580
        %v5027 = vunpack.c.h.b16 %v2580
        %v5028 = vunpack.c.l.b16 %v2581
        %v5029 = vunpack.c.h.b16 %v2581
        %v5030 = vunpack.c.l.b16 %v2582
        %v5031 = vunpack.c.h.b16 %v2582
        %v5032 = vunpack.c.l.b16 %v2583
        %v5033 = vunpack.c.h.b16 %v2583
        %v5034 = vunpack.c.l.b16 %v2584
        %v5035 = vunpack.c.h.b16 %v2584
        %v5036 = vunpack.c.l.b16 %v2585
        %v5037 = vunpack.c.h.b16 %v2585
        %v5038 = vunpack.c.l.b16 %v2586
        %v5039 = vunpack.c.h.b16 %v2586
        %v5040 = vunpack.c.l.b16 %v2587
        %v5041 = vunpack.c.h.b16 %v2587
        %v5042 = vunpack.c.l.b16 %v2588
        %v5043 = vunpack.c.h.b16 %v2588
        %v5044 = vunpack.c.l.b16 %v2589
        %v5045 = vunpack.c.h.b16 %v2589
        %v5046 = vunpack.c.l.b16 %v2590
        %v5047 = vunpack.c.h.b16 %v2590
        %v5048 = vunpack.c.l.b16 %v2591
        %v5049 = vunpack.c.h.b16 %v2591
        %v5050 = vunpack.c.l.b16 %v2592
        %v5051 = vunpack.c.h.b16 %v2592
        %v5052 = vunpack.c.l.b16 %v2593
        %v5053 = vunpack.c.h.b16 %v2593
        %v5054 = vunpack.c.l.b16 %v2594
        %v5055 = vunpack.c.h.b16 %v2594
        %v5056 = vunpack.c.l.b16 %v2595
        %v5057 = vunpack.c.h.b16 %v2595
        %v5058 = vunpack.c.l.b16 %v2596
        %v5059 = vunpack.c.h.b16 %v2596
        %v5060 = vunpack.c.l.b16 %v2597
        %v5061 = vunpack.c.h.b16 %v2597
        %v5062 = vunpack.c.l.b16 %v2598
        %v5063 = vunpack.c.h.b16 %v2598
        %v5064 = vunpack.c.l.b16 %v2599
        %v5065 = vunpack.c.h.b16 %v2599
        %v5066 = vunpack.c.l.b16 %v2600
        %v5067 = vunpack.c.h.b16 %v2600
        %v5068 = vunpack.c.l.b16 %v2601
        %v5069 = vunpack.c.h.b16 %v2601
        %v5070 = vunpack.c.l.b16 %v2602
        %v5071 = vunpack.c.h.b16 %v2602
        %v5072 = vunpack.c.l.b16 %v2603
        %v5073 = vunpack.c.h.b16 %v2603
        %v5074 = vunpack.c.l.b16 %v2604
        %v5075 = vunpack.c.h.b16 %v2604
        %v5076 = vunpack.c.l.b16 %v2605
        %v5077 = vunpack.c.h.b16 %v2605
        %v5078 = vunpack.c.l.b16 %v2606
        %v5079 = vunpack.c.h.b16 %v2606
        %v5080 = vunpack.c.l.b16 %v2607
        %v5081 = vunpack.c.h.b16 %v2607
        %v5082 = vunpack.c.l.b16 %v2608
        %v5083 = vunpack.c.h.b16 %v2608
        %v5084 = vunpack.c.l.b16 %v2609
        %v5085 = vunpack.c.h.b16 %v2609
        %v5086 = vunpack.c.l.b16 %v2610
        %v5087 = vunpack.c.h.b16 %v2610
        %v5088 = vunpack.c.l.b16 %v2611
        %v5089 = vunpack.c.h.b16 %v2611
        %v5090 = vunpack.c.l.b16 %v2612
        %v5091 = vunpack.c.h.b16 %v2612
        %v5092 = vpack.c.b16 %v3560, %v3556
        %v5093 = vpack.c.b16 %v3561, %v3557
        %v5094 = vpack.c.b16 %v3562, %v3558
        %v5095 = vpack.c.b16 %v3563, %v3559
        %v5096 = vpack.c.b16 %v3568, %v3564
        %v5097 = vpack.c.b16 %v3569, %v3565
        %v5098 = vpack.c.b16 %v3570, %v3566
        %v5099 = vpack.c.b16 %v3571, %v3567
        %v5100 = vpack.c.b16 %v3576, %v3572
        %v5101 = vpack.c.b16 %v3577, %v3573
        %v5102 = vpack.c.b16 %v3578, %v3574
        %v5103 = vpack.c.b16 %v3579, %v3575
        %v5104 = vpack.c.b16 %v3584, %v3580
        %v5105 = vpack.c.b16 %v3585, %v3581
        %v5106 = vpack.c.b16 %v3586, %v3582
        %v5107 = vpack.c.b16 %v3587, %v3583
        %v5108 = vpack.c.b16 %v3592, %v3588
        %v5109 = vpack.c.b16 %v3593, %v3589
        %v5110 = vpack.c.b16 %v3594, %v3590
        %v5111 = vpack.c.b16 %v3595, %v3591
        %v5112 = vpack.c.b16 %v3600, %v3596
        %v5113 = vpack.c.b16 %v3601, %v3597
        %v5114 = vpack.c.b16 %v3602, %v3598
        %v5115 = vpack.c.b16 %v3603, %v3599
        %v5116 = vpack.c.b16 %v3608, %v3604
        %v5117 = vpack.c.b16 %v3609, %v3605
        %v5118 = vpack.c.b16 %v3610, %v3606
        %v5119 = vpack.c.b16 %v3611, %v3607
        %v5120 = vpack.c.b16 %v3616, %v3612
        %v5121 = vpack.c.b16 %v3617, %v3613
        %v5122 = vpack.c.b16 %v3618, %v3614
        %v5123 = vpack.c.b16 %v3619, %v3615
        %v5124 = vpack.c.b16 %v3624, %v3620
        %v5125 = vpack.c.b16 %v3625, %v3621
        %v5126 = vpack.c.b16 %v3626, %v3622
        %v5127 = vpack.c.b16 %v3627, %v3623
        %v5128 = vpack.c.b16 %v3632, %v3628
        %v5129 = vpack.c.b16 %v3633, %v3629
        %v5130 = vpack.c.b16 %v3634, %v3630
        %v5131 = vpack.c.b16 %v3635, %v3631
        %v5132 = vpack.c.b16 %v3640, %v3636
        %v5133 = vpack.c.b16 %v3641, %v3637
        %v5134 = vpack.c.b16 %v3642, %v3638
        %v5135 = vpack.c.b16 %v3643, %v3639
        %v5136 = vpack.c.b16 %v3648, %v3644
        %v5137 = vpack.c.b16 %v3649, %v3645
        %v5138 = vpack.c.b16 %v3650, %v3646
        %v5139 = vpack.c.b16 %v3651, %v3647
        %v5140 = vpack.c.b16 %v3656, %v3652
        %v5141 = vpack.c.b16 %v3657, %v3653
        %v5142 = vpack.c.b16 %v3658, %v3654
        %v5143 = vpack.c.b16 %v3659, %v3655
        %v5144 = vpack.c.b16 %v3664, %v3660
        %v5145 = vpack.c.b16 %v3665, %v3661
        %v5146 = vpack.c.b16 %v3666, %v3662
        %v5147 = vpack.c.b16 %v3667, %v3663
        %v5148 = vpack.c.b16 %v3672, %v3668
        %v5149 = vpack.c.b16 %v3673, %v3669
        %v5150 = vpack.c.b16 %v3674, %v3670
        %v5151 = vpack.c.b16 %v3675, %v3671
        %v5152 = vpack.c.b16 %v3680, %v3676
        %v5153 = vpack.c.b16 %v3681, %v3677
        %v5154 = vpack.c.b16 %v3682, %v3678
        %v5155 = vpack.c.b16 %v3683, %v3679
        %v5156 = vpack.c.b16 %v3688, %v3684
        %v5157 = vpack.c.b16 %v3689, %v3685
        %v5158 = vpack.c.b16 %v3690, %v3686
        %v5159 = vpack.c.b16 %v3691, %v3687
        %v5160 = vpack.c.b16 %v3696, %v3692
        %v5161 = vpack.c.b16 %v3697, %v3693
        %v5162 = vpack.c.b16 %v3698, %v3694
        %v5163 = vpack.c.b16 %v3699, %v3695
        %v5164 = vpack.c.b16 %v3704, %v3700
        %v5165 = vpack.c.b16 %v3705, %v3701
        %v5166 = vpack.c.b16 %v3706, %v3702
        %v5167 = vpack.c.b16 %v3707, %v3703
        %v5168 = vpack.c.b16 %v3712, %v3708
        %v5169 = vpack.c.b16 %v3713, %v3709
        %v5170 = vpack.c.b16 %v3714, %v3710
        %v5171 = vpack.c.b16 %v3715, %v3711
        %v5172 = vpack.c.b16 %v3720, %v3716
        %v5173 = vpack.c.b16 %v3721, %v3717
        %v5174 = vpack.c.b16 %v3722, %v3718
        %v5175 = vpack.c.b16 %v3723, %v3719
        %v5176 = vpack.c.b16 %v3728, %v3724
        %v5177 = vpack.c.b16 %v3729, %v3725
        %v5178 = vpack.c.b16 %v3730, %v3726
        %v5179 = vpack.c.b16 %v3731, %v3727
        %v5180 = vpack.c.b16 %v3736, %v3732
        %v5181 = vpack.c.b16 %v3737, %v3733
        %v5182 = vpack.c.b16 %v3738, %v3734
        %v5183 = vpack.c.b16 %v3739, %v3735
        %v5184 = vpack.c.b16 %v3744, %v3740
        %v5185 = vpack.c.b16 %v3745, %v3741
        %v5186 = vpack.c.b16 %v3746, %v3742
        %v5187 = vpack.c.b16 %v3747, %v3743
        %v5188 = vpack.c.b16 %v3752, %v3748
        %v5189 = vpack.c.b16 %v3753, %v3749
        %v5190 = vpack.c.b16 %v3754, %v3750
        %v5191 = vpack.c.b16 %v3755, %v3751
        %v5192 = vpack.c.b16 %v3760, %v3756
        %v5193 = vpack.c.b16 %v3761, %v3757
        %v5194 = vpack.c.b16 %v3762, %v3758
        %v5195 = vpack.c.b16 %v3763, %v3759
        %v5196 = vpack.c.b16 %v3768, %v3764
        %v5197 = vpack.c.b16 %v3769, %v3765
        %v5198 = vpack.c.b16 %v3770, %v3766
        %v5199 = vpack.c.b16 %v3771, %v3767
        %v5200 = vpack.c.b16 %v3776, %v3772
        %v5201 = vpack.c.b16 %v3777, %v3773
        %v5202 = vpack.c.b16 %v3778, %v3774
        %v5203 = vpack.c.b16 %v3779, %v3775
        %v5204 = vpack.c.b16 %v3784, %v3780
        %v5205 = vpack.c.b16 %v3785, %v3781
        %v5206 = vpack.c.b16 %v3786, %v3782
        %v5207 = vpack.c.b16 %v3787, %v3783
        %v5208 = vpack.c.b16 %v3792, %v3788
        %v5209 = vpack.c.b16 %v3793, %v3789
        %v5210 = vpack.c.b16 %v3794, %v3790
        %v5211 = vpack.c.b16 %v3795, %v3791
        %v5212 = vpack.c.b16 %v3800, %v3796
        %v5213 = vpack.c.b16 %v3801, %v3797
        %v5214 = vpack.c.b16 %v3802, %v3798
        %v5215 = vpack.c.b16 %v3803, %v3799
        %v5216 = vpack.c.b16 %v3808, %v3804
        %v5217 = vpack.c.b16 %v3809, %v3805
        %v5218 = vpack.c.b16 %v3810, %v3806
        %v5219 = vpack.c.b16 %v3811, %v3807
        %v5220 = vpack.c.b16 %v3816, %v3812
        %v5221 = vpack.c.b16 %v3817, %v3813
        %v5222 = vpack.c.b16 %v3818, %v3814
        %v5223 = vpack.c.b16 %v3819, %v3815
        %v5224 = vpack.c.b16 %v3824, %v3820
        %v5225 = vpack.c.b16 %v3825, %v3821
        %v5226 = vpack.c.b16 %v3826, %v3822
        %v5227 = vpack.c.b16 %v3827, %v3823
        %v5228 = vpack.c.b16 %v3832, %v3828
        %v5229 = vpack.c.b16 %v3833, %v3829
        %v5230 = vpack.c.b16 %v3834, %v3830
        %v5231 = vpack.c.b16 %v3835, %v3831
        %v5232 = vpack.c.b16 %v3840, %v3836
        %v5233 = vpack.c.b16 %v3841, %v3837
        %v5234 = vpack.c.b16 %v3842, %v3838
        %v5235 = vpack.c.b16 %v3843, %v3839
        %v5236 = vpack.c.b16 %v3848, %v3844
        %v5237 = vpack.c.b16 %v3849, %v3845
        %v5238 = vpack.c.b16 %v3850, %v3846
        %v5239 = vpack.c.b16 %v3851, %v3847
        %v5240 = vpack.c.b16 %v3856, %v3852
        %v5241 = vpack.c.b16 %v3857, %v3853
        %v5242 = vpack.c.b16 %v3858, %v3854
        %v5243 = vpack.c.b16 %v3859, %v3855
        %v5244 = vpack.c.b16 %v3864, %v3860
        %v5245 = vpack.c.b16 %v3865, %v3861
        %v5246 = vpack.c.b16 %v3866, %v3862
        %v5247 = vpack.c.b16 %v3867, %v3863
        %v5248 = vpack.c.b16 %v3872, %v3868
        %v5249 = vpack.c.b16 %v3873, %v3869
        %v5250 = vpack.c.b16 %v3874, %v3870
        %v5251 = vpack.c.b16 %v3875, %v3871
        %v5252 = vpack.c.b16 %v3880, %v3876
        %v5253 = vpack.c.b16 %v3881, %v3877
        %v5254 = vpack.c.b16 %v3882, %v3878
        %v5255 = vpack.c.b16 %v3883, %v3879
        %v5256 = vpack.c.b16 %v3888, %v3884
        %v5257 = vpack.c.b16 %v3889, %v3885
        %v5258 = vpack.c.b16 %v3890, %v3886
        %v5259 = vpack.c.b16 %v3891, %v3887
        %v5260 = vpack.c.b16 %v3896, %v3892
        %v5261 = vpack.c.b16 %v3897, %v3893
        %v5262 = vpack.c.b16 %v3898, %v3894
        %v5263 = vpack.c.b16 %v3899, %v3895
        %v5264 = vpack.c.b16 %v3904, %v3900
        %v5265 = vpack.c.b16 %v3905, %v3901
        %v5266 = vpack.c.b16 %v3906, %v3902
        %v5267 = vpack.c.b16 %v3907, %v3903
        %v5268 = vpack.c.b16 %v3912, %v3908
        %v5269 = vpack.c.b16 %v3913, %v3909
        %v5270 = vpack.c.b16 %v3914, %v3910
        %v5271 = vpack.c.b16 %v3915, %v3911
        %v5272 = vpack.c.b16 %v3920, %v3916
        %v5273 = vpack.c.b16 %v3921, %v3917
        %v5274 = vpack.c.b16 %v3922, %v3918
        %v5275 = vpack.c.b16 %v3923, %v3919
        %v5276 = vpack.c.b16 %v3928, %v3924
        %v5277 = vpack.c.b16 %v3929, %v3925
        %v5278 = vpack.c.b16 %v3930, %v3926
        %v5279 = vpack.c.b16 %v3931, %v3927
        %v5280 = vpack.c.b16 %v3936, %v3932
        %v5281 = vpack.c.b16 %v3937, %v3933
        %v5282 = vpack.c.b16 %v3938, %v3934
        %v5283 = vpack.c.b16 %v3939, %v3935
        %v5284 = vpack.c.b16 %v3944, %v3940
        %v5285 = vpack.c.b16 %v3945, %v3941
        %v5286 = vpack.c.b16 %v3946, %v3942
        %v5287 = vpack.c.b16 %v3947, %v3943
        %v5288 = vpack.c.b16 %v3952, %v3948
        %v5289 = vpack.c.b16 %v3953, %v3949
        %v5290 = vpack.c.b16 %v3954, %v3950
        %v5291 = vpack.c.b16 %v3955, %v3951
        %v5292 = vpack.c.b16 %v3960, %v3956
        %v5293 = vpack.c.b16 %v3961, %v3957
        %v5294 = vpack.c.b16 %v3962, %v3958
        %v5295 = vpack.c.b16 %v3963, %v3959
        %v5296 = vpack.c.b16 %v3968, %v3964
        %v5297 = vpack.c.b16 %v3969, %v3965
        %v5298 = vpack.c.b16 %v3970, %v3966
        %v5299 = vpack.c.b16 %v3971, %v3967
        %v5300 = vpack.c.b16 %v3976, %v3972
        %v5301 = vpack.c.b16 %v3977, %v3973
        %v5302 = vpack.c.b16 %v3978, %v3974
        %v5303 = vpack.c.b16 %v3979, %v3975
        %v5304 = vpack.c.b16 %v3984, %v3980
        %v5305 = vpack.c.b16 %v3985, %v3981
        %v5306 = vpack.c.b16 %v3986, %v3982
        %v5307 = vpack.c.b16 %v3987, %v3983
        %v5308 = vpack.c.b16 %v3992, %v3988
        %v5309 = vpack.c.b16 %v3993, %v3989
        %v5310 = vpack.c.b16 %v3994, %v3990
        %v5311 = vpack.c.b16 %v3995, %v3991
        %v5312 = vpack.c.b16 %v4000, %v3996
        %v5313 = vpack.c.b16 %v4001, %v3997
        %v5314 = vpack.c.b16 %v4002, %v3998
        %v5315 = vpack.c.b16 %v4003, %v3999
        %v5316 = vpack.c.b16 %v4008, %v4004
        %v5317 = vpack.c.b16 %v4009, %v4005
        %v5318 = vpack.c.b16 %v4010, %v4006
        %v5319 = vpack.c.b16 %v4011, %v4007
        %v5320 = vpack.c.b16 %v4016, %v4012
        %v5321 = vpack.c.b16 %v4017, %v4013
        %v5322 = vpack.c.b16 %v4018, %v4014
        %v5323 = vpack.c.b16 %v4019, %v4015
        %v5324 = vpack.c.b16 %v4024, %v4020
        %v5325 = vpack.c.b16 %v4025, %v4021
        %v5326 = vpack.c.b16 %v4026, %v4022
        %v5327 = vpack.c.b16 %v4027, %v4023
        %v5328 = vpack.c.b16 %v4032, %v4028
        %v5329 = vpack.c.b16 %v4033, %v4029
        %v5330 = vpack.c.b16 %v4034, %v4030
        %v5331 = vpack.c.b16 %v4035, %v4031
        %v5332 = vpack.c.b16 %v4040, %v4036
        %v5333 = vpack.c.b16 %v4041, %v4037
        %v5334 = vpack.c.b16 %v4042, %v4038
        %v5335 = vpack.c.b16 %v4043, %v4039
        %v5336 = vpack.c.b16 %v4048, %v4044
        %v5337 = vpack.c.b16 %v4049, %v4045
        %v5338 = vpack.c.b16 %v4050, %v4046
        %v5339 = vpack.c.b16 %v4051, %v4047
        %v5340 = vpack.c.b16 %v4056, %v4052
        %v5341 = vpack.c.b16 %v4057, %v4053
        %v5342 = vpack.c.b16 %v4058, %v4054
        %v5343 = vpack.c.b16 %v4059, %v4055
        %v5344 = vpack.c.b16 %v4064, %v4060
        %v5345 = vpack.c.b16 %v4065, %v4061
        %v5346 = vpack.c.b16 %v4066, %v4062
        %v5347 = vpack.c.b16 %v4067, %v4063
        %v5348 = vpack.c.b16 %v4072, %v4068
        %v5349 = vpack.c.b16 %v4073, %v4069
        %v5350 = vpack.c.b16 %v4074, %v4070
        %v5351 = vpack.c.b16 %v4075, %v4071
        %v5352 = vpack.c.b16 %v4080, %v4076
        %v5353 = vpack.c.b16 %v4081, %v4077
        %v5354 = vpack.c.b16 %v4082, %v4078
        %v5355 = vpack.c.b16 %v4083, %v4079
        %v5356 = vpack.c.b16 %v4088, %v4084
        %v5357 = vpack.c.b16 %v4089, %v4085
        %v5358 = vpack.c.b16 %v4090, %v4086
        %v5359 = vpack.c.b16 %v4091, %v4087
        %v5360 = vpack.c.b16 %v4096, %v4092
        %v5361 = vpack.c.b16 %v4097, %v4093
        %v5362 = vpack.c.b16 %v4098, %v4094
        %v5363 = vpack.c.b16 %v4099, %v4095
        %v5364 = vpack.c.b16 %v4104, %v4100
        %v5365 = vpack.c.b16 %v4105, %v4101
        %v5366 = vpack.c.b16 %v4106, %v4102
        %v5367 = vpack.c.b16 %v4107, %v4103
        %v5368 = vpack.c.b16 %v4112, %v4108
        %v5369 = vpack.c.b16 %v4113, %v4109
        %v5370 = vpack.c.b16 %v4114, %v4110
        %v5371 = vpack.c.b16 %v4115, %v4111
        %v5372 = vpack.c.b16 %v4120, %v4116
        %v5373 = vpack.c.b16 %v4121, %v4117
        %v5374 = vpack.c.b16 %v4122, %v4118
        %v5375 = vpack.c.b16 %v4123, %v4119
        %v5376 = vpack.c.b16 %v4128, %v4124
        %v5377 = vpack.c.b16 %v4129, %v4125
        %v5378 = vpack.c.b16 %v4130, %v4126
        %v5379 = vpack.c.b16 %v4131, %v4127
        %v5380 = vpack.c.b16 %v4136, %v4132
        %v5381 = vpack.c.b16 %v4137, %v4133
        %v5382 = vpack.c.b16 %v4138, %v4134
        %v5383 = vpack.c.b16 %v4139, %v4135
        %v5384 = vpack.c.b16 %v4144, %v4140
        %v5385 = vpack.c.b16 %v4145, %v4141
        %v5386 = vpack.c.b16 %v4146, %v4142
        %v5387 = vpack.c.b16 %v4147, %v4143
        %v5388 = vpack.c.b16 %v4152, %v4148
        %v5389 = vpack.c.b16 %v4153, %v4149
        %v5390 = vpack.c.b16 %v4154, %v4150
        %v5391 = vpack.c.b16 %v4155, %v4151
        %v5392 = vpack.c.b16 %v4160, %v4156
        %v5393 = vpack.c.b16 %v4161, %v4157
        %v5394 = vpack.c.b16 %v4162, %v4158
        %v5395 = vpack.c.b16 %v4163, %v4159
        %v5396 = vpack.c.b16 %v4168, %v4164
        %v5397 = vpack.c.b16 %v4169, %v4165
        %v5398 = vpack.c.b16 %v4170, %v4166
        %v5399 = vpack.c.b16 %v4171, %v4167
        %v5400 = vpack.c.b16 %v4176, %v4172
        %v5401 = vpack.c.b16 %v4177, %v4173
        %v5402 = vpack.c.b16 %v4178, %v4174
        %v5403 = vpack.c.b16 %v4179, %v4175
        %v5404 = vpack.c.b16 %v4184, %v4180
        %v5405 = vpack.c.b16 %v4185, %v4181
        %v5406 = vpack.c.b16 %v4186, %v4182
        %v5407 = vpack.c.b16 %v4187, %v4183
        %v5408 = vpack.c.b16 %v4192, %v4188
        %v5409 = vpack.c.b16 %v4193, %v4189
        %v5410 = vpack.c.b16 %v4194, %v4190
        %v5411 = vpack.c.b16 %v4195, %v4191
        %v5412 = vpack.c.b16 %v4200, %v4196
        %v5413 = vpack.c.b16 %v4201, %v4197
        %v5414 = vpack.c.b16 %v4202, %v4198
        %v5415 = vpack.c.b16 %v4203, %v4199
        %v5416 = vpack.c.b16 %v4208, %v4204
        %v5417 = vpack.c.b16 %v4209, %v4205
        %v5418 = vpack.c.b16 %v4210, %v4206
        %v5419 = vpack.c.b16 %v4211, %v4207
        %v5420 = vpack.c.b16 %v4216, %v4212
        %v5421 = vpack.c.b16 %v4217, %v4213
        %v5422 = vpack.c.b16 %v4218, %v4214
        %v5423 = vpack.c.b16 %v4219, %v4215
        %v5424 = vpack.c.b16 %v4224, %v4220
        %v5425 = vpack.c.b16 %v4225, %v4221
        %v5426 = vpack.c.b16 %v4226, %v4222
        %v5427 = vpack.c.b16 %v4227, %v4223
        %v5428 = vpack.c.b16 %v4232, %v4228
        %v5429 = vpack.c.b16 %v4233, %v4229
        %v5430 = vpack.c.b16 %v4234, %v4230
        %v5431 = vpack.c.b16 %v4235, %v4231
        %v5432 = vpack.c.b16 %v4240, %v4236
        %v5433 = vpack.c.b16 %v4241, %v4237
        %v5434 = vpack.c.b16 %v4242, %v4238
        %v5435 = vpack.c.b16 %v4243, %v4239
        %v5436 = vpack.c.b16 %v4248, %v4244
        %v5437 = vpack.c.b16 %v4249, %v4245
        %v5438 = vpack.c.b16 %v4250, %v4246
        %v5439 = vpack.c.b16 %v4251, %v4247
        %v5440 = vpack.c.b16 %v4256, %v4252
        %v5441 = vpack.c.b16 %v4257, %v4253
        %v5442 = vpack.c.b16 %v4258, %v4254
        %v5443 = vpack.c.b16 %v4259, %v4255
        %v5444 = vpack.c.b16 %v4264, %v4260
        %v5445 = vpack.c.b16 %v4265, %v4261
        %v5446 = vpack.c.b16 %v4266, %v4262
        %v5447 = vpack.c.b16 %v4267, %v4263
        %v5448 = vpack.c.b16 %v4272, %v4268
        %v5449 = vpack.c.b16 %v4273, %v4269
        %v5450 = vpack.c.b16 %v4274, %v4270
        %v5451 = vpack.c.b16 %v4275, %v4271
        %v5452 = vpack.c.b16 %v4280, %v4276
        %v5453 = vpack.c.b16 %v4281, %v4277
        %v5454 = vpack.c.b16 %v4282, %v4278
        %v5455 = vpack.c.b16 %v4283, %v4279
        %v5456 = vpack.c.b16 %v4288, %v4284
        %v5457 = vpack.c.b16 %v4289, %v4285
        %v5458 = vpack.c.b16 %v4290, %v4286
        %v5459 = vpack.c.b16 %v4291, %v4287
        %v5460 = vpack.c.b16 %v4296, %v4292
        %v5461 = vpack.c.b16 %v4297, %v4293
        %v5462 = vpack.c.b16 %v4298, %v4294
        %v5463 = vpack.c.b16 %v4299, %v4295
        %v5464 = vpack.c.b16 %v4304, %v4300
        %v5465 = vpack.c.b16 %v4305, %v4301
        %v5466 = vpack.c.b16 %v4306, %v4302
        %v5467 = vpack.c.b16 %v4307, %v4303
        %v5468 = vpack.c.b16 %v4312, %v4308
        %v5469 = vpack.c.b16 %v4313, %v4309
        %v5470 = vpack.c.b16 %v4314, %v4310
        %v5471 = vpack.c.b16 %v4315, %v4311
        %v5472 = vpack.c.b16 %v4320, %v4316
        %v5473 = vpack.c.b16 %v4321, %v4317
        %v5474 = vpack.c.b16 %v4322, %v4318
        %v5475 = vpack.c.b16 %v4323, %v4319
        %v5476 = vpack.c.b16 %v4328, %v4324
        %v5477 = vpack.c.b16 %v4329, %v4325
        %v5478 = vpack.c.b16 %v4330, %v4326
        %v5479 = vpack.c.b16 %v4331, %v4327
        %v5480 = vpack.c.b16 %v4336, %v4332
        %v5481 = vpack.c.b16 %v4337, %v4333
        %v5482 = vpack.c.b16 %v4338, %v4334
        %v5483 = vpack.c.b16 %v4339, %v4335
        %v5484 = vpack.c.b16 %v4344, %v4340
        %v5485 = vpack.c.b16 %v4345, %v4341
        %v5486 = vpack.c.b16 %v4346, %v4342
        %v5487 = vpack.c.b16 %v4347, %v4343
        %v5488 = vpack.c.b16 %v4352, %v4348
        %v5489 = vpack.c.b16 %v4353, %v4349
        %v5490 = vpack.c.b16 %v4354, %v4350
        %v5491 = vpack.c.b16 %v4355, %v4351
        %v5492 = vpack.c.b16 %v4360, %v4356
        %v5493 = vpack.c.b16 %v4361, %v4357
        %v5494 = vpack.c.b16 %v4362, %v4358
        %v5495 = vpack.c.b16 %v4363, %v4359
        %v5496 = vpack.c.b16 %v4368, %v4364
        %v5497 = vpack.c.b16 %v4369, %v4365
        %v5498 = vpack.c.b16 %v4370, %v4366
        %v5499 = vpack.c.b16 %v4371, %v4367
        %v5500 = vpack.c.b16 %v4376, %v4372
        %v5501 = vpack.c.b16 %v4377, %v4373
        %v5502 = vpack.c.b16 %v4378, %v4374
        %v5503 = vpack.c.b16 %v4379, %v4375
        %v5504 = vpack.c.b16 %v4384, %v4380
        %v5505 = vpack.c.b16 %v4385, %v4381
        %v5506 = vpack.c.b16 %v4386, %v4382
        %v5507 = vpack.c.b16 %v4387, %v4383
        %v5508 = vpack.c.b16 %v4392, %v4388
        %v5509 = vpack.c.b16 %v4393, %v4389
        %v5510 = vpack.c.b16 %v4394, %v4390
        %v5511 = vpack.c.b16 %v4395, %v4391
        %v5512 = vpack.c.b16 %v4400, %v4396
        %v5513 = vpack.c.b16 %v4401, %v4397
        %v5514 = vpack.c.b16 %v4402, %v4398
        %v5515 = vpack.c.b16 %v4403, %v4399
        %v5516 = vpack.c.b16 %v4408, %v4404
        %v5517 = vpack.c.b16 %v4409, %v4405
        %v5518 = vpack.c.b16 %v4410, %v4406
        %v5519 = vpack.c.b16 %v4411, %v4407
        %v5520 = vpack.c.b16 %v4416, %v4412
        %v5521 = vpack.c.b16 %v4417, %v4413
        %v5522 = vpack.c.b16 %v4418, %v4414
        %v5523 = vpack.c.b16 %v4419, %v4415
        %v5524 = vpack.c.b16 %v4424, %v4420
        %v5525 = vpack.c.b16 %v4425, %v4421
        %v5526 = vpack.c.b16 %v4426, %v4422
        %v5527 = vpack.c.b16 %v4427, %v4423
        %v5528 = vpack.c.b16 %v4432, %v4428
        %v5529 = vpack.c.b16 %v4433, %v4429
        %v5530 = vpack.c.b16 %v4434, %v4430
        %v5531 = vpack.c.b16 %v4435, %v4431
        %v5532 = vpack.c.b16 %v4440, %v4436
        %v5533 = vpack.c.b16 %v4441, %v4437
        %v5534 = vpack.c.b16 %v4442, %v4438
        %v5535 = vpack.c.b16 %v4443, %v4439
        %v5536 = vpack.c.b16 %v4448, %v4444
        %v5537 = vpack.c.b16 %v4449, %v4445
        %v5538 = vpack.c.b16 %v4450, %v4446
        %v5539 = vpack.c.b16 %v4451, %v4447
        %v5540 = vpack.c.b16 %v4456, %v4452
        %v5541 = vpack.c.b16 %v4457, %v4453
        %v5542 = vpack.c.b16 %v4458, %v4454
        %v5543 = vpack.c.b16 %v4459, %v4455
        %v5544 = vpack.c.b16 %v4464, %v4460
        %v5545 = vpack.c.b16 %v4465, %v4461
        %v5546 = vpack.c.b16 %v4466, %v4462
        %v5547 = vpack.c.b16 %v4467, %v4463
        %v5548 = vpack.c.b16 %v4472, %v4468
        %v5549 = vpack.c.b16 %v4473, %v4469
        %v5550 = vpack.c.b16 %v4474, %v4470
        %v5551 = vpack.c.b16 %v4475, %v4471
        %v5552 = vpack.c.b16 %v4480, %v4476
        %v5553 = vpack.c.b16 %v4481, %v4477
        %v5554 = vpack.c.b16 %v4482, %v4478
        %v5555 = vpack.c.b16 %v4483, %v4479
        %v5556 = vpack.c.b16 %v4488, %v4484
        %v5557 = vpack.c.b16 %v4489, %v4485
        %v5558 = vpack.c.b16 %v4490, %v4486
        %v5559 = vpack.c.b16 %v4491, %v4487
        %v5560 = vpack.c.b16 %v4496, %v4492
        %v5561 = vpack.c.b16 %v4497, %v4493
        %v5562 = vpack.c.b16 %v4498, %v4494
        %v5563 = vpack.c.b16 %v4499, %v4495
        %v5564 = vpack.c.b16 %v4504, %v4500
        %v5565 = vpack.c.b16 %v4505, %v4501
        %v5566 = vpack.c.b16 %v4506, %v4502
        %v5567 = vpack.c.b16 %v4507, %v4503
        %v5568 = vpack.c.b16 %v4512, %v4508
        %v5569 = vpack.c.b16 %v4513, %v4509
        %v5570 = vpack.c.b16 %v4514, %v4510
        %v5571 = vpack.c.b16 %v4515, %v4511
        %v5572 = vpack.c.b16 %v4520, %v4516
        %v5573 = vpack.c.b16 %v4521, %v4517
        %v5574 = vpack.c.b16 %v4522, %v4518
        %v5575 = vpack.c.b16 %v4523, %v4519
        %v5576 = vpack.c.b16 %v4528, %v4524
        %v5577 = vpack.c.b16 %v4529, %v4525
        %v5578 = vpack.c.b16 %v4530, %v4526
        %v5579 = vpack.c.b16 %v4531, %v4527
        %v5580 = vpack.c.b16 %v4536, %v4532
        %v5581 = vpack.c.b16 %v4537, %v4533
        %v5582 = vpack.c.b16 %v4538, %v4534
        %v5583 = vpack.c.b16 %v4539, %v4535
        %v5584 = vpack.c.b16 %v4544, %v4540
        %v5585 = vpack.c.b16 %v4545, %v4541
        %v5586 = vpack.c.b16 %v4546, %v4542
        %v5587 = vpack.c.b16 %v4547, %v4543
        %v5588 = vpack.c.b16 %v4552, %v4548
        %v5589 = vpack.c.b16 %v4553, %v4549
        %v5590 = vpack.c.b16 %v4554, %v4550
        %v5591 = vpack.c.b16 %v4555, %v4551
        %v5592 = vpack.c.b16 %v4560, %v4556
        %v5593 = vpack.c.b16 %v4561, %v4557
        %v5594 = vpack.c.b16 %v4562, %v4558
        %v5595 = vpack.c.b16 %v4563, %v4559
        %v5596 = vpack.c.b16 %v4568, %v4564
        %v5597 = vpack.c.b16 %v4569, %v4565
        %v5598 = vpack.c.b16 %v4570, %v4566
        %v5599 = vpack.c.b16 %v4571, %v4567
        %v5600 = vpack.c.b16 %v4576, %v4572
        %v5601 = vpack.c.b16 %v4577, %v4573
        %v5602 = vpack.c.b16 %v4578, %v4574
        %v5603 = vpack.c.b16 %v4579, %v4575
        %v5604 = vpack.c.b16 %v4584, %v4580
        %v5605 = vpack.c.b16 %v4585, %v4581
        %v5606 = vpack.c.b16 %v4586, %v4582
        %v5607 = vpack.c.b16 %v4587, %v4583
        %v5608 = vpack.c.b16 %v4592, %v4588
        %v5609 = vpack.c.b16 %v4593, %v4589
        %v5610 = vpack.c.b16 %v4594, %v4590
        %v5611 = vpack.c.b16 %v4595, %v4591
        %v5612 = vpack.c.b16 %v4600, %v4596
        %v5613 = vpack.c.b16 %v4601, %v4597
        %v5614 = vpack.c.b16 %v4602, %v4598
        %v5615 = vpack.c.b16 %v4603, %v4599
        %v5616 = vpack.c.b16 %v4608, %v4604
        %v5617 = vpack.c.b16 %v4609, %v4605
        %v5618 = vpack.c.b16 %v4610, %v4606
        %v5619 = vpack.c.b16 %v4611, %v4607
        %v5620 = vpack.c.b16 %v4616, %v4612
        %v5621 = vpack.c.b16 %v4617, %v4613
        %v5622 = vpack.c.b16 %v4618, %v4614
        %v5623 = vpack.c.b16 %v4619, %v4615
        %v5624 = vpack.c.b16 %v4624, %v4620
        %v5625 = vpack.c.b16 %v4625, %v4621
        %v5626 = vpack.c.b16 %v4626, %v4622
        %v5627 = vpack.c.b16 %v4627, %v4623
        %v5628 = vpack.c.b16 %v4632, %v4628
        %v5629 = vpack.c.b16 %v4633, %v4629
        %v5630 = vpack.c.b16 %v4634, %v4630
        %v5631 = vpack.c.b16 %v4635, %v4631
        %v5632 = vpack.c.b16 %v4640, %v4636
        %v5633 = vpack.c.b16 %v4641, %v4637
        %v5634 = vpack.c.b16 %v4642, %v4638
        %v5635 = vpack.c.b16 %v4643, %v4639
        %v5636 = vpack.c.b16 %v4648, %v4644
        %v5637 = vpack.c.b16 %v4649, %v4645
        %v5638 = vpack.c.b16 %v4650, %v4646
        %v5639 = vpack.c.b16 %v4651, %v4647
        %v5640 = vpack.c.b16 %v4656, %v4652
        %v5641 = vpack.c.b16 %v4657, %v4653
        %v5642 = vpack.c.b16 %v4658, %v4654
        %v5643 = vpack.c.b16 %v4659, %v4655
        %v5644 = vpack.c.b16 %v4664, %v4660
        %v5645 = vpack.c.b16 %v4665, %v4661
        %v5646 = vpack.c.b16 %v4666, %v4662
        %v5647 = vpack.c.b16 %v4667, %v4663
        %v5648 = vpack.c.b16 %v4672, %v4668
        %v5649 = vpack.c.b16 %v4673, %v4669
        %v5650 = vpack.c.b16 %v4674, %v4670
        %v5651 = vpack.c.b16 %v4675, %v4671
        %v5652 = vpack.c.b16 %v4680, %v4676
        %v5653 = vpack.c.b16 %v4681, %v4677
        %v5654 = vpack.c.b16 %v4682, %v4678
        %v5655 = vpack.c.b16 %v4683, %v4679
        %v5656 = vpack.c.b16 %v4688, %v4684
        %v5657 = vpack.c.b16 %v4689, %v4685
        %v5658 = vpack.c.b16 %v4690, %v4686
        %v5659 = vpack.c.b16 %v4691, %v4687
        %v5660 = vpack.c.b16 %v4696, %v4692
        %v5661 = vpack.c.b16 %v4697, %v4693
        %v5662 = vpack.c.b16 %v4698, %v4694
        %v5663 = vpack.c.b16 %v4699, %v4695
        %v5664 = vpack.c.b16 %v4704, %v4700
        %v5665 = vpack.c.b16 %v4705, %v4701
        %v5666 = vpack.c.b16 %v4706, %v4702
        %v5667 = vpack.c.b16 %v4707, %v4703
        %v5668 = vpack.c.b16 %v4712, %v4708
        %v5669 = vpack.c.b16 %v4713, %v4709
        %v5670 = vpack.c.b16 %v4714, %v4710
        %v5671 = vpack.c.b16 %v4715, %v4711
        %v5672 = vpack.c.b16 %v4720, %v4716
        %v5673 = vpack.c.b16 %v4721, %v4717
        %v5674 = vpack.c.b16 %v4722, %v4718
        %v5675 = vpack.c.b16 %v4723, %v4719
        %v5676 = vpack.c.b16 %v4728, %v4724
        %v5677 = vpack.c.b16 %v4729, %v4725
        %v5678 = vpack.c.b16 %v4730, %v4726
        %v5679 = vpack.c.b16 %v4731, %v4727
        %v5680 = vpack.c.b16 %v4736, %v4732
        %v5681 = vpack.c.b16 %v4737, %v4733
        %v5682 = vpack.c.b16 %v4738, %v4734
        %v5683 = vpack.c.b16 %v4739, %v4735
        %v5684 = vpack.c.b16 %v4744, %v4740
        %v5685 = vpack.c.b16 %v4745, %v4741
        %v5686 = vpack.c.b16 %v4746, %v4742
        %v5687 = vpack.c.b16 %v4747, %v4743
        %v5688 = vpack.c.b16 %v4752, %v4748
        %v5689 = vpack.c.b16 %v4753, %v4749
        %v5690 = vpack.c.b16 %v4754, %v4750
        %v5691 = vpack.c.b16 %v4755, %v4751
        %v5692 = vpack.c.b16 %v4760, %v4756
        %v5693 = vpack.c.b16 %v4761, %v4757
        %v5694 = vpack.c.b16 %v4762, %v4758
        %v5695 = vpack.c.b16 %v4763, %v4759
        %v5696 = vpack.c.b16 %v4768, %v4764
        %v5697 = vpack.c.b16 %v4769, %v4765
        %v5698 = vpack.c.b16 %v4770, %v4766
        %v5699 = vpack.c.b16 %v4771, %v4767
        %v5700 = vpack.c.b16 %v4776, %v4772
        %v5701 = vpack.c.b16 %v4777, %v4773
        %v5702 = vpack.c.b16 %v4778, %v4774
        %v5703 = vpack.c.b16 %v4779, %v4775
        %v5704 = vpack.c.b16 %v4784, %v4780
        %v5705 = vpack.c.b16 %v4785, %v4781
        %v5706 = vpack.c.b16 %v4786, %v4782
        %v5707 = vpack.c.b16 %v4787, %v4783
        %v5708 = vpack.c.b16 %v4792, %v4788
        %v5709 = vpack.c.b16 %v4793, %v4789
        %v5710 = vpack.c.b16 %v4794, %v4790
        %v5711 = vpack.c.b16 %v4795, %v4791
        %v5712 = vpack.c.b16 %v4800, %v4796
        %v5713 = vpack.c.b16 %v4801, %v4797
        %v5714 = vpack.c.b16 %v4802, %v4798
        %v5715 = vpack.c.b16 %v4803, %v4799
        %v5716 = vpack.c.b16 %v4808, %v4804
        %v5717 = vpack.c.b16 %v4809, %v4805
        %v5718 = vpack.c.b16 %v4810, %v4806
        %v5719 = vpack.c.b16 %v4811, %v4807
        %v5720 = vpack.c.b16 %v4816, %v4812
        %v5721 = vpack.c.b16 %v4817, %v4813
        %v5722 = vpack.c.b16 %v4818, %v4814
        %v5723 = vpack.c.b16 %v4819, %v4815
        %v5724 = vpack.c.b16 %v4824, %v4820
        %v5725 = vpack.c.b16 %v4825, %v4821
        %v5726 = vpack.c.b16 %v4826, %v4822
        %v5727 = vpack.c.b16 %v4827, %v4823
        %v5728 = vpack.c.b16 %v4832, %v4828
        %v5729 = vpack.c.b16 %v4833, %v4829
        %v5730 = vpack.c.b16 %v4834, %v4830
        %v5731 = vpack.c.b16 %v4835, %v4831
        %v5732 = vpack.c.b16 %v4840, %v4836
        %v5733 = vpack.c.b16 %v4841, %v4837
        %v5734 = vpack.c.b16 %v4842, %v4838
        %v5735 = vpack.c.b16 %v4843, %v4839
        %v5736 = vpack.c.b16 %v4848, %v4844
        %v5737 = vpack.c.b16 %v4849, %v4845
        %v5738 = vpack.c.b16 %v4850, %v4846
        %v5739 = vpack.c.b16 %v4851, %v4847
        %v5740 = vpack.c.b16 %v4856, %v4852
        %v5741 = vpack.c.b16 %v4857, %v4853
        %v5742 = vpack.c.b16 %v4858, %v4854
        %v5743 = vpack.c.b16 %v4859, %v4855
        %v5744 = vpack.c.b16 %v4864, %v4860
        %v5745 = vpack.c.b16 %v4865, %v4861
        %v5746 = vpack.c.b16 %v4866, %v4862
        %v5747 = vpack.c.b16 %v4867, %v4863
        %v5748 = vpack.c.b16 %v4872, %v4868
        %v5749 = vpack.c.b16 %v4873, %v4869
        %v5750 = vpack.c.b16 %v4874, %v4870
        %v5751 = vpack.c.b16 %v4875, %v4871
        %v5752 = vpack.c.b16 %v4880, %v4876
        %v5753 = vpack.c.b16 %v4881, %v4877
        %v5754 = vpack.c.b16 %v4882, %v4878
        %v5755 = vpack.c.b16 %v4883, %v4879
        %v5756 = vpack.c.b16 %v4888, %v4884
        %v5757 = vpack.c.b16 %v4889, %v4885
        %v5758 = vpack.c.b16 %v4890, %v4886
        %v5759 = vpack.c.b16 %v4891, %v4887
        %v5760 = vpack.c.b16 %v4896, %v4892
        %v5761 = vpack.c.b16 %v4897, %v4893
        %v5762 = vpack.c.b16 %v4898, %v4894
        %v5763 = vpack.c.b16 %v4899, %v4895
        %v5764 = vpack.c.b16 %v4904, %v4900
        %v5765 = vpack.c.b16 %v4905, %v4901
        %v5766 = vpack.c.b16 %v4906, %v4902
        %v5767 = vpack.c.b16 %v4907, %v4903
        %v5768 = vpack.c.b16 %v4912, %v4908
        %v5769 = vpack.c.b16 %v4913, %v4909
        %v5770 = vpack.c.b16 %v4914, %v4910
        %v5771 = vpack.c.b16 %v4915, %v4911
        %v5772 = vpack.c.b16 %v4920, %v4916
        %v5773 = vpack.c.b16 %v4921, %v4917
        %v5774 = vpack.c.b16 %v4922, %v4918
        %v5775 = vpack.c.b16 %v4923, %v4919
        %v5776 = vpack.c.b16 %v4928, %v4924
        %v5777 = vpack.c.b16 %v4929, %v4925
        %v5778 = vpack.c.b16 %v4930, %v4926
        %v5779 = vpack.c.b16 %v4931, %v4927
        %v5780 = vpack.c.b16 %v4936, %v4932
        %v5781 = vpack.c.b16 %v4937, %v4933
        %v5782 = vpack.c.b16 %v4938, %v4934
        %v5783 = vpack.c.b16 %v4939, %v4935
        %v5784 = vpack.c.b16 %v4944, %v4940
        %v5785 = vpack.c.b16 %v4945, %v4941
        %v5786 = vpack.c.b16 %v4946, %v4942
        %v5787 = vpack.c.b16 %v4947, %v4943
        %v5788 = vpack.c.b16 %v4952, %v4948
        %v5789 = vpack.c.b16 %v4953, %v4949
        %v5790 = vpack.c.b16 %v4954, %v4950
        %v5791 = vpack.c.b16 %v4955, %v4951
        %v5792 = vpack.c.b16 %v4960, %v4956
        %v5793 = vpack.c.b16 %v4961, %v4957
        %v5794 = vpack.c.b16 %v4962, %v4958
        %v5795 = vpack.c.b16 %v4963, %v4959
        %v5796 = vpack.c.b16 %v4968, %v4964
        %v5797 = vpack.c.b16 %v4969, %v4965
        %v5798 = vpack.c.b16 %v4970, %v4966
        %v5799 = vpack.c.b16 %v4971, %v4967
        %v5800 = vpack.c.b16 %v4976, %v4972
        %v5801 = vpack.c.b16 %v4977, %v4973
        %v5802 = vpack.c.b16 %v4978, %v4974
        %v5803 = vpack.c.b16 %v4979, %v4975
        %v5804 = vpack.c.b16 %v4984, %v4980
        %v5805 = vpack.c.b16 %v4985, %v4981
        %v5806 = vpack.c.b16 %v4986, %v4982
        %v5807 = vpack.c.b16 %v4987, %v4983
        %v5808 = vpack.c.b16 %v4992, %v4988
        %v5809 = vpack.c.b16 %v4993, %v4989
        %v5810 = vpack.c.b16 %v4994, %v4990
        %v5811 = vpack.c.b16 %v4995, %v4991
        %v5812 = vpack.c.b16 %v5000, %v4996
        %v5813 = vpack.c.b16 %v5001, %v4997
        %v5814 = vpack.c.b16 %v5002, %v4998
        %v5815 = vpack.c.b16 %v5003, %v4999
        %v5816 = vpack.c.b16 %v5008, %v5004
        %v5817 = vpack.c.b16 %v5009, %v5005
        %v5818 = vpack.c.b16 %v5010, %v5006
        %v5819 = vpack.c.b16 %v5011, %v5007
        %v5820 = vpack.c.b16 %v5016, %v5012
        %v5821 = vpack.c.b16 %v5017, %v5013
        %v5822 = vpack.c.b16 %v5018, %v5014
        %v5823 = vpack.c.b16 %v5019, %v5015
        %v5824 = vpack.c.b16 %v5024, %v5020
        %v5825 = vpack.c.b16 %v5025, %v5021
        %v5826 = vpack.c.b16 %v5026, %v5022
        %v5827 = vpack.c.b16 %v5027, %v5023
        %v5828 = vpack.c.b16 %v5032, %v5028
        %v5829 = vpack.c.b16 %v5033, %v5029
        %v5830 = vpack.c.b16 %v5034, %v5030
        %v5831 = vpack.c.b16 %v5035, %v5031
        %v5832 = vpack.c.b16 %v5040, %v5036
        %v5833 = vpack.c.b16 %v5041, %v5037
        %v5834 = vpack.c.b16 %v5042, %v5038
        %v5835 = vpack.c.b16 %v5043, %v5039
        %v5836 = vpack.c.b16 %v5048, %v5044
        %v5837 = vpack.c.b16 %v5049, %v5045
        %v5838 = vpack.c.b16 %v5050, %v5046
        %v5839 = vpack.c.b16 %v5051, %v5047
        %v5840 = vpack.c.b16 %v5056, %v5052
        %v5841 = vpack.c.b16 %v5057, %v5053
        %v5842 = vpack.c.b16 %v5058, %v5054
        %v5843 = vpack.c.b16 %v5059, %v5055
        %v5844 = vpack.c.b16 %v5064, %v5060
        %v5845 = vpack.c.b16 %v5065, %v5061
        %v5846 = vpack.c.b16 %v5066, %v5062
        %v5847 = vpack.c.b16 %v5067, %v5063
        %v5848 = vpack.c.b16 %v5072, %v5068
        %v5849 = vpack.c.b16 %v5073, %v5069
        %v5850 = vpack.c.b16 %v5074, %v5070
        %v5851 = vpack.c.b16 %v5075, %v5071
        %v5852 = vpack.c.b16 %v5080, %v5076
        %v5853 = vpack.c.b16 %v5081, %v5077
        %v5854 = vpack.c.b16 %v5082, %v5078
        %v5855 = vpack.c.b16 %v5083, %v5079
        %v5856 = vpack.c.b16 %v5088, %v5084
        %v5857 = vpack.c.b16 %v5089, %v5085
        %v5858 = vpack.c.b16 %v5090, %v5086
        %v5859 = vpack.c.b16 %v5091, %v5087
        %v6629 = vlaneseq
        %v6630 = vshrl.u32 %v6629, 7
        %v6631 = vsub.s32 0, %v6630
        %v6632 = vrot.slane %v2613, %v6631
        %v6633 = vlaneseq
        %v6634 = vshrl.u32 %v6633, 7
        %v6635 = vsub.s32 1, %v6634
        %v6636 = vrot.slane %v2613, %v6635
        %v6637 = vlaneseq
        %v6638 = vshrl.u32 %v6637, 7
        %v6639 = vsub.s32 2, %v6638
        %v6640 = vrot.slane %v2613, %v6639
        %v6641 = vlaneseq
        %v6642 = vshrl.u32 %v6641, 7
        %v6643 = vsub.s32 3, %v6642
        %v6644 = vrot.slane %v2613, %v6643
        %6649 = vmatprep.subr.bf16.mxu0 %v5093
        %6650 = vmatpush1.bf16.msra.mxu0 %v5092
        %6651 = vmatprep.subr.bf16.mxu0 %v5097
        %6652 = vmatpush1.bf16.msra.mxu0 %v5096
        %6653 = vmatprep.subr.bf16.mxu0 %v5101
        %6654 = vmatpush1.bf16.msra.mxu0 %v5100
        %6655 = vmatprep.subr.bf16.mxu0 %v5105
        %6656 = vmatpush1.bf16.msra.mxu0 %v5104
        %6657 = vmatprep.subr.bf16.mxu0 %v5109
        %6658 = vmatpush1.bf16.msra.mxu0 %v5108
        %6659 = vmatprep.subr.bf16.mxu0 %v5113
        %6660 = vmatpush1.bf16.msra.mxu0 %v5112
        %6661 = vmatprep.subr.bf16.mxu0 %v5117
        %6662 = vmatpush1.bf16.msra.mxu0 %v5116
        %6663 = vmatprep.subr.bf16.mxu0 %v5121
        %6664 = vmatpush1.bf16.msra.mxu0 %v5120
        %6665 = vmatprep.subr.bf16.mxu0 %v5125
        %6666 = vmatpush1.bf16.msra.mxu0 %v5124
        %6667 = vmatprep.subr.bf16.mxu0 %v5129
        %6668 = vmatpush1.bf16.msra.mxu0 %v5128
        %6669 = vmatprep.subr.bf16.mxu0 %v5133
        %6670 = vmatpush1.bf16.msra.mxu0 %v5132
        %6671 = vmatprep.subr.bf16.mxu0 %v5137
        %6672 = vmatpush1.bf16.msra.mxu0 %v5136
        %6673 = vmatprep.subr.bf16.mxu0 %v5141
        %6674 = vmatpush1.bf16.msra.mxu0 %v5140
        %6675 = vmatprep.subr.bf16.mxu0 %v5145
        %6676 = vmatpush1.bf16.msra.mxu0 %v5144
        %6677 = vmatprep.subr.bf16.mxu0 %v5149
        %6678 = vmatpush1.bf16.msra.mxu0 %v5148
        %6679 = vmatprep.subr.bf16.mxu0 %v5153
        %6680 = vmatpush1.bf16.msra.mxu0 %v5152
        %6681 = vmatprep.mubr.bf16.mxu0 %v2654
        %6682 = vmatmul.mubr.bf16.gmra.mrb[0].mxu0 %v2640
        %v6683 = vpop.f32.mrb[0].mxu0
        %v6684 = vadd.f32 %v6632, %v6683
        %v6685 = vpop.f32.mrb[0].mxu0
        %v6686 = vadd.f32 %v6636, %v6685
        %v6687 = vpop.f32.mrb[0].mxu0
        %v6688 = vpop.f32.mrb[0].mxu0
        %6689 = vdwg.mxu0
        %6690 = vmatprep.subr.bf16.mxu0 %v5157
        %6691 = vmatpush1.bf16.msra.mxu0 %v5156
        %6692 = vmatprep.subr.bf16.mxu0 %v5161
        %6693 = vmatpush1.bf16.msra.mxu0 %v5160
        %6694 = vmatprep.subr.bf16.mxu0 %v5165
        %6695 = vmatpush1.bf16.msra.mxu0 %v5164
        %6696 = vmatprep.subr.bf16.mxu0 %v5169
        %6697 = vmatpush1.bf16.msra.mxu0 %v5168
        %6698 = vmatprep.subr.bf16.mxu0 %v5173
        %6699 = vmatpush1.bf16.msra.mxu0 %v5172
        %6700 = vmatprep.subr.bf16.mxu0 %v5177
        %6701 = vmatpush1.bf16.msra.mxu0 %v5176
        %6702 = vmatprep.subr.bf16.mxu0 %v5181
        %6703 = vmatpush1.bf16.msra.mxu0 %v5180
        %6704 = vmatprep.subr.bf16.mxu0 %v5185
        %6705 = vmatpush1.bf16.msra.mxu0 %v5184
        %6706 = vmatprep.subr.bf16.mxu0 %v5189
        %6707 = vmatpush1.bf16.msra.mxu0 %v5188
        %6708 = vmatprep.subr.bf16.mxu0 %v5193
        %6709 = vmatpush1.bf16.msra.mxu0 %v5192
        %6710 = vmatprep.subr.bf16.mxu0 %v5197
        %6711 = vmatpush1.bf16.msra.mxu0 %v5196
        %6712 = vmatprep.subr.bf16.mxu0 %v5201
        %6713 = vmatpush1.bf16.msra.mxu0 %v5200
        %6714 = vmatprep.subr.bf16.mxu0 %v5205
        %6715 = vmatpush1.bf16.msra.mxu0 %v5204
        %6716 = vmatprep.subr.bf16.mxu0 %v5209
        %6717 = vmatpush1.bf16.msra.mxu0 %v5208
        %6718 = vmatprep.subr.bf16.mxu0 %v5213
        %6719 = vmatpush1.bf16.msra.mxu0 %v5212
        %6720 = vmatprep.subr.bf16.mxu0 %v5217
        %6721 = vmatpush1.bf16.msra.mxu0 %v5216
        %6722 = vmatprep.mubr.bf16.mxu0 %v2664
        %6723 = vmatmul.mubr.bf16.gmra.mrb[0].mxu0 %v2662
        %v6724 = vpop.f32.mrb[0].mxu0
        %v6725 = vadd.f32 %v6684, %v6724
        %v6726 = vpop.f32.mrb[0].mxu0
        %v6727 = vadd.f32 %v6686, %v6726
        %v6728 = vpop.f32.mrb[0].mxu0
        %v6729 = vpop.f32.mrb[0].mxu0
        %6730 = vdwg.mxu0
        %6731 = vmatprep.subr.bf16.mxu0 %v5221
        %6732 = vmatpush1.bf16.msra.mxu0 %v5220
        %6733 = vmatprep.subr.bf16.mxu0 %v5225
        %6734 = vmatpush1.bf16.msra.mxu0 %v5224
        %6735 = vmatprep.subr.bf16.mxu0 %v5229
        %6736 = vmatpush1.bf16.msra.mxu0 %v5228
        %6737 = vmatprep.subr.bf16.mxu0 %v5233
        %6738 = vmatpush1.bf16.msra.mxu0 %v5232
        %6739 = vmatprep.subr.bf16.mxu0 %v5237
        %6740 = vmatpush1.bf16.msra.mxu0 %v5236
        %6741 = vmatprep.subr.bf16.mxu0 %v5241
        %6742 = vmatpush1.bf16.msra.mxu0 %v5240
        %6743 = vmatprep.subr.bf16.mxu0 %v5245
        %6744 = vmatpush1.bf16.msra.mxu0 %v5244
        %6745 = vmatprep.subr.bf16.mxu0 %v5249
        %6746 = vmatpush1.bf16.msra.mxu0 %v5248
        %6747 = vmatprep.subr.bf16.mxu0 %v5253
        %6748 = vmatpush1.bf16.msra.mxu0 %v5252
        %6749 = vmatprep.subr.bf16.mxu0 %v5257
        %6750 = vmatpush1.bf16.msra.mxu0 %v5256
        %6751 = vmatprep.subr.bf16.mxu0 %v5261
        %6752 = vmatpush1.bf16.msra.mxu0 %v5260
        %6753 = vmatprep.subr.bf16.mxu0 %v5265
        %6754 = vmatpush1.bf16.msra.mxu0 %v5264
        %6755 = vmatprep.subr.bf16.mxu0 %v5269
        %6756 = vmatpush1.bf16.msra.mxu0 %v5268
        %6757 = vmatprep.subr.bf16.mxu0 %v5273
        %6758 = vmatpush1.bf16.msra.mxu0 %v5272
        %6759 = vmatprep.subr.bf16.mxu0 %v5277
        %6760 = vmatpush1.bf16.msra.mxu0 %v5276
        %6761 = vmatprep.subr.bf16.mxu0 %v5281
        %6762 = vmatpush1.bf16.msra.mxu0 %v5280
        %6763 = vmatprep.mubr.bf16.mxu0 %v2661
        %6764 = vmatmul.mubr.bf16.gmra.mrb[0].mxu0 %v2647
        %v6765 = vpop.f32.mrb[0].mxu0
        %v6766 = vadd.f32 %v6725, %v6765
        %v6767 = vpop.f32.mrb[0].mxu0
        %v6768 = vadd.f32 %v6727, %v6767
        %v6769 = vpop.f32.mrb[0].mxu0
        %v6770 = vpop.f32.mrb[0].mxu0
        %6771 = vdwg.mxu0
        %6772 = vmatprep.subr.bf16.mxu0 %v5285
        %6773 = vmatpush1.bf16.msra.mxu0 %v5284
        %6774 = vmatprep.subr.bf16.mxu0 %v5289
        %6775 = vmatpush1.bf16.msra.mxu0 %v5288
        %6776 = vmatprep.subr.bf16.mxu0 %v5293
        %6777 = vmatpush1.bf16.msra.mxu0 %v5292
        %6778 = vmatprep.subr.bf16.mxu0 %v5297
        %6779 = vmatpush1.bf16.msra.mxu0 %v5296
        %6780 = vmatprep.subr.bf16.mxu0 %v5301
        %6781 = vmatpush1.bf16.msra.mxu0 %v5300
        %6782 = vmatprep.subr.bf16.mxu0 %v5305
        %6783 = vmatpush1.bf16.msra.mxu0 %v5304
        %6784 = vmatprep.subr.bf16.mxu0 %v5309
        %6785 = vmatpush1.bf16.msra.mxu0 %v5308
        %6786 = vmatprep.subr.bf16.mxu0 %v5313
        %6787 = vmatpush1.bf16.msra.mxu0 %v5312
        %6788 = vmatprep.subr.bf16.mxu0 %v5317
        %6789 = vmatpush1.bf16.msra.mxu0 %v5316
        %6790 = vmatprep.subr.bf16.mxu0 %v5321
        %6791 = vmatpush1.bf16.msra.mxu0 %v5320
        %6792 = vmatprep.subr.bf16.mxu0 %v5325
        %6793 = vmatpush1.bf16.msra.mxu0 %v5324
        %6794 = vmatprep.subr.bf16.mxu0 %v5329
        %6795 = vmatpush1.bf16.msra.mxu0 %v5328
        %6796 = vmatprep.subr.bf16.mxu0 %v5333
        %6797 = vmatpush1.bf16.msra.mxu0 %v5332
        %6798 = vmatprep.subr.bf16.mxu0 %v5337
        %6799 = vmatpush1.bf16.msra.mxu0 %v5336
        %6800 = vmatprep.subr.bf16.mxu0 %v5341
        %6801 = vmatpush1.bf16.msra.mxu0 %v5340
        %6802 = vmatprep.subr.bf16.mxu0 %v5345
        %6803 = vmatpush1.bf16.msra.mxu0 %v5344
        %6804 = vmatprep.mubr.bf16.mxu0 %v2665
        %6805 = vmatmul.mubr.bf16.gmra.mrb[0].mxu0 %v2663
        %v6806 = vpop.f32.mrb[0].mxu0
        %v6807 = vadd.f32 %v6766, %v6806
        %v6808 = vpop.f32.mrb[0].mxu0
        %v6809 = vadd.f32 %v6768, %v6808
        %v6810 = vpop.f32.mrb[0].mxu0
        %v6811 = vpop.f32.mrb[0].mxu0
        %6812 = vdwg.mxu0
        %6813 = vmatprep.subr.bf16.mxu0 %v5349
        %6814 = vmatpush1.bf16.msra.mxu0 %v5348
        %6815 = vmatprep.subr.bf16.mxu0 %v5353
        %6816 = vmatpush1.bf16.msra.mxu0 %v5352
        %6817 = vmatprep.subr.bf16.mxu0 %v5357
        %6818 = vmatpush1.bf16.msra.mxu0 %v5356
        %6819 = vmatprep.subr.bf16.mxu0 %v5361
        %6820 = vmatpush1.bf16.msra.mxu0 %v5360
        %6821 = vmatprep.subr.bf16.mxu0 %v5365
        %6822 = vmatpush1.bf16.msra.mxu0 %v5364
        %6823 = vmatprep.subr.bf16.mxu0 %v5369
        %6824 = vmatpush1.bf16.msra.mxu0 %v5368
        %6825 = vmatprep.subr.bf16.mxu0 %v5373
        %6826 = vmatpush1.bf16.msra.mxu0 %v5372
        %6827 = vmatprep.subr.bf16.mxu0 %v5377
        %6828 = vmatpush1.bf16.msra.mxu0 %v5376
        %6829 = vmatprep.subr.bf16.mxu0 %v5381
        %6830 = vmatpush1.bf16.msra.mxu0 %v5380
        %6831 = vmatprep.subr.bf16.mxu0 %v5385
        %6832 = vmatpush1.bf16.msra.mxu0 %v5384
        %6833 = vmatprep.subr.bf16.mxu0 %v5389
        %6834 = vmatpush1.bf16.msra.mxu0 %v5388
        %6835 = vmatprep.subr.bf16.mxu0 %v5393
        %6836 = vmatpush1.bf16.msra.mxu0 %v5392
        %6837 = vmatprep.subr.bf16.mxu0 %v5397
        %6838 = vmatpush1.bf16.msra.mxu0 %v5396
        %6839 = vmatprep.subr.bf16.mxu0 %v5401
        %6840 = vmatpush1.bf16.msra.mxu0 %v5400
        %6841 = vmatprep.subr.bf16.mxu0 %v5405
        %6842 = vmatpush1.bf16.msra.mxu0 %v5404
        %6843 = vmatprep.subr.bf16.mxu0 %v5409
        %6844 = vmatpush1.bf16.msra.mxu0 %v5408
        %6845 = vmatprep.mubr.bf16.mxu0 %v2703
        %6846 = vmatmul.mubr.bf16.gmra.mrb[0].mxu0 %v2689
        %v6847 = vpop.f32.mrb[0].mxu0
        %v6848 = vadd.f32 %v6807, %v6847
        %v6849 = vpop.f32.mrb[0].mxu0
        %v6850 = vadd.f32 %v6809, %v6849
        %v6851 = vpop.f32.mrb[0].mxu0
        %v6852 = vpop.f32.mrb[0].mxu0
        %6853 = vdwg.mxu0
        %6854 = vmatprep.subr.bf16.mxu0 %v5413
        %6855 = vmatpush1.bf16.msra.mxu0 %v5412
        %6856 = vmatprep.subr.bf16.mxu0 %v5417
        %6857 = vmatpush1.bf16.msra.mxu0 %v5416
        %6858 = vmatprep.subr.bf16.mxu0 %v5421
        %6859 = vmatpush1.bf16.msra.mxu0 %v5420
        %6860 = vmatprep.subr.bf16.mxu0 %v5425
        %6861 = vmatpush1.bf16.msra.mxu0 %v5424
        %6862 = vmatprep.subr.bf16.mxu0 %v5429
        %6863 = vmatpush1.bf16.msra.mxu0 %v5428
        %6864 = vmatprep.subr.bf16.mxu0 %v5433
        %6865 = vmatpush1.bf16.msra.mxu0 %v5432
        %6866 = vmatprep.subr.bf16.mxu0 %v5437
        %6867 = vmatpush1.bf16.msra.mxu0 %v5436
        %6868 = vmatprep.subr.bf16.mxu0 %v5441
        %6869 = vmatpush1.bf16.msra.mxu0 %v5440
        %6870 = vmatprep.subr.bf16.mxu0 %v5445
        %6871 = vmatpush1.bf16.msra.mxu0 %v5444
        %6872 = vmatprep.subr.bf16.mxu0 %v5449
        %6873 = vmatpush1.bf16.msra.mxu0 %v5448
        %6874 = vmatprep.subr.bf16.mxu0 %v5453
        %6875 = vmatpush1.bf16.msra.mxu0 %v5452
        %6876 = vmatprep.subr.bf16.mxu0 %v5457
        %6877 = vmatpush1.bf16.msra.mxu0 %v5456
        %6878 = vmatprep.subr.bf16.mxu0 %v5461
        %6879 = vmatpush1.bf16.msra.mxu0 %v5460
        %6880 = vmatprep.subr.bf16.mxu0 %v5465
        %6881 = vmatpush1.bf16.msra.mxu0 %v5464
        %6882 = vmatprep.subr.bf16.mxu0 %v5469
        %6883 = vmatpush1.bf16.msra.mxu0 %v5468
        %6884 = vmatprep.subr.bf16.mxu0 %v5473
        %6885 = vmatpush1.bf16.msra.mxu0 %v5472
        %6886 = vmatprep.mubr.bf16.mxu0 %v2713
        %6887 = vmatmul.mubr.bf16.gmra.mrb[0].mxu0 %v2711
        %v6888 = vpop.f32.mrb[0].mxu0
        %v6889 = vadd.f32 %v6848, %v6888
        %v6890 = vpop.f32.mrb[0].mxu0
        %v6891 = vadd.f32 %v6850, %v6890
        %v6892 = vpop.f32.mrb[0].mxu0
        %v6893 = vpop.f32.mrb[0].mxu0
        %6894 = vdwg.mxu0
        %6895 = vmatprep.subr.bf16.mxu0 %v5477
        %6896 = vmatpush1.bf16.msra.mxu0 %v5476
        %6897 = vmatprep.subr.bf16.mxu0 %v5481
        %6898 = vmatpush1.bf16.msra.mxu0 %v5480
        %6899 = vmatprep.subr.bf16.mxu0 %v5485
        %6900 = vmatpush1.bf16.msra.mxu0 %v5484
        %6901 = vmatprep.subr.bf16.mxu0 %v5489
        %6902 = vmatpush1.bf16.msra.mxu0 %v5488
        %6903 = vmatprep.subr.bf16.mxu0 %v5493
        %6904 = vmatpush1.bf16.msra.mxu0 %v5492
        %6905 = vmatprep.subr.bf16.mxu0 %v5497
        %6906 = vmatpush1.bf16.msra.mxu0 %v5496
        %6907 = vmatprep.subr.bf16.mxu0 %v5501
        %6908 = vmatpush1.bf16.msra.mxu0 %v5500
        %6909 = vmatprep.subr.bf16.mxu0 %v5505
        %6910 = vmatpush1.bf16.msra.mxu0 %v5504
        %6911 = vmatprep.subr.bf16.mxu0 %v5509
        %6912 = vmatpush1.bf16.msra.mxu0 %v5508
        %6913 = vmatprep.subr.bf16.mxu0 %v5513
        %6914 = vmatpush1.bf16.msra.mxu0 %v5512
        %6915 = vmatprep.subr.bf16.mxu0 %v5517
        %6916 = vmatpush1.bf16.msra.mxu0 %v5516
        %6917 = vmatprep.subr.bf16.mxu0 %v5521
        %6918 = vmatpush1.bf16.msra.mxu0 %v5520
        %6919 = vmatprep.subr.bf16.mxu0 %v5525
        %6920 = vmatpush1.bf16.msra.mxu0 %v5524
        %6921 = vmatprep.subr.bf16.mxu0 %v5529
        %6922 = vmatpush1.bf16.msra.mxu0 %v5528
        %6923 = vmatprep.subr.bf16.mxu0 %v5533
        %6924 = vmatpush1.bf16.msra.mxu0 %v5532
        %6925 = vmatprep.subr.bf16.mxu0 %v5537
        %6926 = vmatpush1.bf16.msra.mxu0 %v5536
        %6927 = vmatprep.mubr.bf16.mxu0 %v2710
        %6928 = vmatmul.mubr.bf16.gmra.mrb[0].mxu0 %v2696
        %v6929 = vpop.f32.mrb[0].mxu0
        %v6930 = vadd.f32 %v6889, %v6929
        %v6931 = vpop.f32.mrb[0].mxu0
        %v6932 = vadd.f32 %v6891, %v6931
        %v6933 = vpop.f32.mrb[0].mxu0
        %v6934 = vpop.f32.mrb[0].mxu0
        %6935 = vdwg.mxu0
        %6936 = vmatprep.subr.bf16.mxu0 %v5541
        %6937 = vmatpush1.bf16.msra.mxu0 %v5540
        %6938 = vmatprep.subr.bf16.mxu0 %v5545
        %6939 = vmatpush1.bf16.msra.mxu0 %v5544
        %6940 = vmatprep.subr.bf16.mxu0 %v5549
        %6941 = vmatpush1.bf16.msra.mxu0 %v5548
        %6942 = vmatprep.subr.bf16.mxu0 %v5553
        %6943 = vmatpush1.bf16.msra.mxu0 %v5552
        %6944 = vmatprep.subr.bf16.mxu0 %v5557
        %6945 = vmatpush1.bf16.msra.mxu0 %v5556
        %6946 = vmatprep.subr.bf16.mxu0 %v5561
        %6947 = vmatpush1.bf16.msra.mxu0 %v5560
        %6948 = vmatprep.subr.bf16.mxu0 %v5565
        %6949 = vmatpush1.bf16.msra.mxu0 %v5564
        %6950 = vmatprep.subr.bf16.mxu0 %v5569
        %6951 = vmatpush1.bf16.msra.mxu0 %v5568
        %6952 = vmatprep.subr.bf16.mxu0 %v5573
        %6953 = vmatpush1.bf16.msra.mxu0 %v5572
        %6954 = vmatprep.subr.bf16.mxu0 %v5577
        %6955 = vmatpush1.bf16.msra.mxu0 %v5576
        %6956 = vmatprep.subr.bf16.mxu0 %v5581
        %6957 = vmatpush1.bf16.msra.mxu0 %v5580
        %6958 = vmatprep.subr.bf16.mxu0 %v5585
        %6959 = vmatpush1.bf16.msra.mxu0 %v5584
        %6960 = vmatprep.subr.bf16.mxu0 %v5589
        %6961 = vmatpush1.bf16.msra.mxu0 %v5588
        %6962 = vmatprep.subr.bf16.mxu0 %v5593
        %6963 = vmatpush1.bf16.msra.mxu0 %v5592
        %6964 = vmatprep.subr.bf16.mxu0 %v5597
        %6965 = vmatpush1.bf16.msra.mxu0 %v5596
        %6966 = vmatprep.subr.bf16.mxu0 %v5601
        %6967 = vmatpush1.bf16.msra.mxu0 %v5600
        %6968 = vmatprep.mubr.bf16.mxu0 %v2714
        %6969 = vmatmul.mubr.bf16.gmra.mrb[0].mxu0 %v2712
        %v6970 = vpop.f32.mrb[0].mxu0
        %v6971 = vadd.f32 %v6930, %v6970
        %v6972 = vpop.f32.mrb[0].mxu0
        %v6973 = vadd.f32 %v6932, %v6972
        %v6974 = vpop.f32.mrb[0].mxu0
        %v6975 = vpop.f32.mrb[0].mxu0
        %6976 = vdwg.mxu0
        %6977 = vmatprep.subr.bf16.mxu0 %v5605
        %6978 = vmatpush1.bf16.msra.mxu0 %v5604
        %6979 = vmatprep.subr.bf16.mxu0 %v5609
        %6980 = vmatpush1.bf16.msra.mxu0 %v5608
        %6981 = vmatprep.subr.bf16.mxu0 %v5613
        %6982 = vmatpush1.bf16.msra.mxu0 %v5612
        %6983 = vmatprep.subr.bf16.mxu0 %v5617
        %6984 = vmatpush1.bf16.msra.mxu0 %v5616
        %6985 = vmatprep.subr.bf16.mxu0 %v5621
        %6986 = vmatpush1.bf16.msra.mxu0 %v5620
        %6987 = vmatprep.subr.bf16.mxu0 %v5625
        %6988 = vmatpush1.bf16.msra.mxu0 %v5624
        %6989 = vmatprep.subr.bf16.mxu0 %v5629
        %6990 = vmatpush1.bf16.msra.mxu0 %v5628
        %6991 = vmatprep.subr.bf16.mxu0 %v5633
        %6992 = vmatpush1.bf16.msra.mxu0 %v5632
        %6993 = vmatprep.subr.bf16.mxu0 %v5637
        %6994 = vmatpush1.bf16.msra.mxu0 %v5636
        %6995 = vmatprep.subr.bf16.mxu0 %v5641
        %6996 = vmatpush1.bf16.msra.mxu0 %v5640
        %6997 = vmatprep.subr.bf16.mxu0 %v5645
        %6998 = vmatpush1.bf16.msra.mxu0 %v5644
        %6999 = vmatprep.subr.bf16.mxu0 %v5649
        %7000 = vmatpush1.bf16.msra.mxu0 %v5648
        %7001 = vmatprep.subr.bf16.mxu0 %v5653
        %7002 = vmatpush1.bf16.msra.mxu0 %v5652
        %7003 = vmatprep.subr.bf16.mxu0 %v5657
        %7004 = vmatpush1.bf16.msra.mxu0 %v5656
        %7005 = vmatprep.subr.bf16.mxu0 %v5661
        %7006 = vmatpush1.bf16.msra.mxu0 %v5660
        %7007 = vmatprep.subr.bf16.mxu0 %v5665
        %7008 = vmatpush1.bf16.msra.mxu0 %v5664
        %7009 = vmatprep.mubr.bf16.mxu0 %v2752
        %7010 = vmatmul.mubr.bf16.gmra.mrb[0].mxu0 %v2738
        %v7011 = vpop.f32.mrb[0].mxu0
        %v7012 = vadd.f32 %v6971, %v7011
        %v7013 = vpop.f32.mrb[0].mxu0
        %v7014 = vadd.f32 %v6973, %v7013
        %v7015 = vpop.f32.mrb[0].mxu0
        %v7016 = vpop.f32.mrb[0].mxu0
        %7017 = vdwg.mxu0
        %7018 = vmatprep.subr.bf16.mxu0 %v5669
        %7019 = vmatpush1.bf16.msra.mxu0 %v5668
        %7020 = vmatprep.subr.bf16.mxu0 %v5673
        %7021 = vmatpush1.bf16.msra.mxu0 %v5672
        %7022 = vmatprep.subr.bf16.mxu0 %v5677
        %7023 = vmatpush1.bf16.msra.mxu0 %v5676
        %7024 = vmatprep.subr.bf16.mxu0 %v5681
        %7025 = vmatpush1.bf16.msra.mxu0 %v5680
        %7026 = vmatprep.subr.bf16.mxu0 %v5685
        %7027 = vmatpush1.bf16.msra.mxu0 %v5684
        %7028 = vmatprep.subr.bf16.mxu0 %v5689
        %7029 = vmatpush1.bf16.msra.mxu0 %v5688
        %7030 = vmatprep.subr.bf16.mxu0 %v5693
        %7031 = vmatpush1.bf16.msra.mxu0 %v5692
        %7032 = vmatprep.subr.bf16.mxu0 %v5697
        %7033 = vmatpush1.bf16.msra.mxu0 %v5696
        %7034 = vmatprep.subr.bf16.mxu0 %v5701
        %7035 = vmatpush1.bf16.msra.mxu0 %v5700
        %7036 = vmatprep.subr.bf16.mxu0 %v5705
        %7037 = vmatpush1.bf16.msra.mxu0 %v5704
        %7038 = vmatprep.subr.bf16.mxu0 %v5709
        %7039 = vmatpush1.bf16.msra.mxu0 %v5708
        %7040 = vmatprep.subr.bf16.mxu0 %v5713
        %7041 = vmatpush1.bf16.msra.mxu0 %v5712
        %7042 = vmatprep.subr.bf16.mxu0 %v5717
        %7043 = vmatpush1.bf16.msra.mxu0 %v5716
        %7044 = vmatprep.subr.bf16.mxu0 %v5721
        %7045 = vmatpush1.bf16.msra.mxu0 %v5720
        %7046 = vmatprep.subr.bf16.mxu0 %v5725
        %7047 = vmatpush1.bf16.msra.mxu0 %v5724
        %7048 = vmatprep.subr.bf16.mxu0 %v5729
        %7049 = vmatpush1.bf16.msra.mxu0 %v5728
        %7050 = vmatprep.mubr.bf16.mxu0 %v2762
        %7051 = vmatmul.mubr.bf16.gmra.mrb[0].mxu0 %v2760
        %v7052 = vpop.f32.mrb[0].mxu0
        %v7053 = vadd.f32 %v7012, %v7052
        %v7054 = vpop.f32.mrb[0].mxu0
        %v7055 = vadd.f32 %v7014, %v7054
        %v7056 = vpop.f32.mrb[0].mxu0
        %v7057 = vpop.f32.mrb[0].mxu0
        %7058 = vdwg.mxu0
        %7059 = vmatprep.subr.bf16.mxu0 %v5733
        %7060 = vmatpush1.bf16.msra.mxu0 %v5732
        %7061 = vmatprep.subr.bf16.mxu0 %v5737
        %7062 = vmatpush1.bf16.msra.mxu0 %v5736
        %7063 = vmatprep.subr.bf16.mxu0 %v5741
        %7064 = vmatpush1.bf16.msra.mxu0 %v5740
        %7065 = vmatprep.subr.bf16.mxu0 %v5745
        %7066 = vmatpush1.bf16.msra.mxu0 %v5744
        %7067 = vmatprep.subr.bf16.mxu0 %v5749
        %7068 = vmatpush1.bf16.msra.mxu0 %v5748
        %7069 = vmatprep.subr.bf16.mxu0 %v5753
        %7070 = vmatpush1.bf16.msra.mxu0 %v5752
        %7071 = vmatprep.subr.bf16.mxu0 %v5757
        %7072 = vmatpush1.bf16.msra.mxu0 %v5756
        %7073 = vmatprep.subr.bf16.mxu0 %v5761
        %7074 = vmatpush1.bf16.msra.mxu0 %v5760
        %7075 = vmatprep.subr.bf16.mxu0 %v5765
        %7076 = vmatpush1.bf16.msra.mxu0 %v5764
        %7077 = vmatprep.subr.bf16.mxu0 %v5769
        %7078 = vmatpush1.bf16.msra.mxu0 %v5768
        %7079 = vmatprep.subr.bf16.mxu0 %v5773
        %7080 = vmatpush1.bf16.msra.mxu0 %v5772
        %7081 = vmatprep.subr.bf16.mxu0 %v5777
        %7082 = vmatpush1.bf16.msra.mxu0 %v5776
        %7083 = vmatprep.subr.bf16.mxu0 %v5781
        %7084 = vmatpush1.bf16.msra.mxu0 %v5780
        %7085 = vmatprep.subr.bf16.mxu0 %v5785
        %7086 = vmatpush1.bf16.msra.mxu0 %v5784
        %7087 = vmatprep.subr.bf16.mxu0 %v5789
        %7088 = vmatpush1.bf16.msra.mxu0 %v5788
        %7089 = vmatprep.subr.bf16.mxu0 %v5793
        %7090 = vmatpush1.bf16.msra.mxu0 %v5792
        %7091 = vmatprep.mubr.bf16.mxu0 %v2759
        %7092 = vmatmul.mubr.bf16.gmra.mrb[0].mxu0 %v2745
        %v7093 = vpop.f32.mrb[0].mxu0
        %v7094 = vadd.f32 %v7053, %v7093
        %v7095 = vpop.f32.mrb[0].mxu0
        %v7096 = vadd.f32 %v7055, %v7095
        %v7097 = vpop.f32.mrb[0].mxu0
        %v7098 = vpop.f32.mrb[0].mxu0
        %7099 = vdwg.mxu0
        %7100 = vmatprep.subr.bf16.mxu0 %v5797
        %7101 = vmatpush1.bf16.msra.mxu0 %v5796
        %7102 = vmatprep.subr.bf16.mxu0 %v5801
        %7103 = vmatpush1.bf16.msra.mxu0 %v5800
        %7104 = vmatprep.subr.bf16.mxu0 %v5805
        %7105 = vmatpush1.bf16.msra.mxu0 %v5804
        %7106 = vmatprep.subr.bf16.mxu0 %v5809
        %7107 = vmatpush1.bf16.msra.mxu0 %v5808
        %7108 = vmatprep.subr.bf16.mxu0 %v5813
        %7109 = vmatpush1.bf16.msra.mxu0 %v5812
        %7110 = vmatprep.subr.bf16.mxu0 %v5817
        %7111 = vmatpush1.bf16.msra.mxu0 %v5816
        %7112 = vmatprep.subr.bf16.mxu0 %v5821
        %7113 = vmatpush1.bf16.msra.mxu0 %v5820
        %7114 = vmatprep.subr.bf16.mxu0 %v5825
        %7115 = vmatpush1.bf16.msra.mxu0 %v5824
        %7116 = vmatprep.subr.bf16.mxu0 %v5829
        %7117 = vmatpush1.bf16.msra.mxu0 %v5828
        %7118 = vmatprep.subr.bf16.mxu0 %v5833
        %7119 = vmatpush1.bf16.msra.mxu0 %v5832
        %7120 = vmatprep.subr.bf16.mxu0 %v5837
        %7121 = vmatpush1.bf16.msra.mxu0 %v5836
        %7122 = vmatprep.subr.bf16.mxu0 %v5841
        %7123 = vmatpush1.bf16.msra.mxu0 %v5840
        %7124 = vmatprep.subr.bf16.mxu0 %v5845
        %7125 = vmatpush1.bf16.msra.mxu0 %v5844
        %7126 = vmatprep.subr.bf16.mxu0 %v5849
        %7127 = vmatpush1.bf16.msra.mxu0 %v5848
        %7128 = vmatprep.subr.bf16.mxu0 %v5853
        %7129 = vmatpush1.bf16.msra.mxu0 %v5852
        %7130 = vmatprep.subr.bf16.mxu0 %v5857
        %7131 = vmatpush1.bf16.msra.mxu0 %v5856
        %7132 = vmatprep.mubr.bf16.mxu0 %v2763
        %7133 = vmatmul.mubr.bf16.gmra.mrb[0].mxu0 %v2761
        %v7134 = vpop.f32.mrb[0].mxu0
        %v7135 = vadd.f32 %v7094, %v7134
        %v7136 = vpop.f32.mrb[0].mxu0
        %v7137 = vadd.f32 %v7096, %v7136
        %v7138 = vpop.f32.mrb[0].mxu0
        %v7139 = vpop.f32.mrb[0].mxu0
        %7140 = vdwg.mxu0
        %7141 = vmatprep.subr.bf16.mxu0 %v5095
        %7142 = vmatpush1.bf16.msra.mxu0 %v5094
        %7143 = vmatprep.subr.bf16.mxu0 %v5099
        %7144 = vmatpush1.bf16.msra.mxu0 %v5098
        %7145 = vmatprep.subr.bf16.mxu0 %v5103
        %7146 = vmatpush1.bf16.msra.mxu0 %v5102
        %7147 = vmatprep.subr.bf16.mxu0 %v5107
        %7148 = vmatpush1.bf16.msra.mxu0 %v5106
        %7149 = vmatprep.subr.bf16.mxu0 %v5111
        %7150 = vmatpush1.bf16.msra.mxu0 %v5110
        %7151 = vmatprep.subr.bf16.mxu0 %v5115
        %7152 = vmatpush1.bf16.msra.mxu0 %v5114
        %7153 = vmatprep.subr.bf16.mxu0 %v5119
        %7154 = vmatpush1.bf16.msra.mxu0 %v5118
        %7155 = vmatprep.subr.bf16.mxu0 %v5123
        %7156 = vmatpush1.bf16.msra.mxu0 %v5122
        %7157 = vmatprep.subr.bf16.mxu0 %v5127
        %7158 = vmatpush1.bf16.msra.mxu0 %v5126
        %7159 = vmatprep.subr.bf16.mxu0 %v5131
        %7160 = vmatpush1.bf16.msra.mxu0 %v5130
        %7161 = vmatprep.subr.bf16.mxu0 %v5135
        %7162 = vmatpush1.bf16.msra.mxu0 %v5134
        %7163 = vmatprep.subr.bf16.mxu0 %v5139
        %7164 = vmatpush1.bf16.msra.mxu0 %v5138
        %7165 = vmatprep.subr.bf16.mxu0 %v5143
        %7166 = vmatpush1.bf16.msra.mxu0 %v5142
        %7167 = vmatprep.subr.bf16.mxu0 %v5147
        %7168 = vmatpush1.bf16.msra.mxu0 %v5146
        %7169 = vmatprep.subr.bf16.mxu0 %v5151
        %7170 = vmatpush1.bf16.msra.mxu0 %v5150
        %7171 = vmatprep.subr.bf16.mxu0 %v5155
        %7172 = vmatpush1.bf16.msra.mxu0 %v5154
        %7173 = vmatprep.mubr.bf16.mxu0 %v2654
        %7174 = vmatmul.mubr.bf16.gmra.mrb[0].mxu0 %v2640
        %v7175 = vpop.f32.mrb[0].mxu0
        %v7176 = vadd.f32 %v6640, %v7175
        %v7177 = vpop.f32.mrb[0].mxu0
        %v7178 = vadd.f32 %v6644, %v7177
        %v7179 = vpop.f32.mrb[0].mxu0
        %v7180 = vpop.f32.mrb[0].mxu0
        %7181 = vdwg.mxu0
        %7182 = vmatprep.subr.bf16.mxu0 %v5159
        %7183 = vmatpush1.bf16.msra.mxu0 %v5158
        %7184 = vmatprep.subr.bf16.mxu0 %v5163
        %7185 = vmatpush1.bf16.msra.mxu0 %v5162
        %7186 = vmatprep.subr.bf16.mxu0 %v5167
        %7187 = vmatpush1.bf16.msra.mxu0 %v5166
        %7188 = vmatprep.subr.bf16.mxu0 %v5171
        %7189 = vmatpush1.bf16.msra.mxu0 %v5170
        %7190 = vmatprep.subr.bf16.mxu0 %v5175
        %7191 = vmatpush1.bf16.msra.mxu0 %v5174
        %7192 = vmatprep.subr.bf16.mxu0 %v5179
        %7193 = vmatpush1.bf16.msra.mxu0 %v5178
        %7194 = vmatprep.subr.bf16.mxu0 %v5183
        %7195 = vmatpush1.bf16.msra.mxu0 %v5182
        %7196 = vmatprep.subr.bf16.mxu0 %v5187
        %7197 = vmatpush1.bf16.msra.mxu0 %v5186
        %7198 = vmatprep.subr.bf16.mxu0 %v5191
        %7199 = vmatpush1.bf16.msra.mxu0 %v5190
        %7200 = vmatprep.subr.bf16.mxu0 %v5195
        %7201 = vmatpush1.bf16.msra.mxu0 %v5194
        %7202 = vmatprep.subr.bf16.mxu0 %v5199
        %7203 = vmatpush1.bf16.msra.mxu0 %v5198
        %7204 = vmatprep.subr.bf16.mxu0 %v5203
        %7205 = vmatpush1.bf16.msra.mxu0 %v5202
        %7206 = vmatprep.subr.bf16.mxu0 %v5207
        %7207 = vmatpush1.bf16.msra.mxu0 %v5206
        %7208 = vmatprep.subr.bf16.mxu0 %v5211
        %7209 = vmatpush1.bf16.msra.mxu0 %v5210
        %7210 = vmatprep.subr.bf16.mxu0 %v5215
        %7211 = vmatpush1.bf16.msra.mxu0 %v5214
        %7212 = vmatprep.subr.bf16.mxu0 %v5219
        %7213 = vmatpush1.bf16.msra.mxu0 %v5218
        %7214 = vmatprep.mubr.bf16.mxu0 %v2664
        %7215 = vmatmul.mubr.bf16.gmra.mrb[0].mxu0 %v2662
        %v7216 = vpop.f32.mrb[0].mxu0
        %v7217 = vadd.f32 %v7176, %v7216
        %v7218 = vpop.f32.mrb[0].mxu0
        %v7219 = vadd.f32 %v7178, %v7218
        %v7220 = vpop.f32.mrb[0].mxu0
        %v7221 = vpop.f32.mrb[0].mxu0
        %7222 = vdwg.mxu0
        %7223 = vmatprep.subr.bf16.mxu0 %v5223
        %7224 = vmatpush1.bf16.msra.mxu0 %v5222
        %7225 = vmatprep.subr.bf16.mxu0 %v5227
        %7226 = vmatpush1.bf16.msra.mxu0 %v5226
        %7227 = vmatprep.subr.bf16.mxu0 %v5231
        %7228 = vmatpush1.bf16.msra.mxu0 %v5230
        %7229 = vmatprep.subr.bf16.mxu0 %v5235
        %7230 = vmatpush1.bf16.msra.mxu0 %v5234
        %7231 = vmatprep.subr.bf16.mxu0 %v5239
        %7232 = vmatpush1.bf16.msra.mxu0 %v5238
        %7233 = vmatprep.subr.bf16.mxu0 %v5243
        %7234 = vmatpush1.bf16.msra.mxu0 %v5242
        %7235 = vmatprep.subr.bf16.mxu0 %v5247
        %7236 = vmatpush1.bf16.msra.mxu0 %v5246
        %7237 = vmatprep.subr.bf16.mxu0 %v5251
        %7238 = vmatpush1.bf16.msra.mxu0 %v5250
        %7239 = vmatprep.subr.bf16.mxu0 %v5255
        %7240 = vmatpush1.bf16.msra.mxu0 %v5254
        %7241 = vmatprep.subr.bf16.mxu0 %v5259
        %7242 = vmatpush1.bf16.msra.mxu0 %v5258
        %7243 = vmatprep.subr.bf16.mxu0 %v5263
        %7244 = vmatpush1.bf16.msra.mxu0 %v5262
        %7245 = vmatprep.subr.bf16.mxu0 %v5267
        %7246 = vmatpush1.bf16.msra.mxu0 %v5266
        %7247 = vmatprep.subr.bf16.mxu0 %v5271
        %7248 = vmatpush1.bf16.msra.mxu0 %v5270
        %7249 = vmatprep.subr.bf16.mxu0 %v5275
        %7250 = vmatpush1.bf16.msra.mxu0 %v5274
        %7251 = vmatprep.subr.bf16.mxu0 %v5279
        %7252 = vmatpush1.bf16.msra.mxu0 %v5278
        %7253 = vmatprep.subr.bf16.mxu0 %v5283
        %7254 = vmatpush1.bf16.msra.mxu0 %v5282
        %7255 = vmatprep.mubr.bf16.mxu0 %v2661
        %7256 = vmatmul.mubr.bf16.gmra.mrb[0].mxu0 %v2647
        %v7257 = vpop.f32.mrb[0].mxu0
        %v7258 = vadd.f32 %v7217, %v7257
        %v7259 = vpop.f32.mrb[0].mxu0
        %v7260 = vadd.f32 %v7219, %v7259
        %v7261 = vpop.f32.mrb[0].mxu0
        %v7262 = vpop.f32.mrb[0].mxu0
        %7263 = vdwg.mxu0
        %7264 = vmatprep.subr.bf16.mxu0 %v5287
        %7265 = vmatpush1.bf16.msra.mxu0 %v5286
        %7266 = vmatprep.subr.bf16.mxu0 %v5291
        %7267 = vmatpush1.bf16.msra.mxu0 %v5290
        %7268 = vmatprep.subr.bf16.mxu0 %v5295
        %7269 = vmatpush1.bf16.msra.mxu0 %v5294
        %7270 = vmatprep.subr.bf16.mxu0 %v5299
        %7271 = vmatpush1.bf16.msra.mxu0 %v5298
        %7272 = vmatprep.subr.bf16.mxu0 %v5303
        %7273 = vmatpush1.bf16.msra.mxu0 %v5302
        %7274 = vmatprep.subr.bf16.mxu0 %v5307
        %7275 = vmatpush1.bf16.msra.mxu0 %v5306
        %7276 = vmatprep.subr.bf16.mxu0 %v5311
        %7277 = vmatpush1.bf16.msra.mxu0 %v5310
        %7278 = vmatprep.subr.bf16.mxu0 %v5315
        %7279 = vmatpush1.bf16.msra.mxu0 %v5314
        %7280 = vmatprep.subr.bf16.mxu0 %v5319
        %7281 = vmatpush1.bf16.msra.mxu0 %v5318
        %7282 = vmatprep.subr.bf16.mxu0 %v5323
        %7283 = vmatpush1.bf16.msra.mxu0 %v5322
        %7284 = vmatprep.subr.bf16.mxu0 %v5327
        %7285 = vmatpush1.bf16.msra.mxu0 %v5326
        %7286 = vmatprep.subr.bf16.mxu0 %v5331
        %7287 = vmatpush1.bf16.msra.mxu0 %v5330
        %7288 = vmatprep.subr.bf16.mxu0 %v5335
        %7289 = vmatpush1.bf16.msra.mxu0 %v5334
        %7290 = vmatprep.subr.bf16.mxu0 %v5339
        %7291 = vmatpush1.bf16.msra.mxu0 %v5338
        %7292 = vmatprep.subr.bf16.mxu0 %v5343
        %7293 = vmatpush1.bf16.msra.mxu0 %v5342
        %7294 = vmatprep.subr.bf16.mxu0 %v5347
        %7295 = vmatpush1.bf16.msra.mxu0 %v5346
        %7296 = vmatprep.mubr.bf16.mxu0 %v2665
        %7297 = vmatmul.mubr.bf16.gmra.mrb[0].mxu0 %v2663
        %v7298 = vpop.f32.mrb[0].mxu0
        %v7299 = vadd.f32 %v7258, %v7298
        %v7300 = vpop.f32.mrb[0].mxu0
        %v7301 = vadd.f32 %v7260, %v7300
        %v7302 = vpop.f32.mrb[0].mxu0
        %v7303 = vpop.f32.mrb[0].mxu0
        %7304 = vdwg.mxu0
        %7305 = vmatprep.subr.bf16.mxu0 %v5351
        %7306 = vmatpush1.bf16.msra.mxu0 %v5350
        %7307 = vmatprep.subr.bf16.mxu0 %v5355
        %7308 = vmatpush1.bf16.msra.mxu0 %v5354
        %7309 = vmatprep.subr.bf16.mxu0 %v5359
        %7310 = vmatpush1.bf16.msra.mxu0 %v5358
        %7311 = vmatprep.subr.bf16.mxu0 %v5363
        %7312 = vmatpush1.bf16.msra.mxu0 %v5362
        %7313 = vmatprep.subr.bf16.mxu0 %v5367
        %7314 = vmatpush1.bf16.msra.mxu0 %v5366
        %7315 = vmatprep.subr.bf16.mxu0 %v5371
        %7316 = vmatpush1.bf16.msra.mxu0 %v5370
        %7317 = vmatprep.subr.bf16.mxu0 %v5375
        %7318 = vmatpush1.bf16.msra.mxu0 %v5374
        %7319 = vmatprep.subr.bf16.mxu0 %v5379
        %7320 = vmatpush1.bf16.msra.mxu0 %v5378
        %7321 = vmatprep.subr.bf16.mxu0 %v5383
        %7322 = vmatpush1.bf16.msra.mxu0 %v5382
        %7323 = vmatprep.subr.bf16.mxu0 %v5387
        %7324 = vmatpush1.bf16.msra.mxu0 %v5386
        %7325 = vmatprep.subr.bf16.mxu0 %v5391
        %7326 = vmatpush1.bf16.msra.mxu0 %v5390
        %7327 = vmatprep.subr.bf16.mxu0 %v5395
        %7328 = vmatpush1.bf16.msra.mxu0 %v5394
        %7329 = vmatprep.subr.bf16.mxu0 %v5399
        %7330 = vmatpush1.bf16.msra.mxu0 %v5398
        %7331 = vmatprep.subr.bf16.mxu0 %v5403
        %7332 = vmatpush1.bf16.msra.mxu0 %v5402
        %7333 = vmatprep.subr.bf16.mxu0 %v5407
        %7334 = vmatpush1.bf16.msra.mxu0 %v5406
        %7335 = vmatprep.subr.bf16.mxu0 %v5411
        %7336 = vmatpush1.bf16.msra.mxu0 %v5410
        %7337 = vmatprep.mubr.bf16.mxu0 %v2703
        %7338 = vmatmul.mubr.bf16.gmra.mrb[0].mxu0 %v2689
        %v7339 = vpop.f32.mrb[0].mxu0
        %v7340 = vadd.f32 %v7299, %v7339
        %v7341 = vpop.f32.mrb[0].mxu0
        %v7342 = vadd.f32 %v7301, %v7341
        %v7343 = vpop.f32.mrb[0].mxu0
        %v7344 = vpop.f32.mrb[0].mxu0
        %7345 = vdwg.mxu0
        %7346 = vmatprep.subr.bf16.mxu0 %v5415
        %7347 = vmatpush1.bf16.msra.mxu0 %v5414
        %7348 = vmatprep.subr.bf16.mxu0 %v5419
        %7349 = vmatpush1.bf16.msra.mxu0 %v5418
        %7350 = vmatprep.subr.bf16.mxu0 %v5423
        %7351 = vmatpush1.bf16.msra.mxu0 %v5422
        %7352 = vmatprep.subr.bf16.mxu0 %v5427
        %7353 = vmatpush1.bf16.msra.mxu0 %v5426
        %7354 = vmatprep.subr.bf16.mxu0 %v5431
        %7355 = vmatpush1.bf16.msra.mxu0 %v5430
        %7356 = vmatprep.subr.bf16.mxu0 %v5435
        %7357 = vmatpush1.bf16.msra.mxu0 %v5434
        %7358 = vmatprep.subr.bf16.mxu0 %v5439
        %7359 = vmatpush1.bf16.msra.mxu0 %v5438
        %7360 = vmatprep.subr.bf16.mxu0 %v5443
        %7361 = vmatpush1.bf16.msra.mxu0 %v5442
        %7362 = vmatprep.subr.bf16.mxu0 %v5447
        %7363 = vmatpush1.bf16.msra.mxu0 %v5446
        %7364 = vmatprep.subr.bf16.mxu0 %v5451
        %7365 = vmatpush1.bf16.msra.mxu0 %v5450
        %7366 = vmatprep.subr.bf16.mxu0 %v5455
        %7367 = vmatpush1.bf16.msra.mxu0 %v5454
        %7368 = vmatprep.subr.bf16.mxu0 %v5459
        %7369 = vmatpush1.bf16.msra.mxu0 %v5458
        %7370 = vmatprep.subr.bf16.mxu0 %v5463
        %7371 = vmatpush1.bf16.msra.mxu0 %v5462
        %7372 = vmatprep.subr.bf16.mxu0 %v5467
        %7373 = vmatpush1.bf16.msra.mxu0 %v5466
        %7374 = vmatprep.subr.bf16.mxu0 %v5471
        %7375 = vmatpush1.bf16.msra.mxu0 %v5470
        %7376 = vmatprep.subr.bf16.mxu0 %v5475
        %7377 = vmatpush1.bf16.msra.mxu0 %v5474
        %7378 = vmatprep.mubr.bf16.mxu0 %v2713
        %7379 = vmatmul.mubr.bf16.gmra.mrb[0].mxu0 %v2711
        %v7380 = vpop.f32.mrb[0].mxu0
        %v7381 = vadd.f32 %v7340, %v7380
        %v7382 = vpop.f32.mrb[0].mxu0
        %v7383 = vadd.f32 %v7342, %v7382
        %v7384 = vpop.f32.mrb[0].mxu0
        %v7385 = vpop.f32.mrb[0].mxu0
        %7386 = vdwg.mxu0
        %7387 = vmatprep.subr.bf16.mxu0 %v5479
        %7388 = vmatpush1.bf16.msra.mxu0 %v5478
        %7389 = vmatprep.subr.bf16.mxu0 %v5483
        %7390 = vmatpush1.bf16.msra.mxu0 %v5482
        %7391 = vmatprep.subr.bf16.mxu0 %v5487
        %7392 = vmatpush1.bf16.msra.mxu0 %v5486
        %7393 = vmatprep.subr.bf16.mxu0 %v5491
        %7394 = vmatpush1.bf16.msra.mxu0 %v5490
        %7395 = vmatprep.subr.bf16.mxu0 %v5495
        %7396 = vmatpush1.bf16.msra.mxu0 %v5494
        %7397 = vmatprep.subr.bf16.mxu0 %v5499
        %7398 = vmatpush1.bf16.msra.mxu0 %v5498
        %7399 = vmatprep.subr.bf16.mxu0 %v5503
        %7400 = vmatpush1.bf16.msra.mxu0 %v5502
        %7401 = vmatprep.subr.bf16.mxu0 %v5507
        %7402 = vmatpush1.bf16.msra.mxu0 %v5506
        %7403 = vmatprep.subr.bf16.mxu0 %v5511
        %7404 = vmatpush1.bf16.msra.mxu0 %v5510
        %7405 = vmatprep.subr.bf16.mxu0 %v5515
        %7406 = vmatpush1.bf16.msra.mxu0 %v5514
        %7407 = vmatprep.subr.bf16.mxu0 %v5519
        %7408 = vmatpush1.bf16.msra.mxu0 %v5518
        %7409 = vmatprep.subr.bf16.mxu0 %v5523
        %7410 = vmatpush1.bf16.msra.mxu0 %v5522
        %7411 = vmatprep.subr.bf16.mxu0 %v5527
        %7412 = vmatpush1.bf16.msra.mxu0 %v5526
        %7413 = vmatprep.subr.bf16.mxu0 %v5531
        %7414 = vmatpush1.bf16.msra.mxu0 %v5530
        %7415 = vmatprep.subr.bf16.mxu0 %v5535
        %7416 = vmatpush1.bf16.msra.mxu0 %v5534
        %7417 = vmatprep.subr.bf16.mxu0 %v5539
        %7418 = vmatpush1.bf16.msra.mxu0 %v5538
        %7419 = vmatprep.mubr.bf16.mxu0 %v2710
        %7420 = vmatmul.mubr.bf16.gmra.mrb[0].mxu0 %v2696
        %v7421 = vpop.f32.mrb[0].mxu0
        %v7422 = vadd.f32 %v7381, %v7421
        %v7423 = vpop.f32.mrb[0].mxu0
        %v7424 = vadd.f32 %v7383, %v7423
        %v7425 = vpop.f32.mrb[0].mxu0
        %v7426 = vpop.f32.mrb[0].mxu0
        %7427 = vdwg.mxu0
        %7428 = vmatprep.subr.bf16.mxu0 %v5543
        %7429 = vmatpush1.bf16.msra.mxu0 %v5542
        %7430 = vmatprep.subr.bf16.mxu0 %v5547
        %7431 = vmatpush1.bf16.msra.mxu0 %v5546
        %7432 = vmatprep.subr.bf16.mxu0 %v5551
        %7433 = vmatpush1.bf16.msra.mxu0 %v5550
        %7434 = vmatprep.subr.bf16.mxu0 %v5555
        %7435 = vmatpush1.bf16.msra.mxu0 %v5554
        %7436 = vmatprep.subr.bf16.mxu0 %v5559
        %7437 = vmatpush1.bf16.msra.mxu0 %v5558
        %7438 = vmatprep.subr.bf16.mxu0 %v5563
        %7439 = vmatpush1.bf16.msra.mxu0 %v5562
        %7440 = vmatprep.subr.bf16.mxu0 %v5567
        %7441 = vmatpush1.bf16.msra.mxu0 %v5566
        %7442 = vmatprep.subr.bf16.mxu0 %v5571
        %7443 = vmatpush1.bf16.msra.mxu0 %v5570
        %7444 = vmatprep.subr.bf16.mxu0 %v5575
        %7445 = vmatpush1.bf16.msra.mxu0 %v5574
        %7446 = vmatprep.subr.bf16.mxu0 %v5579
        %7447 = vmatpush1.bf16.msra.mxu0 %v5578
        %7448 = vmatprep.subr.bf16.mxu0 %v5583
        %7449 = vmatpush1.bf16.msra.mxu0 %v5582
        %7450 = vmatprep.subr.bf16.mxu0 %v5587
        %7451 = vmatpush1.bf16.msra.mxu0 %v5586
        %7452 = vmatprep.subr.bf16.mxu0 %v5591
        %7453 = vmatpush1.bf16.msra.mxu0 %v5590
        %7454 = vmatprep.subr.bf16.mxu0 %v5595
        %7455 = vmatpush1.bf16.msra.mxu0 %v5594
        %7456 = vmatprep.subr.bf16.mxu0 %v5599
        %7457 = vmatpush1.bf16.msra.mxu0 %v5598
        %7458 = vmatprep.subr.bf16.mxu0 %v5603
        %7459 = vmatpush1.bf16.msra.mxu0 %v5602
        %7460 = vmatprep.mubr.bf16.mxu0 %v2714
        %7461 = vmatmul.mubr.bf16.gmra.mrb[0].mxu0 %v2712
        %v7462 = vpop.f32.mrb[0].mxu0
        %v7463 = vadd.f32 %v7422, %v7462
        %v7464 = vpop.f32.mrb[0].mxu0
        %v7465 = vadd.f32 %v7424, %v7464
        %v7466 = vpop.f32.mrb[0].mxu0
        %v7467 = vpop.f32.mrb[0].mxu0
        %7468 = vdwg.mxu0
        %7469 = vmatprep.subr.bf16.mxu0 %v5607
        %7470 = vmatpush1.bf16.msra.mxu0 %v5606
        %7471 = vmatprep.subr.bf16.mxu0 %v5611
        %7472 = vmatpush1.bf16.msra.mxu0 %v5610
        %7473 = vmatprep.subr.bf16.mxu0 %v5615
        %7474 = vmatpush1.bf16.msra.mxu0 %v5614
        %7475 = vmatprep.subr.bf16.mxu0 %v5619
        %7476 = vmatpush1.bf16.msra.mxu0 %v5618
        %7477 = vmatprep.subr.bf16.mxu0 %v5623
        %7478 = vmatpush1.bf16.msra.mxu0 %v5622
        %7479 = vmatprep.subr.bf16.mxu0 %v5627
        %7480 = vmatpush1.bf16.msra.mxu0 %v5626
        %7481 = vmatprep.subr.bf16.mxu0 %v5631
        %7482 = vmatpush1.bf16.msra.mxu0 %v5630
        %7483 = vmatprep.subr.bf16.mxu0 %v5635
        %7484 = vmatpush1.bf16.msra.mxu0 %v5634
        %7485 = vmatprep.subr.bf16.mxu0 %v5639
        %7486 = vmatpush1.bf16.msra.mxu0 %v5638
        %7487 = vmatprep.subr.bf16.mxu0 %v5643
        %7488 = vmatpush1.bf16.msra.mxu0 %v5642
        %7489 = vmatprep.subr.bf16.mxu0 %v5647
        %7490 = vmatpush1.bf16.msra.mxu0 %v5646
        %7491 = vmatprep.subr.bf16.mxu0 %v5651
        %7492 = vmatpush1.bf16.msra.mxu0 %v5650
        %7493 = vmatprep.subr.bf16.mxu0 %v5655
        %7494 = vmatpush1.bf16.msra.mxu0 %v5654
        %7495 = vmatprep.subr.bf16.mxu0 %v5659
        %7496 = vmatpush1.bf16.msra.mxu0 %v5658
        %7497 = vmatprep.subr.bf16.mxu0 %v5663
        %7498 = vmatpush1.bf16.msra.mxu0 %v5662
        %7499 = vmatprep.subr.bf16.mxu0 %v5667
        %7500 = vmatpush1.bf16.msra.mxu0 %v5666
        %7501 = vmatprep.mubr.bf16.mxu0 %v2752
        %7502 = vmatmul.mubr.bf16.gmra.mrb[0].mxu0 %v2738
        %v7503 = vpop.f32.mrb[0].mxu0
        %v7504 = vadd.f32 %v7463, %v7503
        %v7505 = vpop.f32.mrb[0].mxu0
        %v7506 = vadd.f32 %v7465, %v7505
        %v7507 = vpop.f32.mrb[0].mxu0
        %v7508 = vpop.f32.mrb[0].mxu0
        %7509 = vdwg.mxu0
        %7510 = vmatprep.subr.bf16.mxu0 %v5671
        %7511 = vmatpush1.bf16.msra.mxu0 %v5670
        %7512 = vmatprep.subr.bf16.mxu0 %v5675
        %7513 = vmatpush1.bf16.msra.mxu0 %v5674
        %7514 = vmatprep.subr.bf16.mxu0 %v5679
        %7515 = vmatpush1.bf16.msra.mxu0 %v5678
        %7516 = vmatprep.subr.bf16.mxu0 %v5683
        %7517 = vmatpush1.bf16.msra.mxu0 %v5682
        %7518 = vmatprep.subr.bf16.mxu0 %v5687
        %7519 = vmatpush1.bf16.msra.mxu0 %v5686
        %7520 = vmatprep.subr.bf16.mxu0 %v5691
        %7521 = vmatpush1.bf16.msra.mxu0 %v5690
        %7522 = vmatprep.subr.bf16.mxu0 %v5695
        %7523 = vmatpush1.bf16.msra.mxu0 %v5694
        %7524 = vmatprep.subr.bf16.mxu0 %v5699
        %7525 = vmatpush1.bf16.msra.mxu0 %v5698
        %7526 = vmatprep.subr.bf16.mxu0 %v5703
        %7527 = vmatpush1.bf16.msra.mxu0 %v5702
        %7528 = vmatprep.subr.bf16.mxu0 %v5707
        %7529 = vmatpush1.bf16.msra.mxu0 %v5706
        %7530 = vmatprep.subr.bf16.mxu0 %v5711
        %7531 = vmatpush1.bf16.msra.mxu0 %v5710
        %7532 = vmatprep.subr.bf16.mxu0 %v5715
        %7533 = vmatpush1.bf16.msra.mxu0 %v5714
        %7534 = vmatprep.subr.bf16.mxu0 %v5719
        %7535 = vmatpush1.bf16.msra.mxu0 %v5718
        %7536 = vmatprep.subr.bf16.mxu0 %v5723
        %7537 = vmatpush1.bf16.msra.mxu0 %v5722
        %7538 = vmatprep.subr.bf16.mxu0 %v5727
        %7539 = vmatpush1.bf16.msra.mxu0 %v5726
        %7540 = vmatprep.subr.bf16.mxu0 %v5731
        %7541 = vmatpush1.bf16.msra.mxu0 %v5730
        %7542 = vmatprep.mubr.bf16.mxu0 %v2762
        %7543 = vmatmul.mubr.bf16.gmra.mrb[0].mxu0 %v2760
        %v7544 = vpop.f32.mrb[0].mxu0
        %v7545 = vadd.f32 %v7504, %v7544
        %v7546 = vpop.f32.mrb[0].mxu0
        %v7547 = vadd.f32 %v7506, %v7546
        %v7548 = vpop.f32.mrb[0].mxu0
        %v7549 = vpop.f32.mrb[0].mxu0
        %7550 = vdwg.mxu0
        %7551 = vmatprep.subr.bf16.mxu0 %v5735
        %7552 = vmatpush1.bf16.msra.mxu0 %v5734
        %7553 = vmatprep.subr.bf16.mxu0 %v5739
        %7554 = vmatpush1.bf16.msra.mxu0 %v5738
        %7555 = vmatprep.subr.bf16.mxu0 %v5743
        %7556 = vmatpush1.bf16.msra.mxu0 %v5742
        %7557 = vmatprep.subr.bf16.mxu0 %v5747
        %7558 = vmatpush1.bf16.msra.mxu0 %v5746
        %7559 = vmatprep.subr.bf16.mxu0 %v5751
        %7560 = vmatpush1.bf16.msra.mxu0 %v5750
        %7561 = vmatprep.subr.bf16.mxu0 %v5755
        %7562 = vmatpush1.bf16.msra.mxu0 %v5754
        %7563 = vmatprep.subr.bf16.mxu0 %v5759
        %7564 = vmatpush1.bf16.msra.mxu0 %v5758
        %7565 = vmatprep.subr.bf16.mxu0 %v5763
        %7566 = vmatpush1.bf16.msra.mxu0 %v5762
        %7567 = vmatprep.subr.bf16.mxu0 %v5767
        %7568 = vmatpush1.bf16.msra.mxu0 %v5766
        %7569 = vmatprep.subr.bf16.mxu0 %v5771
        %7570 = vmatpush1.bf16.msra.mxu0 %v5770
        %7571 = vmatprep.subr.bf16.mxu0 %v5775
        %7572 = vmatpush1.bf16.msra.mxu0 %v5774
        %7573 = vmatprep.subr.bf16.mxu0 %v5779
        %7574 = vmatpush1.bf16.msra.mxu0 %v5778
        %7575 = vmatprep.subr.bf16.mxu0 %v5783
        %7576 = vmatpush1.bf16.msra.mxu0 %v5782
        %7577 = vmatprep.subr.bf16.mxu0 %v5787
        %7578 = vmatpush1.bf16.msra.mxu0 %v5786
        %7579 = vmatprep.subr.bf16.mxu0 %v5791
        %7580 = vmatpush1.bf16.msra.mxu0 %v5790
        %7581 = vmatprep.subr.bf16.mxu0 %v5795
        %7582 = vmatpush1.bf16.msra.mxu0 %v5794
        %7583 = vmatprep.mubr.bf16.mxu0 %v2759
        %7584 = vmatmul.mubr.bf16.gmra.mrb[0].mxu0 %v2745
        %v7585 = vpop.f32.mrb[0].mxu0
        %v7586 = vadd.f32 %v7545, %v7585
        %v7587 = vpop.f32.mrb[0].mxu0
        %v7588 = vadd.f32 %v7547, %v7587
        %v7589 = vpop.f32.mrb[0].mxu0
        %v7590 = vpop.f32.mrb[0].mxu0
        %7591 = vdwg.mxu0
        %7592 = vmatprep.subr.bf16.mxu0 %v5799
        %7593 = vmatpush1.bf16.msra.mxu0 %v5798
        %7594 = vmatprep.subr.bf16.mxu0 %v5803
        %7595 = vmatpush1.bf16.msra.mxu0 %v5802
        %7596 = vmatprep.subr.bf16.mxu0 %v5807
        %7597 = vmatpush1.bf16.msra.mxu0 %v5806
        %7598 = vmatprep.subr.bf16.mxu0 %v5811
        %7599 = vmatpush1.bf16.msra.mxu0 %v5810
        %7600 = vmatprep.subr.bf16.mxu0 %v5815
        %7601 = vmatpush1.bf16.msra.mxu0 %v5814
        %7602 = vmatprep.subr.bf16.mxu0 %v5819
        %7603 = vmatpush1.bf16.msra.mxu0 %v5818
        %7604 = vmatprep.subr.bf16.mxu0 %v5823
        %7605 = vmatpush1.bf16.msra.mxu0 %v5822
        %7606 = vmatprep.subr.bf16.mxu0 %v5827
        %7607 = vmatpush1.bf16.msra.mxu0 %v5826
        %7608 = vmatprep.subr.bf16.mxu0 %v5831
        %7609 = vmatpush1.bf16.msra.mxu0 %v5830
        %7610 = vmatprep.subr.bf16.mxu0 %v5835
        %7611 = vmatpush1.bf16.msra.mxu0 %v5834
        %7612 = vmatprep.subr.bf16.mxu0 %v5839
        %7613 = vmatpush1.bf16.msra.mxu0 %v5838
        %7614 = vmatprep.subr.bf16.mxu0 %v5843
        %7615 = vmatpush1.bf16.msra.mxu0 %v5842
        %7616 = vmatprep.subr.bf16.mxu0 %v5847
        %7617 = vmatpush1.bf16.msra.mxu0 %v5846
        %7618 = vmatprep.subr.bf16.mxu0 %v5851
        %7619 = vmatpush1.bf16.msra.mxu0 %v5850
        %7620 = vmatprep.subr.bf16.mxu0 %v5855
        %7621 = vmatpush1.bf16.msra.mxu0 %v5854
        %7622 = vmatprep.subr.bf16.mxu0 %v5859
        %7623 = vmatpush1.bf16.msra.mxu0 %v5858
        %7624 = vmatprep.mubr.bf16.mxu0 %v2763
        %7625 = vmatmul.mubr.bf16.gmra.mrb[0].mxu0 %v2761
        %v7626 = vpop.f32.mrb[0].mxu0
        %v7627 = vadd.f32 %v7586, %v7626
        %v7628 = vpop.f32.mrb[0].mxu0
        %v7629 = vadd.f32 %v7588, %v7628
        %v7630 = vpop.f32.mrb[0].mxu0
        %v7631 = vpop.f32.mrb[0].mxu0
        %7632 = vdwg.mxu0
        %v7633 = vmax.f32 %v7135, 0.0
        %v7634 = vmax.f32 %v7137, 0.0
        %v7635 = vmax.f32 %v7627, 0.0
        %v7636 = vmax.f32 %v7629, 0.0
        %v7637 = vld [vmem:[#allocation15] sm:$0xf]
        %v7639 = vlaneseq
        %v7640 = vshrl.u32 %v7639, 7
        %v7641 = vsub.s32 0, %v7640
        %v7642 = vrot.slane %v7637, %v7641
        %v7643 = vlaneseq
        %v7644 = vshrl.u32 %v7643, 7
        %v7645 = vsub.s32 1, %v7644
        %v7646 = vrot.slane %v7637, %v7645
        %v7647 = vlaneseq
        %v7648 = vshrl.u32 %v7647, 7
        %v7649 = vsub.s32 2, %v7648
        %v7650 = vrot.slane %v7637, %v7649
        %v7651 = vlaneseq
        %v7652 = vshrl.u32 %v7651, 7
        %v7653 = vsub.s32 3, %v7652
        %v7654 = vrot.slane %v7637, %v7653
        %v7659 = vmul.f32 %v7633, %v7642
        %v7660 = vmul.f32 %v7634, %v7646
        %v7661 = vmul.f32 %v7635, %v7650
        %v7662 = vmul.f32 %v7636, %v7654
        %vm7663 = vcmask 1040384
        %v7664 = vsel %vm7663, %v7659, 0.0
        %v7665 = vsel %vm7663, %v7660, 0.0
        %v7666 = vadd.f32 %v7664, %v7665
        %v7667 = vsel %vm7663, %v7661, 0.0
        %v7668 = vadd.f32 %v7666, %v7667
        %v7669 = vsel %vm7663, %v7662, 0.0
        %v7670 = vadd.f32 %v7668, %v7669
        %7671 = vadd.xlane.f32.xlu0 %v7670
        %v7672 = vpop.xlane.xlu0 %7671
        %v7673 = vld [vmem:[#allocation7] sm:$0x1]
        %v7674 = vadd.f32 %v7672, %v7673
        %s7676 = vtos %v7674
        %v7677 = vstv %s7676
        %7679 = vst [vmem:[%s453] sm:$0xff] %v7677
        %p7680 = scmp.lt.s32.totalorder %s27, 1
        %s7681 = scalar_select %p7680, %s27, 1
        %s7682 = smul.addr %s7681, 8
        %s7683 = scalar_lea.vmem %s11, %s7682
        // Predicated region
        $region85: #{simple_cnn_forward.1} parent=63 // pred_check
          %p7684 = pneg %p281
        $region86: #{simple_cnn_forward.1} parent=63 // pred_check_branch
          %7686 = sbr.rel (%p7684) target = $region88
        $region87: #{simple_cnn_forward.1} parent=63 // pred_region
          _
        $region88: #{simple_cnn_forward.1} parent=63 // pred_fallthru
          _
      $region64: #{simple_cnn_forward.1} parent=5 // pred_fallthru
        _
      %p7687 = scmp.le.s32.totalorder 2, %s22
      // Predicated region
      $region89: #{simple_cnn_forward.1} parent=5 // pred_check
        %p7688 = pneg %p7687
      $region90: #{simple_cnn_forward.1} parent=5 // pred_check_branch
        %7690 = sbr.rel (%p7688) target = $region92
      $region91: #{simple_cnn_forward.1} parent=5 // pred_region
        %s7691 = ssub.s32 %s22, 2
        // Predicated region
        $region93: #{simple_cnn_forward.1} parent=91 // pred_check
          %p7692 = pneg %p287
        $region94: #{simple_cnn_forward.1} parent=91 // pred_check_branch
          %7694 = sbr.rel (%p7692) target = $region96
        $region95: #{simple_cnn_forward.1} parent=91 // pred_region
          %p7695 = scmp.lt.s32.totalorder %s28, 1
          %s7696 = scalar_select %p7695, %s28, 1
          %s7697 = smul.addr %s7696, 8
          %s7698 = scalar_lea.vmem %s11, %s7697
        $region96: #{simple_cnn_forward.1} parent=91 // pred_fallthru
          _
      $region92: #{simple_cnn_forward.1} parent=5 // pred_fallthru
        _
    $region6: #{simple_cnn_forward.1} parent=1 // loop_footer
      %s26 = sadd.s32 1, %s22
    $region7: #{simple_cnn_forward.1} parent=1 // loop_footer_branch
      %21 = sbr.rel target = $region3
    $region8: #{simple_cnn_forward.1} parent=1 // loop_exit
      _
    %7699 = vsyncpa [#allocation9], 1
    %s7700 = scalar_lea.sflag [#allocation9], 1
    %7701 = vsyncpa %s7700, 1
    %7702 = vsyncpa [#allocation11], 1
    %7703 = vsyncpa [#allocation14], 1

</llo_original>
